<compile_context>
chip_gen: v7x
topology: tpu7x:2x2x1
jax: 0.10.0
libtpu: 0.0.40
codegen_flags: <defaults>
</compile_context>

<pallas_src>
import math

import jax
import jax.numpy as jnp
from jax import lax
from jax.experimental import pallas as pl
from jax.experimental.pallas import tpu as pltpu

# ----------------------------- config ---------------------------------------
BATCH = 2
SEQ_LEN = 8          # config.seq_len
VOCAB = 16           # config.vocab_size
HIDDEN_LEN = 32      # config.hidden_len   (acts as sequence length after emb)
HIDDEN = 32          # config.hidden_size
INTER = 64           # config.intermediate_size
NUM_HEADS = 4        # config.num_heads
HEAD_DIM = INTER // NUM_HEADS
NUM_LAYERS = 2       # config.num_hidden_layers
INIT_RANGE = 0.02    # config.initializer_range
LN_EPS_EMB = 1e-5    # nn.LayerNorm default (BertEmbedding.batchnorm)
LN_EPS_OUT = 1e-12   # BertOuter.layernorm eps

BL = BATCH * HIDDEN_LEN   # batch folded into rows


def _layernorm(a, g, b, eps):
    mu = jnp.mean(a, axis=-1, keepdims=True)
    var = jnp.mean((a - mu) ** 2, axis=-1, keepdims=True)
    return (a - mu) * lax.rsqrt(var + eps) * g + b


# --------------------------- fused kernel ------------------------------------
def _fused_bert_kernel(x_ref, w_emb_ref, b_emb_ref, eg_ref, eb_ref,
                       w_lin_ref, b_lin_ref,
                       wi_ref, bi_ref, wqkv_ref, bqkv_ref, wo_ref, bo_ref,
                       wd_ref, bd_ref, lg_ref, lb_ref,
                       o_ref, h_scr, ctx_scr):
    scale = 1.0 / math.sqrt(HEAD_DIM)

    # -------- BertEmbedding (permutes folded into contraction dims) --------
    for b in range(BATCH):
        xb = jnp.maximum(x_ref[b], 0.0)                       # (S, V) ReLU
        # Linear(seq_len -> hidden_len) on permuted x: contract SEQ_LEN dims.
        e = lax.dot_general(xb, w_emb_ref[...], (((0,), (1,)), ((), ())),
                            preferred_element_type=jnp.float32)          # (V, HL)
        e = e + b_emb_ref[...]
        e = _layernorm(e, eg_ref[...], eb_ref[...], LN_EPS_EMB)
        # permute(0,2,1) + Linear(vocab -> hidden): contract VOCAB dims.
        hb = lax.dot_general(e, w_lin_ref[...], (((0,), (1,)), ((), ())),
                             preferred_element_type=jnp.float32)         # (HL, H)
        hb = hb + b_lin_ref[...]
        h_scr[b * HIDDEN_LEN:(b + 1) * HIDDEN_LEN, :] = hb

    # -------- BertLayers (statically unrolled, batch folded into rows) -----
    for l in range(NUM_LAYERS):
        h = h_scr[...]                                        # (BL, H)

        # BertInter: act_fn then dense(hidden -> intermediate)
        a = jnp.maximum(h, 0.0)
        xi = lax.dot_general(a, wi_ref[l], (((1,), (1,)), ((), ())),
                             preferred_element_type=jnp.float32) + bi_ref[l]   # (BL, E)

        # Fused Q/K/V projection: one (BL,E) x (E,3E) matmul, lane-dense output.
        qkv = lax.dot_general(xi, wqkv_ref[l], (((1,), (1,)), ((), ())),
                              preferred_element_type=jnp.float32) + bqkv_ref[l]  # (BL, 3E)
        q = qkv[:, :INTER] * scale
        k = qkv[:, INTER:2 * INTER]
        v = qkv[:, 2 * INTER:3 * INTER]

        # Multi-head self-attention per batch / per head (eval mode,
        # attn_dropout = identity).  ctx is assembled into VMEM scratch so the
        # out-projection is a single K=64 matmul.
        for b in range(BATCH):
            r0 = b * HIDDEN_LEN
            for hd in range(NUM_HEADS):
                c0 = hd * HEAD_DIM
                qh = q[r0:r0 + HIDDEN_LEN, c0:c0 + HEAD_DIM]
                kh = k[r0:r0 + HIDDEN_LEN, c0:c0 + HEAD_DIM]
                vh = v[r0:r0 + HIDDEN_LEN, c0:c0 + HEAD_DIM]
                s = lax.dot_general(qh, kh, (((1,), (1,)), ((), ())),
                                    preferred_element_type=jnp.float32)   # (L, L)
                m = jnp.max(s, axis=-1, keepdims=True)
                p = jnp.exp(s - m)
                denom = jnp.sum(p, axis=-1, keepdims=True)
                p = p * pl.reciprocal(denom, approx=True)
                ctx = jnp.dot(p, vh, preferred_element_type=jnp.float32)  # (L, HD)
                ctx_scr[r0:r0 + HIDDEN_LEN, c0:c0 + HEAD_DIM] = ctx

        attn = lax.dot_general(ctx_scr[...], wo_ref[l], (((1,), (1,)), ((), ())),
                               preferred_element_type=jnp.float32) + bo_ref[l]   # (BL, E)

        # BertOuter: dense(intermediate -> hidden), dropout=identity, LayerNorm.
        y = lax.dot_general(attn, wd_ref[l], (((1,), (1,)), ((), ())),
                            preferred_element_type=jnp.float32) + bd_ref[l]      # (BL, H)
        y = _layernorm(y, lg_ref[l], lb_ref[l], LN_EPS_OUT)

        # BertEncoder residual: x = x + layer(x)
        h_scr[...] = h + y

    # -------- final pool: permute + sum over hidden_size + unsqueeze -------
    # ones-matmul keeps the result lane-major over HIDDEN_LEN (avoids a
    # sublane->lane relayout that an XLU lane-reduce would need here).
    ones = jnp.ones((1, HIDDEN), jnp.float32)
    for b in range(BATCH):
        r0 = b * HIDDEN_LEN
        o_ref[b] = lax.dot_general(ones, h_scr[r0:r0 + HIDDEN_LEN, :],
                                   (((1,), (1,)), ((), ())),
                                   preferred_element_type=jnp.float32)    # (1, HL)


# ------------------------------- wrapper -------------------------------------
def bert_encoder_forward(x, p):
    # Single fused pallas_call: no grid, whole arrays resident in VMEM.
    return pl.pallas_call(
        _fused_bert_kernel,
        out_shape=jax.ShapeDtypeStruct((BATCH, 1, HIDDEN_LEN), jnp.float32),
        scratch_shapes=[
            pltpu.VMEM((BL, HIDDEN), jnp.float32),   # h  (B*HIDDEN_LEN, HIDDEN)
            pltpu.VMEM((BL, INTER), jnp.float32),    # concatenated attention ctx
        ],
    )(x,
      p['w_emb'], p['b_emb'], p['eln_g'], p['eln_b'], p['w_lin'], p['b_lin'],
      p['wi'], p['bi'], p['wqkv'], p['bqkv'], p['wo'], p['bo'],
      p['wd'], p['bd'], p['ln_g'], p['ln_b'])


# ------------------------ deterministic parameters ---------------------------
def init_params(key):
    keys = iter(jax.random.split(key, 128))

    def nrm(shape):
        return INIT_RANGE * jax.random.normal(next(keys), shape, jnp.float32)

    p = dict(
        w_emb=nrm((HIDDEN_LEN, SEQ_LEN)),          # nn.Linear(seq_len, hidden_len)
        b_emb=nrm((1, HIDDEN_LEN)),
        eln_g=jnp.ones((1, HIDDEN_LEN), jnp.float32),
        eln_b=jnp.zeros((1, HIDDEN_LEN), jnp.float32),
        w_lin=nrm((HIDDEN, VOCAB)),                # nn.Linear(vocab_size, hidden_size)
        b_lin=nrm((1, HIDDEN)),
    )
    wi, bi, wqkv, bqkv, wo, bo, wd, bd, lg, lb = ([] for _ in range(10))
    for _ in range(NUM_LAYERS):
        wi.append(nrm((INTER, HIDDEN)))            # BertInter.dense
        bi.append(nrm((1, INTER)))
        wqkv.append(nrm((3 * INTER, INTER)))       # MHA in_proj (q;k;v stacked)
        bqkv.append(nrm((1, 3 * INTER)))
        wo.append(nrm((INTER, INTER)))             # MHA out_proj
        bo.append(nrm((1, INTER)))
        wd.append(nrm((HIDDEN, INTER)))            # BertOuter.dense
        bd.append(nrm((1, HIDDEN)))
        lg.append(jnp.ones((1, HIDDEN), jnp.float32))
        lb.append(jnp.zeros((1, HIDDEN), jnp.float32))
    p.update(
        wi=jnp.stack(wi), bi=jnp.stack(bi),
        wqkv=jnp.stack(wqkv), bqkv=jnp.stack(bqkv),
        wo=jnp.stack(wo), bo=jnp.stack(bo),
        wd=jnp.stack(wd), bd=jnp.stack(bd),
        ln_g=jnp.stack(lg), ln_b=jnp.stack(lb),
    )
    return p


# ------------------------------ pure-JAX reference ---------------------------
def ref_forward(x, p):
    def relu(a):
        return jnp.maximum(a, 0.0)

    def ln(a, g, b, eps):
        mu = jnp.mean(a, -1, keepdims=True)
        var = jnp.mean((a - mu) ** 2, -1, keepdims=True)
        return (a - mu) / jnp.sqrt(var + eps) * g + b

    h = jnp.transpose(x, (0, 2, 1))
    h = relu(h)
    h = h @ p['w_emb'].T + p['b_emb'][0]
    h = ln(h, p['eln_g'][0], p['eln_b'][0], LN_EPS_EMB)
    h = jnp.transpose(h, (0, 2, 1))
    h = h @ p['w_lin'].T + p['b_lin'][0]

    for l in range(NUM_LAYERS):
        xi = relu(h) @ p['wi'][l].T + p['bi'][l, 0]
        wq = p['wqkv'][l, :INTER]
        wk = p['wqkv'][l, INTER:2 * INTER]
        wv = p['wqkv'][l, 2 * INTER:]
        bq = p['bqkv'][l, 0, :INTER]
        bk = p['bqkv'][l, 0, INTER:2 * INTER]
        bv = p['bqkv'][l, 0, 2 * INTER:]
        q = xi @ wq.T + bq
        k = xi @ wk.T + bk
        v = xi @ wv.T + bv
        B_, L_, E_ = q.shape

        def split(t):
            return t.reshape(B_, L_, NUM_HEADS, HEAD_DIM).transpose(0, 2, 1, 3)

        qh, kh, vh = split(q), split(k), split(v)
        scores = jnp.einsum('bhld,bhmd->bhlm', qh, kh) / math.sqrt(HEAD_DIM)
        pattn = jax.nn.softmax(scores, axis=-1)
        ctx = jnp.einsum('bhlm,bhmd->bhld', pattn, vh)
        ctx = ctx.transpose(0, 2, 1, 3).reshape(B_, L_, E_)
        attn_out = ctx @ p['wo'][l].T + p['bo'][l, 0]
        y = attn_out @ p['wd'][l].T + p['bd'][l, 0]
        y = ln(y, p['ln_g'][l, 0], p['ln_b'][l, 0], LN_EPS_OUT)
        h = h + y
    return jnp.sum(h, axis=-1)[:, None, :]


# ---------------------------------- main --------------------------------------
if __name__ == "__main__":
    key = jax.random.PRNGKey(0)
    pkey, xkey = jax.random.split(key)
    params = init_params(pkey)
    x = jax.random.normal(xkey, (BATCH, SEQ_LEN, VOCAB), jnp.float32)

    # TODO(synk): dropout layers (hidden_dropout / attn_dropout) are implemented
    # as identity (eval-mode semantics); training-mode random masking is not done.
    out = bert_encoder_forward(x, params)
    out = jax.block_until_ready(out)

    assert out.shape == (BATCH, 1, HIDDEN_LEN), out.shape
    ref = ref_forward(x, params)
    assert bool(jnp.allclose(out, ref, atol=2e-3, rtol=2e-3)), \
        float(jnp.max(jnp.abs(out - ref)))
    print("KERNEL_OK")
</pallas_src>

<mosaic_0001>
module attributes {stable_mosaic.version = 11 : i64} {
  func.func @_fused_bert_kernel(%arg0: memref<2x8x16xf32, #tpu.memory_space<vmem>>, %arg1: memref<32x8xf32, #tpu.memory_space<vmem>>, %arg2: memref<1x32xf32, #tpu.memory_space<vmem>>, %arg3: memref<1x32xf32, #tpu.memory_space<vmem>>, %arg4: memref<1x32xf32, #tpu.memory_space<vmem>>, %arg5: memref<32x16xf32, #tpu.memory_space<vmem>>, %arg6: memref<1x32xf32, #tpu.memory_space<vmem>>, %arg7: memref<2x64x32xf32, #tpu.memory_space<vmem>>, %arg8: memref<2x1x64xf32, #tpu.memory_space<vmem>>, %arg9: memref<2x192x64xf32, #tpu.memory_space<vmem>>, %arg10: memref<2x1x192xf32, #tpu.memory_space<vmem>>, %arg11: memref<2x64x64xf32, #tpu.memory_space<vmem>>, %arg12: memref<2x1x64xf32, #tpu.memory_space<vmem>>, %arg13: memref<2x32x64xf32, #tpu.memory_space<vmem>>, %arg14: memref<2x1x32xf32, #tpu.memory_space<vmem>>, %arg15: memref<2x1x32xf32, #tpu.memory_space<vmem>>, %arg16: memref<2x1x32xf32, #tpu.memory_space<vmem>>, %arg17: memref<2x1x32xf32, #tpu.memory_space<vmem>>, %arg18: memref<64x32xf32, #tpu.memory_space<vmem>>, %arg19: memref<64x64xf32, #tpu.memory_space<vmem>>) attributes {dimension_semantics = [], scalar_prefetch = 0 : i64, scratch_operands = 2 : i64, tpu.core_type = #tpu.core_type<tc>} {
    %c0 = arith.constant 0 : index
    %c0_0 = arith.constant 0 : index
    %c0_1 = arith.constant 0 : index
    %0 = vector.load %arg0[%c0, %c0_0, %c0_1] : memref<2x8x16xf32, #tpu.memory_space<vmem>>, vector<1x8x16xf32>
    %1 = vector.shape_cast %0 : vector<1x8x16xf32> to vector<8x16xf32>
    %cst = arith.constant 0.000000e+00 : f32
    %2 = vector.broadcast %cst : f32 to vector<8x16xf32>
    %3 = arith.maximumf %1, %2 : vector<8x16xf32>
    %c0_2 = arith.constant 0 : index
    %c0_3 = arith.constant 0 : index
    %4 = vector.load %arg1[%c0_2, %c0_3] : memref<32x8xf32, #tpu.memory_space<vmem>>, vector<32x8xf32>
    %cst_4 = arith.constant dense<0.000000e+00> : vector<16x32xf32>
    %5 = tpu.matmul %3, %4, %cst_4 {dimension_numbers = #tpu.dot_dimension_numbers<[0], [1], [1], [0], [0, 1, 1, 0], [], []>} : vector<8x16xf32>, vector<32x8xf32>, vector<16x32xf32> -> vector<16x32xf32>
    %c0_5 = arith.constant 0 : index
    %c0_6 = arith.constant 0 : index
    %6 = vector.load %arg2[%c0_5, %c0_6] : memref<1x32xf32, #tpu.memory_space<vmem>>, vector<1x32xf32>
    %7 = vector.broadcast %6 : vector<1x32xf32> to vector<16x32xf32>
    %8 = arith.addf %5, %7 : vector<16x32xf32>
    %c0_7 = arith.constant 0 : index
    %c0_8 = arith.constant 0 : index
    %9 = vector.load %arg3[%c0_7, %c0_8] : memref<1x32xf32, #tpu.memory_space<vmem>>, vector<1x32xf32>
    %c0_9 = arith.constant 0 : index
    %c0_10 = arith.constant 0 : index
    %10 = vector.load %arg4[%c0_9, %c0_10] : memref<1x32xf32, #tpu.memory_space<vmem>>, vector<1x32xf32>
    %cst_11 = arith.constant dense<0.000000e+00> : vector<16xf32>
    %11 = vector.multi_reduction <add>, %8, %cst_11 [1] : vector<16x32xf32> to vector<16xf32>
    %12 = vector.shape_cast %11 : vector<16xf32> to vector<16x1xf32>
    %cst_12 = arith.constant 3.200000e+01 : f32
    %13 = vector.broadcast %cst_12 : f32 to vector<16x1xf32>
    %14 = arith.divf %12, %13 : vector<16x1xf32>
    %15 = vector.broadcast %14 : vector<16x1xf32> to vector<16x32xf32>
    %16 = arith.subf %8, %15 : vector<16x32xf32>
    %17 = arith.mulf %16, %16 : vector<16x32xf32>
    %cst_13 = arith.constant dense<0.000000e+00> : vector<16xf32>
    %18 = vector.multi_reduction <add>, %17, %cst_13 [1] : vector<16x32xf32> to vector<16xf32>
    %19 = vector.shape_cast %18 : vector<16xf32> to vector<16x1xf32>
    %cst_14 = arith.constant 3.200000e+01 : f32
    %20 = vector.broadcast %cst_14 : f32 to vector<16x1xf32>
    %21 = arith.divf %19, %20 : vector<16x1xf32>
    %22 = vector.broadcast %14 : vector<16x1xf32> to vector<16x32xf32>
    %23 = arith.subf %8, %22 : vector<16x32xf32>
    %cst_15 = arith.constant 9.99999974E-6 : f32
    %24 = vector.broadcast %cst_15 : f32 to vector<16x1xf32>
    %25 = arith.addf %21, %24 : vector<16x1xf32>
    %26 = math.rsqrt %25 : vector<16x1xf32>
    %27 = vector.broadcast %26 : vector<16x1xf32> to vector<16x32xf32>
    %28 = arith.mulf %23, %27 : vector<16x32xf32>
    %29 = vector.broadcast %9 : vector<1x32xf32> to vector<16x32xf32>
    %30 = arith.mulf %28, %29 : vector<16x32xf32>
    %31 = vector.broadcast %10 : vector<1x32xf32> to vector<16x32xf32>
    %32 = arith.addf %30, %31 : vector<16x32xf32>
    %c0_16 = arith.constant 0 : index
    %c0_17 = arith.constant 0 : index
    %33 = vector.load %arg5[%c0_16, %c0_17] : memref<32x16xf32, #tpu.memory_space<vmem>>, vector<32x16xf32>
    %cst_18 = arith.constant dense<0.000000e+00> : vector<32x32xf32>
    %34 = tpu.matmul %32, %33, %cst_18 {dimension_numbers = #tpu.dot_dimension_numbers<[0], [1], [1], [0], [0, 1, 1, 0], [], []>} : vector<16x32xf32>, vector<32x16xf32>, vector<32x32xf32> -> vector<32x32xf32>
    %c0_19 = arith.constant 0 : index
    %c0_20 = arith.constant 0 : index
    %35 = vector.load %arg6[%c0_19, %c0_20] : memref<1x32xf32, #tpu.memory_space<vmem>>, vector<1x32xf32>
    %36 = vector.broadcast %35 : vector<1x32xf32> to vector<32x32xf32>
    %37 = arith.addf %34, %36 : vector<32x32xf32>
    %c0_21 = arith.constant 0 : index
    %c0_22 = arith.constant 0 : index
    %38 = vector.load %arg18[%c0_21, %c0_22] : memref<64x32xf32, #tpu.memory_space<vmem>>, vector<32x32xf32>
    tpu.vector_store %arg18[%c0_21, %c0_22], %37 {strides = array<i32>} : memref<64x32xf32, #tpu.memory_space<vmem>>, vector<32x32xf32>,
    %c1 = arith.constant 1 : index
    %c0_23 = arith.constant 0 : index
    %c0_24 = arith.constant 0 : index
    %39 = vector.load %arg0[%c1, %c0_23, %c0_24] : memref<2x8x16xf32, #tpu.memory_space<vmem>>, vector<1x8x16xf32>
    %40 = vector.shape_cast %39 : vector<1x8x16xf32> to vector<8x16xf32>
    %cst_25 = arith.constant 0.000000e+00 : f32
    %41 = vector.broadcast %cst_25 : f32 to vector<8x16xf32>
    %42 = arith.maximumf %40, %41 : vector<8x16xf32>
    %c0_26 = arith.constant 0 : index
    %c0_27 = arith.constant 0 : index
    %43 = vector.load %arg1[%c0_26, %c0_27] : memref<32x8xf32, #tpu.memory_space<vmem>>, vector<32x8xf32>
    %cst_28 = arith.constant dense<0.000000e+00> : vector<16x32xf32>
    %44 = tpu.matmul %42, %43, %cst_28 {dimension_numbers = #tpu.dot_dimension_numbers<[0], [1], [1], [0], [0, 1, 1, 0], [], []>} : vector<8x16xf32>, vector<32x8xf32>, vector<16x32xf32> -> vector<16x32xf32>
    %c0_29 = arith.constant 0 : index
    %c0_30 = arith.constant 0 : index
    %45 = vector.load %arg2[%c0_29, %c0_30] : memref<1x32xf32, #tpu.memory_space<vmem>>, vector<1x32xf32>
    %46 = vector.broadcast %45 : vector<1x32xf32> to vector<16x32xf32>
    %47 = arith.addf %44, %46 : vector<16x32xf32>
    %c0_31 = arith.constant 0 : index
    %c0_32 = arith.constant 0 : index
    %48 = vector.load %arg3[%c0_31, %c0_32] : memref<1x32xf32, #tpu.memory_space<vmem>>, vector<1x32xf32>
    %c0_33 = arith.constant 0 : index
    %c0_34 = arith.constant 0 : index
    %49 = vector.load %arg4[%c0_33, %c0_34] : memref<1x32xf32, #tpu.memory_space<vmem>>, vector<1x32xf32>
    %cst_35 = arith.constant dense<0.000000e+00> : vector<16xf32>
    %50 = vector.multi_reduction <add>, %47, %cst_35 [1] : vector<16x32xf32> to vector<16xf32>
    %51 = vector.shape_cast %50 : vector<16xf32> to vector<16x1xf32>
    %cst_36 = arith.constant 3.200000e+01 : f32
    %52 = vector.broadcast %cst_36 : f32 to vector<16x1xf32>
    %53 = arith.divf %51, %52 : vector<16x1xf32>
    %54 = vector.broadcast %53 : vector<16x1xf32> to vector<16x32xf32>
    %55 = arith.subf %47, %54 : vector<16x32xf32>
    %56 = arith.mulf %55, %55 : vector<16x32xf32>
    %cst_37 = arith.constant dense<0.000000e+00> : vector<16xf32>
    %57 = vector.multi_reduction <add>, %56, %cst_37 [1] : vector<16x32xf32> to vector<16xf32>
    %58 = vector.shape_cast %57 : vector<16xf32> to vector<16x1xf32>
    %cst_38 = arith.constant 3.200000e+01 : f32
    %59 = vector.broadcast %cst_38 : f32 to vector<16x1xf32>
    %60 = arith.divf %58, %59 : vector<16x1xf32>
    %61 = vector.broadcast %53 : vector<16x1xf32> to vector<16x32xf32>
    %62 = arith.subf %47, %61 : vector<16x32xf32>
    %cst_39 = arith.constant 9.99999974E-6 : f32
    %63 = vector.broadcast %cst_39 : f32 to vector<16x1xf32>
    %64 = arith.addf %60, %63 : vector<16x1xf32>
    %65 = math.rsqrt %64 : vector<16x1xf32>
    %66 = vector.broadcast %65 : vector<16x1xf32> to vector<16x32xf32>
    %67 = arith.mulf %62, %66 : vector<16x32xf32>
    %68 = vector.broadcast %48 : vector<1x32xf32> to vector<16x32xf32>
    %69 = arith.mulf %67, %68 : vector<16x32xf32>
    %70 = vector.broadcast %49 : vector<1x32xf32> to vector<16x32xf32>
    %71 = arith.addf %69, %70 : vector<16x32xf32>
    %c0_40 = arith.constant 0 : index
    %c0_41 = arith.constant 0 : index
    %72 = vector.load %arg5[%c0_40, %c0_41] : memref<32x16xf32, #tpu.memory_space<vmem>>, vector<32x16xf32>
    %cst_42 = arith.constant dense<0.000000e+00> : vector<32x32xf32>
    %73 = tpu.matmul %71, %72, %cst_42 {dimension_numbers = #tpu.dot_dimension_numbers<[0], [1], [1], [0], [0, 1, 1, 0], [], []>} : vector<16x32xf32>, vector<32x16xf32>, vector<32x32xf32> -> vector<32x32xf32>
    %c0_43 = arith.constant 0 : index
    %c0_44 = arith.constant 0 : index
    %74 = vector.load %arg6[%c0_43, %c0_44] : memref<1x32xf32, #tpu.memory_space<vmem>>, vector<1x32xf32>
    %75 = vector.broadcast %74 : vector<1x32xf32> to vector<32x32xf32>
    %76 = arith.addf %73, %75 : vector<32x32xf32>
    %c32 = arith.constant 32 : index
    %c0_45 = arith.constant 0 : index
    %77 = vector.load %arg18[%c32, %c0_45] : memref<64x32xf32, #tpu.memory_space<vmem>>, vector<32x32xf32>
    tpu.vector_store %arg18[%c32, %c0_45], %76 {strides = array<i32>} : memref<64x32xf32, #tpu.memory_space<vmem>>, vector<32x32xf32>,
    %c0_46 = arith.constant 0 : index
    %c0_47 = arith.constant 0 : index
    %78 = vector.load %arg18[%c0_46, %c0_47] : memref<64x32xf32, #tpu.memory_space<vmem>>, vector<64x32xf32>
    %cst_48 = arith.constant 0.000000e+00 : f32
    %79 = vector.broadcast %cst_48 : f32 to vector<64x32xf32>
    %80 = arith.maximumf %78, %79 : vector<64x32xf32>
    %c0_49 = arith.constant 0 : index
    %c0_50 = arith.constant 0 : index
    %c0_51 = arith.constant 0 : index
    %81 = vector.load %arg7[%c0_49, %c0_50, %c0_51] : memref<2x64x32xf32, #tpu.memory_space<vmem>>, vector<1x64x32xf32>
    %82 = vector.shape_cast %81 : vector<1x64x32xf32> to vector<64x32xf32>
    %cst_52 = arith.constant dense<0.000000e+00> : vector<64x64xf32>
    %83 = tpu.matmul %80, %82, %cst_52 {dimension_numbers = #tpu.dot_dimension_numbers<[1], [1], [0], [0], [0, 0, 1, 0], [], []>} : vector<64x32xf32>, vector<64x32xf32>, vector<64x64xf32> -> vector<64x64xf32>
    %c0_53 = arith.constant 0 : index
    %c0_54 = arith.constant 0 : index
    %c0_55 = arith.constant 0 : index
    %84 = vector.load %arg8[%c0_53, %c0_54, %c0_55] : memref<2x1x64xf32, #tpu.memory_space<vmem>>, vector<1x1x64xf32>
    %85 = vector.shape_cast %84 : vector<1x1x64xf32> to vector<1x64xf32>
    %86 = vector.broadcast %85 : vector<1x64xf32> to vector<64x64xf32>
    %87 = arith.addf %83, %86 : vector<64x64xf32>
    %c0_56 = arith.constant 0 : index
    %c0_57 = arith.constant 0 : index
    %c0_58 = arith.constant 0 : index
    %88 = vector.load %arg9[%c0_56, %c0_57, %c0_58] : memref<2x192x64xf32, #tpu.memory_space<vmem>>, vector<1x192x64xf32>
    %89 = vector.shape_cast %88 : vector<1x192x64xf32> to vector<192x64xf32>
    %cst_59 = arith.constant dense<0.000000e+00> : vector<64x192xf32>
    %90 = tpu.matmul %87, %89, %cst_59 {dimension_numbers = #tpu.dot_dimension_numbers<[1], [1], [0], [0], [0, 0, 1, 0], [], []>} : vector<64x64xf32>, vector<192x64xf32>, vector<64x192xf32> -> vector<64x192xf32>
    %c0_60 = arith.constant 0 : index
    %c0_61 = arith.constant 0 : index
    %c0_62 = arith.constant 0 : index
    %91 = vector.load %arg10[%c0_60, %c0_61, %c0_62] : memref<2x1x192xf32, #tpu.memory_space<vmem>>, vector<1x1x192xf32>
    %92 = vector.shape_cast %91 : vector<1x1x192xf32> to vector<1x192xf32>
    %93 = vector.broadcast %92 : vector<1x192xf32> to vector<64x192xf32>
    %94 = arith.addf %90, %93 : vector<64x192xf32>
    %95 = vector.extract_strided_slice %94 {offsets = [0, 0], sizes = [64, 64], strides = [1, 1]} : vector<64x192xf32> to vector<64x64xf32>
    %cst_63 = arith.constant 2.500000e-01 : f32
    %96 = vector.broadcast %cst_63 : f32 to vector<64x64xf32>
    %97 = arith.mulf %95, %96 : vector<64x64xf32>
    %98 = vector.extract_strided_slice %94 {offsets = [0, 64], sizes = [64, 64], strides = [1, 1]} : vector<64x192xf32> to vector<64x64xf32>
    %99 = vector.extract_strided_slice %94 {offsets = [0, 128], sizes = [64, 64], strides = [1, 1]} : vector<64x192xf32> to vector<64x64xf32>
    %100 = vector.extract_strided_slice %97 {offsets = [0, 0], sizes = [32, 16], strides = [1, 1]} : vector<64x64xf32> to vector<32x16xf32>
    %101 = vector.extract_strided_slice %98 {offsets = [0, 0], sizes = [32, 16], strides = [1, 1]} : vector<64x64xf32> to vector<32x16xf32>
    %102 = vector.extract_strided_slice %99 {offsets = [0, 0], sizes = [32, 16], strides = [1, 1]} : vector<64x64xf32> to vector<32x16xf32>
    %cst_64 = arith.constant dense<0.000000e+00> : vector<32x32xf32>
    %103 = tpu.matmul %100, %101, %cst_64 {dimension_numbers = #tpu.dot_dimension_numbers<[1], [1], [0], [0], [0, 0, 1, 0], [], []>} : vector<32x16xf32>, vector<32x16xf32>, vector<32x32xf32> -> vector<32x32xf32>
    %cst_65 = arith.constant dense<0xFF800000> : vector<32xf32>
    %104 = vector.multi_reduction <maximumf>, %103, %cst_65 [1] : vector<32x32xf32> to vector<32xf32>
    %105 = vector.shape_cast %104 : vector<32xf32> to vector<32x1xf32>
    %106 = vector.broadcast %105 : vector<32x1xf32> to vector<32x32xf32>
    %107 = arith.subf %103, %106 : vector<32x32xf32>
    %108 = math.exp %107 : vector<32x32xf32>
    %cst_66 = arith.constant dense<0.000000e+00> : vector<32xf32>
    %109 = vector.multi_reduction <add>, %108, %cst_66 [1] : vector<32x32xf32> to vector<32xf32>
    %110 = vector.shape_cast %109 : vector<32xf32> to vector<32x1xf32>
    %111 = tpu.reciprocal %110 {approx = true} : vector<32x1xf32> -> vector<32x1xf32>
    %112 = vector.broadcast %111 : vector<32x1xf32> to vector<32x32xf32>
    %113 = arith.mulf %108, %112 : vector<32x32xf32>
    %cst_67 = arith.constant dense<0.000000e+00> : vector<32x16xf32>
    %114 = tpu.matmul %113, %102, %cst_67 {dimension_numbers = #tpu.dot_dimension_numbers<[1], [0], [0], [1], [0, 0, 1, 1], [], []>} : vector<32x32xf32>, vector<32x16xf32>, vector<32x16xf32> -> vector<32x16xf32>
    %c0_68 = arith.constant 0 : index
    %c0_69 = arith.constant 0 : index
    %115 = vector.load %arg19[%c0_68, %c0_69] : memref<64x64xf32, #tpu.memory_space<vmem>>, vector<32x16xf32>
    tpu.vector_store %arg19[%c0_68, %c0_69], %114 {strides = array<i32>} : memref<64x64xf32, #tpu.memory_space<vmem>>, vector<32x16xf32>,
    %116 = vector.extract_strided_slice %97 {offsets = [0, 16], sizes = [32, 16], strides = [1, 1]} : vector<64x64xf32> to vector<32x16xf32>
    %117 = vector.extract_strided_slice %98 {offsets = [0, 16], sizes = [32, 16], strides = [1, 1]} : vector<64x64xf32> to vector<32x16xf32>
    %118 = vector.extract_strided_slice %99 {offsets = [0, 16], sizes = [32, 16], strides = [1, 1]} : vector<64x64xf32> to vector<32x16xf32>
    %cst_70 = arith.constant dense<0.000000e+00> : vector<32x32xf32>
    %119 = tpu.matmul %116, %117, %cst_70 {dimension_numbers = #tpu.dot_dimension_numbers<[1], [1], [0], [0], [0, 0, 1, 0], [], []>} : vector<32x16xf32>, vector<32x16xf32>, vector<32x32xf32> -> vector<32x32xf32>
    %cst_71 = arith.constant dense<0xFF800000> : vector<32xf32>
    %120 = vector.multi_reduction <maximumf>, %119, %cst_71 [1] : vector<32x32xf32> to vector<32xf32>
    %121 = vector.shape_cast %120 : vector<32xf32> to vector<32x1xf32>
    %122 = vector.broadcast %121 : vector<32x1xf32> to vector<32x32xf32>
    %123 = arith.subf %119, %122 : vector<32x32xf32>
    %124 = math.exp %123 : vector<32x32xf32>
    %cst_72 = arith.constant dense<0.000000e+00> : vector<32xf32>
    %125 = vector.multi_reduction <add>, %124, %cst_72 [1] : vector<32x32xf32> to vector<32xf32>
    %126 = vector.shape_cast %125 : vector<32xf32> to vector<32x1xf32>
    %127 = tpu.reciprocal %126 {approx = true} : vector<32x1xf32> -> vector<32x1xf32>
    %128 = vector.broadcast %127 : vector<32x1xf32> to vector<32x32xf32>
    %129 = arith.mulf %124, %128 : vector<32x32xf32>
    %cst_73 = arith.constant dense<0.000000e+00> : vector<32x16xf32>
    %130 = tpu.matmul %129, %118, %cst_73 {dimension_numbers = #tpu.dot_dimension_numbers<[1], [0], [0], [1], [0, 0, 1, 1], [], []>} : vector<32x32xf32>, vector<32x16xf32>, vector<32x16xf32> -> vector<32x16xf32>
    %c0_74 = arith.constant 0 : index
    %c16 = arith.constant 16 : index
    %131 = vector.load %arg19[%c0_74, %c16] : memref<64x64xf32, #tpu.memory_space<vmem>>, vector<32x16xf32>
    tpu.vector_store %arg19[%c0_74, %c16], %130 {strides = array<i32>} : memref<64x64xf32, #tpu.memory_space<vmem>>, vector<32x16xf32>,
    %132 = vector.extract_strided_slice %97 {offsets = [0, 32], sizes = [32, 16], strides = [1, 1]} : vector<64x64xf32> to vector<32x16xf32>
    %133 = vector.extract_strided_slice %98 {offsets = [0, 32], sizes = [32, 16], strides = [1, 1]} : vector<64x64xf32> to vector<32x16xf32>
    %134 = vector.extract_strided_slice %99 {offsets = [0, 32], sizes = [32, 16], strides = [1, 1]} : vector<64x64xf32> to vector<32x16xf32>
    %cst_75 = arith.constant dense<0.000000e+00> : vector<32x32xf32>
    %135 = tpu.matmul %132, %133, %cst_75 {dimension_numbers = #tpu.dot_dimension_numbers<[1], [1], [0], [0], [0, 0, 1, 0], [], []>} : vector<32x16xf32>, vector<32x16xf32>, vector<32x32xf32> -> vector<32x32xf32>
    %cst_76 = arith.constant dense<0xFF800000> : vector<32xf32>
    %136 = vector.multi_reduction <maximumf>, %135, %cst_76 [1] : vector<32x32xf32> to vector<32xf32>
    %137 = vector.shape_cast %136 : vector<32xf32> to vector<32x1xf32>
    %138 = vector.broadcast %137 : vector<32x1xf32> to vector<32x32xf32>
    %139 = arith.subf %135, %138 : vector<32x32xf32>
    %140 = math.exp %139 : vector<32x32xf32>
    %cst_77 = arith.constant dense<0.000000e+00> : vector<32xf32>
    %141 = vector.multi_reduction <add>, %140, %cst_77 [1] : vector<32x32xf32> to vector<32xf32>
    %142 = vector.shape_cast %141 : vector<32xf32> to vector<32x1xf32>
    %143 = tpu.reciprocal %142 {approx = true} : vector<32x1xf32> -> vector<32x1xf32>
    %144 = vector.broadcast %143 : vector<32x1xf32> to vector<32x32xf32>
    %145 = arith.mulf %140, %144 : vector<32x32xf32>
    %cst_78 = arith.constant dense<0.000000e+00> : vector<32x16xf32>
    %146 = tpu.matmul %145, %134, %cst_78 {dimension_numbers = #tpu.dot_dimension_numbers<[1], [0], [0], [1], [0, 0, 1, 1], [], []>} : vector<32x32xf32>, vector<32x16xf32>, vector<32x16xf32> -> vector<32x16xf32>
    %c0_79 = arith.constant 0 : index
    %c32_80 = arith.constant 32 : index
    %147 = vector.load %arg19[%c0_79, %c32_80] : memref<64x64xf32, #tpu.memory_space<vmem>>, vector<32x16xf32>
    tpu.vector_store %arg19[%c0_79, %c32_80], %146 {strides = array<i32>} : memref<64x64xf32, #tpu.memory_space<vmem>>, vector<32x16xf32>,
    %148 = vector.extract_strided_slice %97 {offsets = [0, 48], sizes = [32, 16], strides = [1, 1]} : vector<64x64xf32> to vector<32x16xf32>
    %149 = vector.extract_strided_slice %98 {offsets = [0, 48], sizes = [32, 16], strides = [1, 1]} : vector<64x64xf32> to vector<32x16xf32>
    %150 = vector.extract_strided_slice %99 {offsets = [0, 48], sizes = [32, 16], strides = [1, 1]} : vector<64x64xf32> to vector<32x16xf32>
    %cst_81 = arith.constant dense<0.000000e+00> : vector<32x32xf32>
    %151 = tpu.matmul %148, %149, %cst_81 {dimension_numbers = #tpu.dot_dimension_numbers<[1], [1], [0], [0], [0, 0, 1, 0], [], []>} : vector<32x16xf32>, vector<32x16xf32>, vector<32x32xf32> -> vector<32x32xf32>
    %cst_82 = arith.constant dense<0xFF800000> : vector<32xf32>
    %152 = vector.multi_reduction <maximumf>, %151, %cst_82 [1] : vector<32x32xf32> to vector<32xf32>
    %153 = vector.shape_cast %152 : vector<32xf32> to vector<32x1xf32>
    %154 = vector.broadcast %153 : vector<32x1xf32> to vector<32x32xf32>
    %155 = arith.subf %151, %154 : vector<32x32xf32>
    %156 = math.exp %155 : vector<32x32xf32>
    %cst_83 = arith.constant dense<0.000000e+00> : vector<32xf32>
    %157 = vector.multi_reduction <add>, %156, %cst_83 [1] : vector<32x32xf32> to vector<32xf32>
    %158 = vector.shape_cast %157 : vector<32xf32> to vector<32x1xf32>
    %159 = tpu.reciprocal %158 {approx = true} : vector<32x1xf32> -> vector<32x1xf32>
    %160 = vector.broadcast %159 : vector<32x1xf32> to vector<32x32xf32>
    %161 = arith.mulf %156, %160 : vector<32x32xf32>
    %cst_84 = arith.constant dense<0.000000e+00> : vector<32x16xf32>
    %162 = tpu.matmul %161, %150, %cst_84 {dimension_numbers = #tpu.dot_dimension_numbers<[1], [0], [0], [1], [0, 0, 1, 1], [], []>} : vector<32x32xf32>, vector<32x16xf32>, vector<32x16xf32> -> vector<32x16xf32>
    %c0_85 = arith.constant 0 : index
    %c48 = arith.constant 48 : index
    %163 = vector.load %arg19[%c0_85, %c48] : memref<64x64xf32, #tpu.memory_space<vmem>>, vector<32x16xf32>
    tpu.vector_store %arg19[%c0_85, %c48], %162 {strides = array<i32>} : memref<64x64xf32, #tpu.memory_space<vmem>>, vector<32x16xf32>,
    %164 = vector.extract_strided_slice %97 {offsets = [32, 0], sizes = [32, 16], strides = [1, 1]} : vector<64x64xf32> to vector<32x16xf32>
    %165 = vector.extract_strided_slice %98 {offsets = [32, 0], sizes = [32, 16], strides = [1, 1]} : vector<64x64xf32> to vector<32x16xf32>
    %166 = vector.extract_strided_slice %99 {offsets = [32, 0], sizes = [32, 16], strides = [1, 1]} : vector<64x64xf32> to vector<32x16xf32>
    %cst_86 = arith.constant dense<0.000000e+00> : vector<32x32xf32>
    %167 = tpu.matmul %164, %165, %cst_86 {dimension_numbers = #tpu.dot_dimension_numbers<[1], [1], [0], [0], [0, 0, 1, 0], [], []>} : vector<32x16xf32>, vector<32x16xf32>, vector<32x32xf32> -> vector<32x32xf32>
    %cst_87 = arith.constant dense<0xFF800000> : vector<32xf32>
    %168 = vector.multi_reduction <maximumf>, %167, %cst_87 [1] : vector<32x32xf32> to vector<32xf32>
    %169 = vector.shape_cast %168 : vector<32xf32> to vector<32x1xf32>
    %170 = vector.broadcast %169 : vector<32x1xf32> to vector<32x32xf32>
    %171 = arith.subf %167, %170 : vector<32x32xf32>
    %172 = math.exp %171 : vector<32x32xf32>
    %cst_88 = arith.constant dense<0.000000e+00> : vector<32xf32>
    %173 = vector.multi_reduction <add>, %172, %cst_88 [1] : vector<32x32xf32> to vector<32xf32>
    %174 = vector.shape_cast %173 : vector<32xf32> to vector<32x1xf32>
    %175 = tpu.reciprocal %174 {approx = true} : vector<32x1xf32> -> vector<32x1xf32>
    %176 = vector.broadcast %175 : vector<32x1xf32> to vector<32x32xf32>
    %177 = arith.mulf %172, %176 : vector<32x32xf32>
    %cst_89 = arith.constant dense<0.000000e+00> : vector<32x16xf32>
    %178 = tpu.matmul %177, %166, %cst_89 {dimension_numbers = #tpu.dot_dimension_numbers<[1], [0], [0], [1], [0, 0, 1, 1], [], []>} : vector<32x32xf32>, vector<32x16xf32>, vector<32x16xf32> -> vector<32x16xf32>
    %c32_90 = arith.constant 32 : index
    %c0_91 = arith.constant 0 : index
    %179 = vector.load %arg19[%c32_90, %c0_91] : memref<64x64xf32, #tpu.memory_space<vmem>>, vector<32x16xf32>
    tpu.vector_store %arg19[%c32_90, %c0_91], %178 {strides = array<i32>} : memref<64x64xf32, #tpu.memory_space<vmem>>, vector<32x16xf32>,
    %180 = vector.extract_strided_slice %97 {offsets = [32, 16], sizes = [32, 16], strides = [1, 1]} : vector<64x64xf32> to vector<32x16xf32>
    %181 = vector.extract_strided_slice %98 {offsets = [32, 16], sizes = [32, 16], strides = [1, 1]} : vector<64x64xf32> to vector<32x16xf32>
    %182 = vector.extract_strided_slice %99 {offsets = [32, 16], sizes = [32, 16], strides = [1, 1]} : vector<64x64xf32> to vector<32x16xf32>
    %cst_92 = arith.constant dense<0.000000e+00> : vector<32x32xf32>
    %183 = tpu.matmul %180, %181, %cst_92 {dimension_numbers = #tpu.dot_dimension_numbers<[1], [1], [0], [0], [0, 0, 1, 0], [], []>} : vector<32x16xf32>, vector<32x16xf32>, vector<32x32xf32> -> vector<32x32xf32>
    %cst_93 = arith.constant dense<0xFF800000> : vector<32xf32>
    %184 = vector.multi_reduction <maximumf>, %183, %cst_93 [1] : vector<32x32xf32> to vector<32xf32>
    %185 = vector.shape_cast %184 : vector<32xf32> to vector<32x1xf32>
    %186 = vector.broadcast %185 : vector<32x1xf32> to vector<32x32xf32>
    %187 = arith.subf %183, %186 : vector<32x32xf32>
    %188 = math.exp %187 : vector<32x32xf32>
    %cst_94 = arith.constant dense<0.000000e+00> : vector<32xf32>
    %189 = vector.multi_reduction <add>, %188, %cst_94 [1] : vector<32x32xf32> to vector<32xf32>
    %190 = vector.shape_cast %189 : vector<32xf32> to vector<32x1xf32>
    %191 = tpu.reciprocal %190 {approx = true} : vector<32x1xf32> -> vector<32x1xf32>
    %192 = vector.broadcast %191 : vector<32x1xf32> to vector<32x32xf32>
    %193 = arith.mulf %188, %192 : vector<32x32xf32>
    %cst_95 = arith.constant dense<0.000000e+00> : vector<32x16xf32>
    %194 = tpu.matmul %193, %182, %cst_95 {dimension_numbers = #tpu.dot_dimension_numbers<[1], [0], [0], [1], [0, 0, 1, 1], [], []>} : vector<32x32xf32>, vector<32x16xf32>, vector<32x16xf32> -> vector<32x16xf32>
    %c32_96 = arith.constant 32 : index
    %c16_97 = arith.constant 16 : index
    %195 = vector.load %arg19[%c32_96, %c16_97] : memref<64x64xf32, #tpu.memory_space<vmem>>, vector<32x16xf32>
    tpu.vector_store %arg19[%c32_96, %c16_97], %194 {strides = array<i32>} : memref<64x64xf32, #tpu.memory_space<vmem>>, vector<32x16xf32>,
    %196 = vector.extract_strided_slice %97 {offsets = [32, 32], sizes = [32, 16], strides = [1, 1]} : vector<64x64xf32> to vector<32x16xf32>
    %197 = vector.extract_strided_slice %98 {offsets = [32, 32], sizes = [32, 16], strides = [1, 1]} : vector<64x64xf32> to vector<32x16xf32>
    %198 = vector.extract_strided_slice %99 {offsets = [32, 32], sizes = [32, 16], strides = [1, 1]} : vector<64x64xf32> to vector<32x16xf32>
    %cst_98 = arith.constant dense<0.000000e+00> : vector<32x32xf32>
    %199 = tpu.matmul %196, %197, %cst_98 {dimension_numbers = #tpu.dot_dimension_numbers<[1], [1], [0], [0], [0, 0, 1, 0], [], []>} : vector<32x16xf32>, vector<32x16xf32>, vector<32x32xf32> -> vector<32x32xf32>
    %cst_99 = arith.constant dense<0xFF800000> : vector<32xf32>
    %200 = vector.multi_reduction <maximumf>, %199, %cst_99 [1] : vector<32x32xf32> to vector<32xf32>
    %201 = vector.shape_cast %200 : vector<32xf32> to vector<32x1xf32>
    %202 = vector.broadcast %201 : vector<32x1xf32> to vector<32x32xf32>
    %203 = arith.subf %199, %202 : vector<32x32xf32>
    %204 = math.exp %203 : vector<32x32xf32>
    %cst_100 = arith.constant dense<0.000000e+00> : vector<32xf32>
    %205 = vector.multi_reduction <add>, %204, %cst_100 [1] : vector<32x32xf32> to vector<32xf32>
    %206 = vector.shape_cast %205 : vector<32xf32> to vector<32x1xf32>
    %207 = tpu.reciprocal %206 {approx = true} : vector<32x1xf32> -> vector<32x1xf32>
    %208 = vector.broadcast %207 : vector<32x1xf32> to vector<32x32xf32>
    %209 = arith.mulf %204, %208 : vector<32x32xf32>
    %cst_101 = arith.constant dense<0.000000e+00> : vector<32x16xf32>
    %210 = tpu.matmul %209, %198, %cst_101 {dimension_numbers = #tpu.dot_dimension_numbers<[1], [0], [0], [1], [0, 0, 1, 1], [], []>} : vector<32x32xf32>, vector<32x16xf32>, vector<32x16xf32> -> vector<32x16xf32>
    %c32_102 = arith.constant 32 : index
    %c32_103 = arith.constant 32 : index
    %211 = vector.load %arg19[%c32_102, %c32_103] : memref<64x64xf32, #tpu.memory_space<vmem>>, vector<32x16xf32>
    tpu.vector_store %arg19[%c32_102, %c32_103], %210 {strides = array<i32>} : memref<64x64xf32, #tpu.memory_space<vmem>>, vector<32x16xf32>,
    %212 = vector.extract_strided_slice %97 {offsets = [32, 48], sizes = [32, 16], strides = [1, 1]} : vector<64x64xf32> to vector<32x16xf32>
    %213 = vector.extract_strided_slice %98 {offsets = [32, 48], sizes = [32, 16], strides = [1, 1]} : vector<64x64xf32> to vector<32x16xf32>
    %214 = vector.extract_strided_slice %99 {offsets = [32, 48], sizes = [32, 16], strides = [1, 1]} : vector<64x64xf32> to vector<32x16xf32>
    %cst_104 = arith.constant dense<0.000000e+00> : vector<32x32xf32>
    %215 = tpu.matmul %212, %213, %cst_104 {dimension_numbers = #tpu.dot_dimension_numbers<[1], [1], [0], [0], [0, 0, 1, 0], [], []>} : vector<32x16xf32>, vector<32x16xf32>, vector<32x32xf32> -> vector<32x32xf32>
    %cst_105 = arith.constant dense<0xFF800000> : vector<32xf32>
    %216 = vector.multi_reduction <maximumf>, %215, %cst_105 [1] : vector<32x32xf32> to vector<32xf32>
    %217 = vector.shape_cast %216 : vector<32xf32> to vector<32x1xf32>
    %218 = vector.broadcast %217 : vector<32x1xf32> to vector<32x32xf32>
    %219 = arith.subf %215, %218 : vector<32x32xf32>
    %220 = math.exp %219 : vector<32x32xf32>
    %cst_106 = arith.constant dense<0.000000e+00> : vector<32xf32>
    %221 = vector.multi_reduction <add>, %220, %cst_106 [1] : vector<32x32xf32> to vector<32xf32>
    %222 = vector.shape_cast %221 : vector<32xf32> to vector<32x1xf32>
    %223 = tpu.reciprocal %222 {approx = true} : vector<32x1xf32> -> vector<32x1xf32>
    %224 = vector.broadcast %223 : vector<32x1xf32> to vector<32x32xf32>
    %225 = arith.mulf %220, %224 : vector<32x32xf32>
    %cst_107 = arith.constant dense<0.000000e+00> : vector<32x16xf32>
    %226 = tpu.matmul %225, %214, %cst_107 {dimension_numbers = #tpu.dot_dimension_numbers<[1], [0], [0], [1], [0, 0, 1, 1], [], []>} : vector<32x32xf32>, vector<32x16xf32>, vector<32x16xf32> -> vector<32x16xf32>
    %c32_108 = arith.constant 32 : index
    %c48_109 = arith.constant 48 : index
    %227 = vector.load %arg19[%c32_108, %c48_109] : memref<64x64xf32, #tpu.memory_space<vmem>>, vector<32x16xf32>
    tpu.vector_store %arg19[%c32_108, %c48_109], %226 {strides = array<i32>} : memref<64x64xf32, #tpu.memory_space<vmem>>, vector<32x16xf32>,
    %c0_110 = arith.constant 0 : index
    %c0_111 = arith.constant 0 : index
    %228 = vector.load %arg19[%c0_110, %c0_111] : memref<64x64xf32, #tpu.memory_space<vmem>>, vector<64x64xf32>
    %c0_112 = arith.constant 0 : index
    %c0_113 = arith.constant 0 : index
    %c0_114 = arith.constant 0 : index
    %229 = vector.load %arg11[%c0_112, %c0_113, %c0_114] : memref<2x64x64xf32, #tpu.memory_space<vmem>>, vector<1x64x64xf32>
    %230 = vector.shape_cast %229 : vector<1x64x64xf32> to vector<64x64xf32>
    %cst_115 = arith.constant dense<0.000000e+00> : vector<64x64xf32>
    %231 = tpu.matmul %228, %230, %cst_115 {dimension_numbers = #tpu.dot_dimension_numbers<[1], [1], [0], [0], [0, 0, 1, 0], [], []>} : vector<64x64xf32>, vector<64x64xf32>, vector<64x64xf32> -> vector<64x64xf32>
    %c0_116 = arith.constant 0 : index
    %c0_117 = arith.constant 0 : index
    %c0_118 = arith.constant 0 : index
    %232 = vector.load %arg12[%c0_116, %c0_117, %c0_118] : memref<2x1x64xf32, #tpu.memory_space<vmem>>, vector<1x1x64xf32>
    %233 = vector.shape_cast %232 : vector<1x1x64xf32> to vector<1x64xf32>
    %234 = vector.broadcast %233 : vector<1x64xf32> to vector<64x64xf32>
    %235 = arith.addf %231, %234 : vector<64x64xf32>
    %c0_119 = arith.constant 0 : index
    %c0_120 = arith.constant 0 : index
    %c0_121 = arith.constant 0 : index
    %236 = vector.load %arg13[%c0_119, %c0_120, %c0_121] : memref<2x32x64xf32, #tpu.memory_space<vmem>>, vector<1x32x64xf32>
    %237 = vector.shape_cast %236 : vector<1x32x64xf32> to vector<32x64xf32>
    %cst_122 = arith.constant dense<0.000000e+00> : vector<64x32xf32>
    %238 = tpu.matmul %235, %237, %cst_122 {dimension_numbers = #tpu.dot_dimension_numbers<[1], [1], [0], [0], [0, 0, 1, 0], [], []>} : vector<64x64xf32>, vector<32x64xf32>, vector<64x32xf32> -> vector<64x32xf32>
    %c0_123 = arith.constant 0 : index
    %c0_124 = arith.constant 0 : index
    %c0_125 = arith.constant 0 : index
    %239 = vector.load %arg14[%c0_123, %c0_124, %c0_125] : memref<2x1x32xf32, #tpu.memory_space<vmem>>, vector<1x1x32xf32>
    %240 = vector.shape_cast %239 : vector<1x1x32xf32> to vector<1x32xf32>
    %241 = vector.broadcast %240 : vector<1x32xf32> to vector<64x32xf32>
    %242 = arith.addf %238, %241 : vector<64x32xf32>
    %c0_126 = arith.constant 0 : index
    %c0_127 = arith.constant 0 : index
    %c0_128 = arith.constant 0 : index
    %243 = vector.load %arg15[%c0_126, %c0_127, %c0_128] : memref<2x1x32xf32, #tpu.memory_space<vmem>>, vector<1x1x32xf32>
    %244 = vector.shape_cast %243 : vector<1x1x32xf32> to vector<1x32xf32>
    %c0_129 = arith.constant 0 : index
    %c0_130 = arith.constant 0 : index
    %c0_131 = arith.constant 0 : index
    %245 = vector.load %arg16[%c0_129, %c0_130, %c0_131] : memref<2x1x32xf32, #tpu.memory_space<vmem>>, vector<1x1x32xf32>
    %246 = vector.shape_cast %245 : vector<1x1x32xf32> to vector<1x32xf32>
    %cst_132 = arith.constant dense<0.000000e+00> : vector<64xf32>
    %247 = vector.multi_reduction <add>, %242, %cst_132 [1] : vector<64x32xf32> to vector<64xf32>
    %248 = vector.shape_cast %247 : vector<64xf32> to vector<64x1xf32>
    %cst_133 = arith.constant 3.200000e+01 : f32
    %249 = vector.broadcast %cst_133 : f32 to vector<64x1xf32>
    %250 = arith.divf %248, %249 : vector<64x1xf32>
    %251 = vector.broadcast %250 : vector<64x1xf32> to vector<64x32xf32>
    %252 = arith.subf %242, %251 : vector<64x32xf32>
    %253 = arith.mulf %252, %252 : vector<64x32xf32>
    %cst_134 = arith.constant dense<0.000000e+00> : vector<64xf32>
    %254 = vector.multi_reduction <add>, %253, %cst_134 [1] : vector<64x32xf32> to vector<64xf32>
    %255 = vector.shape_cast %254 : vector<64xf32> to vector<64x1xf32>
    %cst_135 = arith.constant 3.200000e+01 : f32
    %256 = vector.broadcast %cst_135 : f32 to vector<64x1xf32>
    %257 = arith.divf %255, %256 : vector<64x1xf32>
    %258 = vector.broadcast %250 : vector<64x1xf32> to vector<64x32xf32>
    %259 = arith.subf %242, %258 : vector<64x32xf32>
    %cst_136 = arith.constant 9.99999996E-13 : f32
    %260 = vector.broadcast %cst_136 : f32 to vector<64x1xf32>
    %261 = arith.addf %257, %260 : vector<64x1xf32>
    %262 = math.rsqrt %261 : vector<64x1xf32>
    %263 = vector.broadcast %262 : vector<64x1xf32> to vector<64x32xf32>
    %264 = arith.mulf %259, %263 : vector<64x32xf32>
    %265 = vector.broadcast %244 : vector<1x32xf32> to vector<64x32xf32>
    %266 = arith.mulf %264, %265 : vector<64x32xf32>
    %267 = vector.broadcast %246 : vector<1x32xf32> to vector<64x32xf32>
    %268 = arith.addf %266, %267 : vector<64x32xf32>
    %269 = arith.addf %78, %268 : vector<64x32xf32>
    %c0_137 = arith.constant 0 : index
    %c0_138 = arith.constant 0 : index
    %270 = vector.load %arg18[%c0_137, %c0_138] : memref<64x32xf32, #tpu.memory_space<vmem>>, vector<64x32xf32>
    tpu.vector_store %arg18[%c0_137, %c0_138], %269 {strides = array<i32>} : memref<64x32xf32, #tpu.memory_space<vmem>>, vector<64x32xf32>,
    %c0_139 = arith.constant 0 : index
    %c0_140 = arith.constant 0 : index
    %271 = vector.load %arg18[%c0_139, %c0_140] : memref<64x32xf32, #tpu.memory_space<vmem>>, vector<64x32xf32>
    %cst_141 = arith.constant 0.000000e+00 : f32
    %272 = vector.broadcast %cst_141 : f32 to vector<64x32xf32>
    %273 = arith.maximumf %271, %272 : vector<64x32xf32>
    %c1_142 = arith.constant 1 : index
    %c0_143 = arith.constant 0 : index
    %c0_144 = arith.constant 0 : index
    %274 = vector.load %arg7[%c1_142, %c0_143, %c0_144] : memref<2x64x32xf32, #tpu.memory_space<vmem>>, vector<1x64x32xf32>
    %275 = vector.shape_cast %274 : vector<1x64x32xf32> to vector<64x32xf32>
    %cst_145 = arith.constant dense<0.000000e+00> : vector<64x64xf32>
    %276 = tpu.matmul %273, %275, %cst_145 {dimension_numbers = #tpu.dot_dimension_numbers<[1], [1], [0], [0], [0, 0, 1, 0], [], []>} : vector<64x32xf32>, vector<64x32xf32>, vector<64x64xf32> -> vector<64x64xf32>
    %c1_146 = arith.constant 1 : index
    %c0_147 = arith.constant 0 : index
    %c0_148 = arith.constant 0 : index
    %277 = vector.load %arg8[%c1_146, %c0_147, %c0_148] : memref<2x1x64xf32, #tpu.memory_space<vmem>>, vector<1x1x64xf32>
    %278 = vector.shape_cast %277 : vector<1x1x64xf32> to vector<1x64xf32>
    %279 = vector.broadcast %278 : vector<1x64xf32> to vector<64x64xf32>
    %280 = arith.addf %276, %279 : vector<64x64xf32>
    %c1_149 = arith.constant 1 : index
    %c0_150 = arith.constant 0 : index
    %c0_151 = arith.constant 0 : index
    %281 = vector.load %arg9[%c1_149, %c0_150, %c0_151] : memref<2x192x64xf32, #tpu.memory_space<vmem>>, vector<1x192x64xf32>
    %282 = vector.shape_cast %281 : vector<1x192x64xf32> to vector<192x64xf32>
    %cst_152 = arith.constant dense<0.000000e+00> : vector<64x192xf32>
    %283 = tpu.matmul %280, %282, %cst_152 {dimension_numbers = #tpu.dot_dimension_numbers<[1], [1], [0], [0], [0, 0, 1, 0], [], []>} : vector<64x64xf32>, vector<192x64xf32>, vector<64x192xf32> -> vector<64x192xf32>
    %c1_153 = arith.constant 1 : index
    %c0_154 = arith.constant 0 : index
    %c0_155 = arith.constant 0 : index
    %284 = vector.load %arg10[%c1_153, %c0_154, %c0_155] : memref<2x1x192xf32, #tpu.memory_space<vmem>>, vector<1x1x192xf32>
    %285 = vector.shape_cast %284 : vector<1x1x192xf32> to vector<1x192xf32>
    %286 = vector.broadcast %285 : vector<1x192xf32> to vector<64x192xf32>
    %287 = arith.addf %283, %286 : vector<64x192xf32>
    %288 = vector.extract_strided_slice %287 {offsets = [0, 0], sizes = [64, 64], strides = [1, 1]} : vector<64x192xf32> to vector<64x64xf32>
    %cst_156 = arith.constant 2.500000e-01 : f32
    %289 = vector.broadcast %cst_156 : f32 to vector<64x64xf32>
    %290 = arith.mulf %288, %289 : vector<64x64xf32>
    %291 = vector.extract_strided_slice %287 {offsets = [0, 64], sizes = [64, 64], strides = [1, 1]} : vector<64x192xf32> to vector<64x64xf32>
    %292 = vector.extract_strided_slice %287 {offsets = [0, 128], sizes = [64, 64], strides = [1, 1]} : vector<64x192xf32> to vector<64x64xf32>
    %293 = vector.extract_strided_slice %290 {offsets = [0, 0], sizes = [32, 16], strides = [1, 1]} : vector<64x64xf32> to vector<32x16xf32>
    %294 = vector.extract_strided_slice %291 {offsets = [0, 0], sizes = [32, 16], strides = [1, 1]} : vector<64x64xf32> to vector<32x16xf32>
    %295 = vector.extract_strided_slice %292 {offsets = [0, 0], sizes = [32, 16], strides = [1, 1]} : vector<64x64xf32> to vector<32x16xf32>
    %cst_157 = arith.constant dense<0.000000e+00> : vector<32x32xf32>
    %296 = tpu.matmul %293, %294, %cst_157 {dimension_numbers = #tpu.dot_dimension_numbers<[1], [1], [0], [0], [0, 0, 1, 0], [], []>} : vector<32x16xf32>, vector<32x16xf32>, vector<32x32xf32> -> vector<32x32xf32>
    %cst_158 = arith.constant dense<0xFF800000> : vector<32xf32>
    %297 = vector.multi_reduction <maximumf>, %296, %cst_158 [1] : vector<32x32xf32> to vector<32xf32>
    %298 = vector.shape_cast %297 : vector<32xf32> to vector<32x1xf32>
    %299 = vector.broadcast %298 : vector<32x1xf32> to vector<32x32xf32>
    %300 = arith.subf %296, %299 : vector<32x32xf32>
    %301 = math.exp %300 : vector<32x32xf32>
    %cst_159 = arith.constant dense<0.000000e+00> : vector<32xf32>
    %302 = vector.multi_reduction <add>, %301, %cst_159 [1] : vector<32x32xf32> to vector<32xf32>
    %303 = vector.shape_cast %302 : vector<32xf32> to vector<32x1xf32>
    %304 = tpu.reciprocal %303 {approx = true} : vector<32x1xf32> -> vector<32x1xf32>
    %305 = vector.broadcast %304 : vector<32x1xf32> to vector<32x32xf32>
    %306 = arith.mulf %301, %305 : vector<32x32xf32>
    %cst_160 = arith.constant dense<0.000000e+00> : vector<32x16xf32>
    %307 = tpu.matmul %306, %295, %cst_160 {dimension_numbers = #tpu.dot_dimension_numbers<[1], [0], [0], [1], [0, 0, 1, 1], [], []>} : vector<32x32xf32>, vector<32x16xf32>, vector<32x16xf32> -> vector<32x16xf32>
    %c0_161 = arith.constant 0 : index
    %c0_162 = arith.constant 0 : index
    %308 = vector.load %arg19[%c0_161, %c0_162] : memref<64x64xf32, #tpu.memory_space<vmem>>, vector<32x16xf32>
    tpu.vector_store %arg19[%c0_161, %c0_162], %307 {strides = array<i32>} : memref<64x64xf32, #tpu.memory_space<vmem>>, vector<32x16xf32>,
    %309 = vector.extract_strided_slice %290 {offsets = [0, 16], sizes = [32, 16], strides = [1, 1]} : vector<64x64xf32> to vector<32x16xf32>
    %310 = vector.extract_strided_slice %291 {offsets = [0, 16], sizes = [32, 16], strides = [1, 1]} : vector<64x64xf32> to vector<32x16xf32>
    %311 = vector.extract_strided_slice %292 {offsets = [0, 16], sizes = [32, 16], strides = [1, 1]} : vector<64x64xf32> to vector<32x16xf32>
    %cst_163 = arith.constant dense<0.000000e+00> : vector<32x32xf32>
    %312 = tpu.matmul %309, %310, %cst_163 {dimension_numbers = #tpu.dot_dimension_numbers<[1], [1], [0], [0], [0, 0, 1, 0], [], []>} : vector<32x16xf32>, vector<32x16xf32>, vector<32x32xf32> -> vector<32x32xf32>
    %cst_164 = arith.constant dense<0xFF800000> : vector<32xf32>
    %313 = vector.multi_reduction <maximumf>, %312, %cst_164 [1] : vector<32x32xf32> to vector<32xf32>
    %314 = vector.shape_cast %313 : vector<32xf32> to vector<32x1xf32>
    %315 = vector.broadcast %314 : vector<32x1xf32> to vector<32x32xf32>
    %316 = arith.subf %312, %315 : vector<32x32xf32>
    %317 = math.exp %316 : vector<32x32xf32>
    %cst_165 = arith.constant dense<0.000000e+00> : vector<32xf32>
    %318 = vector.multi_reduction <add>, %317, %cst_165 [1] : vector<32x32xf32> to vector<32xf32>
    %319 = vector.shape_cast %318 : vector<32xf32> to vector<32x1xf32>
    %320 = tpu.reciprocal %319 {approx = true} : vector<32x1xf32> -> vector<32x1xf32>
    %321 = vector.broadcast %320 : vector<32x1xf32> to vector<32x32xf32>
    %322 = arith.mulf %317, %321 : vector<32x32xf32>
    %cst_166 = arith.constant dense<0.000000e+00> : vector<32x16xf32>
    %323 = tpu.matmul %322, %311, %cst_166 {dimension_numbers = #tpu.dot_dimension_numbers<[1], [0], [0], [1], [0, 0, 1, 1], [], []>} : vector<32x32xf32>, vector<32x16xf32>, vector<32x16xf32> -> vector<32x16xf32>
    %c0_167 = arith.constant 0 : index
    %c16_168 = arith.constant 16 : index
    %324 = vector.load %arg19[%c0_167, %c16_168] : memref<64x64xf32, #tpu.memory_space<vmem>>, vector<32x16xf32>
    tpu.vector_store %arg19[%c0_167, %c16_168], %323 {strides = array<i32>} : memref<64x64xf32, #tpu.memory_space<vmem>>, vector<32x16xf32>,
    %325 = vector.extract_strided_slice %290 {offsets = [0, 32], sizes = [32, 16], strides = [1, 1]} : vector<64x64xf32> to vector<32x16xf32>
    %326 = vector.extract_strided_slice %291 {offsets = [0, 32], sizes = [32, 16], strides = [1, 1]} : vector<64x64xf32> to vector<32x16xf32>
    %327 = vector.extract_strided_slice %292 {offsets = [0, 32], sizes = [32, 16], strides = [1, 1]} : vector<64x64xf32> to vector<32x16xf32>
    %cst_169 = arith.constant dense<0.000000e+00> : vector<32x32xf32>
    %328 = tpu.matmul %325, %326, %cst_169 {dimension_numbers = #tpu.dot_dimension_numbers<[1], [1], [0], [0], [0, 0, 1, 0], [], []>} : vector<32x16xf32>, vector<32x16xf32>, vector<32x32xf32> -> vector<32x32xf32>
    %cst_170 = arith.constant dense<0xFF800000> : vector<32xf32>
    %329 = vector.multi_reduction <maximumf>, %328, %cst_170 [1] : vector<32x32xf32> to vector<32xf32>
    %330 = vector.shape_cast %329 : vector<32xf32> to vector<32x1xf32>
    %331 = vector.broadcast %330 : vector<32x1xf32> to vector<32x32xf32>
    %332 = arith.subf %328, %331 : vector<32x32xf32>
    %333 = math.exp %332 : vector<32x32xf32>
    %cst_171 = arith.constant dense<0.000000e+00> : vector<32xf32>
    %334 = vector.multi_reduction <add>, %333, %cst_171 [1] : vector<32x32xf32> to vector<32xf32>
    %335 = vector.shape_cast %334 : vector<32xf32> to vector<32x1xf32>
    %336 = tpu.reciprocal %335 {approx = true} : vector<32x1xf32> -> vector<32x1xf32>
    %337 = vector.broadcast %336 : vector<32x1xf32> to vector<32x32xf32>
    %338 = arith.mulf %333, %337 : vector<32x32xf32>
    %cst_172 = arith.constant dense<0.000000e+00> : vector<32x16xf32>
    %339 = tpu.matmul %338, %327, %cst_172 {dimension_numbers = #tpu.dot_dimension_numbers<[1], [0], [0], [1], [0, 0, 1, 1], [], []>} : vector<32x32xf32>, vector<32x16xf32>, vector<32x16xf32> -> vector<32x16xf32>
    %c0_173 = arith.constant 0 : index
    %c32_174 = arith.constant 32 : index
    %340 = vector.load %arg19[%c0_173, %c32_174] : memref<64x64xf32, #tpu.memory_space<vmem>>, vector<32x16xf32>
    tpu.vector_store %arg19[%c0_173, %c32_174], %339 {strides = array<i32>} : memref<64x64xf32, #tpu.memory_space<vmem>>, vector<32x16xf32>,
    %341 = vector.extract_strided_slice %290 {offsets = [0, 48], sizes = [32, 16], strides = [1, 1]} : vector<64x64xf32> to vector<32x16xf32>
    %342 = vector.extract_strided_slice %291 {offsets = [0, 48], sizes = [32, 16], strides = [1, 1]} : vector<64x64xf32> to vector<32x16xf32>
    %343 = vector.extract_strided_slice %292 {offsets = [0, 48], sizes = [32, 16], strides = [1, 1]} : vector<64x64xf32> to vector<32x16xf32>
    %cst_175 = arith.constant dense<0.000000e+00> : vector<32x32xf32>
    %344 = tpu.matmul %341, %342, %cst_175 {dimension_numbers = #tpu.dot_dimension_numbers<[1], [1], [0], [0], [0, 0, 1, 0], [], []>} : vector<32x16xf32>, vector<32x16xf32>, vector<32x32xf32> -> vector<32x32xf32>
    %cst_176 = arith.constant dense<0xFF800000> : vector<32xf32>
    %345 = vector.multi_reduction <maximumf>, %344, %cst_176 [1] : vector<32x32xf32> to vector<32xf32>
    %346 = vector.shape_cast %345 : vector<32xf32> to vector<32x1xf32>
    %347 = vector.broadcast %346 : vector<32x1xf32> to vector<32x32xf32>
    %348 = arith.subf %344, %347 : vector<32x32xf32>
    %349 = math.exp %348 : vector<32x32xf32>
    %cst_177 = arith.constant dense<0.000000e+00> : vector<32xf32>
    %350 = vector.multi_reduction <add>, %349, %cst_177 [1] : vector<32x32xf32> to vector<32xf32>
    %351 = vector.shape_cast %350 : vector<32xf32> to vector<32x1xf32>
    %352 = tpu.reciprocal %351 {approx = true} : vector<32x1xf32> -> vector<32x1xf32>
    %353 = vector.broadcast %352 : vector<32x1xf32> to vector<32x32xf32>
    %354 = arith.mulf %349, %353 : vector<32x32xf32>
    %cst_178 = arith.constant dense<0.000000e+00> : vector<32x16xf32>
    %355 = tpu.matmul %354, %343, %cst_178 {dimension_numbers = #tpu.dot_dimension_numbers<[1], [0], [0], [1], [0, 0, 1, 1], [], []>} : vector<32x32xf32>, vector<32x16xf32>, vector<32x16xf32> -> vector<32x16xf32>
    %c0_179 = arith.constant 0 : index
    %c48_180 = arith.constant 48 : index
    %356 = vector.load %arg19[%c0_179, %c48_180] : memref<64x64xf32, #tpu.memory_space<vmem>>, vector<32x16xf32>
    tpu.vector_store %arg19[%c0_179, %c48_180], %355 {strides = array<i32>} : memref<64x64xf32, #tpu.memory_space<vmem>>, vector<32x16xf32>,
    %357 = vector.extract_strided_slice %290 {offsets = [32, 0], sizes = [32, 16], strides = [1, 1]} : vector<64x64xf32> to vector<32x16xf32>
    %358 = vector.extract_strided_slice %291 {offsets = [32, 0], sizes = [32, 16], strides = [1, 1]} : vector<64x64xf32> to vector<32x16xf32>
    %359 = vector.extract_strided_slice %292 {offsets = [32, 0], sizes = [32, 16], strides = [1, 1]} : vector<64x64xf32> to vector<32x16xf32>
    %cst_181 = arith.constant dense<0.000000e+00> : vector<32x32xf32>
    %360 = tpu.matmul %357, %358, %cst_181 {dimension_numbers = #tpu.dot_dimension_numbers<[1], [1], [0], [0], [0, 0, 1, 0], [], []>} : vector<32x16xf32>, vector<32x16xf32>, vector<32x32xf32> -> vector<32x32xf32>
    %cst_182 = arith.constant dense<0xFF800000> : vector<32xf32>
    %361 = vector.multi_reduction <maximumf>, %360, %cst_182 [1] : vector<32x32xf32> to vector<32xf32>
    %362 = vector.shape_cast %361 : vector<32xf32> to vector<32x1xf32>
    %363 = vector.broadcast %362 : vector<32x1xf32> to vector<32x32xf32>
    %364 = arith.subf %360, %363 : vector<32x32xf32>
    %365 = math.exp %364 : vector<32x32xf32>
    %cst_183 = arith.constant dense<0.000000e+00> : vector<32xf32>
    %366 = vector.multi_reduction <add>, %365, %cst_183 [1] : vector<32x32xf32> to vector<32xf32>
    %367 = vector.shape_cast %366 : vector<32xf32> to vector<32x1xf32>
    %368 = tpu.reciprocal %367 {approx = true} : vector<32x1xf32> -> vector<32x1xf32>
    %369 = vector.broadcast %368 : vector<32x1xf32> to vector<32x32xf32>
    %370 = arith.mulf %365, %369 : vector<32x32xf32>
    %cst_184 = arith.constant dense<0.000000e+00> : vector<32x16xf32>
    %371 = tpu.matmul %370, %359, %cst_184 {dimension_numbers = #tpu.dot_dimension_numbers<[1], [0], [0], [1], [0, 0, 1, 1], [], []>} : vector<32x32xf32>, vector<32x16xf32>, vector<32x16xf32> -> vector<32x16xf32>
    %c32_185 = arith.constant 32 : index
    %c0_186 = arith.constant 0 : index
    %372 = vector.load %arg19[%c32_185, %c0_186] : memref<64x64xf32, #tpu.memory_space<vmem>>, vector<32x16xf32>
    tpu.vector_store %arg19[%c32_185, %c0_186], %371 {strides = array<i32>} : memref<64x64xf32, #tpu.memory_space<vmem>>, vector<32x16xf32>,
    %373 = vector.extract_strided_slice %290 {offsets = [32, 16], sizes = [32, 16], strides = [1, 1]} : vector<64x64xf32> to vector<32x16xf32>
    %374 = vector.extract_strided_slice %291 {offsets = [32, 16], sizes = [32, 16], strides = [1, 1]} : vector<64x64xf32> to vector<32x16xf32>
    %375 = vector.extract_strided_slice %292 {offsets = [32, 16], sizes = [32, 16], strides = [1, 1]} : vector<64x64xf32> to vector<32x16xf32>
    %cst_187 = arith.constant dense<0.000000e+00> : vector<32x32xf32>
    %376 = tpu.matmul %373, %374, %cst_187 {dimension_numbers = #tpu.dot_dimension_numbers<[1], [1], [0], [0], [0, 0, 1, 0], [], []>} : vector<32x16xf32>, vector<32x16xf32>, vector<32x32xf32> -> vector<32x32xf32>
    %cst_188 = arith.constant dense<0xFF800000> : vector<32xf32>
    %377 = vector.multi_reduction <maximumf>, %376, %cst_188 [1] : vector<32x32xf32> to vector<32xf32>
    %378 = vector.shape_cast %377 : vector<32xf32> to vector<32x1xf32>
    %379 = vector.broadcast %378 : vector<32x1xf32> to vector<32x32xf32>
    %380 = arith.subf %376, %379 : vector<32x32xf32>
    %381 = math.exp %380 : vector<32x32xf32>
    %cst_189 = arith.constant dense<0.000000e+00> : vector<32xf32>
    %382 = vector.multi_reduction <add>, %381, %cst_189 [1] : vector<32x32xf32> to vector<32xf32>
    %383 = vector.shape_cast %382 : vector<32xf32> to vector<32x1xf32>
    %384 = tpu.reciprocal %383 {approx = true} : vector<32x1xf32> -> vector<32x1xf32>
    %385 = vector.broadcast %384 : vector<32x1xf32> to vector<32x32xf32>
    %386 = arith.mulf %381, %385 : vector<32x32xf32>
    %cst_190 = arith.constant dense<0.000000e+00> : vector<32x16xf32>
    %387 = tpu.matmul %386, %375, %cst_190 {dimension_numbers = #tpu.dot_dimension_numbers<[1], [0], [0], [1], [0, 0, 1, 1], [], []>} : vector<32x32xf32>, vector<32x16xf32>, vector<32x16xf32> -> vector<32x16xf32>
    %c32_191 = arith.constant 32 : index
    %c16_192 = arith.constant 16 : index
    %388 = vector.load %arg19[%c32_191, %c16_192] : memref<64x64xf32, #tpu.memory_space<vmem>>, vector<32x16xf32>
    tpu.vector_store %arg19[%c32_191, %c16_192], %387 {strides = array<i32>} : memref<64x64xf32, #tpu.memory_space<vmem>>, vector<32x16xf32>,
    %389 = vector.extract_strided_slice %290 {offsets = [32, 32], sizes = [32, 16], strides = [1, 1]} : vector<64x64xf32> to vector<32x16xf32>
    %390 = vector.extract_strided_slice %291 {offsets = [32, 32], sizes = [32, 16], strides = [1, 1]} : vector<64x64xf32> to vector<32x16xf32>
    %391 = vector.extract_strided_slice %292 {offsets = [32, 32], sizes = [32, 16], strides = [1, 1]} : vector<64x64xf32> to vector<32x16xf32>
    %cst_193 = arith.constant dense<0.000000e+00> : vector<32x32xf32>
    %392 = tpu.matmul %389, %390, %cst_193 {dimension_numbers = #tpu.dot_dimension_numbers<[1], [1], [0], [0], [0, 0, 1, 0], [], []>} : vector<32x16xf32>, vector<32x16xf32>, vector<32x32xf32> -> vector<32x32xf32>
    %cst_194 = arith.constant dense<0xFF800000> : vector<32xf32>
    %393 = vector.multi_reduction <maximumf>, %392, %cst_194 [1] : vector<32x32xf32> to vector<32xf32>
    %394 = vector.shape_cast %393 : vector<32xf32> to vector<32x1xf32>
    %395 = vector.broadcast %394 : vector<32x1xf32> to vector<32x32xf32>
    %396 = arith.subf %392, %395 : vector<32x32xf32>
    %397 = math.exp %396 : vector<32x32xf32>
    %cst_195 = arith.constant dense<0.000000e+00> : vector<32xf32>
    %398 = vector.multi_reduction <add>, %397, %cst_195 [1] : vector<32x32xf32> to vector<32xf32>
    %399 = vector.shape_cast %398 : vector<32xf32> to vector<32x1xf32>
    %400 = tpu.reciprocal %399 {approx = true} : vector<32x1xf32> -> vector<32x1xf32>
    %401 = vector.broadcast %400 : vector<32x1xf32> to vector<32x32xf32>
    %402 = arith.mulf %397, %401 : vector<32x32xf32>
    %cst_196 = arith.constant dense<0.000000e+00> : vector<32x16xf32>
    %403 = tpu.matmul %402, %391, %cst_196 {dimension_numbers = #tpu.dot_dimension_numbers<[1], [0], [0], [1], [0, 0, 1, 1], [], []>} : vector<32x32xf32>, vector<32x16xf32>, vector<32x16xf32> -> vector<32x16xf32>
    %c32_197 = arith.constant 32 : index
    %c32_198 = arith.constant 32 : index
    %404 = vector.load %arg19[%c32_197, %c32_198] : memref<64x64xf32, #tpu.memory_space<vmem>>, vector<32x16xf32>
    tpu.vector_store %arg19[%c32_197, %c32_198], %403 {strides = array<i32>} : memref<64x64xf32, #tpu.memory_space<vmem>>, vector<32x16xf32>,
    %405 = vector.extract_strided_slice %290 {offsets = [32, 48], sizes = [32, 16], strides = [1, 1]} : vector<64x64xf32> to vector<32x16xf32>
    %406 = vector.extract_strided_slice %291 {offsets = [32, 48], sizes = [32, 16], strides = [1, 1]} : vector<64x64xf32> to vector<32x16xf32>
    %407 = vector.extract_strided_slice %292 {offsets = [32, 48], sizes = [32, 16], strides = [1, 1]} : vector<64x64xf32> to vector<32x16xf32>
    %cst_199 = arith.constant dense<0.000000e+00> : vector<32x32xf32>
    %408 = tpu.matmul %405, %406, %cst_199 {dimension_numbers = #tpu.dot_dimension_numbers<[1], [1], [0], [0], [0, 0, 1, 0], [], []>} : vector<32x16xf32>, vector<32x16xf32>, vector<32x32xf32> -> vector<32x32xf32>
    %cst_200 = arith.constant dense<0xFF800000> : vector<32xf32>
    %409 = vector.multi_reduction <maximumf>, %408, %cst_200 [1] : vector<32x32xf32> to vector<32xf32>
    %410 = vector.shape_cast %409 : vector<32xf32> to vector<32x1xf32>
    %411 = vector.broadcast %410 : vector<32x1xf32> to vector<32x32xf32>
    %412 = arith.subf %408, %411 : vector<32x32xf32>
    %413 = math.exp %412 : vector<32x32xf32>
    %cst_201 = arith.constant dense<0.000000e+00> : vector<32xf32>
    %414 = vector.multi_reduction <add>, %413, %cst_201 [1] : vector<32x32xf32> to vector<32xf32>
    %415 = vector.shape_cast %414 : vector<32xf32> to vector<32x1xf32>
    %416 = tpu.reciprocal %415 {approx = true} : vector<32x1xf32> -> vector<32x1xf32>
    %417 = vector.broadcast %416 : vector<32x1xf32> to vector<32x32xf32>
    %418 = arith.mulf %413, %417 : vector<32x32xf32>
    %cst_202 = arith.constant dense<0.000000e+00> : vector<32x16xf32>
    %419 = tpu.matmul %418, %407, %cst_202 {dimension_numbers = #tpu.dot_dimension_numbers<[1], [0], [0], [1], [0, 0, 1, 1], [], []>} : vector<32x32xf32>, vector<32x16xf32>, vector<32x16xf32> -> vector<32x16xf32>
    %c32_203 = arith.constant 32 : index
    %c48_204 = arith.constant 48 : index
    %420 = vector.load %arg19[%c32_203, %c48_204] : memref<64x64xf32, #tpu.memory_space<vmem>>, vector<32x16xf32>
    tpu.vector_store %arg19[%c32_203, %c48_204], %419 {strides = array<i32>} : memref<64x64xf32, #tpu.memory_space<vmem>>, vector<32x16xf32>,
    %c0_205 = arith.constant 0 : index
    %c0_206 = arith.constant 0 : index
    %421 = vector.load %arg19[%c0_205, %c0_206] : memref<64x64xf32, #tpu.memory_space<vmem>>, vector<64x64xf32>
    %c1_207 = arith.constant 1 : index
    %c0_208 = arith.constant 0 : index
    %c0_209 = arith.constant 0 : index
    %422 = vector.load %arg11[%c1_207, %c0_208, %c0_209] : memref<2x64x64xf32, #tpu.memory_space<vmem>>, vector<1x64x64xf32>
    %423 = vector.shape_cast %422 : vector<1x64x64xf32> to vector<64x64xf32>
    %cst_210 = arith.constant dense<0.000000e+00> : vector<64x64xf32>
    %424 = tpu.matmul %421, %423, %cst_210 {dimension_numbers = #tpu.dot_dimension_numbers<[1], [1], [0], [0], [0, 0, 1, 0], [], []>} : vector<64x64xf32>, vector<64x64xf32>, vector<64x64xf32> -> vector<64x64xf32>
    %c1_211 = arith.constant 1 : index
    %c0_212 = arith.constant 0 : index
    %c0_213 = arith.constant 0 : index
    %425 = vector.load %arg12[%c1_211, %c0_212, %c0_213] : memref<2x1x64xf32, #tpu.memory_space<vmem>>, vector<1x1x64xf32>
    %426 = vector.shape_cast %425 : vector<1x1x64xf32> to vector<1x64xf32>
    %427 = vector.broadcast %426 : vector<1x64xf32> to vector<64x64xf32>
    %428 = arith.addf %424, %427 : vector<64x64xf32>
    %c1_214 = arith.constant 1 : index
    %c0_215 = arith.constant 0 : index
    %c0_216 = arith.constant 0 : index
    %429 = vector.load %arg13[%c1_214, %c0_215, %c0_216] : memref<2x32x64xf32, #tpu.memory_space<vmem>>, vector<1x32x64xf32>
    %430 = vector.shape_cast %429 : vector<1x32x64xf32> to vector<32x64xf32>
    %cst_217 = arith.constant dense<0.000000e+00> : vector<64x32xf32>
    %431 = tpu.matmul %428, %430, %cst_217 {dimension_numbers = #tpu.dot_dimension_numbers<[1], [1], [0], [0], [0, 0, 1, 0], [], []>} : vector<64x64xf32>, vector<32x64xf32>, vector<64x32xf32> -> vector<64x32xf32>
    %c1_218 = arith.constant 1 : index
    %c0_219 = arith.constant 0 : index
    %c0_220 = arith.constant 0 : index
    %432 = vector.load %arg14[%c1_218, %c0_219, %c0_220] : memref<2x1x32xf32, #tpu.memory_space<vmem>>, vector<1x1x32xf32>
    %433 = vector.shape_cast %432 : vector<1x1x32xf32> to vector<1x32xf32>
    %434 = vector.broadcast %433 : vector<1x32xf32> to vector<64x32xf32>
    %435 = arith.addf %431, %434 : vector<64x32xf32>
    %c1_221 = arith.constant 1 : index
    %c0_222 = arith.constant 0 : index
    %c0_223 = arith.constant 0 : index
    %436 = vector.load %arg15[%c1_221, %c0_222, %c0_223] : memref<2x1x32xf32, #tpu.memory_space<vmem>>, vector<1x1x32xf32>
    %437 = vector.shape_cast %436 : vector<1x1x32xf32> to vector<1x32xf32>
    %c1_224 = arith.constant 1 : index
    %c0_225 = arith.constant 0 : index
    %c0_226 = arith.constant 0 : index
    %438 = vector.load %arg16[%c1_224, %c0_225, %c0_226] : memref<2x1x32xf32, #tpu.memory_space<vmem>>, vector<1x1x32xf32>
    %439 = vector.shape_cast %438 : vector<1x1x32xf32> to vector<1x32xf32>
    %cst_227 = arith.constant dense<0.000000e+00> : vector<64xf32>
    %440 = vector.multi_reduction <add>, %435, %cst_227 [1] : vector<64x32xf32> to vector<64xf32>
    %441 = vector.shape_cast %440 : vector<64xf32> to vector<64x1xf32>
    %cst_228 = arith.constant 3.200000e+01 : f32
    %442 = vector.broadcast %cst_228 : f32 to vector<64x1xf32>
    %443 = arith.divf %441, %442 : vector<64x1xf32>
    %444 = vector.broadcast %443 : vector<64x1xf32> to vector<64x32xf32>
    %445 = arith.subf %435, %444 : vector<64x32xf32>
    %446 = arith.mulf %445, %445 : vector<64x32xf32>
    %cst_229 = arith.constant dense<0.000000e+00> : vector<64xf32>
    %447 = vector.multi_reduction <add>, %446, %cst_229 [1] : vector<64x32xf32> to vector<64xf32>
    %448 = vector.shape_cast %447 : vector<64xf32> to vector<64x1xf32>
    %cst_230 = arith.constant 3.200000e+01 : f32
    %449 = vector.broadcast %cst_230 : f32 to vector<64x1xf32>
    %450 = arith.divf %448, %449 : vector<64x1xf32>
    %451 = vector.broadcast %443 : vector<64x1xf32> to vector<64x32xf32>
    %452 = arith.subf %435, %451 : vector<64x32xf32>
    %cst_231 = arith.constant 9.99999996E-13 : f32
    %453 = vector.broadcast %cst_231 : f32 to vector<64x1xf32>
    %454 = arith.addf %450, %453 : vector<64x1xf32>
    %455 = math.rsqrt %454 : vector<64x1xf32>
    %456 = vector.broadcast %455 : vector<64x1xf32> to vector<64x32xf32>
    %457 = arith.mulf %452, %456 : vector<64x32xf32>
    %458 = vector.broadcast %437 : vector<1x32xf32> to vector<64x32xf32>
    %459 = arith.mulf %457, %458 : vector<64x32xf32>
    %460 = vector.broadcast %439 : vector<1x32xf32> to vector<64x32xf32>
    %461 = arith.addf %459, %460 : vector<64x32xf32>
    %462 = arith.addf %271, %461 : vector<64x32xf32>
    %c0_232 = arith.constant 0 : index
    %c0_233 = arith.constant 0 : index
    %463 = vector.load %arg18[%c0_232, %c0_233] : memref<64x32xf32, #tpu.memory_space<vmem>>, vector<64x32xf32>
    tpu.vector_store %arg18[%c0_232, %c0_233], %462 {strides = array<i32>} : memref<64x32xf32, #tpu.memory_space<vmem>>, vector<64x32xf32>,
    %cst_234 = arith.constant 1.000000e+00 : f32
    %464 = vector.broadcast %cst_234 : f32 to vector<1x32xf32>
    %c0_235 = arith.constant 0 : index
    %c0_236 = arith.constant 0 : index
    %465 = vector.load %arg18[%c0_235, %c0_236] : memref<64x32xf32, #tpu.memory_space<vmem>>, vector<32x32xf32>
    %cst_237 = arith.constant dense<0.000000e+00> : vector<1x32xf32>
    %466 = tpu.matmul %464, %465, %cst_237 {dimension_numbers = #tpu.dot_dimension_numbers<[1], [1], [0], [0], [0, 0, 1, 0], [], []>} : vector<1x32xf32>, vector<32x32xf32>, vector<1x32xf32> -> vector<1x32xf32>
    %c0_238 = arith.constant 0 : index
    %c0_239 = arith.constant 0 : index
    %c0_240 = arith.constant 0 : index
    %467 = vector.load %arg17[%c0_238, %c0_239, %c0_240] : memref<2x1x32xf32, #tpu.memory_space<vmem>>, vector<1x1x32xf32>
    %468 = vector.shape_cast %467 : vector<1x1x32xf32> to vector<1x32xf32>
    %469 = vector.shape_cast %466 : vector<1x32xf32> to vector<1x1x32xf32>
    tpu.vector_store %arg17[%c0_238, %c0_239, %c0_240], %469 {strides = array<i32>} : memref<2x1x32xf32, #tpu.memory_space<vmem>>, vector<1x1x32xf32>,
    %c32_241 = arith.constant 32 : index
    %c0_242 = arith.constant 0 : index
    %470 = vector.load %arg18[%c32_241, %c0_242] : memref<64x32xf32, #tpu.memory_space<vmem>>, vector<32x32xf32>
    %cst_243 = arith.constant dense<0.000000e+00> : vector<1x32xf32>
    %471 = tpu.matmul %464, %470, %cst_243 {dimension_numbers = #tpu.dot_dimension_numbers<[1], [1], [0], [0], [0, 0, 1, 0], [], []>} : vector<1x32xf32>, vector<32x32xf32>, vector<1x32xf32> -> vector<1x32xf32>
    %c1_244 = arith.constant 1 : index
    %c0_245 = arith.constant 0 : index
    %c0_246 = arith.constant 0 : index
    %472 = vector.load %arg17[%c1_244, %c0_245, %c0_246] : memref<2x1x32xf32, #tpu.memory_space<vmem>>, vector<1x1x32xf32>
    %473 = vector.shape_cast %472 : vector<1x1x32xf32> to vector<1x32xf32>
    %474 = vector.shape_cast %471 : vector<1x32xf32> to vector<1x1x32xf32>
    tpu.vector_store %arg17[%c1_244, %c0_245, %c0_246], %474 {strides = array<i32>} : memref<2x1x32xf32, #tpu.memory_space<vmem>>, vector<1x1x32xf32>,
    return
  }
}

</mosaic_0001>

<llo_original>
// kernel: tpu_custom_call.1
$region0: #{tpu_custom_call.1}
  #allocation0 [shape = 'u32[]', space=smem, size = 0x4, offset = 0x4, fixed_abs, tag = 'smem constant byte address 0x4 - core index']
  #allocation1 [shape = 'u32[144,128]{1,0:T(1,128)}', space=vmem, size = 0x12000, scoped, tag = 'internal scratch']
  #allocation2 [shape = 'f32[64,32]{1,0:T(8,128)}', space=vmem, size = 0x8000, scoped, tag = 'scratch operand']
  #allocation3 [shape = 'f32[64,64]{1,0:T(8,128)}', space=vmem, size = 0x8000, scoped, tag = 'scratch operand']
  %s0 = inlined_call_operand.vmem [shape: f32[2,8,16], index: 0, kind: input, shape index: {}]
  %s1 = inlined_call_operand.vmem [shape: f32[32,8], index: 1, kind: input, shape index: {}]
  %s2 = inlined_call_operand.vmem [shape: f32[1,32], index: 2, kind: input, shape index: {}]
  %s3 = inlined_call_operand.vmem [shape: f32[1,32], index: 3, kind: input, shape index: {}]
  %s4 = inlined_call_operand.vmem [shape: f32[1,32], index: 4, kind: input, shape index: {}]
  %s5 = inlined_call_operand.vmem [shape: f32[32,16], index: 5, kind: input, shape index: {}]
  %s6 = inlined_call_operand.vmem [shape: f32[1,32], index: 6, kind: input, shape index: {}]
  %s7 = inlined_call_operand.vmem [shape: f32[2,64,32], index: 7, kind: input, shape index: {}]
  %s8 = inlined_call_operand.vmem [shape: f32[2,1,64], index: 8, kind: input, shape index: {}]
  %s9 = inlined_call_operand.vmem [shape: f32[2,192,64], index: 9, kind: input, shape index: {}]
  %s10 = inlined_call_operand.vmem [shape: f32[2,1,192], index: 10, kind: input, shape index: {}]
  %s11 = inlined_call_operand.vmem [shape: f32[2,64,64], index: 11, kind: input, shape index: {}]
  %s12 = inlined_call_operand.vmem [shape: f32[2,1,64], index: 12, kind: input, shape index: {}]
  %s13 = inlined_call_operand.vmem [shape: f32[2,32,64], index: 13, kind: input, shape index: {}]
  %s14 = inlined_call_operand.vmem [shape: f32[2,1,32], index: 14, kind: input, shape index: {}]
  %s15 = inlined_call_operand.vmem [shape: f32[2,1,32], index: 15, kind: input, shape index: {}]
  %s16 = inlined_call_operand.vmem [shape: f32[2,1,32], index: 16, kind: input, shape index: {}]
  %s17 = inlined_call_operand.hbm [shape: f32[2,1,32], index: 17, kind: output, shape index: {}]
  %s18 = sld [smem:[#allocation0]]
  $region78: #{tpu_custom_call.1} parent=0
    _
  %s20 = ssub.s32 1, %s18
  %s21 = scalar_select 0, %s20, %s18
  $region1: #{tpu_custom_call.1} parent=0
    #allocation4 [shape = 'u8[1024]{0}', space=vmem, size = 0x400, scoped, tag = 'output window, operand 0, single buffered']
    #allocation5 [shape = 's32[1]{0}', space=sflag, size = 0x4, scoped, tag = 'scoped memory for tpu_custom_call.1']
    %22 = vsyncpa [#allocation5], 0
    // Predicated region
    $region2: #{tpu_custom_call.1} parent=1 // pred_check
      _
    $region3: #{tpu_custom_call.1} parent=1 // pred_check_branch
      %24 = sbr.rel (0) target = $region5
    $region4: #{tpu_custom_call.1} parent=1 // pred_region
      _
    $region5: #{tpu_custom_call.1} parent=1 // pred_fallthru
      _
    // Predicated region
    $region6: #{tpu_custom_call.1} parent=1 // pred_check
      _
    $region7: #{tpu_custom_call.1} parent=1 // pred_check_branch
      %26 = sbr.rel (0) target = $region9
    $region8: #{tpu_custom_call.1} parent=1 // pred_region
      _
    $region9: #{tpu_custom_call.1} parent=1 // pred_fallthru
      _
    // Predicated region
    $region10: #{tpu_custom_call.1} parent=1 // pred_check
      _
    $region11: #{tpu_custom_call.1} parent=1 // pred_check_branch
      %28 = sbr.rel (0) target = $region13
    $region12: #{tpu_custom_call.1} parent=1 // pred_region
      _
    $region13: #{tpu_custom_call.1} parent=1 // pred_fallthru
      _
    // Predicated region
    $region14: #{tpu_custom_call.1} parent=1 // pred_check
      _
    $region15: #{tpu_custom_call.1} parent=1 // pred_check_branch
      %30 = sbr.rel (0) target = $region17
    $region16: #{tpu_custom_call.1} parent=1 // pred_region
      _
    $region17: #{tpu_custom_call.1} parent=1 // pred_fallthru
      _
    // Predicated region
    $region18: #{tpu_custom_call.1} parent=1 // pred_check
      _
    $region19: #{tpu_custom_call.1} parent=1 // pred_check_branch
      %32 = sbr.rel (0) target = $region21
    $region20: #{tpu_custom_call.1} parent=1 // pred_region
      _
    $region21: #{tpu_custom_call.1} parent=1 // pred_fallthru
      _
    // Predicated region
    $region22: #{tpu_custom_call.1} parent=1 // pred_check
      _
    $region23: #{tpu_custom_call.1} parent=1 // pred_check_branch
      %34 = sbr.rel (0) target = $region25
    $region24: #{tpu_custom_call.1} parent=1 // pred_region
      _
    $region25: #{tpu_custom_call.1} parent=1 // pred_fallthru
      _
    // Predicated region
    $region26: #{tpu_custom_call.1} parent=1 // pred_check
      _
    $region27: #{tpu_custom_call.1} parent=1 // pred_check_branch
      %36 = sbr.rel (0) target = $region29
    $region28: #{tpu_custom_call.1} parent=1 // pred_region
      _
    $region29: #{tpu_custom_call.1} parent=1 // pred_fallthru
      _
    // Predicated region
    $region30: #{tpu_custom_call.1} parent=1 // pred_check
      _
    $region31: #{tpu_custom_call.1} parent=1 // pred_check_branch
      %38 = sbr.rel (0) target = $region33
    $region32: #{tpu_custom_call.1} parent=1 // pred_region
      _
    $region33: #{tpu_custom_call.1} parent=1 // pred_fallthru
      _
    // Predicated region
    $region34: #{tpu_custom_call.1} parent=1 // pred_check
      _
    $region35: #{tpu_custom_call.1} parent=1 // pred_check_branch
      %40 = sbr.rel (0) target = $region37
    $region36: #{tpu_custom_call.1} parent=1 // pred_region
      _
    $region37: #{tpu_custom_call.1} parent=1 // pred_fallthru
      _
    // Predicated region
    $region38: #{tpu_custom_call.1} parent=1 // pred_check
      _
    $region39: #{tpu_custom_call.1} parent=1 // pred_check_branch
      %42 = sbr.rel (0) target = $region41
    $region40: #{tpu_custom_call.1} parent=1 // pred_region
      _
    $region41: #{tpu_custom_call.1} parent=1 // pred_fallthru
      _
    // Predicated region
    $region42: #{tpu_custom_call.1} parent=1 // pred_check
      _
    $region43: #{tpu_custom_call.1} parent=1 // pred_check_branch
      %44 = sbr.rel (0) target = $region45
    $region44: #{tpu_custom_call.1} parent=1 // pred_region
      _
    $region45: #{tpu_custom_call.1} parent=1 // pred_fallthru
      _
    // Predicated region
    $region46: #{tpu_custom_call.1} parent=1 // pred_check
      _
    $region47: #{tpu_custom_call.1} parent=1 // pred_check_branch
      %46 = sbr.rel (0) target = $region49
    $region48: #{tpu_custom_call.1} parent=1 // pred_region
      _
    $region49: #{tpu_custom_call.1} parent=1 // pred_fallthru
      _
    // Predicated region
    $region50: #{tpu_custom_call.1} parent=1 // pred_check
      _
    $region51: #{tpu_custom_call.1} parent=1 // pred_check_branch
      %48 = sbr.rel (0) target = $region53
    $region52: #{tpu_custom_call.1} parent=1 // pred_region
      _
    $region53: #{tpu_custom_call.1} parent=1 // pred_fallthru
      _
    // Predicated region
    $region54: #{tpu_custom_call.1} parent=1 // pred_check
      _
    $region55: #{tpu_custom_call.1} parent=1 // pred_check_branch
      %50 = sbr.rel (0) target = $region57
    $region56: #{tpu_custom_call.1} parent=1 // pred_region
      _
    $region57: #{tpu_custom_call.1} parent=1 // pred_fallthru
      _
    // Predicated region
    $region58: #{tpu_custom_call.1} parent=1 // pred_check
      _
    $region59: #{tpu_custom_call.1} parent=1 // pred_check_branch
      %52 = sbr.rel (0) target = $region61
    $region60: #{tpu_custom_call.1} parent=1 // pred_region
      _
    $region61: #{tpu_custom_call.1} parent=1 // pred_fallthru
      _
    // Predicated region
    $region62: #{tpu_custom_call.1} parent=1 // pred_check
      _
    $region63: #{tpu_custom_call.1} parent=1 // pred_check_branch
      %54 = sbr.rel (0) target = $region65
    $region64: #{tpu_custom_call.1} parent=1 // pred_region
      _
    $region65: #{tpu_custom_call.1} parent=1 // pred_fallthru
      _
    // Predicated region
    $region66: #{tpu_custom_call.1} parent=1 // pred_check
      _
    $region67: #{tpu_custom_call.1} parent=1 // pred_check_branch
      %56 = sbr.rel (0) target = $region69
    $region68: #{tpu_custom_call.1} parent=1 // pred_region
      _
    $region69: #{tpu_custom_call.1} parent=1 // pred_fallthru
      _
    %v57 = vld [vmem:[%s0] sm:$0xff]
    %v58 = vmax.f32 %v57, 0.0
    %v59 = vld [vmem:[%s1] sm:$0xff]
    %v60 = vld [vmem:[%s1 + $0x8] sm:$0xff]
    %v61 = vld [vmem:[%s1 + $0x10] sm:$0xff]
    %v62 = vld [vmem:[%s1 + $0x18] sm:$0xff]
    %v63 = vld [vmem:[%s2] sm:$0x1]
    %v65 = vlaneseq
    %v66 = vshrl.u32 %v65, 7
    %v67 = vsub.s32 0, %v66
    %v68 = vrot.slane %v63, %v67
    %70 = vxpose.xlu0.b32.start [1/16] %v58, 128
    %71 = vxpose.xlu0.b32.cont [2/16] 0.0, 128
    %72 = vxpose.xlu0.b32.cont [3/16] 0.0, 128
    %73 = vxpose.xlu0.b32.cont [4/16] 0.0, 128
    %74 = vxpose.xlu0.b32.cont [5/16] 0.0, 128
    %75 = vxpose.xlu0.b32.cont [6/16] 0.0, 128
    %76 = vxpose.xlu0.b32.cont [7/16] 0.0, 128
    %77 = vxpose.xlu0.b32.cont [8/16] 0.0, 128
    %78 = vxpose.xlu0.b32.cont [9/16] 0.0, 128
    %79 = vxpose.xlu0.b32.cont [10/16] 0.0, 128
    %80 = vxpose.xlu0.b32.cont [11/16] 0.0, 128
    %81 = vxpose.xlu0.b32.cont [12/16] 0.0, 128
    %82 = vxpose.xlu0.b32.cont [13/16] 0.0, 128
    %83 = vxpose.xlu0.b32.cont [14/16] 0.0, 128
    %84 = vxpose.xlu0.b32.cont [15/16] 0.0, 128
    %85 = vxpose.xlu0.b32.end [16/16] 0.0, 128
    %v86 = vpop.trf.xlu0
    %v87 = vpop.trf.xlu0
    %v88 = vpop.trf.xlu0
    %v89 = vpop.trf.xlu0
    %v90 = vpop.trf.xlu0
    %v91 = vpop.trf.xlu0
    %v92 = vpop.trf.xlu0
    %v93 = vpop.trf.xlu0
    %v94 = vpop.trf.xlu0
    %v95 = vpop.trf.xlu0
    %v96 = vpop.trf.xlu0
    %v97 = vpop.trf.xlu0
    %v98 = vpop.trf.xlu0
    %v99 = vpop.trf.xlu0
    %v100 = vpop.trf.xlu0
    %v101 = vpop.trf.xlu0
    %vm102 = vcmask 64512
    %v104 = vsel %vm102, %v86, 0
    %v107 = vsel %vm102, %v87, 0
    %v110 = vsel %vm102, %v59, 0
    %v113 = vsel %vm102, %v60, 0
    %v116 = vsel %vm102, %v61, 0
    %v119 = vsel %vm102, %v62, 0
    %121 = vmatprep.subr.mxu0 0.0
    %122 = vmatpush1.xpose.msra.mxu0 %v110
    %123 = vmatprep.subr.mxu0 0.0
    %124 = vmatpush1.xpose.msra.mxu0 %v113
    %125 = vmatprep.subr.mxu0 0.0
    %126 = vmatpush1.xpose.msra.mxu0 %v116
    %127 = vmatprep.subr.mxu0 0.0
    %128 = vmatpush1.xpose.msra.mxu0 %v119
    %129 = vmatprep.subr.mxu0 0.0
    %130 = vmatpush1.xpose.msra.mxu0 0.0
    %131 = vmatprep.subr.mxu0 0.0
    %132 = vmatpush1.xpose.msra.mxu0 0.0
    %133 = vmatprep.subr.mxu0 0.0
    %134 = vmatpush1.xpose.msra.mxu0 0.0
    %135 = vmatprep.subr.mxu0 0.0
    %136 = vmatpush1.xpose.msra.mxu0 0.0
    %137 = vmatprep.subr.mxu0 0.0
    %138 = vmatpush1.xpose.msra.mxu0 0.0
    %139 = vmatprep.subr.mxu0 0.0
    %140 = vmatpush1.xpose.msra.mxu0 0.0
    %141 = vmatprep.subr.mxu0 0.0
    %142 = vmatpush1.xpose.msra.mxu0 0.0
    %143 = vmatprep.subr.mxu0 0.0
    %144 = vmatpush1.xpose.msra.mxu0 0.0
    %145 = vmatprep.subr.mxu0 0.0
    %146 = vmatpush1.xpose.msra.mxu0 0.0
    %147 = vmatprep.subr.mxu0 0.0
    %148 = vmatpush1.xpose.msra.mxu0 0.0
    %149 = vmatprep.subr.mxu0 0.0
    %150 = vmatpush1.xpose.msra.mxu0 0.0
    %151 = vmatprep.subr.mxu0 0.0
    %152 = vmatpush1.xpose.msra.mxu0 0.0
    %153 = vmatprep.subr.mxu0 0.0
    %154 = vmatpush1.xpose.msra.mxu0 0.0
    %155 = vmatprep.subr.mxu0 0.0
    %156 = vmatpush1.xpose.msra.mxu0 0.0
    %157 = vmatprep.subr.mxu0 0.0
    %158 = vmatpush1.xpose.msra.mxu0 0.0
    %159 = vmatprep.subr.mxu0 0.0
    %160 = vmatpush1.xpose.msra.mxu0 0.0
    %161 = vmatprep.subr.mxu0 0.0
    %162 = vmatpush1.xpose.msra.mxu0 0.0
    %163 = vmatprep.subr.mxu0 0.0
    %164 = vmatpush1.xpose.msra.mxu0 0.0
    %165 = vmatprep.subr.mxu0 0.0
    %166 = vmatpush1.xpose.msra.mxu0 0.0
    %167 = vmatprep.subr.mxu0 0.0
    %168 = vmatpush1.xpose.msra.mxu0 0.0
    %169 = vmatprep.subr.mxu0 0.0
    %170 = vmatpush1.xpose.msra.mxu0 0.0
    %171 = vmatprep.subr.mxu0 0.0
    %172 = vmatpush1.xpose.msra.mxu0 0.0
    %173 = vmatprep.subr.mxu0 0.0
    %174 = vmatpush1.xpose.msra.mxu0 0.0
    %175 = vmatprep.subr.mxu0 0.0
    %176 = vmatpush1.xpose.msra.mxu0 0.0
    %177 = vmatprep.subr.mxu0 0.0
    %178 = vmatpush1.xpose.msra.mxu0 0.0
    %179 = vmatprep.subr.mxu0 0.0
    %180 = vmatpush1.xpose.msra.mxu0 0.0
    %181 = vmatprep.subr.mxu0 0.0
    %182 = vmatpush1.xpose.msra.mxu0 0.0
    %183 = vmatprep.subr.mxu0 0.0
    %184 = vmatpush1.xpose.msra.mxu0 0.0
    %185 = vmatprep.mubr.f32.mxu0 0.0
    %186 = vmatmul.mubr.f32.gmra.mrb[0].mxu0 %v104
    %v187 = vpop.f32.mrb[0].mxu0
    %v188 = vadd.f32 %v68, %v187
    %v189 = vpop.f32.mrb[0].mxu0
    %190 = vmatprep.mubr.f32.mxu0 0.0
    %191 = vmatmul.mubr.f32.gmra.mrb[0].mxu0 %v107
    %v192 = vpop.f32.mrb[0].mxu0
    %v193 = vadd.f32 %v68, %v192
    %v194 = vpop.f32.mrb[0].mxu0
    %195 = vdwg.mxu0
    %v196 = vld [vmem:[%s3] sm:$0x1]
    %v197 = vld [vmem:[%s4] sm:$0x1]
    %vm198 = vcmask 261120
    %v199 = vsel %vm198, %v188, 0.0
    %200 = vadd.xlane.f32.xlu0 %v199
    %v201 = vpop.xlane.xlu0 %200
    %v202 = vsel %vm198, %v193, 0.0
    %203 = vadd.xlane.f32.xlu0 %v202
    %v204 = vpop.xlane.xlu0 %203
    %v205 = vrcp.pop 32.0
    %v206 = vmul.f32 %v201, %v205
    %v207 = vmul.f32 %v204, %v205
    %v208 = vsub.f32 %v188, %v206
    %v209 = vsub.f32 %v193, %v207
    %v210 = vmul.f32 %v208, %v208
    %v211 = vmul.f32 %v209, %v209
    %v212 = vsel %vm198, %v210, 0.0
    %213 = vadd.xlane.f32.xlu0 %v212
    %v214 = vpop.xlane.xlu0 %213
    %v215 = vsel %vm198, %v211, 0.0
    %216 = vadd.xlane.f32.xlu0 %v215
    %v217 = vpop.xlane.xlu0 %216
    %v218 = vmul.f32 %v214, %v205
    %v219 = vmul.f32 %v217, %v205
    %v220 = vadd.f32 %v218, 1e-05
    %v221 = vadd.f32 %v219, 1e-05
    %v222 = vrsqrt.pop %v220
    %v223 = vrsqrt.pop %v221
    %v224 = vmul.f32 %v208, %v222
    %v225 = vmul.f32 %v209, %v223
    %v227 = vlaneseq
    %v228 = vshrl.u32 %v227, 7
    %v229 = vsub.s32 0, %v228
    %v230 = vrot.slane %v196, %v229
    %v232 = vmul.f32 %v224, %v230
    %v233 = vmul.f32 %v225, %v230
    %v235 = vlaneseq
    %v236 = vshrl.u32 %v235, 7
    %v237 = vsub.s32 0, %v236
    %v238 = vrot.slane %v197, %v237
    %v240 = vadd.f32 %v232, %v238
    %v241 = vadd.f32 %v233, %v238
    %v242 = vld [vmem:[%s5] sm:$0xff]
    %v243 = vld [vmem:[%s5 + $0x8] sm:$0xff]
    %v244 = vld [vmem:[%s5 + $0x10] sm:$0xff]
    %v245 = vld [vmem:[%s5 + $0x18] sm:$0xff]
    %v246 = vld [vmem:[%s6] sm:$0x1]
    %v248 = vlaneseq
    %v249 = vshrl.u32 %v248, 7
    %v250 = vsub.s32 0, %v249
    %v251 = vrot.slane %v246, %v250
    %253 = vxpose.xlu0.b32.start [1/16] %v240, 128
    %254 = vxpose.xlu0.b32.cont [2/16] %v241, 128
    %255 = vxpose.xlu0.b32.cont [3/16] 0.0, 128
    %256 = vxpose.xlu0.b32.cont [4/16] 0.0, 128
    %257 = vxpose.xlu0.b32.cont [5/16] 0.0, 128
    %258 = vxpose.xlu0.b32.cont [6/16] 0.0, 128
    %259 = vxpose.xlu0.b32.cont [7/16] 0.0, 128
    %260 = vxpose.xlu0.b32.cont [8/16] 0.0, 128
    %261 = vxpose.xlu0.b32.cont [9/16] 0.0, 128
    %262 = vxpose.xlu0.b32.cont [10/16] 0.0, 128
    %263 = vxpose.xlu0.b32.cont [11/16] 0.0, 128
    %264 = vxpose.xlu0.b32.cont [12/16] 0.0, 128
    %265 = vxpose.xlu0.b32.cont [13/16] 0.0, 128
    %266 = vxpose.xlu0.b32.cont [14/16] 0.0, 128
    %267 = vxpose.xlu0.b32.cont [15/16] 0.0, 128
    %268 = vxpose.xlu0.b32.end [16/16] 0.0, 128
    %v269 = vpop.trf.xlu0
    %v270 = vpop.trf.xlu0
    %v271 = vpop.trf.xlu0
    %v272 = vpop.trf.xlu0
    %v273 = vpop.trf.xlu0
    %v274 = vpop.trf.xlu0
    %v275 = vpop.trf.xlu0
    %v276 = vpop.trf.xlu0
    %v277 = vpop.trf.xlu0
    %v278 = vpop.trf.xlu0
    %v279 = vpop.trf.xlu0
    %v280 = vpop.trf.xlu0
    %v281 = vpop.trf.xlu0
    %v282 = vpop.trf.xlu0
    %v283 = vpop.trf.xlu0
    %v284 = vpop.trf.xlu0
    %vm285 = vcmask 130048
    %v287 = vsel %vm285, %v269, 0
    %v290 = vsel %vm285, %v270, 0
    %v293 = vsel %vm285, %v271, 0
    %v296 = vsel %vm285, %v272, 0
    %v299 = vsel %vm285, %v242, 0
    %v302 = vsel %vm285, %v243, 0
    %v305 = vsel %vm285, %v244, 0
    %v308 = vsel %vm285, %v245, 0
    %310 = vmatprep.subr.mxu0 0.0
    %311 = vmatpush1.xpose.msra.mxu0 %v299
    %312 = vmatprep.subr.mxu0 0.0
    %313 = vmatpush1.xpose.msra.mxu0 %v302
    %314 = vmatprep.subr.mxu0 0.0
    %315 = vmatpush1.xpose.msra.mxu0 %v305
    %316 = vmatprep.subr.mxu0 0.0
    %317 = vmatpush1.xpose.msra.mxu0 %v308
    %318 = vmatprep.subr.mxu0 0.0
    %319 = vmatpush1.xpose.msra.mxu0 0.0
    %320 = vmatprep.subr.mxu0 0.0
    %321 = vmatpush1.xpose.msra.mxu0 0.0
    %322 = vmatprep.subr.mxu0 0.0
    %323 = vmatpush1.xpose.msra.mxu0 0.0
    %324 = vmatprep.subr.mxu0 0.0
    %325 = vmatpush1.xpose.msra.mxu0 0.0
    %326 = vmatprep.subr.mxu0 0.0
    %327 = vmatpush1.xpose.msra.mxu0 0.0
    %328 = vmatprep.subr.mxu0 0.0
    %329 = vmatpush1.xpose.msra.mxu0 0.0
    %330 = vmatprep.subr.mxu0 0.0
    %331 = vmatpush1.xpose.msra.mxu0 0.0
    %332 = vmatprep.subr.mxu0 0.0
    %333 = vmatpush1.xpose.msra.mxu0 0.0
    %334 = vmatprep.subr.mxu0 0.0
    %335 = vmatpush1.xpose.msra.mxu0 0.0
    %336 = vmatprep.subr.mxu0 0.0
    %337 = vmatpush1.xpose.msra.mxu0 0.0
    %338 = vmatprep.subr.mxu0 0.0
    %339 = vmatpush1.xpose.msra.mxu0 0.0
    %340 = vmatprep.subr.mxu0 0.0
    %341 = vmatpush1.xpose.msra.mxu0 0.0
    %342 = vmatprep.subr.mxu0 0.0
    %343 = vmatpush1.xpose.msra.mxu0 0.0
    %344 = vmatprep.subr.mxu0 0.0
    %345 = vmatpush1.xpose.msra.mxu0 0.0
    %346 = vmatprep.subr.mxu0 0.0
    %347 = vmatpush1.xpose.msra.mxu0 0.0
    %348 = vmatprep.subr.mxu0 0.0
    %349 = vmatpush1.xpose.msra.mxu0 0.0
    %350 = vmatprep.subr.mxu0 0.0
    %351 = vmatpush1.xpose.msra.mxu0 0.0
    %352 = vmatprep.subr.mxu0 0.0
    %353 = vmatpush1.xpose.msra.mxu0 0.0
    %354 = vmatprep.subr.mxu0 0.0
    %355 = vmatpush1.xpose.msra.mxu0 0.0
    %356 = vmatprep.subr.mxu0 0.0
    %357 = vmatpush1.xpose.msra.mxu0 0.0
    %358 = vmatprep.subr.mxu0 0.0
    %359 = vmatpush1.xpose.msra.mxu0 0.0
    %360 = vmatprep.subr.mxu0 0.0
    %361 = vmatpush1.xpose.msra.mxu0 0.0
    %362 = vmatprep.subr.mxu0 0.0
    %363 = vmatpush1.xpose.msra.mxu0 0.0
    %364 = vmatprep.subr.mxu0 0.0
    %365 = vmatpush1.xpose.msra.mxu0 0.0
    %366 = vmatprep.subr.mxu0 0.0
    %367 = vmatpush1.xpose.msra.mxu0 0.0
    %368 = vmatprep.subr.mxu0 0.0
    %369 = vmatpush1.xpose.msra.mxu0 0.0
    %370 = vmatprep.subr.mxu0 0.0
    %371 = vmatpush1.xpose.msra.mxu0 0.0
    %372 = vmatprep.subr.mxu0 0.0
    %373 = vmatpush1.xpose.msra.mxu0 0.0
    %374 = vmatprep.mubr.f32.mxu0 0.0
    %375 = vmatmul.mubr.f32.gmra.mrb[0].mxu0 %v287
    %v376 = vpop.f32.mrb[0].mxu0
    %v377 = vadd.f32 %v251, %v376
    %v378 = vpop.f32.mrb[0].mxu0
    %379 = vmatprep.mubr.f32.mxu0 0.0
    %380 = vmatmul.mubr.f32.gmra.mrb[0].mxu0 %v290
    %v381 = vpop.f32.mrb[0].mxu0
    %v382 = vadd.f32 %v251, %v381
    %v383 = vpop.f32.mrb[0].mxu0
    %384 = vmatprep.mubr.f32.mxu0 0.0
    %385 = vmatmul.mubr.f32.gmra.mrb[0].mxu0 %v293
    %v386 = vpop.f32.mrb[0].mxu0
    %v387 = vadd.f32 %v251, %v386
    %v388 = vpop.f32.mrb[0].mxu0
    %389 = vmatprep.mubr.f32.mxu0 0.0
    %390 = vmatmul.mubr.f32.gmra.mrb[0].mxu0 %v296
    %v391 = vpop.f32.mrb[0].mxu0
    %v392 = vadd.f32 %v251, %v391
    %v393 = vpop.f32.mrb[0].mxu0
    %394 = vdwg.mxu0
    %395 = vst.msk [vmem:[#allocation2] sm:$0xff] %vm198, %v377
    %396 = vst.msk [vmem:[#allocation2 + $0x8] sm:$0xff] %vm198, %v382
    %397 = vst.msk [vmem:[#allocation2 + $0x10] sm:$0xff] %vm198, %v387
    %398 = vst.msk [vmem:[#allocation2 + $0x18] sm:$0xff] %vm198, %v392
    %s399 = scalar_lea.vmem %s0, 8
    %v400 = vld [vmem:[%s399] sm:$0xff]
    %v401 = vmax.f32 %v400, 0.0
    %v402 = vld [vmem:[%s1] sm:$0xff]
    %v403 = vld [vmem:[%s1 + $0x8] sm:$0xff]
    %v404 = vld [vmem:[%s1 + $0x10] sm:$0xff]
    %v405 = vld [vmem:[%s1 + $0x18] sm:$0xff]
    %v406 = vld [vmem:[%s2] sm:$0x1]
    %v408 = vlaneseq
    %v409 = vshrl.u32 %v408, 7
    %v410 = vsub.s32 0, %v409
    %v411 = vrot.slane %v406, %v410
    %413 = vxpose.xlu0.b32.start [1/16] %v401, 128
    %414 = vxpose.xlu0.b32.cont [2/16] 0.0, 128
    %415 = vxpose.xlu0.b32.cont [3/16] 0.0, 128
    %416 = vxpose.xlu0.b32.cont [4/16] 0.0, 128
    %417 = vxpose.xlu0.b32.cont [5/16] 0.0, 128
    %418 = vxpose.xlu0.b32.cont [6/16] 0.0, 128
    %419 = vxpose.xlu0.b32.cont [7/16] 0.0, 128
    %420 = vxpose.xlu0.b32.cont [8/16] 0.0, 128
    %421 = vxpose.xlu0.b32.cont [9/16] 0.0, 128
    %422 = vxpose.xlu0.b32.cont [10/16] 0.0, 128
    %423 = vxpose.xlu0.b32.cont [11/16] 0.0, 128
    %424 = vxpose.xlu0.b32.cont [12/16] 0.0, 128
    %425 = vxpose.xlu0.b32.cont [13/16] 0.0, 128
    %426 = vxpose.xlu0.b32.cont [14/16] 0.0, 128
    %427 = vxpose.xlu0.b32.cont [15/16] 0.0, 128
    %428 = vxpose.xlu0.b32.end [16/16] 0.0, 128
    %v429 = vpop.trf.xlu0
    %v430 = vpop.trf.xlu0
    %v431 = vpop.trf.xlu0
    %v432 = vpop.trf.xlu0
    %v433 = vpop.trf.xlu0
    %v434 = vpop.trf.xlu0
    %v435 = vpop.trf.xlu0
    %v436 = vpop.trf.xlu0
    %v437 = vpop.trf.xlu0
    %v438 = vpop.trf.xlu0
    %v439 = vpop.trf.xlu0
    %v440 = vpop.trf.xlu0
    %v441 = vpop.trf.xlu0
    %v442 = vpop.trf.xlu0
    %v443 = vpop.trf.xlu0
    %v444 = vpop.trf.xlu0
    %v446 = vsel %vm102, %v429, 0
    %v449 = vsel %vm102, %v430, 0
    %v452 = vsel %vm102, %v402, 0
    %v455 = vsel %vm102, %v403, 0
    %v458 = vsel %vm102, %v404, 0
    %v461 = vsel %vm102, %v405, 0
    %463 = vmatprep.subr.mxu0 0.0
    %464 = vmatpush1.xpose.msra.mxu0 %v452
    %465 = vmatprep.subr.mxu0 0.0
    %466 = vmatpush1.xpose.msra.mxu0 %v455
    %467 = vmatprep.subr.mxu0 0.0
    %468 = vmatpush1.xpose.msra.mxu0 %v458
    %469 = vmatprep.subr.mxu0 0.0
    %470 = vmatpush1.xpose.msra.mxu0 %v461
    %471 = vmatprep.subr.mxu0 0.0
    %472 = vmatpush1.xpose.msra.mxu0 0.0
    %473 = vmatprep.subr.mxu0 0.0
    %474 = vmatpush1.xpose.msra.mxu0 0.0
    %475 = vmatprep.subr.mxu0 0.0
    %476 = vmatpush1.xpose.msra.mxu0 0.0
    %477 = vmatprep.subr.mxu0 0.0
    %478 = vmatpush1.xpose.msra.mxu0 0.0
    %479 = vmatprep.subr.mxu0 0.0
    %480 = vmatpush1.xpose.msra.mxu0 0.0
    %481 = vmatprep.subr.mxu0 0.0
    %482 = vmatpush1.xpose.msra.mxu0 0.0
    %483 = vmatprep.subr.mxu0 0.0
    %484 = vmatpush1.xpose.msra.mxu0 0.0
    %485 = vmatprep.subr.mxu0 0.0
    %486 = vmatpush1.xpose.msra.mxu0 0.0
    %487 = vmatprep.subr.mxu0 0.0
    %488 = vmatpush1.xpose.msra.mxu0 0.0
    %489 = vmatprep.subr.mxu0 0.0
    %490 = vmatpush1.xpose.msra.mxu0 0.0
    %491 = vmatprep.subr.mxu0 0.0
    %492 = vmatpush1.xpose.msra.mxu0 0.0
    %493 = vmatprep.subr.mxu0 0.0
    %494 = vmatpush1.xpose.msra.mxu0 0.0
    %495 = vmatprep.subr.mxu0 0.0
    %496 = vmatpush1.xpose.msra.mxu0 0.0
    %497 = vmatprep.subr.mxu0 0.0
    %498 = vmatpush1.xpose.msra.mxu0 0.0
    %499 = vmatprep.subr.mxu0 0.0
    %500 = vmatpush1.xpose.msra.mxu0 0.0
    %501 = vmatprep.subr.mxu0 0.0
    %502 = vmatpush1.xpose.msra.mxu0 0.0
    %503 = vmatprep.subr.mxu0 0.0
    %504 = vmatpush1.xpose.msra.mxu0 0.0
    %505 = vmatprep.subr.mxu0 0.0
    %506 = vmatpush1.xpose.msra.mxu0 0.0
    %507 = vmatprep.subr.mxu0 0.0
    %508 = vmatpush1.xpose.msra.mxu0 0.0
    %509 = vmatprep.subr.mxu0 0.0
    %510 = vmatpush1.xpose.msra.mxu0 0.0
    %511 = vmatprep.subr.mxu0 0.0
    %512 = vmatpush1.xpose.msra.mxu0 0.0
    %513 = vmatprep.subr.mxu0 0.0
    %514 = vmatpush1.xpose.msra.mxu0 0.0
    %515 = vmatprep.subr.mxu0 0.0
    %516 = vmatpush1.xpose.msra.mxu0 0.0
    %517 = vmatprep.subr.mxu0 0.0
    %518 = vmatpush1.xpose.msra.mxu0 0.0
    %519 = vmatprep.subr.mxu0 0.0
    %520 = vmatpush1.xpose.msra.mxu0 0.0
    %521 = vmatprep.subr.mxu0 0.0
    %522 = vmatpush1.xpose.msra.mxu0 0.0
    %523 = vmatprep.subr.mxu0 0.0
    %524 = vmatpush1.xpose.msra.mxu0 0.0
    %525 = vmatprep.subr.mxu0 0.0
    %526 = vmatpush1.xpose.msra.mxu0 0.0
    %527 = vmatprep.mubr.f32.mxu0 0.0
    %528 = vmatmul.mubr.f32.gmra.mrb[0].mxu0 %v446
    %v529 = vpop.f32.mrb[0].mxu0
    %v530 = vadd.f32 %v411, %v529
    %v531 = vpop.f32.mrb[0].mxu0
    %532 = vmatprep.mubr.f32.mxu0 0.0
    %533 = vmatmul.mubr.f32.gmra.mrb[0].mxu0 %v449
    %v534 = vpop.f32.mrb[0].mxu0
    %v535 = vadd.f32 %v411, %v534
    %v536 = vpop.f32.mrb[0].mxu0
    %537 = vdwg.mxu0
    %v538 = vld [vmem:[%s3] sm:$0x1]
    %v539 = vld [vmem:[%s4] sm:$0x1]
    %v540 = vsel %vm198, %v530, 0.0
    %541 = vadd.xlane.f32.xlu0 %v540
    %v542 = vpop.xlane.xlu0 %541
    %v543 = vsel %vm198, %v535, 0.0
    %544 = vadd.xlane.f32.xlu0 %v543
    %v545 = vpop.xlane.xlu0 %544
    %v546 = vmul.f32 %v542, %v205
    %v547 = vmul.f32 %v545, %v205
    %v548 = vsub.f32 %v530, %v546
    %v549 = vsub.f32 %v535, %v547
    %v550 = vmul.f32 %v548, %v548
    %v551 = vmul.f32 %v549, %v549
    %v552 = vsel %vm198, %v550, 0.0
    %553 = vadd.xlane.f32.xlu0 %v552
    %v554 = vpop.xlane.xlu0 %553
    %v555 = vsel %vm198, %v551, 0.0
    %556 = vadd.xlane.f32.xlu0 %v555
    %v557 = vpop.xlane.xlu0 %556
    %v558 = vmul.f32 %v554, %v205
    %v559 = vmul.f32 %v557, %v205
    %v560 = vadd.f32 %v558, 1e-05
    %v561 = vadd.f32 %v559, 1e-05
    %v562 = vrsqrt.pop %v560
    %v563 = vrsqrt.pop %v561
    %v564 = vmul.f32 %v548, %v562
    %v565 = vmul.f32 %v549, %v563
    %v567 = vlaneseq
    %v568 = vshrl.u32 %v567, 7
    %v569 = vsub.s32 0, %v568
    %v570 = vrot.slane %v538, %v569
    %v572 = vmul.f32 %v564, %v570
    %v573 = vmul.f32 %v565, %v570
    %v575 = vlaneseq
    %v576 = vshrl.u32 %v575, 7
    %v577 = vsub.s32 0, %v576
    %v578 = vrot.slane %v539, %v577
    %v580 = vadd.f32 %v572, %v578
    %v581 = vadd.f32 %v573, %v578
    %v582 = vld [vmem:[%s5] sm:$0xff]
    %v583 = vld [vmem:[%s5 + $0x8] sm:$0xff]
    %v584 = vld [vmem:[%s5 + $0x10] sm:$0xff]
    %v585 = vld [vmem:[%s5 + $0x18] sm:$0xff]
    %v586 = vld [vmem:[%s6] sm:$0x1]
    %v588 = vlaneseq
    %v589 = vshrl.u32 %v588, 7
    %v590 = vsub.s32 0, %v589
    %v591 = vrot.slane %v586, %v590
    %593 = vxpose.xlu0.b32.start [1/16] %v580, 128
    %594 = vxpose.xlu0.b32.cont [2/16] %v581, 128
    %595 = vxpose.xlu0.b32.cont [3/16] 0.0, 128
    %596 = vxpose.xlu0.b32.cont [4/16] 0.0, 128
    %597 = vxpose.xlu0.b32.cont [5/16] 0.0, 128
    %598 = vxpose.xlu0.b32.cont [6/16] 0.0, 128
    %599 = vxpose.xlu0.b32.cont [7/16] 0.0, 128
    %600 = vxpose.xlu0.b32.cont [8/16] 0.0, 128
    %601 = vxpose.xlu0.b32.cont [9/16] 0.0, 128
    %602 = vxpose.xlu0.b32.cont [10/16] 0.0, 128
    %603 = vxpose.xlu0.b32.cont [11/16] 0.0, 128
    %604 = vxpose.xlu0.b32.cont [12/16] 0.0, 128
    %605 = vxpose.xlu0.b32.cont [13/16] 0.0, 128
    %606 = vxpose.xlu0.b32.cont [14/16] 0.0, 128
    %607 = vxpose.xlu0.b32.cont [15/16] 0.0, 128
    %608 = vxpose.xlu0.b32.end [16/16] 0.0, 128
    %v609 = vpop.trf.xlu0
    %v610 = vpop.trf.xlu0
    %v611 = vpop.trf.xlu0
    %v612 = vpop.trf.xlu0
    %v613 = vpop.trf.xlu0
    %v614 = vpop.trf.xlu0
    %v615 = vpop.trf.xlu0
    %v616 = vpop.trf.xlu0
    %v617 = vpop.trf.xlu0
    %v618 = vpop.trf.xlu0
    %v619 = vpop.trf.xlu0
    %v620 = vpop.trf.xlu0
    %v621 = vpop.trf.xlu0
    %v622 = vpop.trf.xlu0
    %v623 = vpop.trf.xlu0
    %v624 = vpop.trf.xlu0
    %v626 = vsel %vm285, %v609, 0
    %v629 = vsel %vm285, %v610, 0
    %v632 = vsel %vm285, %v611, 0
    %v635 = vsel %vm285, %v612, 0
    %v638 = vsel %vm285, %v582, 0
    %v641 = vsel %vm285, %v583, 0
    %v644 = vsel %vm285, %v584, 0
    %v647 = vsel %vm285, %v585, 0
    %649 = vmatprep.subr.mxu0 0.0
    %650 = vmatpush1.xpose.msra.mxu0 %v638
    %651 = vmatprep.subr.mxu0 0.0
    %652 = vmatpush1.xpose.msra.mxu0 %v641
    %653 = vmatprep.subr.mxu0 0.0
    %654 = vmatpush1.xpose.msra.mxu0 %v644
    %655 = vmatprep.subr.mxu0 0.0
    %656 = vmatpush1.xpose.msra.mxu0 %v647
    %657 = vmatprep.subr.mxu0 0.0
    %658 = vmatpush1.xpose.msra.mxu0 0.0
    %659 = vmatprep.subr.mxu0 0.0
    %660 = vmatpush1.xpose.msra.mxu0 0.0
    %661 = vmatprep.subr.mxu0 0.0
    %662 = vmatpush1.xpose.msra.mxu0 0.0
    %663 = vmatprep.subr.mxu0 0.0
    %664 = vmatpush1.xpose.msra.mxu0 0.0
    %665 = vmatprep.subr.mxu0 0.0
    %666 = vmatpush1.xpose.msra.mxu0 0.0
    %667 = vmatprep.subr.mxu0 0.0
    %668 = vmatpush1.xpose.msra.mxu0 0.0
    %669 = vmatprep.subr.mxu0 0.0
    %670 = vmatpush1.xpose.msra.mxu0 0.0
    %671 = vmatprep.subr.mxu0 0.0
    %672 = vmatpush1.xpose.msra.mxu0 0.0
    %673 = vmatprep.subr.mxu0 0.0
    %674 = vmatpush1.xpose.msra.mxu0 0.0
    %675 = vmatprep.subr.mxu0 0.0
    %676 = vmatpush1.xpose.msra.mxu0 0.0
    %677 = vmatprep.subr.mxu0 0.0
    %678 = vmatpush1.xpose.msra.mxu0 0.0
    %679 = vmatprep.subr.mxu0 0.0
    %680 = vmatpush1.xpose.msra.mxu0 0.0
    %681 = vmatprep.subr.mxu0 0.0
    %682 = vmatpush1.xpose.msra.mxu0 0.0
    %683 = vmatprep.subr.mxu0 0.0
    %684 = vmatpush1.xpose.msra.mxu0 0.0
    %685 = vmatprep.subr.mxu0 0.0
    %686 = vmatpush1.xpose.msra.mxu0 0.0
    %687 = vmatprep.subr.mxu0 0.0
    %688 = vmatpush1.xpose.msra.mxu0 0.0
    %689 = vmatprep.subr.mxu0 0.0
    %690 = vmatpush1.xpose.msra.mxu0 0.0
    %691 = vmatprep.subr.mxu0 0.0
    %692 = vmatpush1.xpose.msra.mxu0 0.0
    %693 = vmatprep.subr.mxu0 0.0
    %694 = vmatpush1.xpose.msra.mxu0 0.0
    %695 = vmatprep.subr.mxu0 0.0
    %696 = vmatpush1.xpose.msra.mxu0 0.0
    %697 = vmatprep.subr.mxu0 0.0
    %698 = vmatpush1.xpose.msra.mxu0 0.0
    %699 = vmatprep.subr.mxu0 0.0
    %700 = vmatpush1.xpose.msra.mxu0 0.0
    %701 = vmatprep.subr.mxu0 0.0
    %702 = vmatpush1.xpose.msra.mxu0 0.0
    %703 = vmatprep.subr.mxu0 0.0
    %704 = vmatpush1.xpose.msra.mxu0 0.0
    %705 = vmatprep.subr.mxu0 0.0
    %706 = vmatpush1.xpose.msra.mxu0 0.0
    %707 = vmatprep.subr.mxu0 0.0
    %708 = vmatpush1.xpose.msra.mxu0 0.0
    %709 = vmatprep.subr.mxu0 0.0
    %710 = vmatpush1.xpose.msra.mxu0 0.0
    %711 = vmatprep.subr.mxu0 0.0
    %712 = vmatpush1.xpose.msra.mxu0 0.0
    %713 = vmatprep.mubr.f32.mxu0 0.0
    %714 = vmatmul.mubr.f32.gmra.mrb[0].mxu0 %v626
    %v715 = vpop.f32.mrb[0].mxu0
    %v716 = vadd.f32 %v591, %v715
    %v717 = vpop.f32.mrb[0].mxu0
    %718 = vmatprep.mubr.f32.mxu0 0.0
    %719 = vmatmul.mubr.f32.gmra.mrb[0].mxu0 %v629
    %v720 = vpop.f32.mrb[0].mxu0
    %v721 = vadd.f32 %v591, %v720
    %v722 = vpop.f32.mrb[0].mxu0
    %723 = vmatprep.mubr.f32.mxu0 0.0
    %724 = vmatmul.mubr.f32.gmra.mrb[0].mxu0 %v632
    %v725 = vpop.f32.mrb[0].mxu0
    %v726 = vadd.f32 %v591, %v725
    %v727 = vpop.f32.mrb[0].mxu0
    %728 = vmatprep.mubr.f32.mxu0 0.0
    %729 = vmatmul.mubr.f32.gmra.mrb[0].mxu0 %v635
    %v730 = vpop.f32.mrb[0].mxu0
    %v731 = vadd.f32 %v591, %v730
    %v732 = vpop.f32.mrb[0].mxu0
    %733 = vdwg.mxu0
    %734 = vst.msk [vmem:[#allocation2 + $0x20] sm:$0xff] %vm198, %v716
    %735 = vst.msk [vmem:[#allocation2 + $0x28] sm:$0xff] %vm198, %v721
    %736 = vst.msk [vmem:[#allocation2 + $0x30] sm:$0xff] %vm198, %v726
    %737 = vst.msk [vmem:[#allocation2 + $0x38] sm:$0xff] %vm198, %v731
    %v738 = vld [vmem:[#allocation2] sm:$0xff]
    %v739 = vld [vmem:[#allocation2 + $0x8] sm:$0xff]
    %v740 = vld [vmem:[#allocation2 + $0x10] sm:$0xff]
    %v741 = vld [vmem:[#allocation2 + $0x18] sm:$0xff]
    %v742 = vld [vmem:[#allocation2 + $0x20] sm:$0xff]
    %v743 = vld [vmem:[#allocation2 + $0x28] sm:$0xff]
    %v744 = vld [vmem:[#allocation2 + $0x30] sm:$0xff]
    %v745 = vld [vmem:[#allocation2 + $0x38] sm:$0xff]
    %v746 = vmax.f32 %v738, 0.0
    %v747 = vmax.f32 %v739, 0.0
    %v748 = vmax.f32 %v740, 0.0
    %v749 = vmax.f32 %v741, 0.0
    %v750 = vmax.f32 %v742, 0.0
    %v751 = vmax.f32 %v743, 0.0
    %v752 = vmax.f32 %v744, 0.0
    %v753 = vmax.f32 %v745, 0.0
    %v754 = vld [vmem:[%s7] sm:$0xff]
    %v755 = vld [vmem:[%s7 + $0x8] sm:$0xff]
    %v756 = vld [vmem:[%s7 + $0x10] sm:$0xff]
    %v757 = vld [vmem:[%s7 + $0x18] sm:$0xff]
    %v758 = vld [vmem:[%s7 + $0x20] sm:$0xff]
    %v759 = vld [vmem:[%s7 + $0x28] sm:$0xff]
    %v760 = vld [vmem:[%s7 + $0x30] sm:$0xff]
    %v761 = vld [vmem:[%s7 + $0x38] sm:$0xff]
    %v762 = vld [vmem:[%s8] sm:$0x1]
    %v764 = vlaneseq
    %v765 = vshrl.u32 %v764, 7
    %v766 = vsub.s32 0, %v765
    %v767 = vrot.slane %v762, %v766
    %v770 = vsel %vm198, %v746, 0
    %v773 = vsel %vm198, %v747, 0
    %v776 = vsel %vm198, %v748, 0
    %v779 = vsel %vm198, %v749, 0
    %v782 = vsel %vm198, %v750, 0
    %v785 = vsel %vm198, %v751, 0
    %v788 = vsel %vm198, %v752, 0
    %v791 = vsel %vm198, %v753, 0
    %v794 = vsel %vm198, %v754, 0
    %v797 = vsel %vm198, %v755, 0
    %v800 = vsel %vm198, %v756, 0
    %v803 = vsel %vm198, %v757, 0
    %v806 = vsel %vm198, %v758, 0
    %v809 = vsel %vm198, %v759, 0
    %v812 = vsel %vm198, %v760, 0
    %v815 = vsel %vm198, %v761, 0
    %817 = vmatprep.subr.mxu0 0.0
    %818 = vmatpush1.xpose.msra.mxu0 %v794
    %819 = vmatprep.subr.mxu0 0.0
    %820 = vmatpush1.xpose.msra.mxu0 %v797
    %821 = vmatprep.subr.mxu0 0.0
    %822 = vmatpush1.xpose.msra.mxu0 %v800
    %823 = vmatprep.subr.mxu0 0.0
    %824 = vmatpush1.xpose.msra.mxu0 %v803
    %825 = vmatprep.subr.mxu0 0.0
    %826 = vmatpush1.xpose.msra.mxu0 %v806
    %827 = vmatprep.subr.mxu0 0.0
    %828 = vmatpush1.xpose.msra.mxu0 %v809
    %829 = vmatprep.subr.mxu0 0.0
    %830 = vmatpush1.xpose.msra.mxu0 %v812
    %831 = vmatprep.subr.mxu0 0.0
    %832 = vmatpush1.xpose.msra.mxu0 %v815
    %833 = vmatprep.subr.mxu0 0.0
    %834 = vmatpush1.xpose.msra.mxu0 0.0
    %835 = vmatprep.subr.mxu0 0.0
    %836 = vmatpush1.xpose.msra.mxu0 0.0
    %837 = vmatprep.subr.mxu0 0.0
    %838 = vmatpush1.xpose.msra.mxu0 0.0
    %839 = vmatprep.subr.mxu0 0.0
    %840 = vmatpush1.xpose.msra.mxu0 0.0
    %841 = vmatprep.subr.mxu0 0.0
    %842 = vmatpush1.xpose.msra.mxu0 0.0
    %843 = vmatprep.subr.mxu0 0.0
    %844 = vmatpush1.xpose.msra.mxu0 0.0
    %845 = vmatprep.subr.mxu0 0.0
    %846 = vmatpush1.xpose.msra.mxu0 0.0
    %847 = vmatprep.subr.mxu0 0.0
    %848 = vmatpush1.xpose.msra.mxu0 0.0
    %849 = vmatprep.subr.mxu0 0.0
    %850 = vmatpush1.xpose.msra.mxu0 0.0
    %851 = vmatprep.subr.mxu0 0.0
    %852 = vmatpush1.xpose.msra.mxu0 0.0
    %853 = vmatprep.subr.mxu0 0.0
    %854 = vmatpush1.xpose.msra.mxu0 0.0
    %855 = vmatprep.subr.mxu0 0.0
    %856 = vmatpush1.xpose.msra.mxu0 0.0
    %857 = vmatprep.subr.mxu0 0.0
    %858 = vmatpush1.xpose.msra.mxu0 0.0
    %859 = vmatprep.subr.mxu0 0.0
    %860 = vmatpush1.xpose.msra.mxu0 0.0
    %861 = vmatprep.subr.mxu0 0.0
    %862 = vmatpush1.xpose.msra.mxu0 0.0
    %863 = vmatprep.subr.mxu0 0.0
    %864 = vmatpush1.xpose.msra.mxu0 0.0
    %865 = vmatprep.subr.mxu0 0.0
    %866 = vmatpush1.xpose.msra.mxu0 0.0
    %867 = vmatprep.subr.mxu0 0.0
    %868 = vmatpush1.xpose.msra.mxu0 0.0
    %869 = vmatprep.subr.mxu0 0.0
    %870 = vmatpush1.xpose.msra.mxu0 0.0
    %871 = vmatprep.subr.mxu0 0.0
    %872 = vmatpush1.xpose.msra.mxu0 0.0
    %873 = vmatprep.subr.mxu0 0.0
    %874 = vmatpush1.xpose.msra.mxu0 0.0
    %875 = vmatprep.subr.mxu0 0.0
    %876 = vmatpush1.xpose.msra.mxu0 0.0
    %877 = vmatprep.subr.mxu0 0.0
    %878 = vmatpush1.xpose.msra.mxu0 0.0
    %879 = vmatprep.subr.mxu0 0.0
    %880 = vmatpush1.xpose.msra.mxu0 0.0
    %881 = vmatprep.mubr.f32.mxu0 0.0
    %882 = vmatmul.mubr.f32.gmra.mrb[0].mxu0 %v770
    %v883 = vpop.f32.mrb[0].mxu0
    %v884 = vadd.f32 %v767, %v883
    %v885 = vpop.f32.mrb[0].mxu0
    %886 = vmatprep.mubr.f32.mxu0 0.0
    %887 = vmatmul.mubr.f32.gmra.mrb[0].mxu0 %v773
    %v888 = vpop.f32.mrb[0].mxu0
    %v889 = vadd.f32 %v767, %v888
    %v890 = vpop.f32.mrb[0].mxu0
    %891 = vmatprep.mubr.f32.mxu0 0.0
    %892 = vmatmul.mubr.f32.gmra.mrb[0].mxu0 %v776
    %v893 = vpop.f32.mrb[0].mxu0
    %v894 = vadd.f32 %v767, %v893
    %v895 = vpop.f32.mrb[0].mxu0
    %896 = vmatprep.mubr.f32.mxu0 0.0
    %897 = vmatmul.mubr.f32.gmra.mrb[0].mxu0 %v779
    %v898 = vpop.f32.mrb[0].mxu0
    %v899 = vadd.f32 %v767, %v898
    %v900 = vpop.f32.mrb[0].mxu0
    %901 = vmatprep.mubr.f32.mxu0 0.0
    %902 = vmatmul.mubr.f32.gmra.mrb[0].mxu0 %v782
    %v903 = vpop.f32.mrb[0].mxu0
    %v904 = vadd.f32 %v767, %v903
    %v905 = vpop.f32.mrb[0].mxu0
    %906 = vmatprep.mubr.f32.mxu0 0.0
    %907 = vmatmul.mubr.f32.gmra.mrb[0].mxu0 %v785
    %v908 = vpop.f32.mrb[0].mxu0
    %v909 = vadd.f32 %v767, %v908
    %v910 = vpop.f32.mrb[0].mxu0
    %911 = vmatprep.mubr.f32.mxu0 0.0
    %912 = vmatmul.mubr.f32.gmra.mrb[0].mxu0 %v788
    %v913 = vpop.f32.mrb[0].mxu0
    %v914 = vadd.f32 %v767, %v913
    %v915 = vpop.f32.mrb[0].mxu0
    %916 = vmatprep.mubr.f32.mxu0 0.0
    %917 = vmatmul.mubr.f32.gmra.mrb[0].mxu0 %v791
    %v918 = vpop.f32.mrb[0].mxu0
    %v919 = vadd.f32 %v767, %v918
    %v920 = vpop.f32.mrb[0].mxu0
    %921 = vdwg.mxu0
    %v922 = vld [vmem:[%s9] sm:$0xff]
    %v923 = vld [vmem:[%s9 + $0x8] sm:$0xff]
    %v924 = vld [vmem:[%s9 + $0x10] sm:$0xff]
    %v925 = vld [vmem:[%s9 + $0x18] sm:$0xff]
    %v926 = vld [vmem:[%s9 + $0x20] sm:$0xff]
    %v927 = vld [vmem:[%s9 + $0x28] sm:$0xff]
    %v928 = vld [vmem:[%s9 + $0x30] sm:$0xff]
    %v929 = vld [vmem:[%s9 + $0x38] sm:$0xff]
    %v930 = vld [vmem:[%s9 + $0x40] sm:$0xff]
    %v931 = vld [vmem:[%s9 + $0x48] sm:$0xff]
    %v932 = vld [vmem:[%s9 + $0x50] sm:$0xff]
    %v933 = vld [vmem:[%s9 + $0x58] sm:$0xff]
    %v934 = vld [vmem:[%s9 + $0x60] sm:$0xff]
    %v935 = vld [vmem:[%s9 + $0x68] sm:$0xff]
    %v936 = vld [vmem:[%s9 + $0x70] sm:$0xff]
    %v937 = vld [vmem:[%s9 + $0x78] sm:$0xff]
    %v938 = vld [vmem:[%s9 + $0x80] sm:$0xff]
    %v939 = vld [vmem:[%s9 + $0x88] sm:$0xff]
    %v940 = vld [vmem:[%s9 + $0x90] sm:$0xff]
    %v941 = vld [vmem:[%s9 + $0x98] sm:$0xff]
    %v942 = vld [vmem:[%s9 + $0xa0] sm:$0xff]
    %v943 = vld [vmem:[%s9 + $0xa8] sm:$0xff]
    %v944 = vld [vmem:[%s9 + $0xb0] sm:$0xff]
    %v945 = vld [vmem:[%s9 + $0xb8] sm:$0xff]
    %v946 = vld [vmem:[%s10] sm:$0x3]
    %v948 = vlaneseq
    %v949 = vshrl.u32 %v948, 7
    %v950 = vsub.s32 0, %v949
    %v951 = vrot.slane %v946, %v950
    %v952 = vlaneseq
    %v953 = vshrl.u32 %v952, 7
    %v954 = vsub.s32 1, %v953
    %v955 = vrot.slane %v946, %v954
    %vm958 = vcmask 523264
    %v960 = vsel %vm958, %v884, 0
    %v963 = vsel %vm958, %v889, 0
    %v966 = vsel %vm958, %v894, 0
    %v969 = vsel %vm958, %v899, 0
    %v972 = vsel %vm958, %v904, 0
    %v975 = vsel %vm958, %v909, 0
    %v978 = vsel %vm958, %v914, 0
    %v981 = vsel %vm958, %v919, 0
    %v984 = vsel %vm958, %v922, 0
    %v987 = vsel %vm958, %v923, 0
    %v990 = vsel %vm958, %v924, 0
    %v993 = vsel %vm958, %v925, 0
    %v996 = vsel %vm958, %v926, 0
    %v999 = vsel %vm958, %v927, 0
    %v1002 = vsel %vm958, %v928, 0
    %v1005 = vsel %vm958, %v929, 0
    %v1008 = vsel %vm958, %v930, 0
    %v1011 = vsel %vm958, %v931, 0
    %v1014 = vsel %vm958, %v932, 0
    %v1017 = vsel %vm958, %v933, 0
    %v1020 = vsel %vm958, %v934, 0
    %v1023 = vsel %vm958, %v935, 0
    %v1026 = vsel %vm958, %v936, 0
    %v1029 = vsel %vm958, %v937, 0
    %v1032 = vsel %vm958, %v938, 0
    %v1035 = vsel %vm958, %v939, 0
    %v1038 = vsel %vm958, %v940, 0
    %v1041 = vsel %vm958, %v941, 0
    %v1044 = vsel %vm958, %v942, 0
    %v1047 = vsel %vm958, %v943, 0
    %v1050 = vsel %vm958, %v944, 0
    %v1053 = vsel %vm958, %v945, 0
    %1055 = vmatprep.subr.mxu0 0.0
    %1056 = vmatpush1.xpose.msra.mxu0 %v984
    %1057 = vmatprep.subr.mxu0 0.0
    %1058 = vmatpush1.xpose.msra.mxu0 %v987
    %1059 = vmatprep.subr.mxu0 0.0
    %1060 = vmatpush1.xpose.msra.mxu0 %v990
    %1061 = vmatprep.subr.mxu0 0.0
    %1062 = vmatpush1.xpose.msra.mxu0 %v993
    %1063 = vmatprep.subr.mxu0 0.0
    %1064 = vmatpush1.xpose.msra.mxu0 %v996
    %1065 = vmatprep.subr.mxu0 0.0
    %1066 = vmatpush1.xpose.msra.mxu0 %v999
    %1067 = vmatprep.subr.mxu0 0.0
    %1068 = vmatpush1.xpose.msra.mxu0 %v1002
    %1069 = vmatprep.subr.mxu0 0.0
    %1070 = vmatpush1.xpose.msra.mxu0 %v1005
    %1071 = vmatprep.subr.mxu0 0.0
    %1072 = vmatpush1.xpose.msra.mxu0 %v1008
    %1073 = vmatprep.subr.mxu0 0.0
    %1074 = vmatpush1.xpose.msra.mxu0 %v1011
    %1075 = vmatprep.subr.mxu0 0.0
    %1076 = vmatpush1.xpose.msra.mxu0 %v1014
    %1077 = vmatprep.subr.mxu0 0.0
    %1078 = vmatpush1.xpose.msra.mxu0 %v1017
    %1079 = vmatprep.subr.mxu0 0.0
    %1080 = vmatpush1.xpose.msra.mxu0 %v1020
    %1081 = vmatprep.subr.mxu0 0.0
    %1082 = vmatpush1.xpose.msra.mxu0 %v1023
    %1083 = vmatprep.subr.mxu0 0.0
    %1084 = vmatpush1.xpose.msra.mxu0 %v1026
    %1085 = vmatprep.subr.mxu0 0.0
    %1086 = vmatpush1.xpose.msra.mxu0 %v1029
    %1087 = vmatprep.subr.mxu0 0.0
    %1088 = vmatpush1.xpose.msra.mxu0 %v1032
    %1089 = vmatprep.subr.mxu0 0.0
    %1090 = vmatpush1.xpose.msra.mxu0 %v1035
    %1091 = vmatprep.subr.mxu0 0.0
    %1092 = vmatpush1.xpose.msra.mxu0 %v1038
    %1093 = vmatprep.subr.mxu0 0.0
    %1094 = vmatpush1.xpose.msra.mxu0 %v1041
    %1095 = vmatprep.subr.mxu0 0.0
    %1096 = vmatpush1.xpose.msra.mxu0 %v1044
    %1097 = vmatprep.subr.mxu0 0.0
    %1098 = vmatpush1.xpose.msra.mxu0 %v1047
    %1099 = vmatprep.subr.mxu0 0.0
    %1100 = vmatpush1.xpose.msra.mxu0 %v1050
    %1101 = vmatprep.subr.mxu0 0.0
    %1102 = vmatpush1.xpose.msra.mxu0 %v1053
    %1103 = vmatprep.subr.mxu0 0.0
    %1104 = vmatpush1.xpose.msra.mxu0 0.0
    %1105 = vmatprep.subr.mxu0 0.0
    %1106 = vmatpush1.xpose.msra.mxu0 0.0
    %1107 = vmatprep.subr.mxu0 0.0
    %1108 = vmatpush1.xpose.msra.mxu0 0.0
    %1109 = vmatprep.subr.mxu0 0.0
    %1110 = vmatpush1.xpose.msra.mxu0 0.0
    %1111 = vmatprep.subr.mxu0 0.0
    %1112 = vmatpush1.xpose.msra.mxu0 0.0
    %1113 = vmatprep.subr.mxu0 0.0
    %1114 = vmatpush1.xpose.msra.mxu0 0.0
    %1115 = vmatprep.subr.mxu0 0.0
    %1116 = vmatpush1.xpose.msra.mxu0 0.0
    %1117 = vmatprep.subr.mxu0 0.0
    %1118 = vmatpush1.xpose.msra.mxu0 0.0
    %1119 = vmatprep.mubr.f32.mxu0 0.0
    %1120 = vmatmul.mubr.f32.gmra.mrb[0].mxu0 %v960
    %v1121 = vpop.f32.mrb[0].mxu0
    %v1122 = vadd.f32 %v951, %v1121
    %v1123 = vpop.f32.mrb[0].mxu0
    %v1124 = vadd.f32 %v955, %v1123
    %1125 = vmatprep.mubr.f32.mxu0 0.0
    %1126 = vmatmul.mubr.f32.gmra.mrb[0].mxu0 %v963
    %v1127 = vpop.f32.mrb[0].mxu0
    %v1128 = vadd.f32 %v951, %v1127
    %v1129 = vpop.f32.mrb[0].mxu0
    %v1130 = vadd.f32 %v955, %v1129
    %1131 = vmatprep.mubr.f32.mxu0 0.0
    %1132 = vmatmul.mubr.f32.gmra.mrb[0].mxu0 %v966
    %v1133 = vpop.f32.mrb[0].mxu0
    %v1134 = vadd.f32 %v951, %v1133
    %v1135 = vpop.f32.mrb[0].mxu0
    %v1136 = vadd.f32 %v955, %v1135
    %1137 = vmatprep.mubr.f32.mxu0 0.0
    %1138 = vmatmul.mubr.f32.gmra.mrb[0].mxu0 %v969
    %v1139 = vpop.f32.mrb[0].mxu0
    %v1140 = vadd.f32 %v951, %v1139
    %v1141 = vpop.f32.mrb[0].mxu0
    %v1142 = vadd.f32 %v955, %v1141
    %1143 = vmatprep.mubr.f32.mxu0 0.0
    %1144 = vmatmul.mubr.f32.gmra.mrb[0].mxu0 %v972
    %v1145 = vpop.f32.mrb[0].mxu0
    %v1146 = vadd.f32 %v951, %v1145
    %v1147 = vpop.f32.mrb[0].mxu0
    %v1148 = vadd.f32 %v955, %v1147
    %1149 = vmatprep.mubr.f32.mxu0 0.0
    %1150 = vmatmul.mubr.f32.gmra.mrb[0].mxu0 %v975
    %v1151 = vpop.f32.mrb[0].mxu0
    %v1152 = vadd.f32 %v951, %v1151
    %v1153 = vpop.f32.mrb[0].mxu0
    %v1154 = vadd.f32 %v955, %v1153
    %1155 = vmatprep.mubr.f32.mxu0 0.0
    %1156 = vmatmul.mubr.f32.gmra.mrb[0].mxu0 %v978
    %v1157 = vpop.f32.mrb[0].mxu0
    %v1158 = vadd.f32 %v951, %v1157
    %v1159 = vpop.f32.mrb[0].mxu0
    %v1160 = vadd.f32 %v955, %v1159
    %1161 = vmatprep.mubr.f32.mxu0 0.0
    %1162 = vmatmul.mubr.f32.gmra.mrb[0].mxu0 %v981
    %v1163 = vpop.f32.mrb[0].mxu0
    %v1164 = vadd.f32 %v951, %v1163
    %v1165 = vpop.f32.mrb[0].mxu0
    %v1166 = vadd.f32 %v955, %v1165
    %1167 = vdwg.mxu0
    %v1168 = vmul.f32 %v1122, 0.25
    %v1169 = vmul.f32 %v1128, 0.25
    %v1170 = vmul.f32 %v1134, 0.25
    %v1171 = vmul.f32 %v1140, 0.25
    %v1172 = vmul.f32 %v1146, 0.25
    %v1173 = vmul.f32 %v1152, 0.25
    %v1174 = vmul.f32 %v1158, 0.25
    %v1175 = vmul.f32 %v1164, 0.25
    %1180 = vrot.lane.b32.xlu0 %v1122, 64
    %v1181 = vpop.permute.xlu0 %1180
    %1182 = vrot.lane.b32.xlu0 %v1128, 64
    %v1183 = vpop.permute.xlu0 %1182
    %1184 = vrot.lane.b32.xlu0 %v1134, 64
    %v1185 = vpop.permute.xlu0 %1184
    %1186 = vrot.lane.b32.xlu0 %v1140, 64
    %v1187 = vpop.permute.xlu0 %1186
    %v1189 = vsel %vm285, %v1168, 0
    %v1192 = vsel %vm285, %v1169, 0
    %v1195 = vsel %vm285, %v1170, 0
    %v1198 = vsel %vm285, %v1171, 0
    %v1200 = vsel %vm285, %v1181, 0
    %v1202 = vsel %vm285, %v1183, 0
    %v1204 = vsel %vm285, %v1185, 0
    %v1206 = vsel %vm285, %v1187, 0
    %1208 = vmatprep.subr.mxu0 0.0
    %1209 = vmatpush1.xpose.msra.mxu0 %v1200
    %1210 = vmatprep.subr.mxu0 0.0
    %1211 = vmatpush1.xpose.msra.mxu0 %v1202
    %1212 = vmatprep.subr.mxu0 0.0
    %1213 = vmatpush1.xpose.msra.mxu0 %v1204
    %1214 = vmatprep.subr.mxu0 0.0
    %1215 = vmatpush1.xpose.msra.mxu0 %v1206
    %1216 = vmatprep.subr.mxu0 0.0
    %1217 = vmatpush1.xpose.msra.mxu0 0.0
    %1218 = vmatprep.subr.mxu0 0.0
    %1219 = vmatpush1.xpose.msra.mxu0 0.0
    %1220 = vmatprep.subr.mxu0 0.0
    %1221 = vmatpush1.xpose.msra.mxu0 0.0
    %1222 = vmatprep.subr.mxu0 0.0
    %1223 = vmatpush1.xpose.msra.mxu0 0.0
    %1224 = vmatprep.subr.mxu0 0.0
    %1225 = vmatpush1.xpose.msra.mxu0 0.0
    %1226 = vmatprep.subr.mxu0 0.0
    %1227 = vmatpush1.xpose.msra.mxu0 0.0
    %1228 = vmatprep.subr.mxu0 0.0
    %1229 = vmatpush1.xpose.msra.mxu0 0.0
    %1230 = vmatprep.subr.mxu0 0.0
    %1231 = vmatpush1.xpose.msra.mxu0 0.0
    %1232 = vmatprep.subr.mxu0 0.0
    %1233 = vmatpush1.xpose.msra.mxu0 0.0
    %1234 = vmatprep.subr.mxu0 0.0
    %1235 = vmatpush1.xpose.msra.mxu0 0.0
    %1236 = vmatprep.subr.mxu0 0.0
    %1237 = vmatpush1.xpose.msra.mxu0 0.0
    %1238 = vmatprep.subr.mxu0 0.0
    %1239 = vmatpush1.xpose.msra.mxu0 0.0
    %1240 = vmatprep.subr.mxu0 0.0
    %1241 = vmatpush1.xpose.msra.mxu0 0.0
    %1242 = vmatprep.subr.mxu0 0.0
    %1243 = vmatpush1.xpose.msra.mxu0 0.0
    %1244 = vmatprep.subr.mxu0 0.0
    %1245 = vmatpush1.xpose.msra.mxu0 0.0
    %1246 = vmatprep.subr.mxu0 0.0
    %1247 = vmatpush1.xpose.msra.mxu0 0.0
    %1248 = vmatprep.subr.mxu0 0.0
    %1249 = vmatpush1.xpose.msra.mxu0 0.0
    %1250 = vmatprep.subr.mxu0 0.0
    %1251 = vmatpush1.xpose.msra.mxu0 0.0
    %1252 = vmatprep.subr.mxu0 0.0
    %1253 = vmatpush1.xpose.msra.mxu0 0.0
    %1254 = vmatprep.subr.mxu0 0.0
    %1255 = vmatpush1.xpose.msra.mxu0 0.0
    %1256 = vmatprep.subr.mxu0 0.0
    %1257 = vmatpush1.xpose.msra.mxu0 0.0
    %1258 = vmatprep.subr.mxu0 0.0
    %1259 = vmatpush1.xpose.msra.mxu0 0.0
    %1260 = vmatprep.subr.mxu0 0.0
    %1261 = vmatpush1.xpose.msra.mxu0 0.0
    %1262 = vmatprep.subr.mxu0 0.0
    %1263 = vmatpush1.xpose.msra.mxu0 0.0
    %1264 = vmatprep.subr.mxu0 0.0
    %1265 = vmatpush1.xpose.msra.mxu0 0.0
    %1266 = vmatprep.subr.mxu0 0.0
    %1267 = vmatpush1.xpose.msra.mxu0 0.0
    %1268 = vmatprep.subr.mxu0 0.0
    %1269 = vmatpush1.xpose.msra.mxu0 0.0
    %1270 = vmatprep.subr.mxu0 0.0
    %1271 = vmatpush1.xpose.msra.mxu0 0.0
    %1272 = vmatprep.mubr.f32.mxu0 0.0
    %1273 = vmatmul.mubr.f32.gmra.mrb[0].mxu0 %v1189
    %v1274 = vpop.f32.mrb[0].mxu0
    %v1275 = vadd.f32 0.0, %v1274
    %v1276 = vpop.f32.mrb[0].mxu0
    %1277 = vmatprep.mubr.f32.mxu0 0.0
    %1278 = vmatmul.mubr.f32.gmra.mrb[0].mxu0 %v1192
    %v1279 = vpop.f32.mrb[0].mxu0
    %v1280 = vadd.f32 0.0, %v1279
    %v1281 = vpop.f32.mrb[0].mxu0
    %1282 = vmatprep.mubr.f32.mxu0 0.0
    %1283 = vmatmul.mubr.f32.gmra.mrb[0].mxu0 %v1195
    %v1284 = vpop.f32.mrb[0].mxu0
    %v1285 = vadd.f32 0.0, %v1284
    %v1286 = vpop.f32.mrb[0].mxu0
    %1287 = vmatprep.mubr.f32.mxu0 0.0
    %1288 = vmatmul.mubr.f32.gmra.mrb[0].mxu0 %v1198
    %v1289 = vpop.f32.mrb[0].mxu0
    %v1290 = vadd.f32 0.0, %v1289
    %v1291 = vpop.f32.mrb[0].mxu0
    %1292 = vdwg.mxu0
    %v1293 = vsel %vm198, %v1275, -inf
    %1294 = vmax.xlane.f32.xlu0 %v1293
    %v1295 = vpop.xlane.xlu0 %1294
    %v1296 = vsel %vm198, %v1280, -inf
    %1297 = vmax.xlane.f32.xlu0 %v1296
    %v1298 = vpop.xlane.xlu0 %1297
    %v1299 = vsel %vm198, %v1285, -inf
    %1300 = vmax.xlane.f32.xlu0 %v1299
    %v1301 = vpop.xlane.xlu0 %1300
    %v1302 = vsel %vm198, %v1290, -inf
    %1303 = vmax.xlane.f32.xlu0 %v1302
    %v1304 = vpop.xlane.xlu0 %1303
    %v1305 = vsub.f32 %v1275, %v1295
    %v1306 = vsub.f32 %v1280, %v1298
    %v1307 = vsub.f32 %v1285, %v1301
    %v1308 = vsub.f32 %v1290, %v1304
    %v1309 = vmul.f32 %v1305, 1.442695
    %v1310 = vpow.pop %v1309
    %v1311 = vmul.f32 %v1306, 1.442695
    %v1312 = vpow.pop %v1311
    %v1313 = vmul.f32 %v1307, 1.442695
    %v1314 = vpow.pop %v1313
    %v1315 = vmul.f32 %v1308, 1.442695
    %v1316 = vpow.pop %v1315
    %v1317 = vsel %vm198, %v1310, 0.0
    %1318 = vadd.xlane.f32.xlu0 %v1317
    %v1319 = vpop.xlane.xlu0 %1318
    %v1320 = vsel %vm198, %v1312, 0.0
    %1321 = vadd.xlane.f32.xlu0 %v1320
    %v1322 = vpop.xlane.xlu0 %1321
    %v1323 = vsel %vm198, %v1314, 0.0
    %1324 = vadd.xlane.f32.xlu0 %v1323
    %v1325 = vpop.xlane.xlu0 %1324
    %v1326 = vsel %vm198, %v1316, 0.0
    %1327 = vadd.xlane.f32.xlu0 %v1326
    %v1328 = vpop.xlane.xlu0 %1327
    %v1329 = vrcp.pop %v1319
    %v1330 = vrcp.pop %v1322
    %v1331 = vrcp.pop %v1325
    %v1332 = vrcp.pop %v1328
    %v1333 = vmul.f32 %v1310, %v1329
    %v1334 = vmul.f32 %v1312, %v1330
    %v1335 = vmul.f32 %v1314, %v1331
    %v1336 = vmul.f32 %v1316, %v1332
    %v1338 = vsel %vm198, %v1333, 0
    %v1341 = vsel %vm198, %v1334, 0
    %v1344 = vsel %vm198, %v1335, 0
    %v1347 = vsel %vm198, %v1336, 0
    %1349 = vmatprep.subr.mxu0 0.0
    %1350 = vmatpush1.msra.mxu0 %v1124
    %1351 = vmatprep.subr.mxu0 0.0
    %1352 = vmatpush1.msra.mxu0 %v1130
    %1353 = vmatprep.subr.mxu0 0.0
    %1354 = vmatpush1.msra.mxu0 %v1136
    %1355 = vmatprep.subr.mxu0 0.0
    %1356 = vmatpush1.msra.mxu0 %v1142
    %1357 = vmatprep.subr.mxu0 0.0
    %1358 = vmatpush1.msra.mxu0 0.0
    %1359 = vmatprep.subr.mxu0 0.0
    %1360 = vmatpush1.msra.mxu0 0.0
    %1361 = vmatprep.subr.mxu0 0.0
    %1362 = vmatpush1.msra.mxu0 0.0
    %1363 = vmatprep.subr.mxu0 0.0
    %1364 = vmatpush1.msra.mxu0 0.0
    %1365 = vmatprep.subr.mxu0 0.0
    %1366 = vmatpush1.msra.mxu0 0.0
    %1367 = vmatprep.subr.mxu0 0.0
    %1368 = vmatpush1.msra.mxu0 0.0
    %1369 = vmatprep.subr.mxu0 0.0
    %1370 = vmatpush1.msra.mxu0 0.0
    %1371 = vmatprep.subr.mxu0 0.0
    %1372 = vmatpush1.msra.mxu0 0.0
    %1373 = vmatprep.subr.mxu0 0.0
    %1374 = vmatpush1.msra.mxu0 0.0
    %1375 = vmatprep.subr.mxu0 0.0
    %1376 = vmatpush1.msra.mxu0 0.0
    %1377 = vmatprep.subr.mxu0 0.0
    %1378 = vmatpush1.msra.mxu0 0.0
    %1379 = vmatprep.subr.mxu0 0.0
    %1380 = vmatpush1.msra.mxu0 0.0
    %1381 = vmatprep.subr.mxu0 0.0
    %1382 = vmatpush1.msra.mxu0 0.0
    %1383 = vmatprep.subr.mxu0 0.0
    %1384 = vmatpush1.msra.mxu0 0.0
    %1385 = vmatprep.subr.mxu0 0.0
    %1386 = vmatpush1.msra.mxu0 0.0
    %1387 = vmatprep.subr.mxu0 0.0
    %1388 = vmatpush1.msra.mxu0 0.0
    %1389 = vmatprep.subr.mxu0 0.0
    %1390 = vmatpush1.msra.mxu0 0.0
    %1391 = vmatprep.subr.mxu0 0.0
    %1392 = vmatpush1.msra.mxu0 0.0
    %1393 = vmatprep.subr.mxu0 0.0
    %1394 = vmatpush1.msra.mxu0 0.0
    %1395 = vmatprep.subr.mxu0 0.0
    %1396 = vmatpush1.msra.mxu0 0.0
    %1397 = vmatprep.subr.mxu0 0.0
    %1398 = vmatpush1.msra.mxu0 0.0
    %1399 = vmatprep.subr.mxu0 0.0
    %1400 = vmatpush1.msra.mxu0 0.0
    %1401 = vmatprep.subr.mxu0 0.0
    %1402 = vmatpush1.msra.mxu0 0.0
    %1403 = vmatprep.subr.mxu0 0.0
    %1404 = vmatpush1.msra.mxu0 0.0
    %1405 = vmatprep.subr.mxu0 0.0
    %1406 = vmatpush1.msra.mxu0 0.0
    %1407 = vmatprep.subr.mxu0 0.0
    %1408 = vmatpush1.msra.mxu0 0.0
    %1409 = vmatprep.subr.mxu0 0.0
    %1410 = vmatpush1.msra.mxu0 0.0
    %1411 = vmatprep.subr.mxu0 0.0
    %1412 = vmatpush1.msra.mxu0 0.0
    %1413 = vmatprep.mubr.f32.mxu0 0.0
    %1414 = vmatmul.mubr.f32.gmra.mrb[0].mxu0 %v1338
    %v1415 = vpop.f32.mrb[0].mxu0
    %v1416 = vadd.f32 0.0, %v1415
    %v1417 = vpop.f32.mrb[0].mxu0
    %1418 = vmatprep.mubr.f32.mxu0 0.0
    %1419 = vmatmul.mubr.f32.gmra.mrb[0].mxu0 %v1341
    %v1420 = vpop.f32.mrb[0].mxu0
    %v1421 = vadd.f32 0.0, %v1420
    %v1422 = vpop.f32.mrb[0].mxu0
    %1423 = vmatprep.mubr.f32.mxu0 0.0
    %1424 = vmatmul.mubr.f32.gmra.mrb[0].mxu0 %v1344
    %v1425 = vpop.f32.mrb[0].mxu0
    %v1426 = vadd.f32 0.0, %v1425
    %v1427 = vpop.f32.mrb[0].mxu0
    %1428 = vmatprep.mubr.f32.mxu0 0.0
    %1429 = vmatmul.mubr.f32.gmra.mrb[0].mxu0 %v1347
    %v1430 = vpop.f32.mrb[0].mxu0
    %v1431 = vadd.f32 0.0, %v1430
    %v1432 = vpop.f32.mrb[0].mxu0
    %1433 = vdwg.mxu0
    %1434 = vst.msk [vmem:[#allocation3] sm:$0xff] %vm285, %v1416
    %1435 = vst.msk [vmem:[#allocation3 + $0x8] sm:$0xff] %vm285, %v1421
    %1436 = vst.msk [vmem:[#allocation3 + $0x10] sm:$0xff] %vm285, %v1426
    %1437 = vst.msk [vmem:[#allocation3 + $0x18] sm:$0xff] %vm285, %v1431
    %1438 = vrot.lane.b32.xlu0 %v1168, 112
    %v1439 = vpop.permute.xlu0 %1438
    %1440 = vrot.lane.b32.xlu0 %v1169, 112
    %v1441 = vpop.permute.xlu0 %1440
    %1442 = vrot.lane.b32.xlu0 %v1170, 112
    %v1443 = vpop.permute.xlu0 %1442
    %1444 = vrot.lane.b32.xlu0 %v1171, 112
    %v1445 = vpop.permute.xlu0 %1444
    %1446 = vrot.lane.b32.xlu0 %v1122, 48
    %v1447 = vpop.permute.xlu0 %1446
    %1448 = vrot.lane.b32.xlu0 %v1128, 48
    %v1449 = vpop.permute.xlu0 %1448
    %1450 = vrot.lane.b32.xlu0 %v1134, 48
    %v1451 = vpop.permute.xlu0 %1450
    %1452 = vrot.lane.b32.xlu0 %v1140, 48
    %v1453 = vpop.permute.xlu0 %1452
    %v1454 = vsel %vm285, %v1439, 0
    %v1456 = vsel %vm285, %v1441, 0
    %v1458 = vsel %vm285, %v1443, 0
    %v1460 = vsel %vm285, %v1445, 0
    %v1462 = vsel %vm285, %v1447, 0
    %v1464 = vsel %vm285, %v1449, 0
    %v1466 = vsel %vm285, %v1451, 0
    %v1468 = vsel %vm285, %v1453, 0
    %1470 = vmatprep.subr.mxu0 0.0
    %1471 = vmatpush1.xpose.msra.mxu0 %v1462
    %1472 = vmatprep.subr.mxu0 0.0
    %1473 = vmatpush1.xpose.msra.mxu0 %v1464
    %1474 = vmatprep.subr.mxu0 0.0
    %1475 = vmatpush1.xpose.msra.mxu0 %v1466
    %1476 = vmatprep.subr.mxu0 0.0
    %1477 = vmatpush1.xpose.msra.mxu0 %v1468
    %1478 = vmatprep.subr.mxu0 0.0
    %1479 = vmatpush1.xpose.msra.mxu0 0.0
    %1480 = vmatprep.subr.mxu0 0.0
    %1481 = vmatpush1.xpose.msra.mxu0 0.0
    %1482 = vmatprep.subr.mxu0 0.0
    %1483 = vmatpush1.xpose.msra.mxu0 0.0
    %1484 = vmatprep.subr.mxu0 0.0
    %1485 = vmatpush1.xpose.msra.mxu0 0.0
    %1486 = vmatprep.subr.mxu0 0.0
    %1487 = vmatpush1.xpose.msra.mxu0 0.0
    %1488 = vmatprep.subr.mxu0 0.0
    %1489 = vmatpush1.xpose.msra.mxu0 0.0
    %1490 = vmatprep.subr.mxu0 0.0
    %1491 = vmatpush1.xpose.msra.mxu0 0.0
    %1492 = vmatprep.subr.mxu0 0.0
    %1493 = vmatpush1.xpose.msra.mxu0 0.0
    %1494 = vmatprep.subr.mxu0 0.0
    %1495 = vmatpush1.xpose.msra.mxu0 0.0
    %1496 = vmatprep.subr.mxu0 0.0
    %1497 = vmatpush1.xpose.msra.mxu0 0.0
    %1498 = vmatprep.subr.mxu0 0.0
    %1499 = vmatpush1.xpose.msra.mxu0 0.0
    %1500 = vmatprep.subr.mxu0 0.0
    %1501 = vmatpush1.xpose.msra.mxu0 0.0
    %1502 = vmatprep.subr.mxu0 0.0
    %1503 = vmatpush1.xpose.msra.mxu0 0.0
    %1504 = vmatprep.subr.mxu0 0.0
    %1505 = vmatpush1.xpose.msra.mxu0 0.0
    %1506 = vmatprep.subr.mxu0 0.0
    %1507 = vmatpush1.xpose.msra.mxu0 0.0
    %1508 = vmatprep.subr.mxu0 0.0
    %1509 = vmatpush1.xpose.msra.mxu0 0.0
    %1510 = vmatprep.subr.mxu0 0.0
    %1511 = vmatpush1.xpose.msra.mxu0 0.0
    %1512 = vmatprep.subr.mxu0 0.0
    %1513 = vmatpush1.xpose.msra.mxu0 0.0
    %1514 = vmatprep.subr.mxu0 0.0
    %1515 = vmatpush1.xpose.msra.mxu0 0.0
    %1516 = vmatprep.subr.mxu0 0.0
    %1517 = vmatpush1.xpose.msra.mxu0 0.0
    %1518 = vmatprep.subr.mxu0 0.0
    %1519 = vmatpush1.xpose.msra.mxu0 0.0
    %1520 = vmatprep.subr.mxu0 0.0
    %1521 = vmatpush1.xpose.msra.mxu0 0.0
    %1522 = vmatprep.subr.mxu0 0.0
    %1523 = vmatpush1.xpose.msra.mxu0 0.0
    %1524 = vmatprep.subr.mxu0 0.0
    %1525 = vmatpush1.xpose.msra.mxu0 0.0
    %1526 = vmatprep.subr.mxu0 0.0
    %1527 = vmatpush1.xpose.msra.mxu0 0.0
    %1528 = vmatprep.subr.mxu0 0.0
    %1529 = vmatpush1.xpose.msra.mxu0 0.0
    %1530 = vmatprep.subr.mxu0 0.0
    %1531 = vmatpush1.xpose.msra.mxu0 0.0
    %1532 = vmatprep.subr.mxu0 0.0
    %1533 = vmatpush1.xpose.msra.mxu0 0.0
    %1534 = vmatprep.mubr.f32.mxu0 0.0
    %1535 = vmatmul.mubr.f32.gmra.mrb[0].mxu0 %v1454
    %v1536 = vpop.f32.mrb[0].mxu0
    %v1537 = vadd.f32 0.0, %v1536
    %v1538 = vpop.f32.mrb[0].mxu0
    %1539 = vmatprep.mubr.f32.mxu0 0.0
    %1540 = vmatmul.mubr.f32.gmra.mrb[0].mxu0 %v1456
    %v1541 = vpop.f32.mrb[0].mxu0
    %v1542 = vadd.f32 0.0, %v1541
    %v1543 = vpop.f32.mrb[0].mxu0
    %1544 = vmatprep.mubr.f32.mxu0 0.0
    %1545 = vmatmul.mubr.f32.gmra.mrb[0].mxu0 %v1458
    %v1546 = vpop.f32.mrb[0].mxu0
    %v1547 = vadd.f32 0.0, %v1546
    %v1548 = vpop.f32.mrb[0].mxu0
    %1549 = vmatprep.mubr.f32.mxu0 0.0
    %1550 = vmatmul.mubr.f32.gmra.mrb[0].mxu0 %v1460
    %v1551 = vpop.f32.mrb[0].mxu0
    %v1552 = vadd.f32 0.0, %v1551
    %v1553 = vpop.f32.mrb[0].mxu0
    %1554 = vdwg.mxu0
    %v1555 = vsel %vm198, %v1537, -inf
    %1556 = vmax.xlane.f32.xlu0 %v1555
    %v1557 = vpop.xlane.xlu0 %1556
    %v1558 = vsel %vm198, %v1542, -inf
    %1559 = vmax.xlane.f32.xlu0 %v1558
    %v1560 = vpop.xlane.xlu0 %1559
    %v1561 = vsel %vm198, %v1547, -inf
    %1562 = vmax.xlane.f32.xlu0 %v1561
    %v1563 = vpop.xlane.xlu0 %1562
    %v1564 = vsel %vm198, %v1552, -inf
    %1565 = vmax.xlane.f32.xlu0 %v1564
    %v1566 = vpop.xlane.xlu0 %1565
    %v1567 = vsub.f32 %v1537, %v1557
    %v1568 = vsub.f32 %v1542, %v1560
    %v1569 = vsub.f32 %v1547, %v1563
    %v1570 = vsub.f32 %v1552, %v1566
    %v1571 = vmul.f32 %v1567, 1.442695
    %v1572 = vpow.pop %v1571
    %v1573 = vmul.f32 %v1568, 1.442695
    %v1574 = vpow.pop %v1573
    %v1575 = vmul.f32 %v1569, 1.442695
    %v1576 = vpow.pop %v1575
    %v1577 = vmul.f32 %v1570, 1.442695
    %v1578 = vpow.pop %v1577
    %v1579 = vsel %vm198, %v1572, 0.0
    %1580 = vadd.xlane.f32.xlu0 %v1579
    %v1581 = vpop.xlane.xlu0 %1580
    %v1582 = vsel %vm198, %v1574, 0.0
    %1583 = vadd.xlane.f32.xlu0 %v1582
    %v1584 = vpop.xlane.xlu0 %1583
    %v1585 = vsel %vm198, %v1576, 0.0
    %1586 = vadd.xlane.f32.xlu0 %v1585
    %v1587 = vpop.xlane.xlu0 %1586
    %v1588 = vsel %vm198, %v1578, 0.0
    %1589 = vadd.xlane.f32.xlu0 %v1588
    %v1590 = vpop.xlane.xlu0 %1589
    %v1591 = vrcp.pop %v1581
    %v1592 = vrcp.pop %v1584
    %v1593 = vrcp.pop %v1587
    %v1594 = vrcp.pop %v1590
    %v1595 = vmul.f32 %v1572, %v1591
    %v1596 = vmul.f32 %v1574, %v1592
    %v1597 = vmul.f32 %v1576, %v1593
    %v1598 = vmul.f32 %v1578, %v1594
    %1603 = vrot.lane.b32.xlu0 %v1124, 112
    %v1604 = vpop.permute.xlu0 %1603
    %1605 = vrot.lane.b32.xlu0 %v1130, 112
    %v1606 = vpop.permute.xlu0 %1605
    %1607 = vrot.lane.b32.xlu0 %v1136, 112
    %v1608 = vpop.permute.xlu0 %1607
    %1609 = vrot.lane.b32.xlu0 %v1142, 112
    %v1610 = vpop.permute.xlu0 %1609
    %v1616 = vsel %vm198, %v1595, 0
    %v1619 = vsel %vm198, %v1596, 0
    %v1622 = vsel %vm198, %v1597, 0
    %v1625 = vsel %vm198, %v1598, 0
    %1627 = vmatprep.subr.mxu0 0.0
    %1628 = vmatpush1.msra.mxu0 %v1604
    %1629 = vmatprep.subr.mxu0 0.0
    %1630 = vmatpush1.msra.mxu0 %v1606
    %1631 = vmatprep.subr.mxu0 0.0
    %1632 = vmatpush1.msra.mxu0 %v1608
    %1633 = vmatprep.subr.mxu0 0.0
    %1634 = vmatpush1.msra.mxu0 %v1610
    %1635 = vmatprep.subr.mxu0 0.0
    %1636 = vmatpush1.msra.mxu0 0.0
    %1637 = vmatprep.subr.mxu0 0.0
    %1638 = vmatpush1.msra.mxu0 0.0
    %1639 = vmatprep.subr.mxu0 0.0
    %1640 = vmatpush1.msra.mxu0 0.0
    %1641 = vmatprep.subr.mxu0 0.0
    %1642 = vmatpush1.msra.mxu0 0.0
    %1643 = vmatprep.subr.mxu0 0.0
    %1644 = vmatpush1.msra.mxu0 0.0
    %1645 = vmatprep.subr.mxu0 0.0
    %1646 = vmatpush1.msra.mxu0 0.0
    %1647 = vmatprep.subr.mxu0 0.0
    %1648 = vmatpush1.msra.mxu0 0.0
    %1649 = vmatprep.subr.mxu0 0.0
    %1650 = vmatpush1.msra.mxu0 0.0
    %1651 = vmatprep.subr.mxu0 0.0
    %1652 = vmatpush1.msra.mxu0 0.0
    %1653 = vmatprep.subr.mxu0 0.0
    %1654 = vmatpush1.msra.mxu0 0.0
    %1655 = vmatprep.subr.mxu0 0.0
    %1656 = vmatpush1.msra.mxu0 0.0
    %1657 = vmatprep.subr.mxu0 0.0
    %1658 = vmatpush1.msra.mxu0 0.0
    %1659 = vmatprep.subr.mxu0 0.0
    %1660 = vmatpush1.msra.mxu0 0.0
    %1661 = vmatprep.subr.mxu0 0.0
    %1662 = vmatpush1.msra.mxu0 0.0
    %1663 = vmatprep.subr.mxu0 0.0
    %1664 = vmatpush1.msra.mxu0 0.0
    %1665 = vmatprep.subr.mxu0 0.0
    %1666 = vmatpush1.msra.mxu0 0.0
    %1667 = vmatprep.subr.mxu0 0.0
    %1668 = vmatpush1.msra.mxu0 0.0
    %1669 = vmatprep.subr.mxu0 0.0
    %1670 = vmatpush1.msra.mxu0 0.0
    %1671 = vmatprep.subr.mxu0 0.0
    %1672 = vmatpush1.msra.mxu0 0.0
    %1673 = vmatprep.subr.mxu0 0.0
    %1674 = vmatpush1.msra.mxu0 0.0
    %1675 = vmatprep.subr.mxu0 0.0
    %1676 = vmatpush1.msra.mxu0 0.0
    %1677 = vmatprep.subr.mxu0 0.0
    %1678 = vmatpush1.msra.mxu0 0.0
    %1679 = vmatprep.subr.mxu0 0.0
    %1680 = vmatpush1.msra.mxu0 0.0
    %1681 = vmatprep.subr.mxu0 0.0
    %1682 = vmatpush1.msra.mxu0 0.0
    %1683 = vmatprep.subr.mxu0 0.0
    %1684 = vmatpush1.msra.mxu0 0.0
    %1685 = vmatprep.subr.mxu0 0.0
    %1686 = vmatpush1.msra.mxu0 0.0
    %1687 = vmatprep.subr.mxu0 0.0
    %1688 = vmatpush1.msra.mxu0 0.0
    %1689 = vmatprep.subr.mxu0 0.0
    %1690 = vmatpush1.msra.mxu0 0.0
    %1691 = vmatprep.mubr.f32.mxu0 0.0
    %1692 = vmatmul.mubr.f32.gmra.mrb[0].mxu0 %v1616
    %v1693 = vpop.f32.mrb[0].mxu0
    %v1694 = vadd.f32 0.0, %v1693
    %v1695 = vpop.f32.mrb[0].mxu0
    %1696 = vmatprep.mubr.f32.mxu0 0.0
    %1697 = vmatmul.mubr.f32.gmra.mrb[0].mxu0 %v1619
    %v1698 = vpop.f32.mrb[0].mxu0
    %v1699 = vadd.f32 0.0, %v1698
    %v1700 = vpop.f32.mrb[0].mxu0
    %1701 = vmatprep.mubr.f32.mxu0 0.0
    %1702 = vmatmul.mubr.f32.gmra.mrb[0].mxu0 %v1622
    %v1703 = vpop.f32.mrb[0].mxu0
    %v1704 = vadd.f32 0.0, %v1703
    %v1705 = vpop.f32.mrb[0].mxu0
    %1706 = vmatprep.mubr.f32.mxu0 0.0
    %1707 = vmatmul.mubr.f32.gmra.mrb[0].mxu0 %v1625
    %v1708 = vpop.f32.mrb[0].mxu0
    %v1709 = vadd.f32 0.0, %v1708
    %v1710 = vpop.f32.mrb[0].mxu0
    %1711 = vdwg.mxu0
    %1716 = vrot.lane.b32.xlu0 %v1694, 16
    %v1717 = vpop.permute.xlu0 %1716
    %1718 = vrot.lane.b32.xlu0 %v1699, 16
    %v1719 = vpop.permute.xlu0 %1718
    %1720 = vrot.lane.b32.xlu0 %v1704, 16
    %v1721 = vpop.permute.xlu0 %1720
    %1722 = vrot.lane.b32.xlu0 %v1709, 16
    %v1723 = vpop.permute.xlu0 %1722
    %vm1728 = vcmask 261248
    %1729 = vst.msk [vmem:[#allocation3] sm:$0xff] %vm1728, %v1717
    %1730 = vst.msk [vmem:[#allocation3 + $0x8] sm:$0xff] %vm1728, %v1719
    %1731 = vst.msk [vmem:[#allocation3 + $0x10] sm:$0xff] %vm1728, %v1721
    %1732 = vst.msk [vmem:[#allocation3 + $0x18] sm:$0xff] %vm1728, %v1723
    %1733 = vrot.lane.b32.xlu0 %v1168, 96
    %v1734 = vpop.permute.xlu0 %1733
    %1735 = vrot.lane.b32.xlu0 %v1169, 96
    %v1736 = vpop.permute.xlu0 %1735
    %1737 = vrot.lane.b32.xlu0 %v1170, 96
    %v1738 = vpop.permute.xlu0 %1737
    %1739 = vrot.lane.b32.xlu0 %v1171, 96
    %v1740 = vpop.permute.xlu0 %1739
    %1741 = vrot.lane.b32.xlu0 %v1122, 32
    %v1742 = vpop.permute.xlu0 %1741
    %1743 = vrot.lane.b32.xlu0 %v1128, 32
    %v1744 = vpop.permute.xlu0 %1743
    %1745 = vrot.lane.b32.xlu0 %v1134, 32
    %v1746 = vpop.permute.xlu0 %1745
    %1747 = vrot.lane.b32.xlu0 %v1140, 32
    %v1748 = vpop.permute.xlu0 %1747
    %v1749 = vsel %vm285, %v1734, 0
    %v1751 = vsel %vm285, %v1736, 0
    %v1753 = vsel %vm285, %v1738, 0
    %v1755 = vsel %vm285, %v1740, 0
    %v1757 = vsel %vm285, %v1742, 0
    %v1759 = vsel %vm285, %v1744, 0
    %v1761 = vsel %vm285, %v1746, 0
    %v1763 = vsel %vm285, %v1748, 0
    %1765 = vmatprep.subr.mxu0 0.0
    %1766 = vmatpush1.xpose.msra.mxu0 %v1757
    %1767 = vmatprep.subr.mxu0 0.0
    %1768 = vmatpush1.xpose.msra.mxu0 %v1759
    %1769 = vmatprep.subr.mxu0 0.0
    %1770 = vmatpush1.xpose.msra.mxu0 %v1761
    %1771 = vmatprep.subr.mxu0 0.0
    %1772 = vmatpush1.xpose.msra.mxu0 %v1763
    %1773 = vmatprep.subr.mxu0 0.0
    %1774 = vmatpush1.xpose.msra.mxu0 0.0
    %1775 = vmatprep.subr.mxu0 0.0
    %1776 = vmatpush1.xpose.msra.mxu0 0.0
    %1777 = vmatprep.subr.mxu0 0.0
    %1778 = vmatpush1.xpose.msra.mxu0 0.0
    %1779 = vmatprep.subr.mxu0 0.0
    %1780 = vmatpush1.xpose.msra.mxu0 0.0
    %1781 = vmatprep.subr.mxu0 0.0
    %1782 = vmatpush1.xpose.msra.mxu0 0.0
    %1783 = vmatprep.subr.mxu0 0.0
    %1784 = vmatpush1.xpose.msra.mxu0 0.0
    %1785 = vmatprep.subr.mxu0 0.0
    %1786 = vmatpush1.xpose.msra.mxu0 0.0
    %1787 = vmatprep.subr.mxu0 0.0
    %1788 = vmatpush1.xpose.msra.mxu0 0.0
    %1789 = vmatprep.subr.mxu0 0.0
    %1790 = vmatpush1.xpose.msra.mxu0 0.0
    %1791 = vmatprep.subr.mxu0 0.0
    %1792 = vmatpush1.xpose.msra.mxu0 0.0
    %1793 = vmatprep.subr.mxu0 0.0
    %1794 = vmatpush1.xpose.msra.mxu0 0.0
    %1795 = vmatprep.subr.mxu0 0.0
    %1796 = vmatpush1.xpose.msra.mxu0 0.0
    %1797 = vmatprep.subr.mxu0 0.0
    %1798 = vmatpush1.xpose.msra.mxu0 0.0
    %1799 = vmatprep.subr.mxu0 0.0
    %1800 = vmatpush1.xpose.msra.mxu0 0.0
    %1801 = vmatprep.subr.mxu0 0.0
    %1802 = vmatpush1.xpose.msra.mxu0 0.0
    %1803 = vmatprep.subr.mxu0 0.0
    %1804 = vmatpush1.xpose.msra.mxu0 0.0
    %1805 = vmatprep.subr.mxu0 0.0
    %1806 = vmatpush1.xpose.msra.mxu0 0.0
    %1807 = vmatprep.subr.mxu0 0.0
    %1808 = vmatpush1.xpose.msra.mxu0 0.0
    %1809 = vmatprep.subr.mxu0 0.0
    %1810 = vmatpush1.xpose.msra.mxu0 0.0
    %1811 = vmatprep.subr.mxu0 0.0
    %1812 = vmatpush1.xpose.msra.mxu0 0.0
    %1813 = vmatprep.subr.mxu0 0.0
    %1814 = vmatpush1.xpose.msra.mxu0 0.0
    %1815 = vmatprep.subr.mxu0 0.0
    %1816 = vmatpush1.xpose.msra.mxu0 0.0
    %1817 = vmatprep.subr.mxu0 0.0
    %1818 = vmatpush1.xpose.msra.mxu0 0.0
    %1819 = vmatprep.subr.mxu0 0.0
    %1820 = vmatpush1.xpose.msra.mxu0 0.0
    %1821 = vmatprep.subr.mxu0 0.0
    %1822 = vmatpush1.xpose.msra.mxu0 0.0
    %1823 = vmatprep.subr.mxu0 0.0
    %1824 = vmatpush1.xpose.msra.mxu0 0.0
    %1825 = vmatprep.subr.mxu0 0.0
    %1826 = vmatpush1.xpose.msra.mxu0 0.0
    %1827 = vmatprep.subr.mxu0 0.0
    %1828 = vmatpush1.xpose.msra.mxu0 0.0
    %1829 = vmatprep.mubr.f32.mxu0 0.0
    %1830 = vmatmul.mubr.f32.gmra.mrb[0].mxu0 %v1749
    %v1831 = vpop.f32.mrb[0].mxu0
    %v1832 = vadd.f32 0.0, %v1831
    %v1833 = vpop.f32.mrb[0].mxu0
    %1834 = vmatprep.mubr.f32.mxu0 0.0
    %1835 = vmatmul.mubr.f32.gmra.mrb[0].mxu0 %v1751
    %v1836 = vpop.f32.mrb[0].mxu0
    %v1837 = vadd.f32 0.0, %v1836
    %v1838 = vpop.f32.mrb[0].mxu0
    %1839 = vmatprep.mubr.f32.mxu0 0.0
    %1840 = vmatmul.mubr.f32.gmra.mrb[0].mxu0 %v1753
    %v1841 = vpop.f32.mrb[0].mxu0
    %v1842 = vadd.f32 0.0, %v1841
    %v1843 = vpop.f32.mrb[0].mxu0
    %1844 = vmatprep.mubr.f32.mxu0 0.0
    %1845 = vmatmul.mubr.f32.gmra.mrb[0].mxu0 %v1755
    %v1846 = vpop.f32.mrb[0].mxu0
    %v1847 = vadd.f32 0.0, %v1846
    %v1848 = vpop.f32.mrb[0].mxu0
    %1849 = vdwg.mxu0
    %v1850 = vsel %vm198, %v1832, -inf
    %1851 = vmax.xlane.f32.xlu0 %v1850
    %v1852 = vpop.xlane.xlu0 %1851
    %v1853 = vsel %vm198, %v1837, -inf
    %1854 = vmax.xlane.f32.xlu0 %v1853
    %v1855 = vpop.xlane.xlu0 %1854
    %v1856 = vsel %vm198, %v1842, -inf
    %1857 = vmax.xlane.f32.xlu0 %v1856
    %v1858 = vpop.xlane.xlu0 %1857
    %v1859 = vsel %vm198, %v1847, -inf
    %1860 = vmax.xlane.f32.xlu0 %v1859
    %v1861 = vpop.xlane.xlu0 %1860
    %v1862 = vsub.f32 %v1832, %v1852
    %v1863 = vsub.f32 %v1837, %v1855
    %v1864 = vsub.f32 %v1842, %v1858
    %v1865 = vsub.f32 %v1847, %v1861
    %v1866 = vmul.f32 %v1862, 1.442695
    %v1867 = vpow.pop %v1866
    %v1868 = vmul.f32 %v1863, 1.442695
    %v1869 = vpow.pop %v1868
    %v1870 = vmul.f32 %v1864, 1.442695
    %v1871 = vpow.pop %v1870
    %v1872 = vmul.f32 %v1865, 1.442695
    %v1873 = vpow.pop %v1872
    %v1874 = vsel %vm198, %v1867, 0.0
    %1875 = vadd.xlane.f32.xlu0 %v1874
    %v1876 = vpop.xlane.xlu0 %1875
    %v1877 = vsel %vm198, %v1869, 0.0
    %1878 = vadd.xlane.f32.xlu0 %v1877
    %v1879 = vpop.xlane.xlu0 %1878
    %v1880 = vsel %vm198, %v1871, 0.0
    %1881 = vadd.xlane.f32.xlu0 %v1880
    %v1882 = vpop.xlane.xlu0 %1881
    %v1883 = vsel %vm198, %v1873, 0.0
    %1884 = vadd.xlane.f32.xlu0 %v1883
    %v1885 = vpop.xlane.xlu0 %1884
    %v1886 = vrcp.pop %v1876
    %v1887 = vrcp.pop %v1879
    %v1888 = vrcp.pop %v1882
    %v1889 = vrcp.pop %v1885
    %v1890 = vmul.f32 %v1867, %v1886
    %v1891 = vmul.f32 %v1869, %v1887
    %v1892 = vmul.f32 %v1871, %v1888
    %v1893 = vmul.f32 %v1873, %v1889
    %1894 = vrot.lane.b32.xlu0 %v1124, 96
    %v1895 = vpop.permute.xlu0 %1894
    %1896 = vrot.lane.b32.xlu0 %v1130, 96
    %v1897 = vpop.permute.xlu0 %1896
    %1898 = vrot.lane.b32.xlu0 %v1136, 96
    %v1899 = vpop.permute.xlu0 %1898
    %1900 = vrot.lane.b32.xlu0 %v1142, 96
    %v1901 = vpop.permute.xlu0 %1900
    %v1907 = vsel %vm198, %v1890, 0
    %v1910 = vsel %vm198, %v1891, 0
    %v1913 = vsel %vm198, %v1892, 0
    %v1916 = vsel %vm198, %v1893, 0
    %1918 = vmatprep.subr.mxu0 0.0
    %1919 = vmatpush1.msra.mxu0 %v1895
    %1920 = vmatprep.subr.mxu0 0.0
    %1921 = vmatpush1.msra.mxu0 %v1897
    %1922 = vmatprep.subr.mxu0 0.0
    %1923 = vmatpush1.msra.mxu0 %v1899
    %1924 = vmatprep.subr.mxu0 0.0
    %1925 = vmatpush1.msra.mxu0 %v1901
    %1926 = vmatprep.subr.mxu0 0.0
    %1927 = vmatpush1.msra.mxu0 0.0
    %1928 = vmatprep.subr.mxu0 0.0
    %1929 = vmatpush1.msra.mxu0 0.0
    %1930 = vmatprep.subr.mxu0 0.0
    %1931 = vmatpush1.msra.mxu0 0.0
    %1932 = vmatprep.subr.mxu0 0.0
    %1933 = vmatpush1.msra.mxu0 0.0
    %1934 = vmatprep.subr.mxu0 0.0
    %1935 = vmatpush1.msra.mxu0 0.0
    %1936 = vmatprep.subr.mxu0 0.0
    %1937 = vmatpush1.msra.mxu0 0.0
    %1938 = vmatprep.subr.mxu0 0.0
    %1939 = vmatpush1.msra.mxu0 0.0
    %1940 = vmatprep.subr.mxu0 0.0
    %1941 = vmatpush1.msra.mxu0 0.0
    %1942 = vmatprep.subr.mxu0 0.0
    %1943 = vmatpush1.msra.mxu0 0.0
    %1944 = vmatprep.subr.mxu0 0.0
    %1945 = vmatpush1.msra.mxu0 0.0
    %1946 = vmatprep.subr.mxu0 0.0
    %1947 = vmatpush1.msra.mxu0 0.0
    %1948 = vmatprep.subr.mxu0 0.0
    %1949 = vmatpush1.msra.mxu0 0.0
    %1950 = vmatprep.subr.mxu0 0.0
    %1951 = vmatpush1.msra.mxu0 0.0
    %1952 = vmatprep.subr.mxu0 0.0
    %1953 = vmatpush1.msra.mxu0 0.0
    %1954 = vmatprep.subr.mxu0 0.0
    %1955 = vmatpush1.msra.mxu0 0.0
    %1956 = vmatprep.subr.mxu0 0.0
    %1957 = vmatpush1.msra.mxu0 0.0
    %1958 = vmatprep.subr.mxu0 0.0
    %1959 = vmatpush1.msra.mxu0 0.0
    %1960 = vmatprep.subr.mxu0 0.0
    %1961 = vmatpush1.msra.mxu0 0.0
    %1962 = vmatprep.subr.mxu0 0.0
    %1963 = vmatpush1.msra.mxu0 0.0
    %1964 = vmatprep.subr.mxu0 0.0
    %1965 = vmatpush1.msra.mxu0 0.0
    %1966 = vmatprep.subr.mxu0 0.0
    %1967 = vmatpush1.msra.mxu0 0.0
    %1968 = vmatprep.subr.mxu0 0.0
    %1969 = vmatpush1.msra.mxu0 0.0
    %1970 = vmatprep.subr.mxu0 0.0
    %1971 = vmatpush1.msra.mxu0 0.0
    %1972 = vmatprep.subr.mxu0 0.0
    %1973 = vmatpush1.msra.mxu0 0.0
    %1974 = vmatprep.subr.mxu0 0.0
    %1975 = vmatpush1.msra.mxu0 0.0
    %1976 = vmatprep.subr.mxu0 0.0
    %1977 = vmatpush1.msra.mxu0 0.0
    %1978 = vmatprep.subr.mxu0 0.0
    %1979 = vmatpush1.msra.mxu0 0.0
    %1980 = vmatprep.subr.mxu0 0.0
    %1981 = vmatpush1.msra.mxu0 0.0
    %1982 = vmatprep.mubr.f32.mxu0 0.0
    %1983 = vmatmul.mubr.f32.gmra.mrb[0].mxu0 %v1907
    %v1984 = vpop.f32.mrb[0].mxu0
    %v1985 = vadd.f32 0.0, %v1984
    %v1986 = vpop.f32.mrb[0].mxu0
    %1987 = vmatprep.mubr.f32.mxu0 0.0
    %1988 = vmatmul.mubr.f32.gmra.mrb[0].mxu0 %v1910
    %v1989 = vpop.f32.mrb[0].mxu0
    %v1990 = vadd.f32 0.0, %v1989
    %v1991 = vpop.f32.mrb[0].mxu0
    %1992 = vmatprep.mubr.f32.mxu0 0.0
    %1993 = vmatmul.mubr.f32.gmra.mrb[0].mxu0 %v1913
    %v1994 = vpop.f32.mrb[0].mxu0
    %v1995 = vadd.f32 0.0, %v1994
    %v1996 = vpop.f32.mrb[0].mxu0
    %1997 = vmatprep.mubr.f32.mxu0 0.0
    %1998 = vmatmul.mubr.f32.gmra.mrb[0].mxu0 %v1916
    %v1999 = vpop.f32.mrb[0].mxu0
    %v2000 = vadd.f32 0.0, %v1999
    %v2001 = vpop.f32.mrb[0].mxu0
    %2002 = vdwg.mxu0
    %2007 = vrot.lane.b32.xlu0 %v1985, 32
    %v2008 = vpop.permute.xlu0 %2007
    %2009 = vrot.lane.b32.xlu0 %v1990, 32
    %v2010 = vpop.permute.xlu0 %2009
    %2011 = vrot.lane.b32.xlu0 %v1995, 32
    %v2012 = vpop.permute.xlu0 %2011
    %2013 = vrot.lane.b32.xlu0 %v2000, 32
    %v2014 = vpop.permute.xlu0 %2013
    %vm2019 = vcmask 392448
    %2020 = vst.msk [vmem:[#allocation3] sm:$0xff] %vm2019, %v2008
    %2021 = vst.msk [vmem:[#allocation3 + $0x8] sm:$0xff] %vm2019, %v2010
    %2022 = vst.msk [vmem:[#allocation3 + $0x10] sm:$0xff] %vm2019, %v2012
    %2023 = vst.msk [vmem:[#allocation3 + $0x18] sm:$0xff] %vm2019, %v2014
    %2024 = vrot.lane.b32.xlu0 %v1168, 80
    %v2025 = vpop.permute.xlu0 %2024
    %2026 = vrot.lane.b32.xlu0 %v1169, 80
    %v2027 = vpop.permute.xlu0 %2026
    %2028 = vrot.lane.b32.xlu0 %v1170, 80
    %v2029 = vpop.permute.xlu0 %2028
    %2030 = vrot.lane.b32.xlu0 %v1171, 80
    %v2031 = vpop.permute.xlu0 %2030
    %2032 = vrot.lane.b32.xlu0 %v1122, 16
    %v2033 = vpop.permute.xlu0 %2032
    %2034 = vrot.lane.b32.xlu0 %v1128, 16
    %v2035 = vpop.permute.xlu0 %2034
    %2036 = vrot.lane.b32.xlu0 %v1134, 16
    %v2037 = vpop.permute.xlu0 %2036
    %2038 = vrot.lane.b32.xlu0 %v1140, 16
    %v2039 = vpop.permute.xlu0 %2038
    %v2040 = vsel %vm285, %v2025, 0
    %v2042 = vsel %vm285, %v2027, 0
    %v2044 = vsel %vm285, %v2029, 0
    %v2046 = vsel %vm285, %v2031, 0
    %v2048 = vsel %vm285, %v2033, 0
    %v2050 = vsel %vm285, %v2035, 0
    %v2052 = vsel %vm285, %v2037, 0
    %v2054 = vsel %vm285, %v2039, 0
    %2056 = vmatprep.subr.mxu0 0.0
    %2057 = vmatpush1.xpose.msra.mxu0 %v2048
    %2058 = vmatprep.subr.mxu0 0.0
    %2059 = vmatpush1.xpose.msra.mxu0 %v2050
    %2060 = vmatprep.subr.mxu0 0.0
    %2061 = vmatpush1.xpose.msra.mxu0 %v2052
    %2062 = vmatprep.subr.mxu0 0.0
    %2063 = vmatpush1.xpose.msra.mxu0 %v2054
    %2064 = vmatprep.subr.mxu0 0.0
    %2065 = vmatpush1.xpose.msra.mxu0 0.0
    %2066 = vmatprep.subr.mxu0 0.0
    %2067 = vmatpush1.xpose.msra.mxu0 0.0
    %2068 = vmatprep.subr.mxu0 0.0
    %2069 = vmatpush1.xpose.msra.mxu0 0.0
    %2070 = vmatprep.subr.mxu0 0.0
    %2071 = vmatpush1.xpose.msra.mxu0 0.0
    %2072 = vmatprep.subr.mxu0 0.0
    %2073 = vmatpush1.xpose.msra.mxu0 0.0
    %2074 = vmatprep.subr.mxu0 0.0
    %2075 = vmatpush1.xpose.msra.mxu0 0.0
    %2076 = vmatprep.subr.mxu0 0.0
    %2077 = vmatpush1.xpose.msra.mxu0 0.0
    %2078 = vmatprep.subr.mxu0 0.0
    %2079 = vmatpush1.xpose.msra.mxu0 0.0
    %2080 = vmatprep.subr.mxu0 0.0
    %2081 = vmatpush1.xpose.msra.mxu0 0.0
    %2082 = vmatprep.subr.mxu0 0.0
    %2083 = vmatpush1.xpose.msra.mxu0 0.0
    %2084 = vmatprep.subr.mxu0 0.0
    %2085 = vmatpush1.xpose.msra.mxu0 0.0
    %2086 = vmatprep.subr.mxu0 0.0
    %2087 = vmatpush1.xpose.msra.mxu0 0.0
    %2088 = vmatprep.subr.mxu0 0.0
    %2089 = vmatpush1.xpose.msra.mxu0 0.0
    %2090 = vmatprep.subr.mxu0 0.0
    %2091 = vmatpush1.xpose.msra.mxu0 0.0
    %2092 = vmatprep.subr.mxu0 0.0
    %2093 = vmatpush1.xpose.msra.mxu0 0.0
    %2094 = vmatprep.subr.mxu0 0.0
    %2095 = vmatpush1.xpose.msra.mxu0 0.0
    %2096 = vmatprep.subr.mxu0 0.0
    %2097 = vmatpush1.xpose.msra.mxu0 0.0
    %2098 = vmatprep.subr.mxu0 0.0
    %2099 = vmatpush1.xpose.msra.mxu0 0.0
    %2100 = vmatprep.subr.mxu0 0.0
    %2101 = vmatpush1.xpose.msra.mxu0 0.0
    %2102 = vmatprep.subr.mxu0 0.0
    %2103 = vmatpush1.xpose.msra.mxu0 0.0
    %2104 = vmatprep.subr.mxu0 0.0
    %2105 = vmatpush1.xpose.msra.mxu0 0.0
    %2106 = vmatprep.subr.mxu0 0.0
    %2107 = vmatpush1.xpose.msra.mxu0 0.0
    %2108 = vmatprep.subr.mxu0 0.0
    %2109 = vmatpush1.xpose.msra.mxu0 0.0
    %2110 = vmatprep.subr.mxu0 0.0
    %2111 = vmatpush1.xpose.msra.mxu0 0.0
    %2112 = vmatprep.subr.mxu0 0.0
    %2113 = vmatpush1.xpose.msra.mxu0 0.0
    %2114 = vmatprep.subr.mxu0 0.0
    %2115 = vmatpush1.xpose.msra.mxu0 0.0
    %2116 = vmatprep.subr.mxu0 0.0
    %2117 = vmatpush1.xpose.msra.mxu0 0.0
    %2118 = vmatprep.subr.mxu0 0.0
    %2119 = vmatpush1.xpose.msra.mxu0 0.0
    %2120 = vmatprep.mubr.f32.mxu0 0.0
    %2121 = vmatmul.mubr.f32.gmra.mrb[0].mxu0 %v2040
    %v2122 = vpop.f32.mrb[0].mxu0
    %v2123 = vadd.f32 0.0, %v2122
    %v2124 = vpop.f32.mrb[0].mxu0
    %2125 = vmatprep.mubr.f32.mxu0 0.0
    %2126 = vmatmul.mubr.f32.gmra.mrb[0].mxu0 %v2042
    %v2127 = vpop.f32.mrb[0].mxu0
    %v2128 = vadd.f32 0.0, %v2127
    %v2129 = vpop.f32.mrb[0].mxu0
    %2130 = vmatprep.mubr.f32.mxu0 0.0
    %2131 = vmatmul.mubr.f32.gmra.mrb[0].mxu0 %v2044
    %v2132 = vpop.f32.mrb[0].mxu0
    %v2133 = vadd.f32 0.0, %v2132
    %v2134 = vpop.f32.mrb[0].mxu0
    %2135 = vmatprep.mubr.f32.mxu0 0.0
    %2136 = vmatmul.mubr.f32.gmra.mrb[0].mxu0 %v2046
    %v2137 = vpop.f32.mrb[0].mxu0
    %v2138 = vadd.f32 0.0, %v2137
    %v2139 = vpop.f32.mrb[0].mxu0
    %2140 = vdwg.mxu0
    %v2141 = vsel %vm198, %v2123, -inf
    %2142 = vmax.xlane.f32.xlu0 %v2141
    %v2143 = vpop.xlane.xlu0 %2142
    %v2144 = vsel %vm198, %v2128, -inf
    %2145 = vmax.xlane.f32.xlu0 %v2144
    %v2146 = vpop.xlane.xlu0 %2145
    %v2147 = vsel %vm198, %v2133, -inf
    %2148 = vmax.xlane.f32.xlu0 %v2147
    %v2149 = vpop.xlane.xlu0 %2148
    %v2150 = vsel %vm198, %v2138, -inf
    %2151 = vmax.xlane.f32.xlu0 %v2150
    %v2152 = vpop.xlane.xlu0 %2151
    %v2153 = vsub.f32 %v2123, %v2143
    %v2154 = vsub.f32 %v2128, %v2146
    %v2155 = vsub.f32 %v2133, %v2149
    %v2156 = vsub.f32 %v2138, %v2152
    %v2157 = vmul.f32 %v2153, 1.442695
    %v2158 = vpow.pop %v2157
    %v2159 = vmul.f32 %v2154, 1.442695
    %v2160 = vpow.pop %v2159
    %v2161 = vmul.f32 %v2155, 1.442695
    %v2162 = vpow.pop %v2161
    %v2163 = vmul.f32 %v2156, 1.442695
    %v2164 = vpow.pop %v2163
    %v2165 = vsel %vm198, %v2158, 0.0
    %2166 = vadd.xlane.f32.xlu0 %v2165
    %v2167 = vpop.xlane.xlu0 %2166
    %v2168 = vsel %vm198, %v2160, 0.0
    %2169 = vadd.xlane.f32.xlu0 %v2168
    %v2170 = vpop.xlane.xlu0 %2169
    %v2171 = vsel %vm198, %v2162, 0.0
    %2172 = vadd.xlane.f32.xlu0 %v2171
    %v2173 = vpop.xlane.xlu0 %2172
    %v2174 = vsel %vm198, %v2164, 0.0
    %2175 = vadd.xlane.f32.xlu0 %v2174
    %v2176 = vpop.xlane.xlu0 %2175
    %v2177 = vrcp.pop %v2167
    %v2178 = vrcp.pop %v2170
    %v2179 = vrcp.pop %v2173
    %v2180 = vrcp.pop %v2176
    %v2181 = vmul.f32 %v2158, %v2177
    %v2182 = vmul.f32 %v2160, %v2178
    %v2183 = vmul.f32 %v2162, %v2179
    %v2184 = vmul.f32 %v2164, %v2180
    %2185 = vrot.lane.b32.xlu0 %v1124, 80
    %v2186 = vpop.permute.xlu0 %2185
    %2187 = vrot.lane.b32.xlu0 %v1130, 80
    %v2188 = vpop.permute.xlu0 %2187
    %2189 = vrot.lane.b32.xlu0 %v1136, 80
    %v2190 = vpop.permute.xlu0 %2189
    %2191 = vrot.lane.b32.xlu0 %v1142, 80
    %v2192 = vpop.permute.xlu0 %2191
    %v2198 = vsel %vm198, %v2181, 0
    %v2201 = vsel %vm198, %v2182, 0
    %v2204 = vsel %vm198, %v2183, 0
    %v2207 = vsel %vm198, %v2184, 0
    %2209 = vmatprep.subr.mxu0 0.0
    %2210 = vmatpush1.msra.mxu0 %v2186
    %2211 = vmatprep.subr.mxu0 0.0
    %2212 = vmatpush1.msra.mxu0 %v2188
    %2213 = vmatprep.subr.mxu0 0.0
    %2214 = vmatpush1.msra.mxu0 %v2190
    %2215 = vmatprep.subr.mxu0 0.0
    %2216 = vmatpush1.msra.mxu0 %v2192
    %2217 = vmatprep.subr.mxu0 0.0
    %2218 = vmatpush1.msra.mxu0 0.0
    %2219 = vmatprep.subr.mxu0 0.0
    %2220 = vmatpush1.msra.mxu0 0.0
    %2221 = vmatprep.subr.mxu0 0.0
    %2222 = vmatpush1.msra.mxu0 0.0
    %2223 = vmatprep.subr.mxu0 0.0
    %2224 = vmatpush1.msra.mxu0 0.0
    %2225 = vmatprep.subr.mxu0 0.0
    %2226 = vmatpush1.msra.mxu0 0.0
    %2227 = vmatprep.subr.mxu0 0.0
    %2228 = vmatpush1.msra.mxu0 0.0
    %2229 = vmatprep.subr.mxu0 0.0
    %2230 = vmatpush1.msra.mxu0 0.0
    %2231 = vmatprep.subr.mxu0 0.0
    %2232 = vmatpush1.msra.mxu0 0.0
    %2233 = vmatprep.subr.mxu0 0.0
    %2234 = vmatpush1.msra.mxu0 0.0
    %2235 = vmatprep.subr.mxu0 0.0
    %2236 = vmatpush1.msra.mxu0 0.0
    %2237 = vmatprep.subr.mxu0 0.0
    %2238 = vmatpush1.msra.mxu0 0.0
    %2239 = vmatprep.subr.mxu0 0.0
    %2240 = vmatpush1.msra.mxu0 0.0
    %2241 = vmatprep.subr.mxu0 0.0
    %2242 = vmatpush1.msra.mxu0 0.0
    %2243 = vmatprep.subr.mxu0 0.0
    %2244 = vmatpush1.msra.mxu0 0.0
    %2245 = vmatprep.subr.mxu0 0.0
    %2246 = vmatpush1.msra.mxu0 0.0
    %2247 = vmatprep.subr.mxu0 0.0
    %2248 = vmatpush1.msra.mxu0 0.0
    %2249 = vmatprep.subr.mxu0 0.0
    %2250 = vmatpush1.msra.mxu0 0.0
    %2251 = vmatprep.subr.mxu0 0.0
    %2252 = vmatpush1.msra.mxu0 0.0
    %2253 = vmatprep.subr.mxu0 0.0
    %2254 = vmatpush1.msra.mxu0 0.0
    %2255 = vmatprep.subr.mxu0 0.0
    %2256 = vmatpush1.msra.mxu0 0.0
    %2257 = vmatprep.subr.mxu0 0.0
    %2258 = vmatpush1.msra.mxu0 0.0
    %2259 = vmatprep.subr.mxu0 0.0
    %2260 = vmatpush1.msra.mxu0 0.0
    %2261 = vmatprep.subr.mxu0 0.0
    %2262 = vmatpush1.msra.mxu0 0.0
    %2263 = vmatprep.subr.mxu0 0.0
    %2264 = vmatpush1.msra.mxu0 0.0
    %2265 = vmatprep.subr.mxu0 0.0
    %2266 = vmatpush1.msra.mxu0 0.0
    %2267 = vmatprep.subr.mxu0 0.0
    %2268 = vmatpush1.msra.mxu0 0.0
    %2269 = vmatprep.subr.mxu0 0.0
    %2270 = vmatpush1.msra.mxu0 0.0
    %2271 = vmatprep.subr.mxu0 0.0
    %2272 = vmatpush1.msra.mxu0 0.0
    %2273 = vmatprep.mubr.f32.mxu0 0.0
    %2274 = vmatmul.mubr.f32.gmra.mrb[0].mxu0 %v2198
    %v2275 = vpop.f32.mrb[0].mxu0
    %v2276 = vadd.f32 0.0, %v2275
    %v2277 = vpop.f32.mrb[0].mxu0
    %2278 = vmatprep.mubr.f32.mxu0 0.0
    %2279 = vmatmul.mubr.f32.gmra.mrb[0].mxu0 %v2201
    %v2280 = vpop.f32.mrb[0].mxu0
    %v2281 = vadd.f32 0.0, %v2280
    %v2282 = vpop.f32.mrb[0].mxu0
    %2283 = vmatprep.mubr.f32.mxu0 0.0
    %2284 = vmatmul.mubr.f32.gmra.mrb[0].mxu0 %v2204
    %v2285 = vpop.f32.mrb[0].mxu0
    %v2286 = vadd.f32 0.0, %v2285
    %v2287 = vpop.f32.mrb[0].mxu0
    %2288 = vmatprep.mubr.f32.mxu0 0.0
    %2289 = vmatmul.mubr.f32.gmra.mrb[0].mxu0 %v2207
    %v2290 = vpop.f32.mrb[0].mxu0
    %v2291 = vadd.f32 0.0, %v2290
    %v2292 = vpop.f32.mrb[0].mxu0
    %2293 = vdwg.mxu0
    %2298 = vrot.lane.b32.xlu0 %v2276, 48
    %v2299 = vpop.permute.xlu0 %2298
    %2300 = vrot.lane.b32.xlu0 %v2281, 48
    %v2301 = vpop.permute.xlu0 %2300
    %2302 = vrot.lane.b32.xlu0 %v2286, 48
    %v2303 = vpop.permute.xlu0 %2302
    %2304 = vrot.lane.b32.xlu0 %v2291, 48
    %v2305 = vpop.permute.xlu0 %2304
    %vm2310 = vcmask 523648
    %2311 = vst.msk [vmem:[#allocation3] sm:$0xff] %vm2310, %v2299
    %2312 = vst.msk [vmem:[#allocation3 + $0x8] sm:$0xff] %vm2310, %v2301
    %2313 = vst.msk [vmem:[#allocation3 + $0x10] sm:$0xff] %vm2310, %v2303
    %2314 = vst.msk [vmem:[#allocation3 + $0x18] sm:$0xff] %vm2310, %v2305
    %2319 = vrot.lane.b32.xlu0 %v1146, 64
    %v2320 = vpop.permute.xlu0 %2319
    %2321 = vrot.lane.b32.xlu0 %v1152, 64
    %v2322 = vpop.permute.xlu0 %2321
    %2323 = vrot.lane.b32.xlu0 %v1158, 64
    %v2324 = vpop.permute.xlu0 %2323
    %2325 = vrot.lane.b32.xlu0 %v1164, 64
    %v2326 = vpop.permute.xlu0 %2325
    %v2328 = vsel %vm285, %v1172, 0
    %v2331 = vsel %vm285, %v1173, 0
    %v2334 = vsel %vm285, %v1174, 0
    %v2337 = vsel %vm285, %v1175, 0
    %v2339 = vsel %vm285, %v2320, 0
    %v2341 = vsel %vm285, %v2322, 0
    %v2343 = vsel %vm285, %v2324, 0
    %v2345 = vsel %vm285, %v2326, 0
    %2347 = vmatprep.subr.mxu0 0.0
    %2348 = vmatpush1.xpose.msra.mxu0 %v2339
    %2349 = vmatprep.subr.mxu0 0.0
    %2350 = vmatpush1.xpose.msra.mxu0 %v2341
    %2351 = vmatprep.subr.mxu0 0.0
    %2352 = vmatpush1.xpose.msra.mxu0 %v2343
    %2353 = vmatprep.subr.mxu0 0.0
    %2354 = vmatpush1.xpose.msra.mxu0 %v2345
    %2355 = vmatprep.subr.mxu0 0.0
    %2356 = vmatpush1.xpose.msra.mxu0 0.0
    %2357 = vmatprep.subr.mxu0 0.0
    %2358 = vmatpush1.xpose.msra.mxu0 0.0
    %2359 = vmatprep.subr.mxu0 0.0
    %2360 = vmatpush1.xpose.msra.mxu0 0.0
    %2361 = vmatprep.subr.mxu0 0.0
    %2362 = vmatpush1.xpose.msra.mxu0 0.0
    %2363 = vmatprep.subr.mxu0 0.0
    %2364 = vmatpush1.xpose.msra.mxu0 0.0
    %2365 = vmatprep.subr.mxu0 0.0
    %2366 = vmatpush1.xpose.msra.mxu0 0.0
    %2367 = vmatprep.subr.mxu0 0.0
    %2368 = vmatpush1.xpose.msra.mxu0 0.0
    %2369 = vmatprep.subr.mxu0 0.0
    %2370 = vmatpush1.xpose.msra.mxu0 0.0
    %2371 = vmatprep.subr.mxu0 0.0
    %2372 = vmatpush1.xpose.msra.mxu0 0.0
    %2373 = vmatprep.subr.mxu0 0.0
    %2374 = vmatpush1.xpose.msra.mxu0 0.0
    %2375 = vmatprep.subr.mxu0 0.0
    %2376 = vmatpush1.xpose.msra.mxu0 0.0
    %2377 = vmatprep.subr.mxu0 0.0
    %2378 = vmatpush1.xpose.msra.mxu0 0.0
    %2379 = vmatprep.subr.mxu0 0.0
    %2380 = vmatpush1.xpose.msra.mxu0 0.0
    %2381 = vmatprep.subr.mxu0 0.0
    %2382 = vmatpush1.xpose.msra.mxu0 0.0
    %2383 = vmatprep.subr.mxu0 0.0
    %2384 = vmatpush1.xpose.msra.mxu0 0.0
    %2385 = vmatprep.subr.mxu0 0.0
    %2386 = vmatpush1.xpose.msra.mxu0 0.0
    %2387 = vmatprep.subr.mxu0 0.0
    %2388 = vmatpush1.xpose.msra.mxu0 0.0
    %2389 = vmatprep.subr.mxu0 0.0
    %2390 = vmatpush1.xpose.msra.mxu0 0.0
    %2391 = vmatprep.subr.mxu0 0.0
    %2392 = vmatpush1.xpose.msra.mxu0 0.0
    %2393 = vmatprep.subr.mxu0 0.0
    %2394 = vmatpush1.xpose.msra.mxu0 0.0
    %2395 = vmatprep.subr.mxu0 0.0
    %2396 = vmatpush1.xpose.msra.mxu0 0.0
    %2397 = vmatprep.subr.mxu0 0.0
    %2398 = vmatpush1.xpose.msra.mxu0 0.0
    %2399 = vmatprep.subr.mxu0 0.0
    %2400 = vmatpush1.xpose.msra.mxu0 0.0
    %2401 = vmatprep.subr.mxu0 0.0
    %2402 = vmatpush1.xpose.msra.mxu0 0.0
    %2403 = vmatprep.subr.mxu0 0.0
    %2404 = vmatpush1.xpose.msra.mxu0 0.0
    %2405 = vmatprep.subr.mxu0 0.0
    %2406 = vmatpush1.xpose.msra.mxu0 0.0
    %2407 = vmatprep.subr.mxu0 0.0
    %2408 = vmatpush1.xpose.msra.mxu0 0.0
    %2409 = vmatprep.subr.mxu0 0.0
    %2410 = vmatpush1.xpose.msra.mxu0 0.0
    %2411 = vmatprep.mubr.f32.mxu0 0.0
    %2412 = vmatmul.mubr.f32.gmra.mrb[0].mxu0 %v2328
    %v2413 = vpop.f32.mrb[0].mxu0
    %v2414 = vadd.f32 0.0, %v2413
    %v2415 = vpop.f32.mrb[0].mxu0
    %2416 = vmatprep.mubr.f32.mxu0 0.0
    %2417 = vmatmul.mubr.f32.gmra.mrb[0].mxu0 %v2331
    %v2418 = vpop.f32.mrb[0].mxu0
    %v2419 = vadd.f32 0.0, %v2418
    %v2420 = vpop.f32.mrb[0].mxu0
    %2421 = vmatprep.mubr.f32.mxu0 0.0
    %2422 = vmatmul.mubr.f32.gmra.mrb[0].mxu0 %v2334
    %v2423 = vpop.f32.mrb[0].mxu0
    %v2424 = vadd.f32 0.0, %v2423
    %v2425 = vpop.f32.mrb[0].mxu0
    %2426 = vmatprep.mubr.f32.mxu0 0.0
    %2427 = vmatmul.mubr.f32.gmra.mrb[0].mxu0 %v2337
    %v2428 = vpop.f32.mrb[0].mxu0
    %v2429 = vadd.f32 0.0, %v2428
    %v2430 = vpop.f32.mrb[0].mxu0
    %2431 = vdwg.mxu0
    %v2432 = vsel %vm198, %v2414, -inf
    %2433 = vmax.xlane.f32.xlu0 %v2432
    %v2434 = vpop.xlane.xlu0 %2433
    %v2435 = vsel %vm198, %v2419, -inf
    %2436 = vmax.xlane.f32.xlu0 %v2435
    %v2437 = vpop.xlane.xlu0 %2436
    %v2438 = vsel %vm198, %v2424, -inf
    %2439 = vmax.xlane.f32.xlu0 %v2438
    %v2440 = vpop.xlane.xlu0 %2439
    %v2441 = vsel %vm198, %v2429, -inf
    %2442 = vmax.xlane.f32.xlu0 %v2441
    %v2443 = vpop.xlane.xlu0 %2442
    %v2444 = vsub.f32 %v2414, %v2434
    %v2445 = vsub.f32 %v2419, %v2437
    %v2446 = vsub.f32 %v2424, %v2440
    %v2447 = vsub.f32 %v2429, %v2443
    %v2448 = vmul.f32 %v2444, 1.442695
    %v2449 = vpow.pop %v2448
    %v2450 = vmul.f32 %v2445, 1.442695
    %v2451 = vpow.pop %v2450
    %v2452 = vmul.f32 %v2446, 1.442695
    %v2453 = vpow.pop %v2452
    %v2454 = vmul.f32 %v2447, 1.442695
    %v2455 = vpow.pop %v2454
    %v2456 = vsel %vm198, %v2449, 0.0
    %2457 = vadd.xlane.f32.xlu0 %v2456
    %v2458 = vpop.xlane.xlu0 %2457
    %v2459 = vsel %vm198, %v2451, 0.0
    %2460 = vadd.xlane.f32.xlu0 %v2459
    %v2461 = vpop.xlane.xlu0 %2460
    %v2462 = vsel %vm198, %v2453, 0.0
    %2463 = vadd.xlane.f32.xlu0 %v2462
    %v2464 = vpop.xlane.xlu0 %2463
    %v2465 = vsel %vm198, %v2455, 0.0
    %2466 = vadd.xlane.f32.xlu0 %v2465
    %v2467 = vpop.xlane.xlu0 %2466
    %v2468 = vrcp.pop %v2458
    %v2469 = vrcp.pop %v2461
    %v2470 = vrcp.pop %v2464
    %v2471 = vrcp.pop %v2467
    %v2472 = vmul.f32 %v2449, %v2468
    %v2473 = vmul.f32 %v2451, %v2469
    %v2474 = vmul.f32 %v2453, %v2470
    %v2475 = vmul.f32 %v2455, %v2471
    %v2477 = vsel %vm198, %v2472, 0
    %v2480 = vsel %vm198, %v2473, 0
    %v2483 = vsel %vm198, %v2474, 0
    %v2486 = vsel %vm198, %v2475, 0
    %2488 = vmatprep.subr.mxu0 0.0
    %2489 = vmatpush1.msra.mxu0 %v1148
    %2490 = vmatprep.subr.mxu0 0.0
    %2491 = vmatpush1.msra.mxu0 %v1154
    %2492 = vmatprep.subr.mxu0 0.0
    %2493 = vmatpush1.msra.mxu0 %v1160
    %2494 = vmatprep.subr.mxu0 0.0
    %2495 = vmatpush1.msra.mxu0 %v1166
    %2496 = vmatprep.subr.mxu0 0.0
    %2497 = vmatpush1.msra.mxu0 0.0
    %2498 = vmatprep.subr.mxu0 0.0
    %2499 = vmatpush1.msra.mxu0 0.0
    %2500 = vmatprep.subr.mxu0 0.0
    %2501 = vmatpush1.msra.mxu0 0.0
    %2502 = vmatprep.subr.mxu0 0.0
    %2503 = vmatpush1.msra.mxu0 0.0
    %2504 = vmatprep.subr.mxu0 0.0
    %2505 = vmatpush1.msra.mxu0 0.0
    %2506 = vmatprep.subr.mxu0 0.0
    %2507 = vmatpush1.msra.mxu0 0.0
    %2508 = vmatprep.subr.mxu0 0.0
    %2509 = vmatpush1.msra.mxu0 0.0
    %2510 = vmatprep.subr.mxu0 0.0
    %2511 = vmatpush1.msra.mxu0 0.0
    %2512 = vmatprep.subr.mxu0 0.0
    %2513 = vmatpush1.msra.mxu0 0.0
    %2514 = vmatprep.subr.mxu0 0.0
    %2515 = vmatpush1.msra.mxu0 0.0
    %2516 = vmatprep.subr.mxu0 0.0
    %2517 = vmatpush1.msra.mxu0 0.0
    %2518 = vmatprep.subr.mxu0 0.0
    %2519 = vmatpush1.msra.mxu0 0.0
    %2520 = vmatprep.subr.mxu0 0.0
    %2521 = vmatpush1.msra.mxu0 0.0
    %2522 = vmatprep.subr.mxu0 0.0
    %2523 = vmatpush1.msra.mxu0 0.0
    %2524 = vmatprep.subr.mxu0 0.0
    %2525 = vmatpush1.msra.mxu0 0.0
    %2526 = vmatprep.subr.mxu0 0.0
    %2527 = vmatpush1.msra.mxu0 0.0
    %2528 = vmatprep.subr.mxu0 0.0
    %2529 = vmatpush1.msra.mxu0 0.0
    %2530 = vmatprep.subr.mxu0 0.0
    %2531 = vmatpush1.msra.mxu0 0.0
    %2532 = vmatprep.subr.mxu0 0.0
    %2533 = vmatpush1.msra.mxu0 0.0
    %2534 = vmatprep.subr.mxu0 0.0
    %2535 = vmatpush1.msra.mxu0 0.0
    %2536 = vmatprep.subr.mxu0 0.0
    %2537 = vmatpush1.msra.mxu0 0.0
    %2538 = vmatprep.subr.mxu0 0.0
    %2539 = vmatpush1.msra.mxu0 0.0
    %2540 = vmatprep.subr.mxu0 0.0
    %2541 = vmatpush1.msra.mxu0 0.0
    %2542 = vmatprep.subr.mxu0 0.0
    %2543 = vmatpush1.msra.mxu0 0.0
    %2544 = vmatprep.subr.mxu0 0.0
    %2545 = vmatpush1.msra.mxu0 0.0
    %2546 = vmatprep.subr.mxu0 0.0
    %2547 = vmatpush1.msra.mxu0 0.0
    %2548 = vmatprep.subr.mxu0 0.0
    %2549 = vmatpush1.msra.mxu0 0.0
    %2550 = vmatprep.subr.mxu0 0.0
    %2551 = vmatpush1.msra.mxu0 0.0
    %2552 = vmatprep.mubr.f32.mxu0 0.0
    %2553 = vmatmul.mubr.f32.gmra.mrb[0].mxu0 %v2477
    %v2554 = vpop.f32.mrb[0].mxu0
    %v2555 = vadd.f32 0.0, %v2554
    %v2556 = vpop.f32.mrb[0].mxu0
    %2557 = vmatprep.mubr.f32.mxu0 0.0
    %2558 = vmatmul.mubr.f32.gmra.mrb[0].mxu0 %v2480
    %v2559 = vpop.f32.mrb[0].mxu0
    %v2560 = vadd.f32 0.0, %v2559
    %v2561 = vpop.f32.mrb[0].mxu0
    %2562 = vmatprep.mubr.f32.mxu0 0.0
    %2563 = vmatmul.mubr.f32.gmra.mrb[0].mxu0 %v2483
    %v2564 = vpop.f32.mrb[0].mxu0
    %v2565 = vadd.f32 0.0, %v2564
    %v2566 = vpop.f32.mrb[0].mxu0
    %2567 = vmatprep.mubr.f32.mxu0 0.0
    %2568 = vmatmul.mubr.f32.gmra.mrb[0].mxu0 %v2486
    %v2569 = vpop.f32.mrb[0].mxu0
    %v2570 = vadd.f32 0.0, %v2569
    %v2571 = vpop.f32.mrb[0].mxu0
    %2572 = vdwg.mxu0
    %2573 = vst.msk [vmem:[#allocation3 + $0x20] sm:$0xff] %vm285, %v2555
    %2574 = vst.msk [vmem:[#allocation3 + $0x28] sm:$0xff] %vm285, %v2560
    %2575 = vst.msk [vmem:[#allocation3 + $0x30] sm:$0xff] %vm285, %v2565
    %2576 = vst.msk [vmem:[#allocation3 + $0x38] sm:$0xff] %vm285, %v2570
    %2577 = vrot.lane.b32.xlu0 %v1172, 112
    %v2578 = vpop.permute.xlu0 %2577
    %2579 = vrot.lane.b32.xlu0 %v1173, 112
    %v2580 = vpop.permute.xlu0 %2579
    %2581 = vrot.lane.b32.xlu0 %v1174, 112
    %v2582 = vpop.permute.xlu0 %2581
    %2583 = vrot.lane.b32.xlu0 %v1175, 112
    %v2584 = vpop.permute.xlu0 %2583
    %2585 = vrot.lane.b32.xlu0 %v1146, 48
    %v2586 = vpop.permute.xlu0 %2585
    %2587 = vrot.lane.b32.xlu0 %v1152, 48
    %v2588 = vpop.permute.xlu0 %2587
    %2589 = vrot.lane.b32.xlu0 %v1158, 48
    %v2590 = vpop.permute.xlu0 %2589
    %2591 = vrot.lane.b32.xlu0 %v1164, 48
    %v2592 = vpop.permute.xlu0 %2591
    %v2593 = vsel %vm285, %v2578, 0
    %v2595 = vsel %vm285, %v2580, 0
    %v2597 = vsel %vm285, %v2582, 0
    %v2599 = vsel %vm285, %v2584, 0
    %v2601 = vsel %vm285, %v2586, 0
    %v2603 = vsel %vm285, %v2588, 0
    %v2605 = vsel %vm285, %v2590, 0
    %v2607 = vsel %vm285, %v2592, 0
    %2609 = vmatprep.subr.mxu0 0.0
    %2610 = vmatpush1.xpose.msra.mxu0 %v2601
    %2611 = vmatprep.subr.mxu0 0.0
    %2612 = vmatpush1.xpose.msra.mxu0 %v2603
    %2613 = vmatprep.subr.mxu0 0.0
    %2614 = vmatpush1.xpose.msra.mxu0 %v2605
    %2615 = vmatprep.subr.mxu0 0.0
    %2616 = vmatpush1.xpose.msra.mxu0 %v2607
    %2617 = vmatprep.subr.mxu0 0.0
    %2618 = vmatpush1.xpose.msra.mxu0 0.0
    %2619 = vmatprep.subr.mxu0 0.0
    %2620 = vmatpush1.xpose.msra.mxu0 0.0
    %2621 = vmatprep.subr.mxu0 0.0
    %2622 = vmatpush1.xpose.msra.mxu0 0.0
    %2623 = vmatprep.subr.mxu0 0.0
    %2624 = vmatpush1.xpose.msra.mxu0 0.0
    %2625 = vmatprep.subr.mxu0 0.0
    %2626 = vmatpush1.xpose.msra.mxu0 0.0
    %2627 = vmatprep.subr.mxu0 0.0
    %2628 = vmatpush1.xpose.msra.mxu0 0.0
    %2629 = vmatprep.subr.mxu0 0.0
    %2630 = vmatpush1.xpose.msra.mxu0 0.0
    %2631 = vmatprep.subr.mxu0 0.0
    %2632 = vmatpush1.xpose.msra.mxu0 0.0
    %2633 = vmatprep.subr.mxu0 0.0
    %2634 = vmatpush1.xpose.msra.mxu0 0.0
    %2635 = vmatprep.subr.mxu0 0.0
    %2636 = vmatpush1.xpose.msra.mxu0 0.0
    %2637 = vmatprep.subr.mxu0 0.0
    %2638 = vmatpush1.xpose.msra.mxu0 0.0
    %2639 = vmatprep.subr.mxu0 0.0
    %2640 = vmatpush1.xpose.msra.mxu0 0.0
    %2641 = vmatprep.subr.mxu0 0.0
    %2642 = vmatpush1.xpose.msra.mxu0 0.0
    %2643 = vmatprep.subr.mxu0 0.0
    %2644 = vmatpush1.xpose.msra.mxu0 0.0
    %2645 = vmatprep.subr.mxu0 0.0
    %2646 = vmatpush1.xpose.msra.mxu0 0.0
    %2647 = vmatprep.subr.mxu0 0.0
    %2648 = vmatpush1.xpose.msra.mxu0 0.0
    %2649 = vmatprep.subr.mxu0 0.0
    %2650 = vmatpush1.xpose.msra.mxu0 0.0
    %2651 = vmatprep.subr.mxu0 0.0
    %2652 = vmatpush1.xpose.msra.mxu0 0.0
    %2653 = vmatprep.subr.mxu0 0.0
    %2654 = vmatpush1.xpose.msra.mxu0 0.0
    %2655 = vmatprep.subr.mxu0 0.0
    %2656 = vmatpush1.xpose.msra.mxu0 0.0
    %2657 = vmatprep.subr.mxu0 0.0
    %2658 = vmatpush1.xpose.msra.mxu0 0.0
    %2659 = vmatprep.subr.mxu0 0.0
    %2660 = vmatpush1.xpose.msra.mxu0 0.0
    %2661 = vmatprep.subr.mxu0 0.0
    %2662 = vmatpush1.xpose.msra.mxu0 0.0
    %2663 = vmatprep.subr.mxu0 0.0
    %2664 = vmatpush1.xpose.msra.mxu0 0.0
    %2665 = vmatprep.subr.mxu0 0.0
    %2666 = vmatpush1.xpose.msra.mxu0 0.0
    %2667 = vmatprep.subr.mxu0 0.0
    %2668 = vmatpush1.xpose.msra.mxu0 0.0
    %2669 = vmatprep.subr.mxu0 0.0
    %2670 = vmatpush1.xpose.msra.mxu0 0.0
    %2671 = vmatprep.subr.mxu0 0.0
    %2672 = vmatpush1.xpose.msra.mxu0 0.0
    %2673 = vmatprep.mubr.f32.mxu0 0.0
    %2674 = vmatmul.mubr.f32.gmra.mrb[0].mxu0 %v2593
    %v2675 = vpop.f32.mrb[0].mxu0
    %v2676 = vadd.f32 0.0, %v2675
    %v2677 = vpop.f32.mrb[0].mxu0
    %2678 = vmatprep.mubr.f32.mxu0 0.0
    %2679 = vmatmul.mubr.f32.gmra.mrb[0].mxu0 %v2595
    %v2680 = vpop.f32.mrb[0].mxu0
    %v2681 = vadd.f32 0.0, %v2680
    %v2682 = vpop.f32.mrb[0].mxu0
    %2683 = vmatprep.mubr.f32.mxu0 0.0
    %2684 = vmatmul.mubr.f32.gmra.mrb[0].mxu0 %v2597
    %v2685 = vpop.f32.mrb[0].mxu0
    %v2686 = vadd.f32 0.0, %v2685
    %v2687 = vpop.f32.mrb[0].mxu0
    %2688 = vmatprep.mubr.f32.mxu0 0.0
    %2689 = vmatmul.mubr.f32.gmra.mrb[0].mxu0 %v2599
    %v2690 = vpop.f32.mrb[0].mxu0
    %v2691 = vadd.f32 0.0, %v2690
    %v2692 = vpop.f32.mrb[0].mxu0
    %2693 = vdwg.mxu0
    %v2694 = vsel %vm198, %v2676, -inf
    %2695 = vmax.xlane.f32.xlu0 %v2694
    %v2696 = vpop.xlane.xlu0 %2695
    %v2697 = vsel %vm198, %v2681, -inf
    %2698 = vmax.xlane.f32.xlu0 %v2697
    %v2699 = vpop.xlane.xlu0 %2698
    %v2700 = vsel %vm198, %v2686, -inf
    %2701 = vmax.xlane.f32.xlu0 %v2700
    %v2702 = vpop.xlane.xlu0 %2701
    %v2703 = vsel %vm198, %v2691, -inf
    %2704 = vmax.xlane.f32.xlu0 %v2703
    %v2705 = vpop.xlane.xlu0 %2704
    %v2706 = vsub.f32 %v2676, %v2696
    %v2707 = vsub.f32 %v2681, %v2699
    %v2708 = vsub.f32 %v2686, %v2702
    %v2709 = vsub.f32 %v2691, %v2705
    %v2710 = vmul.f32 %v2706, 1.442695
    %v2711 = vpow.pop %v2710
    %v2712 = vmul.f32 %v2707, 1.442695
    %v2713 = vpow.pop %v2712
    %v2714 = vmul.f32 %v2708, 1.442695
    %v2715 = vpow.pop %v2714
    %v2716 = vmul.f32 %v2709, 1.442695
    %v2717 = vpow.pop %v2716
    %v2718 = vsel %vm198, %v2711, 0.0
    %2719 = vadd.xlane.f32.xlu0 %v2718
    %v2720 = vpop.xlane.xlu0 %2719
    %v2721 = vsel %vm198, %v2713, 0.0
    %2722 = vadd.xlane.f32.xlu0 %v2721
    %v2723 = vpop.xlane.xlu0 %2722
    %v2724 = vsel %vm198, %v2715, 0.0
    %2725 = vadd.xlane.f32.xlu0 %v2724
    %v2726 = vpop.xlane.xlu0 %2725
    %v2727 = vsel %vm198, %v2717, 0.0
    %2728 = vadd.xlane.f32.xlu0 %v2727
    %v2729 = vpop.xlane.xlu0 %2728
    %v2730 = vrcp.pop %v2720
    %v2731 = vrcp.pop %v2723
    %v2732 = vrcp.pop %v2726
    %v2733 = vrcp.pop %v2729
    %v2734 = vmul.f32 %v2711, %v2730
    %v2735 = vmul.f32 %v2713, %v2731
    %v2736 = vmul.f32 %v2715, %v2732
    %v2737 = vmul.f32 %v2717, %v2733
    %2742 = vrot.lane.b32.xlu0 %v1148, 112
    %v2743 = vpop.permute.xlu0 %2742
    %2744 = vrot.lane.b32.xlu0 %v1154, 112
    %v2745 = vpop.permute.xlu0 %2744
    %2746 = vrot.lane.b32.xlu0 %v1160, 112
    %v2747 = vpop.permute.xlu0 %2746
    %2748 = vrot.lane.b32.xlu0 %v1166, 112
    %v2749 = vpop.permute.xlu0 %2748
    %v2755 = vsel %vm198, %v2734, 0
    %v2758 = vsel %vm198, %v2735, 0
    %v2761 = vsel %vm198, %v2736, 0
    %v2764 = vsel %vm198, %v2737, 0
    %2766 = vmatprep.subr.mxu0 0.0
    %2767 = vmatpush1.msra.mxu0 %v2743
    %2768 = vmatprep.subr.mxu0 0.0
    %2769 = vmatpush1.msra.mxu0 %v2745
    %2770 = vmatprep.subr.mxu0 0.0
    %2771 = vmatpush1.msra.mxu0 %v2747
    %2772 = vmatprep.subr.mxu0 0.0
    %2773 = vmatpush1.msra.mxu0 %v2749
    %2774 = vmatprep.subr.mxu0 0.0
    %2775 = vmatpush1.msra.mxu0 0.0
    %2776 = vmatprep.subr.mxu0 0.0
    %2777 = vmatpush1.msra.mxu0 0.0
    %2778 = vmatprep.subr.mxu0 0.0
    %2779 = vmatpush1.msra.mxu0 0.0
    %2780 = vmatprep.subr.mxu0 0.0
    %2781 = vmatpush1.msra.mxu0 0.0
    %2782 = vmatprep.subr.mxu0 0.0
    %2783 = vmatpush1.msra.mxu0 0.0
    %2784 = vmatprep.subr.mxu0 0.0
    %2785 = vmatpush1.msra.mxu0 0.0
    %2786 = vmatprep.subr.mxu0 0.0
    %2787 = vmatpush1.msra.mxu0 0.0
    %2788 = vmatprep.subr.mxu0 0.0
    %2789 = vmatpush1.msra.mxu0 0.0
    %2790 = vmatprep.subr.mxu0 0.0
    %2791 = vmatpush1.msra.mxu0 0.0
    %2792 = vmatprep.subr.mxu0 0.0
    %2793 = vmatpush1.msra.mxu0 0.0
    %2794 = vmatprep.subr.mxu0 0.0
    %2795 = vmatpush1.msra.mxu0 0.0
    %2796 = vmatprep.subr.mxu0 0.0
    %2797 = vmatpush1.msra.mxu0 0.0
    %2798 = vmatprep.subr.mxu0 0.0
    %2799 = vmatpush1.msra.mxu0 0.0
    %2800 = vmatprep.subr.mxu0 0.0
    %2801 = vmatpush1.msra.mxu0 0.0
    %2802 = vmatprep.subr.mxu0 0.0
    %2803 = vmatpush1.msra.mxu0 0.0
    %2804 = vmatprep.subr.mxu0 0.0
    %2805 = vmatpush1.msra.mxu0 0.0
    %2806 = vmatprep.subr.mxu0 0.0
    %2807 = vmatpush1.msra.mxu0 0.0
    %2808 = vmatprep.subr.mxu0 0.0
    %2809 = vmatpush1.msra.mxu0 0.0
    %2810 = vmatprep.subr.mxu0 0.0
    %2811 = vmatpush1.msra.mxu0 0.0
    %2812 = vmatprep.subr.mxu0 0.0
    %2813 = vmatpush1.msra.mxu0 0.0
    %2814 = vmatprep.subr.mxu0 0.0
    %2815 = vmatpush1.msra.mxu0 0.0
    %2816 = vmatprep.subr.mxu0 0.0
    %2817 = vmatpush1.msra.mxu0 0.0
    %2818 = vmatprep.subr.mxu0 0.0
    %2819 = vmatpush1.msra.mxu0 0.0
    %2820 = vmatprep.subr.mxu0 0.0
    %2821 = vmatpush1.msra.mxu0 0.0
    %2822 = vmatprep.subr.mxu0 0.0
    %2823 = vmatpush1.msra.mxu0 0.0
    %2824 = vmatprep.subr.mxu0 0.0
    %2825 = vmatpush1.msra.mxu0 0.0
    %2826 = vmatprep.subr.mxu0 0.0
    %2827 = vmatpush1.msra.mxu0 0.0
    %2828 = vmatprep.subr.mxu0 0.0
    %2829 = vmatpush1.msra.mxu0 0.0
    %2830 = vmatprep.mubr.f32.mxu0 0.0
    %2831 = vmatmul.mubr.f32.gmra.mrb[0].mxu0 %v2755
    %v2832 = vpop.f32.mrb[0].mxu0
    %v2833 = vadd.f32 0.0, %v2832
    %v2834 = vpop.f32.mrb[0].mxu0
    %2835 = vmatprep.mubr.f32.mxu0 0.0
    %2836 = vmatmul.mubr.f32.gmra.mrb[0].mxu0 %v2758
    %v2837 = vpop.f32.mrb[0].mxu0
    %v2838 = vadd.f32 0.0, %v2837
    %v2839 = vpop.f32.mrb[0].mxu0
    %2840 = vmatprep.mubr.f32.mxu0 0.0
    %2841 = vmatmul.mubr.f32.gmra.mrb[0].mxu0 %v2761
    %v2842 = vpop.f32.mrb[0].mxu0
    %v2843 = vadd.f32 0.0, %v2842
    %v2844 = vpop.f32.mrb[0].mxu0
    %2845 = vmatprep.mubr.f32.mxu0 0.0
    %2846 = vmatmul.mubr.f32.gmra.mrb[0].mxu0 %v2764
    %v2847 = vpop.f32.mrb[0].mxu0
    %v2848 = vadd.f32 0.0, %v2847
    %v2849 = vpop.f32.mrb[0].mxu0
    %2850 = vdwg.mxu0
    %2855 = vrot.lane.b32.xlu0 %v2833, 16
    %v2856 = vpop.permute.xlu0 %2855
    %2857 = vrot.lane.b32.xlu0 %v2838, 16
    %v2858 = vpop.permute.xlu0 %2857
    %2859 = vrot.lane.b32.xlu0 %v2843, 16
    %v2860 = vpop.permute.xlu0 %2859
    %2861 = vrot.lane.b32.xlu0 %v2848, 16
    %v2862 = vpop.permute.xlu0 %2861
    %2867 = vst.msk [vmem:[#allocation3 + $0x20] sm:$0xff] %vm1728, %v2856
    %2868 = vst.msk [vmem:[#allocation3 + $0x28] sm:$0xff] %vm1728, %v2858
    %2869 = vst.msk [vmem:[#allocation3 + $0x30] sm:$0xff] %vm1728, %v2860
    %2870 = vst.msk [vmem:[#allocation3 + $0x38] sm:$0xff] %vm1728, %v2862
    %2871 = vrot.lane.b32.xlu0 %v1172, 96
    %v2872 = vpop.permute.xlu0 %2871
    %2873 = vrot.lane.b32.xlu0 %v1173, 96
    %v2874 = vpop.permute.xlu0 %2873
    %2875 = vrot.lane.b32.xlu0 %v1174, 96
    %v2876 = vpop.permute.xlu0 %2875
    %2877 = vrot.lane.b32.xlu0 %v1175, 96
    %v2878 = vpop.permute.xlu0 %2877
    %2879 = vrot.lane.b32.xlu0 %v1146, 32
    %v2880 = vpop.permute.xlu0 %2879
    %2881 = vrot.lane.b32.xlu0 %v1152, 32
    %v2882 = vpop.permute.xlu0 %2881
    %2883 = vrot.lane.b32.xlu0 %v1158, 32
    %v2884 = vpop.permute.xlu0 %2883
    %2885 = vrot.lane.b32.xlu0 %v1164, 32
    %v2886 = vpop.permute.xlu0 %2885
    %v2887 = vsel %vm285, %v2872, 0
    %v2889 = vsel %vm285, %v2874, 0
    %v2891 = vsel %vm285, %v2876, 0
    %v2893 = vsel %vm285, %v2878, 0
    %v2895 = vsel %vm285, %v2880, 0
    %v2897 = vsel %vm285, %v2882, 0
    %v2899 = vsel %vm285, %v2884, 0
    %v2901 = vsel %vm285, %v2886, 0
    %2903 = vmatprep.subr.mxu0 0.0
    %2904 = vmatpush1.xpose.msra.mxu0 %v2895
    %2905 = vmatprep.subr.mxu0 0.0
    %2906 = vmatpush1.xpose.msra.mxu0 %v2897
    %2907 = vmatprep.subr.mxu0 0.0
    %2908 = vmatpush1.xpose.msra.mxu0 %v2899
    %2909 = vmatprep.subr.mxu0 0.0
    %2910 = vmatpush1.xpose.msra.mxu0 %v2901
    %2911 = vmatprep.subr.mxu0 0.0
    %2912 = vmatpush1.xpose.msra.mxu0 0.0
    %2913 = vmatprep.subr.mxu0 0.0
    %2914 = vmatpush1.xpose.msra.mxu0 0.0
    %2915 = vmatprep.subr.mxu0 0.0
    %2916 = vmatpush1.xpose.msra.mxu0 0.0
    %2917 = vmatprep.subr.mxu0 0.0
    %2918 = vmatpush1.xpose.msra.mxu0 0.0
    %2919 = vmatprep.subr.mxu0 0.0
    %2920 = vmatpush1.xpose.msra.mxu0 0.0
    %2921 = vmatprep.subr.mxu0 0.0
    %2922 = vmatpush1.xpose.msra.mxu0 0.0
    %2923 = vmatprep.subr.mxu0 0.0
    %2924 = vmatpush1.xpose.msra.mxu0 0.0
    %2925 = vmatprep.subr.mxu0 0.0
    %2926 = vmatpush1.xpose.msra.mxu0 0.0
    %2927 = vmatprep.subr.mxu0 0.0
    %2928 = vmatpush1.xpose.msra.mxu0 0.0
    %2929 = vmatprep.subr.mxu0 0.0
    %2930 = vmatpush1.xpose.msra.mxu0 0.0
    %2931 = vmatprep.subr.mxu0 0.0
    %2932 = vmatpush1.xpose.msra.mxu0 0.0
    %2933 = vmatprep.subr.mxu0 0.0
    %2934 = vmatpush1.xpose.msra.mxu0 0.0
    %2935 = vmatprep.subr.mxu0 0.0
    %2936 = vmatpush1.xpose.msra.mxu0 0.0
    %2937 = vmatprep.subr.mxu0 0.0
    %2938 = vmatpush1.xpose.msra.mxu0 0.0
    %2939 = vmatprep.subr.mxu0 0.0
    %2940 = vmatpush1.xpose.msra.mxu0 0.0
    %2941 = vmatprep.subr.mxu0 0.0
    %2942 = vmatpush1.xpose.msra.mxu0 0.0
    %2943 = vmatprep.subr.mxu0 0.0
    %2944 = vmatpush1.xpose.msra.mxu0 0.0
    %2945 = vmatprep.subr.mxu0 0.0
    %2946 = vmatpush1.xpose.msra.mxu0 0.0
    %2947 = vmatprep.subr.mxu0 0.0
    %2948 = vmatpush1.xpose.msra.mxu0 0.0
    %2949 = vmatprep.subr.mxu0 0.0
    %2950 = vmatpush1.xpose.msra.mxu0 0.0
    %2951 = vmatprep.subr.mxu0 0.0
    %2952 = vmatpush1.xpose.msra.mxu0 0.0
    %2953 = vmatprep.subr.mxu0 0.0
    %2954 = vmatpush1.xpose.msra.mxu0 0.0
    %2955 = vmatprep.subr.mxu0 0.0
    %2956 = vmatpush1.xpose.msra.mxu0 0.0
    %2957 = vmatprep.subr.mxu0 0.0
    %2958 = vmatpush1.xpose.msra.mxu0 0.0
    %2959 = vmatprep.subr.mxu0 0.0
    %2960 = vmatpush1.xpose.msra.mxu0 0.0
    %2961 = vmatprep.subr.mxu0 0.0
    %2962 = vmatpush1.xpose.msra.mxu0 0.0
    %2963 = vmatprep.subr.mxu0 0.0
    %2964 = vmatpush1.xpose.msra.mxu0 0.0
    %2965 = vmatprep.subr.mxu0 0.0
    %2966 = vmatpush1.xpose.msra.mxu0 0.0
    %2967 = vmatprep.mubr.f32.mxu0 0.0
    %2968 = vmatmul.mubr.f32.gmra.mrb[0].mxu0 %v2887
    %v2969 = vpop.f32.mrb[0].mxu0
    %v2970 = vadd.f32 0.0, %v2969
    %v2971 = vpop.f32.mrb[0].mxu0
    %2972 = vmatprep.mubr.f32.mxu0 0.0
    %2973 = vmatmul.mubr.f32.gmra.mrb[0].mxu0 %v2889
    %v2974 = vpop.f32.mrb[0].mxu0
    %v2975 = vadd.f32 0.0, %v2974
    %v2976 = vpop.f32.mrb[0].mxu0
    %2977 = vmatprep.mubr.f32.mxu0 0.0
    %2978 = vmatmul.mubr.f32.gmra.mrb[0].mxu0 %v2891
    %v2979 = vpop.f32.mrb[0].mxu0
    %v2980 = vadd.f32 0.0, %v2979
    %v2981 = vpop.f32.mrb[0].mxu0
    %2982 = vmatprep.mubr.f32.mxu0 0.0
    %2983 = vmatmul.mubr.f32.gmra.mrb[0].mxu0 %v2893
    %v2984 = vpop.f32.mrb[0].mxu0
    %v2985 = vadd.f32 0.0, %v2984
    %v2986 = vpop.f32.mrb[0].mxu0
    %2987 = vdwg.mxu0
    %v2988 = vsel %vm198, %v2970, -inf
    %2989 = vmax.xlane.f32.xlu0 %v2988
    %v2990 = vpop.xlane.xlu0 %2989
    %v2991 = vsel %vm198, %v2975, -inf
    %2992 = vmax.xlane.f32.xlu0 %v2991
    %v2993 = vpop.xlane.xlu0 %2992
    %v2994 = vsel %vm198, %v2980, -inf
    %2995 = vmax.xlane.f32.xlu0 %v2994
    %v2996 = vpop.xlane.xlu0 %2995
    %v2997 = vsel %vm198, %v2985, -inf
    %2998 = vmax.xlane.f32.xlu0 %v2997
    %v2999 = vpop.xlane.xlu0 %2998
    %v3000 = vsub.f32 %v2970, %v2990
    %v3001 = vsub.f32 %v2975, %v2993
    %v3002 = vsub.f32 %v2980, %v2996
    %v3003 = vsub.f32 %v2985, %v2999
    %v3004 = vmul.f32 %v3000, 1.442695
    %v3005 = vpow.pop %v3004
    %v3006 = vmul.f32 %v3001, 1.442695
    %v3007 = vpow.pop %v3006
    %v3008 = vmul.f32 %v3002, 1.442695
    %v3009 = vpow.pop %v3008
    %v3010 = vmul.f32 %v3003, 1.442695
    %v3011 = vpow.pop %v3010
    %v3012 = vsel %vm198, %v3005, 0.0
    %3013 = vadd.xlane.f32.xlu0 %v3012
    %v3014 = vpop.xlane.xlu0 %3013
    %v3015 = vsel %vm198, %v3007, 0.0
    %3016 = vadd.xlane.f32.xlu0 %v3015
    %v3017 = vpop.xlane.xlu0 %3016
    %v3018 = vsel %vm198, %v3009, 0.0
    %3019 = vadd.xlane.f32.xlu0 %v3018
    %v3020 = vpop.xlane.xlu0 %3019
    %v3021 = vsel %vm198, %v3011, 0.0
    %3022 = vadd.xlane.f32.xlu0 %v3021
    %v3023 = vpop.xlane.xlu0 %3022
    %v3024 = vrcp.pop %v3014
    %v3025 = vrcp.pop %v3017
    %v3026 = vrcp.pop %v3020
    %v3027 = vrcp.pop %v3023
    %v3028 = vmul.f32 %v3005, %v3024
    %v3029 = vmul.f32 %v3007, %v3025
    %v3030 = vmul.f32 %v3009, %v3026
    %v3031 = vmul.f32 %v3011, %v3027
    %3032 = vrot.lane.b32.xlu0 %v1148, 96
    %v3033 = vpop.permute.xlu0 %3032
    %3034 = vrot.lane.b32.xlu0 %v1154, 96
    %v3035 = vpop.permute.xlu0 %3034
    %3036 = vrot.lane.b32.xlu0 %v1160, 96
    %v3037 = vpop.permute.xlu0 %3036
    %3038 = vrot.lane.b32.xlu0 %v1166, 96
    %v3039 = vpop.permute.xlu0 %3038
    %v3045 = vsel %vm198, %v3028, 0
    %v3048 = vsel %vm198, %v3029, 0
    %v3051 = vsel %vm198, %v3030, 0
    %v3054 = vsel %vm198, %v3031, 0
    %3056 = vmatprep.subr.mxu0 0.0
    %3057 = vmatpush1.msra.mxu0 %v3033
    %3058 = vmatprep.subr.mxu0 0.0
    %3059 = vmatpush1.msra.mxu0 %v3035
    %3060 = vmatprep.subr.mxu0 0.0
    %3061 = vmatpush1.msra.mxu0 %v3037
    %3062 = vmatprep.subr.mxu0 0.0
    %3063 = vmatpush1.msra.mxu0 %v3039
    %3064 = vmatprep.subr.mxu0 0.0
    %3065 = vmatpush1.msra.mxu0 0.0
    %3066 = vmatprep.subr.mxu0 0.0
    %3067 = vmatpush1.msra.mxu0 0.0
    %3068 = vmatprep.subr.mxu0 0.0
    %3069 = vmatpush1.msra.mxu0 0.0
    %3070 = vmatprep.subr.mxu0 0.0
    %3071 = vmatpush1.msra.mxu0 0.0
    %3072 = vmatprep.subr.mxu0 0.0
    %3073 = vmatpush1.msra.mxu0 0.0
    %3074 = vmatprep.subr.mxu0 0.0
    %3075 = vmatpush1.msra.mxu0 0.0
    %3076 = vmatprep.subr.mxu0 0.0
    %3077 = vmatpush1.msra.mxu0 0.0
    %3078 = vmatprep.subr.mxu0 0.0
    %3079 = vmatpush1.msra.mxu0 0.0
    %3080 = vmatprep.subr.mxu0 0.0
    %3081 = vmatpush1.msra.mxu0 0.0
    %3082 = vmatprep.subr.mxu0 0.0
    %3083 = vmatpush1.msra.mxu0 0.0
    %3084 = vmatprep.subr.mxu0 0.0
    %3085 = vmatpush1.msra.mxu0 0.0
    %3086 = vmatprep.subr.mxu0 0.0
    %3087 = vmatpush1.msra.mxu0 0.0
    %3088 = vmatprep.subr.mxu0 0.0
    %3089 = vmatpush1.msra.mxu0 0.0
    %3090 = vmatprep.subr.mxu0 0.0
    %3091 = vmatpush1.msra.mxu0 0.0
    %3092 = vmatprep.subr.mxu0 0.0
    %3093 = vmatpush1.msra.mxu0 0.0
    %3094 = vmatprep.subr.mxu0 0.0
    %3095 = vmatpush1.msra.mxu0 0.0
    %3096 = vmatprep.subr.mxu0 0.0
    %3097 = vmatpush1.msra.mxu0 0.0
    %3098 = vmatprep.subr.mxu0 0.0
    %3099 = vmatpush1.msra.mxu0 0.0
    %3100 = vmatprep.subr.mxu0 0.0
    %3101 = vmatpush1.msra.mxu0 0.0
    %3102 = vmatprep.subr.mxu0 0.0
    %3103 = vmatpush1.msra.mxu0 0.0
    %3104 = vmatprep.subr.mxu0 0.0
    %3105 = vmatpush1.msra.mxu0 0.0
    %3106 = vmatprep.subr.mxu0 0.0
    %3107 = vmatpush1.msra.mxu0 0.0
    %3108 = vmatprep.subr.mxu0 0.0
    %3109 = vmatpush1.msra.mxu0 0.0
    %3110 = vmatprep.subr.mxu0 0.0
    %3111 = vmatpush1.msra.mxu0 0.0
    %3112 = vmatprep.subr.mxu0 0.0
    %3113 = vmatpush1.msra.mxu0 0.0
    %3114 = vmatprep.subr.mxu0 0.0
    %3115 = vmatpush1.msra.mxu0 0.0
    %3116 = vmatprep.subr.mxu0 0.0
    %3117 = vmatpush1.msra.mxu0 0.0
    %3118 = vmatprep.subr.mxu0 0.0
    %3119 = vmatpush1.msra.mxu0 0.0
    %3120 = vmatprep.mubr.f32.mxu0 0.0
    %3121 = vmatmul.mubr.f32.gmra.mrb[0].mxu0 %v3045
    %v3122 = vpop.f32.mrb[0].mxu0
    %v3123 = vadd.f32 0.0, %v3122
    %v3124 = vpop.f32.mrb[0].mxu0
    %3125 = vmatprep.mubr.f32.mxu0 0.0
    %3126 = vmatmul.mubr.f32.gmra.mrb[0].mxu0 %v3048
    %v3127 = vpop.f32.mrb[0].mxu0
    %v3128 = vadd.f32 0.0, %v3127
    %v3129 = vpop.f32.mrb[0].mxu0
    %3130 = vmatprep.mubr.f32.mxu0 0.0
    %3131 = vmatmul.mubr.f32.gmra.mrb[0].mxu0 %v3051
    %v3132 = vpop.f32.mrb[0].mxu0
    %v3133 = vadd.f32 0.0, %v3132
    %v3134 = vpop.f32.mrb[0].mxu0
    %3135 = vmatprep.mubr.f32.mxu0 0.0
    %3136 = vmatmul.mubr.f32.gmra.mrb[0].mxu0 %v3054
    %v3137 = vpop.f32.mrb[0].mxu0
    %v3138 = vadd.f32 0.0, %v3137
    %v3139 = vpop.f32.mrb[0].mxu0
    %3140 = vdwg.mxu0
    %3145 = vrot.lane.b32.xlu0 %v3123, 32
    %v3146 = vpop.permute.xlu0 %3145
    %3147 = vrot.lane.b32.xlu0 %v3128, 32
    %v3148 = vpop.permute.xlu0 %3147
    %3149 = vrot.lane.b32.xlu0 %v3133, 32
    %v3150 = vpop.permute.xlu0 %3149
    %3151 = vrot.lane.b32.xlu0 %v3138, 32
    %v3152 = vpop.permute.xlu0 %3151
    %3157 = vst.msk [vmem:[#allocation3 + $0x20] sm:$0xff] %vm2019, %v3146
    %3158 = vst.msk [vmem:[#allocation3 + $0x28] sm:$0xff] %vm2019, %v3148
    %3159 = vst.msk [vmem:[#allocation3 + $0x30] sm:$0xff] %vm2019, %v3150
    %3160 = vst.msk [vmem:[#allocation3 + $0x38] sm:$0xff] %vm2019, %v3152
    %3161 = vrot.lane.b32.xlu0 %v1172, 80
    %v3162 = vpop.permute.xlu0 %3161
    %3163 = vrot.lane.b32.xlu0 %v1173, 80
    %v3164 = vpop.permute.xlu0 %3163
    %3165 = vrot.lane.b32.xlu0 %v1174, 80
    %v3166 = vpop.permute.xlu0 %3165
    %3167 = vrot.lane.b32.xlu0 %v1175, 80
    %v3168 = vpop.permute.xlu0 %3167
    %3169 = vrot.lane.b32.xlu0 %v1146, 16
    %v3170 = vpop.permute.xlu0 %3169
    %3171 = vrot.lane.b32.xlu0 %v1152, 16
    %v3172 = vpop.permute.xlu0 %3171
    %3173 = vrot.lane.b32.xlu0 %v1158, 16
    %v3174 = vpop.permute.xlu0 %3173
    %3175 = vrot.lane.b32.xlu0 %v1164, 16
    %v3176 = vpop.permute.xlu0 %3175
    %v3177 = vsel %vm285, %v3162, 0
    %v3179 = vsel %vm285, %v3164, 0
    %v3181 = vsel %vm285, %v3166, 0
    %v3183 = vsel %vm285, %v3168, 0
    %v3185 = vsel %vm285, %v3170, 0
    %v3187 = vsel %vm285, %v3172, 0
    %v3189 = vsel %vm285, %v3174, 0
    %v3191 = vsel %vm285, %v3176, 0
    %3193 = vmatprep.subr.mxu0 0.0
    %3194 = vmatpush1.xpose.msra.mxu0 %v3185
    %3195 = vmatprep.subr.mxu0 0.0
    %3196 = vmatpush1.xpose.msra.mxu0 %v3187
    %3197 = vmatprep.subr.mxu0 0.0
    %3198 = vmatpush1.xpose.msra.mxu0 %v3189
    %3199 = vmatprep.subr.mxu0 0.0
    %3200 = vmatpush1.xpose.msra.mxu0 %v3191
    %3201 = vmatprep.subr.mxu0 0.0
    %3202 = vmatpush1.xpose.msra.mxu0 0.0
    %3203 = vmatprep.subr.mxu0 0.0
    %3204 = vmatpush1.xpose.msra.mxu0 0.0
    %3205 = vmatprep.subr.mxu0 0.0
    %3206 = vmatpush1.xpose.msra.mxu0 0.0
    %3207 = vmatprep.subr.mxu0 0.0
    %3208 = vmatpush1.xpose.msra.mxu0 0.0
    %3209 = vmatprep.subr.mxu0 0.0
    %3210 = vmatpush1.xpose.msra.mxu0 0.0
    %3211 = vmatprep.subr.mxu0 0.0
    %3212 = vmatpush1.xpose.msra.mxu0 0.0
    %3213 = vmatprep.subr.mxu0 0.0
    %3214 = vmatpush1.xpose.msra.mxu0 0.0
    %3215 = vmatprep.subr.mxu0 0.0
    %3216 = vmatpush1.xpose.msra.mxu0 0.0
    %3217 = vmatprep.subr.mxu0 0.0
    %3218 = vmatpush1.xpose.msra.mxu0 0.0
    %3219 = vmatprep.subr.mxu0 0.0
    %3220 = vmatpush1.xpose.msra.mxu0 0.0
    %3221 = vmatprep.subr.mxu0 0.0
    %3222 = vmatpush1.xpose.msra.mxu0 0.0
    %3223 = vmatprep.subr.mxu0 0.0
    %3224 = vmatpush1.xpose.msra.mxu0 0.0
    %3225 = vmatprep.subr.mxu0 0.0
    %3226 = vmatpush1.xpose.msra.mxu0 0.0
    %3227 = vmatprep.subr.mxu0 0.0
    %3228 = vmatpush1.xpose.msra.mxu0 0.0
    %3229 = vmatprep.subr.mxu0 0.0
    %3230 = vmatpush1.xpose.msra.mxu0 0.0
    %3231 = vmatprep.subr.mxu0 0.0
    %3232 = vmatpush1.xpose.msra.mxu0 0.0
    %3233 = vmatprep.subr.mxu0 0.0
    %3234 = vmatpush1.xpose.msra.mxu0 0.0
    %3235 = vmatprep.subr.mxu0 0.0
    %3236 = vmatpush1.xpose.msra.mxu0 0.0
    %3237 = vmatprep.subr.mxu0 0.0
    %3238 = vmatpush1.xpose.msra.mxu0 0.0
    %3239 = vmatprep.subr.mxu0 0.0
    %3240 = vmatpush1.xpose.msra.mxu0 0.0
    %3241 = vmatprep.subr.mxu0 0.0
    %3242 = vmatpush1.xpose.msra.mxu0 0.0
    %3243 = vmatprep.subr.mxu0 0.0
    %3244 = vmatpush1.xpose.msra.mxu0 0.0
    %3245 = vmatprep.subr.mxu0 0.0
    %3246 = vmatpush1.xpose.msra.mxu0 0.0
    %3247 = vmatprep.subr.mxu0 0.0
    %3248 = vmatpush1.xpose.msra.mxu0 0.0
    %3249 = vmatprep.subr.mxu0 0.0
    %3250 = vmatpush1.xpose.msra.mxu0 0.0
    %3251 = vmatprep.subr.mxu0 0.0
    %3252 = vmatpush1.xpose.msra.mxu0 0.0
    %3253 = vmatprep.subr.mxu0 0.0
    %3254 = vmatpush1.xpose.msra.mxu0 0.0
    %3255 = vmatprep.subr.mxu0 0.0
    %3256 = vmatpush1.xpose.msra.mxu0 0.0
    %3257 = vmatprep.mubr.f32.mxu0 0.0
    %3258 = vmatmul.mubr.f32.gmra.mrb[0].mxu0 %v3177
    %v3259 = vpop.f32.mrb[0].mxu0
    %v3260 = vadd.f32 0.0, %v3259
    %v3261 = vpop.f32.mrb[0].mxu0
    %3262 = vmatprep.mubr.f32.mxu0 0.0
    %3263 = vmatmul.mubr.f32.gmra.mrb[0].mxu0 %v3179
    %v3264 = vpop.f32.mrb[0].mxu0
    %v3265 = vadd.f32 0.0, %v3264
    %v3266 = vpop.f32.mrb[0].mxu0
    %3267 = vmatprep.mubr.f32.mxu0 0.0
    %3268 = vmatmul.mubr.f32.gmra.mrb[0].mxu0 %v3181
    %v3269 = vpop.f32.mrb[0].mxu0
    %v3270 = vadd.f32 0.0, %v3269
    %v3271 = vpop.f32.mrb[0].mxu0
    %3272 = vmatprep.mubr.f32.mxu0 0.0
    %3273 = vmatmul.mubr.f32.gmra.mrb[0].mxu0 %v3183
    %v3274 = vpop.f32.mrb[0].mxu0
    %v3275 = vadd.f32 0.0, %v3274
    %v3276 = vpop.f32.mrb[0].mxu0
    %3277 = vdwg.mxu0
    %v3278 = vsel %vm198, %v3260, -inf
    %3279 = vmax.xlane.f32.xlu0 %v3278
    %v3280 = vpop.xlane.xlu0 %3279
    %v3281 = vsel %vm198, %v3265, -inf
    %3282 = vmax.xlane.f32.xlu0 %v3281
    %v3283 = vpop.xlane.xlu0 %3282
    %v3284 = vsel %vm198, %v3270, -inf
    %3285 = vmax.xlane.f32.xlu0 %v3284
    %v3286 = vpop.xlane.xlu0 %3285
    %v3287 = vsel %vm198, %v3275, -inf
    %3288 = vmax.xlane.f32.xlu0 %v3287
    %v3289 = vpop.xlane.xlu0 %3288
    %v3290 = vsub.f32 %v3260, %v3280
    %v3291 = vsub.f32 %v3265, %v3283
    %v3292 = vsub.f32 %v3270, %v3286
    %v3293 = vsub.f32 %v3275, %v3289
    %v3294 = vmul.f32 %v3290, 1.442695
    %v3295 = vpow.pop %v3294
    %v3296 = vmul.f32 %v3291, 1.442695
    %v3297 = vpow.pop %v3296
    %v3298 = vmul.f32 %v3292, 1.442695
    %v3299 = vpow.pop %v3298
    %v3300 = vmul.f32 %v3293, 1.442695
    %v3301 = vpow.pop %v3300
    %v3302 = vsel %vm198, %v3295, 0.0
    %3303 = vadd.xlane.f32.xlu0 %v3302
    %v3304 = vpop.xlane.xlu0 %3303
    %v3305 = vsel %vm198, %v3297, 0.0
    %3306 = vadd.xlane.f32.xlu0 %v3305
    %v3307 = vpop.xlane.xlu0 %3306
    %v3308 = vsel %vm198, %v3299, 0.0
    %3309 = vadd.xlane.f32.xlu0 %v3308
    %v3310 = vpop.xlane.xlu0 %3309
    %v3311 = vsel %vm198, %v3301, 0.0
    %3312 = vadd.xlane.f32.xlu0 %v3311
    %v3313 = vpop.xlane.xlu0 %3312
    %v3314 = vrcp.pop %v3304
    %v3315 = vrcp.pop %v3307
    %v3316 = vrcp.pop %v3310
    %v3317 = vrcp.pop %v3313
    %v3318 = vmul.f32 %v3295, %v3314
    %v3319 = vmul.f32 %v3297, %v3315
    %v3320 = vmul.f32 %v3299, %v3316
    %v3321 = vmul.f32 %v3301, %v3317
    %3322 = vrot.lane.b32.xlu0 %v1148, 80
    %v3323 = vpop.permute.xlu0 %3322
    %3324 = vrot.lane.b32.xlu0 %v1154, 80
    %v3325 = vpop.permute.xlu0 %3324
    %3326 = vrot.lane.b32.xlu0 %v1160, 80
    %v3327 = vpop.permute.xlu0 %3326
    %3328 = vrot.lane.b32.xlu0 %v1166, 80
    %v3329 = vpop.permute.xlu0 %3328
    %v3335 = vsel %vm198, %v3318, 0
    %v3338 = vsel %vm198, %v3319, 0
    %v3341 = vsel %vm198, %v3320, 0
    %v3344 = vsel %vm198, %v3321, 0
    %3346 = vmatprep.subr.mxu0 0.0
    %3347 = vmatpush1.msra.mxu0 %v3323
    %3348 = vmatprep.subr.mxu0 0.0
    %3349 = vmatpush1.msra.mxu0 %v3325
    %3350 = vmatprep.subr.mxu0 0.0
    %3351 = vmatpush1.msra.mxu0 %v3327
    %3352 = vmatprep.subr.mxu0 0.0
    %3353 = vmatpush1.msra.mxu0 %v3329
    %3354 = vmatprep.subr.mxu0 0.0
    %3355 = vmatpush1.msra.mxu0 0.0
    %3356 = vmatprep.subr.mxu0 0.0
    %3357 = vmatpush1.msra.mxu0 0.0
    %3358 = vmatprep.subr.mxu0 0.0
    %3359 = vmatpush1.msra.mxu0 0.0
    %3360 = vmatprep.subr.mxu0 0.0
    %3361 = vmatpush1.msra.mxu0 0.0
    %3362 = vmatprep.subr.mxu0 0.0
    %3363 = vmatpush1.msra.mxu0 0.0
    %3364 = vmatprep.subr.mxu0 0.0
    %3365 = vmatpush1.msra.mxu0 0.0
    %3366 = vmatprep.subr.mxu0 0.0
    %3367 = vmatpush1.msra.mxu0 0.0
    %3368 = vmatprep.subr.mxu0 0.0
    %3369 = vmatpush1.msra.mxu0 0.0
    %3370 = vmatprep.subr.mxu0 0.0
    %3371 = vmatpush1.msra.mxu0 0.0
    %3372 = vmatprep.subr.mxu0 0.0
    %3373 = vmatpush1.msra.mxu0 0.0
    %3374 = vmatprep.subr.mxu0 0.0
    %3375 = vmatpush1.msra.mxu0 0.0
    %3376 = vmatprep.subr.mxu0 0.0
    %3377 = vmatpush1.msra.mxu0 0.0
    %3378 = vmatprep.subr.mxu0 0.0
    %3379 = vmatpush1.msra.mxu0 0.0
    %3380 = vmatprep.subr.mxu0 0.0
    %3381 = vmatpush1.msra.mxu0 0.0
    %3382 = vmatprep.subr.mxu0 0.0
    %3383 = vmatpush1.msra.mxu0 0.0
    %3384 = vmatprep.subr.mxu0 0.0
    %3385 = vmatpush1.msra.mxu0 0.0
    %3386 = vmatprep.subr.mxu0 0.0
    %3387 = vmatpush1.msra.mxu0 0.0
    %3388 = vmatprep.subr.mxu0 0.0
    %3389 = vmatpush1.msra.mxu0 0.0
    %3390 = vmatprep.subr.mxu0 0.0
    %3391 = vmatpush1.msra.mxu0 0.0
    %3392 = vmatprep.subr.mxu0 0.0
    %3393 = vmatpush1.msra.mxu0 0.0
    %3394 = vmatprep.subr.mxu0 0.0
    %3395 = vmatpush1.msra.mxu0 0.0
    %3396 = vmatprep.subr.mxu0 0.0
    %3397 = vmatpush1.msra.mxu0 0.0
    %3398 = vmatprep.subr.mxu0 0.0
    %3399 = vmatpush1.msra.mxu0 0.0
    %3400 = vmatprep.subr.mxu0 0.0
    %3401 = vmatpush1.msra.mxu0 0.0
    %3402 = vmatprep.subr.mxu0 0.0
    %3403 = vmatpush1.msra.mxu0 0.0
    %3404 = vmatprep.subr.mxu0 0.0
    %3405 = vmatpush1.msra.mxu0 0.0
    %3406 = vmatprep.subr.mxu0 0.0
    %3407 = vmatpush1.msra.mxu0 0.0
    %3408 = vmatprep.subr.mxu0 0.0
    %3409 = vmatpush1.msra.mxu0 0.0
    %3410 = vmatprep.mubr.f32.mxu0 0.0
    %3411 = vmatmul.mubr.f32.gmra.mrb[0].mxu0 %v3335
    %v3412 = vpop.f32.mrb[0].mxu0
    %v3413 = vadd.f32 0.0, %v3412
    %v3414 = vpop.f32.mrb[0].mxu0
    %3415 = vmatprep.mubr.f32.mxu0 0.0
    %3416 = vmatmul.mubr.f32.gmra.mrb[0].mxu0 %v3338
    %v3417 = vpop.f32.mrb[0].mxu0
    %v3418 = vadd.f32 0.0, %v3417
    %v3419 = vpop.f32.mrb[0].mxu0
    %3420 = vmatprep.mubr.f32.mxu0 0.0
    %3421 = vmatmul.mubr.f32.gmra.mrb[0].mxu0 %v3341
    %v3422 = vpop.f32.mrb[0].mxu0
    %v3423 = vadd.f32 0.0, %v3422
    %v3424 = vpop.f32.mrb[0].mxu0
    %3425 = vmatprep.mubr.f32.mxu0 0.0
    %3426 = vmatmul.mubr.f32.gmra.mrb[0].mxu0 %v3344
    %v3427 = vpop.f32.mrb[0].mxu0
    %v3428 = vadd.f32 0.0, %v3427
    %v3429 = vpop.f32.mrb[0].mxu0
    %3430 = vdwg.mxu0
    %3435 = vrot.lane.b32.xlu0 %v3413, 48
    %v3436 = vpop.permute.xlu0 %3435
    %3437 = vrot.lane.b32.xlu0 %v3418, 48
    %v3438 = vpop.permute.xlu0 %3437
    %3439 = vrot.lane.b32.xlu0 %v3423, 48
    %v3440 = vpop.permute.xlu0 %3439
    %3441 = vrot.lane.b32.xlu0 %v3428, 48
    %v3442 = vpop.permute.xlu0 %3441
    %3447 = vst.msk [vmem:[#allocation3 + $0x20] sm:$0xff] %vm2310, %v3436
    %3448 = vst.msk [vmem:[#allocation3 + $0x28] sm:$0xff] %vm2310, %v3438
    %3449 = vst.msk [vmem:[#allocation3 + $0x30] sm:$0xff] %vm2310, %v3440
    %3450 = vst.msk [vmem:[#allocation3 + $0x38] sm:$0xff] %vm2310, %v3442
    %v3451 = vld [vmem:[#allocation3] sm:$0xff]
    %v3452 = vld [vmem:[#allocation3 + $0x8] sm:$0xff]
    %v3453 = vld [vmem:[#allocation3 + $0x10] sm:$0xff]
    %v3454 = vld [vmem:[#allocation3 + $0x18] sm:$0xff]
    %v3455 = vld [vmem:[#allocation3 + $0x20] sm:$0xff]
    %v3456 = vld [vmem:[#allocation3 + $0x28] sm:$0xff]
    %v3457 = vld [vmem:[#allocation3 + $0x30] sm:$0xff]
    %v3458 = vld [vmem:[#allocation3 + $0x38] sm:$0xff]
    %v3459 = vld [vmem:[%s11] sm:$0xff]
    %v3460 = vld [vmem:[%s11 + $0x8] sm:$0xff]
    %v3461 = vld [vmem:[%s11 + $0x10] sm:$0xff]
    %v3462 = vld [vmem:[%s11 + $0x18] sm:$0xff]
    %v3463 = vld [vmem:[%s11 + $0x20] sm:$0xff]
    %v3464 = vld [vmem:[%s11 + $0x28] sm:$0xff]
    %v3465 = vld [vmem:[%s11 + $0x30] sm:$0xff]
    %v3466 = vld [vmem:[%s11 + $0x38] sm:$0xff]
    %v3467 = vld [vmem:[%s12] sm:$0x1]
    %v3469 = vlaneseq
    %v3470 = vshrl.u32 %v3469, 7
    %v3471 = vsub.s32 0, %v3470
    %v3472 = vrot.slane %v3467, %v3471
    %v3475 = vsel %vm958, %v3451, 0
    %v3478 = vsel %vm958, %v3452, 0
    %v3481 = vsel %vm958, %v3453, 0
    %v3484 = vsel %vm958, %v3454, 0
    %v3487 = vsel %vm958, %v3455, 0
    %v3490 = vsel %vm958, %v3456, 0
    %v3493 = vsel %vm958, %v3457, 0
    %v3496 = vsel %vm958, %v3458, 0
    %v3499 = vsel %vm958, %v3459, 0
    %v3502 = vsel %vm958, %v3460, 0
    %v3505 = vsel %vm958, %v3461, 0
    %v3508 = vsel %vm958, %v3462, 0
    %v3511 = vsel %vm958, %v3463, 0
    %v3514 = vsel %vm958, %v3464, 0
    %v3517 = vsel %vm958, %v3465, 0
    %v3520 = vsel %vm958, %v3466, 0
    %3522 = vmatprep.subr.mxu0 0.0
    %3523 = vmatpush1.xpose.msra.mxu0 %v3499
    %3524 = vmatprep.subr.mxu0 0.0
    %3525 = vmatpush1.xpose.msra.mxu0 %v3502
    %3526 = vmatprep.subr.mxu0 0.0
    %3527 = vmatpush1.xpose.msra.mxu0 %v3505
    %3528 = vmatprep.subr.mxu0 0.0
    %3529 = vmatpush1.xpose.msra.mxu0 %v3508
    %3530 = vmatprep.subr.mxu0 0.0
    %3531 = vmatpush1.xpose.msra.mxu0 %v3511
    %3532 = vmatprep.subr.mxu0 0.0
    %3533 = vmatpush1.xpose.msra.mxu0 %v3514
    %3534 = vmatprep.subr.mxu0 0.0
    %3535 = vmatpush1.xpose.msra.mxu0 %v3517
    %3536 = vmatprep.subr.mxu0 0.0
    %3537 = vmatpush1.xpose.msra.mxu0 %v3520
    %3538 = vmatprep.subr.mxu0 0.0
    %3539 = vmatpush1.xpose.msra.mxu0 0.0
    %3540 = vmatprep.subr.mxu0 0.0
    %3541 = vmatpush1.xpose.msra.mxu0 0.0
    %3542 = vmatprep.subr.mxu0 0.0
    %3543 = vmatpush1.xpose.msra.mxu0 0.0
    %3544 = vmatprep.subr.mxu0 0.0
    %3545 = vmatpush1.xpose.msra.mxu0 0.0
    %3546 = vmatprep.subr.mxu0 0.0
    %3547 = vmatpush1.xpose.msra.mxu0 0.0
    %3548 = vmatprep.subr.mxu0 0.0
    %3549 = vmatpush1.xpose.msra.mxu0 0.0
    %3550 = vmatprep.subr.mxu0 0.0
    %3551 = vmatpush1.xpose.msra.mxu0 0.0
    %3552 = vmatprep.subr.mxu0 0.0
    %3553 = vmatpush1.xpose.msra.mxu0 0.0
    %3554 = vmatprep.subr.mxu0 0.0
    %3555 = vmatpush1.xpose.msra.mxu0 0.0
    %3556 = vmatprep.subr.mxu0 0.0
    %3557 = vmatpush1.xpose.msra.mxu0 0.0
    %3558 = vmatprep.subr.mxu0 0.0
    %3559 = vmatpush1.xpose.msra.mxu0 0.0
    %3560 = vmatprep.subr.mxu0 0.0
    %3561 = vmatpush1.xpose.msra.mxu0 0.0
    %3562 = vmatprep.subr.mxu0 0.0
    %3563 = vmatpush1.xpose.msra.mxu0 0.0
    %3564 = vmatprep.subr.mxu0 0.0
    %3565 = vmatpush1.xpose.msra.mxu0 0.0
    %3566 = vmatprep.subr.mxu0 0.0
    %3567 = vmatpush1.xpose.msra.mxu0 0.0
    %3568 = vmatprep.subr.mxu0 0.0
    %3569 = vmatpush1.xpose.msra.mxu0 0.0
    %3570 = vmatprep.subr.mxu0 0.0
    %3571 = vmatpush1.xpose.msra.mxu0 0.0
    %3572 = vmatprep.subr.mxu0 0.0
    %3573 = vmatpush1.xpose.msra.mxu0 0.0
    %3574 = vmatprep.subr.mxu0 0.0
    %3575 = vmatpush1.xpose.msra.mxu0 0.0
    %3576 = vmatprep.subr.mxu0 0.0
    %3577 = vmatpush1.xpose.msra.mxu0 0.0
    %3578 = vmatprep.subr.mxu0 0.0
    %3579 = vmatpush1.xpose.msra.mxu0 0.0
    %3580 = vmatprep.subr.mxu0 0.0
    %3581 = vmatpush1.xpose.msra.mxu0 0.0
    %3582 = vmatprep.subr.mxu0 0.0
    %3583 = vmatpush1.xpose.msra.mxu0 0.0
    %3584 = vmatprep.subr.mxu0 0.0
    %3585 = vmatpush1.xpose.msra.mxu0 0.0
    %3586 = vmatprep.mubr.f32.mxu0 0.0
    %3587 = vmatmul.mubr.f32.gmra.mrb[0].mxu0 %v3475
    %v3588 = vpop.f32.mrb[0].mxu0
    %v3589 = vadd.f32 %v3472, %v3588
    %v3590 = vpop.f32.mrb[0].mxu0
    %3591 = vmatprep.mubr.f32.mxu0 0.0
    %3592 = vmatmul.mubr.f32.gmra.mrb[0].mxu0 %v3478
    %v3593 = vpop.f32.mrb[0].mxu0
    %v3594 = vadd.f32 %v3472, %v3593
    %v3595 = vpop.f32.mrb[0].mxu0
    %3596 = vmatprep.mubr.f32.mxu0 0.0
    %3597 = vmatmul.mubr.f32.gmra.mrb[0].mxu0 %v3481
    %v3598 = vpop.f32.mrb[0].mxu0
    %v3599 = vadd.f32 %v3472, %v3598
    %v3600 = vpop.f32.mrb[0].mxu0
    %3601 = vmatprep.mubr.f32.mxu0 0.0
    %3602 = vmatmul.mubr.f32.gmra.mrb[0].mxu0 %v3484
    %v3603 = vpop.f32.mrb[0].mxu0
    %v3604 = vadd.f32 %v3472, %v3603
    %v3605 = vpop.f32.mrb[0].mxu0
    %3606 = vmatprep.mubr.f32.mxu0 0.0
    %3607 = vmatmul.mubr.f32.gmra.mrb[0].mxu0 %v3487
    %v3608 = vpop.f32.mrb[0].mxu0
    %v3609 = vadd.f32 %v3472, %v3608
    %v3610 = vpop.f32.mrb[0].mxu0
    %3611 = vmatprep.mubr.f32.mxu0 0.0
    %3612 = vmatmul.mubr.f32.gmra.mrb[0].mxu0 %v3490
    %v3613 = vpop.f32.mrb[0].mxu0
    %v3614 = vadd.f32 %v3472, %v3613
    %v3615 = vpop.f32.mrb[0].mxu0
    %3616 = vmatprep.mubr.f32.mxu0 0.0
    %3617 = vmatmul.mubr.f32.gmra.mrb[0].mxu0 %v3493
    %v3618 = vpop.f32.mrb[0].mxu0
    %v3619 = vadd.f32 %v3472, %v3618
    %v3620 = vpop.f32.mrb[0].mxu0
    %3621 = vmatprep.mubr.f32.mxu0 0.0
    %3622 = vmatmul.mubr.f32.gmra.mrb[0].mxu0 %v3496
    %v3623 = vpop.f32.mrb[0].mxu0
    %v3624 = vadd.f32 %v3472, %v3623
    %v3625 = vpop.f32.mrb[0].mxu0
    %3626 = vdwg.mxu0
    %v3627 = vld [vmem:[%s13] sm:$0xff]
    %v3628 = vld [vmem:[%s13 + $0x8] sm:$0xff]
    %v3629 = vld [vmem:[%s13 + $0x10] sm:$0xff]
    %v3630 = vld [vmem:[%s13 + $0x18] sm:$0xff]
    %v3631 = vld [vmem:[%s14] sm:$0x1]
    %v3633 = vlaneseq
    %v3634 = vshrl.u32 %v3633, 7
    %v3635 = vsub.s32 0, %v3634
    %v3636 = vrot.slane %v3631, %v3635
    %v3639 = vsel %vm958, %v3589, 0
    %v3642 = vsel %vm958, %v3594, 0
    %v3645 = vsel %vm958, %v3599, 0
    %v3648 = vsel %vm958, %v3604, 0
    %v3651 = vsel %vm958, %v3609, 0
    %v3654 = vsel %vm958, %v3614, 0
    %v3657 = vsel %vm958, %v3619, 0
    %v3660 = vsel %vm958, %v3624, 0
    %v3663 = vsel %vm958, %v3627, 0
    %v3666 = vsel %vm958, %v3628, 0
    %v3669 = vsel %vm958, %v3629, 0
    %v3672 = vsel %vm958, %v3630, 0
    %3674 = vmatprep.subr.mxu0 0.0
    %3675 = vmatpush1.xpose.msra.mxu0 %v3663
    %3676 = vmatprep.subr.mxu0 0.0
    %3677 = vmatpush1.xpose.msra.mxu0 %v3666
    %3678 = vmatprep.subr.mxu0 0.0
    %3679 = vmatpush1.xpose.msra.mxu0 %v3669
    %3680 = vmatprep.subr.mxu0 0.0
    %3681 = vmatpush1.xpose.msra.mxu0 %v3672
    %3682 = vmatprep.subr.mxu0 0.0
    %3683 = vmatpush1.xpose.msra.mxu0 0.0
    %3684 = vmatprep.subr.mxu0 0.0
    %3685 = vmatpush1.xpose.msra.mxu0 0.0
    %3686 = vmatprep.subr.mxu0 0.0
    %3687 = vmatpush1.xpose.msra.mxu0 0.0
    %3688 = vmatprep.subr.mxu0 0.0
    %3689 = vmatpush1.xpose.msra.mxu0 0.0
    %3690 = vmatprep.subr.mxu0 0.0
    %3691 = vmatpush1.xpose.msra.mxu0 0.0
    %3692 = vmatprep.subr.mxu0 0.0
    %3693 = vmatpush1.xpose.msra.mxu0 0.0
    %3694 = vmatprep.subr.mxu0 0.0
    %3695 = vmatpush1.xpose.msra.mxu0 0.0
    %3696 = vmatprep.subr.mxu0 0.0
    %3697 = vmatpush1.xpose.msra.mxu0 0.0
    %3698 = vmatprep.subr.mxu0 0.0
    %3699 = vmatpush1.xpose.msra.mxu0 0.0
    %3700 = vmatprep.subr.mxu0 0.0
    %3701 = vmatpush1.xpose.msra.mxu0 0.0
    %3702 = vmatprep.subr.mxu0 0.0
    %3703 = vmatpush1.xpose.msra.mxu0 0.0
    %3704 = vmatprep.subr.mxu0 0.0
    %3705 = vmatpush1.xpose.msra.mxu0 0.0
    %3706 = vmatprep.subr.mxu0 0.0
    %3707 = vmatpush1.xpose.msra.mxu0 0.0
    %3708 = vmatprep.subr.mxu0 0.0
    %3709 = vmatpush1.xpose.msra.mxu0 0.0
    %3710 = vmatprep.subr.mxu0 0.0
    %3711 = vmatpush1.xpose.msra.mxu0 0.0
    %3712 = vmatprep.subr.mxu0 0.0
    %3713 = vmatpush1.xpose.msra.mxu0 0.0
    %3714 = vmatprep.subr.mxu0 0.0
    %3715 = vmatpush1.xpose.msra.mxu0 0.0
    %3716 = vmatprep.subr.mxu0 0.0
    %3717 = vmatpush1.xpose.msra.mxu0 0.0
    %3718 = vmatprep.subr.mxu0 0.0
    %3719 = vmatpush1.xpose.msra.mxu0 0.0
    %3720 = vmatprep.subr.mxu0 0.0
    %3721 = vmatpush1.xpose.msra.mxu0 0.0
    %3722 = vmatprep.subr.mxu0 0.0
    %3723 = vmatpush1.xpose.msra.mxu0 0.0
    %3724 = vmatprep.subr.mxu0 0.0
    %3725 = vmatpush1.xpose.msra.mxu0 0.0
    %3726 = vmatprep.subr.mxu0 0.0
    %3727 = vmatpush1.xpose.msra.mxu0 0.0
    %3728 = vmatprep.subr.mxu0 0.0
    %3729 = vmatpush1.xpose.msra.mxu0 0.0
    %3730 = vmatprep.subr.mxu0 0.0
    %3731 = vmatpush1.xpose.msra.mxu0 0.0
    %3732 = vmatprep.subr.mxu0 0.0
    %3733 = vmatpush1.xpose.msra.mxu0 0.0
    %3734 = vmatprep.subr.mxu0 0.0
    %3735 = vmatpush1.xpose.msra.mxu0 0.0
    %3736 = vmatprep.subr.mxu0 0.0
    %3737 = vmatpush1.xpose.msra.mxu0 0.0
    %3738 = vmatprep.mubr.f32.mxu0 0.0
    %3739 = vmatmul.mubr.f32.gmra.mrb[0].mxu0 %v3639
    %v3740 = vpop.f32.mrb[0].mxu0
    %v3741 = vadd.f32 %v3636, %v3740
    %v3742 = vpop.f32.mrb[0].mxu0
    %3743 = vmatprep.mubr.f32.mxu0 0.0
    %3744 = vmatmul.mubr.f32.gmra.mrb[0].mxu0 %v3642
    %v3745 = vpop.f32.mrb[0].mxu0
    %v3746 = vadd.f32 %v3636, %v3745
    %v3747 = vpop.f32.mrb[0].mxu0
    %3748 = vmatprep.mubr.f32.mxu0 0.0
    %3749 = vmatmul.mubr.f32.gmra.mrb[0].mxu0 %v3645
    %v3750 = vpop.f32.mrb[0].mxu0
    %v3751 = vadd.f32 %v3636, %v3750
    %v3752 = vpop.f32.mrb[0].mxu0
    %3753 = vmatprep.mubr.f32.mxu0 0.0
    %3754 = vmatmul.mubr.f32.gmra.mrb[0].mxu0 %v3648
    %v3755 = vpop.f32.mrb[0].mxu0
    %v3756 = vadd.f32 %v3636, %v3755
    %v3757 = vpop.f32.mrb[0].mxu0
    %3758 = vmatprep.mubr.f32.mxu0 0.0
    %3759 = vmatmul.mubr.f32.gmra.mrb[0].mxu0 %v3651
    %v3760 = vpop.f32.mrb[0].mxu0
    %v3761 = vadd.f32 %v3636, %v3760
    %v3762 = vpop.f32.mrb[0].mxu0
    %3763 = vmatprep.mubr.f32.mxu0 0.0
    %3764 = vmatmul.mubr.f32.gmra.mrb[0].mxu0 %v3654
    %v3765 = vpop.f32.mrb[0].mxu0
    %v3766 = vadd.f32 %v3636, %v3765
    %v3767 = vpop.f32.mrb[0].mxu0
    %3768 = vmatprep.mubr.f32.mxu0 0.0
    %3769 = vmatmul.mubr.f32.gmra.mrb[0].mxu0 %v3657
    %v3770 = vpop.f32.mrb[0].mxu0
    %v3771 = vadd.f32 %v3636, %v3770
    %v3772 = vpop.f32.mrb[0].mxu0
    %3773 = vmatprep.mubr.f32.mxu0 0.0
    %3774 = vmatmul.mubr.f32.gmra.mrb[0].mxu0 %v3660
    %v3775 = vpop.f32.mrb[0].mxu0
    %v3776 = vadd.f32 %v3636, %v3775
    %v3777 = vpop.f32.mrb[0].mxu0
    %3778 = vdwg.mxu0
    %v3779 = vld [vmem:[%s15] sm:$0x1]
    %v3780 = vld [vmem:[%s16] sm:$0x1]
    %v3781 = vsel %vm198, %v3741, 0.0
    %3782 = vadd.xlane.f32.xlu0 %v3781
    %v3783 = vpop.xlane.xlu0 %3782
    %v3784 = vsel %vm198, %v3746, 0.0
    %3785 = vadd.xlane.f32.xlu0 %v3784
    %v3786 = vpop.xlane.xlu0 %3785
    %v3787 = vsel %vm198, %v3751, 0.0
    %3788 = vadd.xlane.f32.xlu0 %v3787
    %v3789 = vpop.xlane.xlu0 %3788
    %v3790 = vsel %vm198, %v3756, 0.0
    %3791 = vadd.xlane.f32.xlu0 %v3790
    %v3792 = vpop.xlane.xlu0 %3791
    %v3793 = vsel %vm198, %v3761, 0.0
    %3794 = vadd.xlane.f32.xlu0 %v3793
    %v3795 = vpop.xlane.xlu0 %3794
    %v3796 = vsel %vm198, %v3766, 0.0
    %3797 = vadd.xlane.f32.xlu0 %v3796
    %v3798 = vpop.xlane.xlu0 %3797
    %v3799 = vsel %vm198, %v3771, 0.0
    %3800 = vadd.xlane.f32.xlu0 %v3799
    %v3801 = vpop.xlane.xlu0 %3800
    %v3802 = vsel %vm198, %v3776, 0.0
    %3803 = vadd.xlane.f32.xlu0 %v3802
    %v3804 = vpop.xlane.xlu0 %3803
    %v3805 = vmul.f32 %v3783, %v205
    %v3806 = vmul.f32 %v3786, %v205
    %v3807 = vmul.f32 %v3789, %v205
    %v3808 = vmul.f32 %v3792, %v205
    %v3809 = vmul.f32 %v3795, %v205
    %v3810 = vmul.f32 %v3798, %v205
    %v3811 = vmul.f32 %v3801, %v205
    %v3812 = vmul.f32 %v3804, %v205
    %v3813 = vsub.f32 %v3741, %v3805
    %v3814 = vsub.f32 %v3746, %v3806
    %v3815 = vsub.f32 %v3751, %v3807
    %v3816 = vsub.f32 %v3756, %v3808
    %v3817 = vsub.f32 %v3761, %v3809
    %v3818 = vsub.f32 %v3766, %v3810
    %v3819 = vsub.f32 %v3771, %v3811
    %v3820 = vsub.f32 %v3776, %v3812
    %v3821 = vmul.f32 %v3813, %v3813
    %v3822 = vmul.f32 %v3814, %v3814
    %v3823 = vmul.f32 %v3815, %v3815
    %v3824 = vmul.f32 %v3816, %v3816
    %v3825 = vmul.f32 %v3817, %v3817
    %v3826 = vmul.f32 %v3818, %v3818
    %v3827 = vmul.f32 %v3819, %v3819
    %v3828 = vmul.f32 %v3820, %v3820
    %v3829 = vsel %vm198, %v3821, 0.0
    %3830 = vadd.xlane.f32.xlu0 %v3829
    %v3831 = vpop.xlane.xlu0 %3830
    %v3832 = vsel %vm198, %v3822, 0.0
    %3833 = vadd.xlane.f32.xlu0 %v3832
    %v3834 = vpop.xlane.xlu0 %3833
    %v3835 = vsel %vm198, %v3823, 0.0
    %3836 = vadd.xlane.f32.xlu0 %v3835
    %v3837 = vpop.xlane.xlu0 %3836
    %v3838 = vsel %vm198, %v3824, 0.0
    %3839 = vadd.xlane.f32.xlu0 %v3838
    %v3840 = vpop.xlane.xlu0 %3839
    %v3841 = vsel %vm198, %v3825, 0.0
    %3842 = vadd.xlane.f32.xlu0 %v3841
    %v3843 = vpop.xlane.xlu0 %3842
    %v3844 = vsel %vm198, %v3826, 0.0
    %3845 = vadd.xlane.f32.xlu0 %v3844
    %v3846 = vpop.xlane.xlu0 %3845
    %v3847 = vsel %vm198, %v3827, 0.0
    %3848 = vadd.xlane.f32.xlu0 %v3847
    %v3849 = vpop.xlane.xlu0 %3848
    %v3850 = vsel %vm198, %v3828, 0.0
    %3851 = vadd.xlane.f32.xlu0 %v3850
    %v3852 = vpop.xlane.xlu0 %3851
    %v3853 = vmul.f32 %v3831, %v205
    %v3854 = vmul.f32 %v3834, %v205
    %v3855 = vmul.f32 %v3837, %v205
    %v3856 = vmul.f32 %v3840, %v205
    %v3857 = vmul.f32 %v3843, %v205
    %v3858 = vmul.f32 %v3846, %v205
    %v3859 = vmul.f32 %v3849, %v205
    %v3860 = vmul.f32 %v3852, %v205
    %v3861 = vadd.f32 %v3853, 1e-12
    %v3862 = vadd.f32 %v3854, 1e-12
    %v3863 = vadd.f32 %v3855, 1e-12
    %v3864 = vadd.f32 %v3856, 1e-12
    %v3865 = vadd.f32 %v3857, 1e-12
    %v3866 = vadd.f32 %v3858, 1e-12
    %v3867 = vadd.f32 %v3859, 1e-12
    %v3868 = vadd.f32 %v3860, 1e-12
    %v3869 = vrsqrt.pop %v3861
    %v3870 = vrsqrt.pop %v3862
    %v3871 = vrsqrt.pop %v3863
    %v3872 = vrsqrt.pop %v3864
    %v3873 = vrsqrt.pop %v3865
    %v3874 = vrsqrt.pop %v3866
    %v3875 = vrsqrt.pop %v3867
    %v3876 = vrsqrt.pop %v3868
    %v3877 = vmul.f32 %v3813, %v3869
    %v3878 = vmul.f32 %v3814, %v3870
    %v3879 = vmul.f32 %v3815, %v3871
    %v3880 = vmul.f32 %v3816, %v3872
    %v3881 = vmul.f32 %v3817, %v3873
    %v3882 = vmul.f32 %v3818, %v3874
    %v3883 = vmul.f32 %v3819, %v3875
    %v3884 = vmul.f32 %v3820, %v3876
    %v3886 = vlaneseq
    %v3887 = vshrl.u32 %v3886, 7
    %v3888 = vsub.s32 0, %v3887
    %v3889 = vrot.slane %v3779, %v3888
    %v3891 = vmul.f32 %v3877, %v3889
    %v3892 = vmul.f32 %v3878, %v3889
    %v3893 = vmul.f32 %v3879, %v3889
    %v3894 = vmul.f32 %v3880, %v3889
    %v3895 = vmul.f32 %v3881, %v3889
    %v3896 = vmul.f32 %v3882, %v3889
    %v3897 = vmul.f32 %v3883, %v3889
    %v3898 = vmul.f32 %v3884, %v3889
    %v3900 = vlaneseq
    %v3901 = vshrl.u32 %v3900, 7
    %v3902 = vsub.s32 0, %v3901
    %v3903 = vrot.slane %v3780, %v3902
    %v3905 = vadd.f32 %v3891, %v3903
    %v3906 = vadd.f32 %v3892, %v3903
    %v3907 = vadd.f32 %v3893, %v3903
    %v3908 = vadd.f32 %v3894, %v3903
    %v3909 = vadd.f32 %v3895, %v3903
    %v3910 = vadd.f32 %v3896, %v3903
    %v3911 = vadd.f32 %v3897, %v3903
    %v3912 = vadd.f32 %v3898, %v3903
    %v3913 = vadd.f32 %v738, %v3905
    %v3914 = vadd.f32 %v739, %v3906
    %v3915 = vadd.f32 %v740, %v3907
    %v3916 = vadd.f32 %v741, %v3908
    %v3917 = vadd.f32 %v742, %v3909
    %v3918 = vadd.f32 %v743, %v3910
    %v3919 = vadd.f32 %v744, %v3911
    %v3920 = vadd.f32 %v745, %v3912
    %3921 = vst.msk [vmem:[#allocation2] sm:$0xff] %vm198, %v3913
    %3922 = vst.msk [vmem:[#allocation2 + $0x8] sm:$0xff] %vm198, %v3914
    %3923 = vst.msk [vmem:[#allocation2 + $0x10] sm:$0xff] %vm198, %v3915
    %3924 = vst.msk [vmem:[#allocation2 + $0x18] sm:$0xff] %vm198, %v3916
    %3925 = vst.msk [vmem:[#allocation2 + $0x20] sm:$0xff] %vm198, %v3917
    %3926 = vst.msk [vmem:[#allocation2 + $0x28] sm:$0xff] %vm198, %v3918
    %3927 = vst.msk [vmem:[#allocation2 + $0x30] sm:$0xff] %vm198, %v3919
    %3928 = vst.msk [vmem:[#allocation2 + $0x38] sm:$0xff] %vm198, %v3920
    %v3929 = vld [vmem:[#allocation2] sm:$0xff]
    %v3930 = vld [vmem:[#allocation2 + $0x8] sm:$0xff]
    %v3931 = vld [vmem:[#allocation2 + $0x10] sm:$0xff]
    %v3932 = vld [vmem:[#allocation2 + $0x18] sm:$0xff]
    %v3933 = vld [vmem:[#allocation2 + $0x20] sm:$0xff]
    %v3934 = vld [vmem:[#allocation2 + $0x28] sm:$0xff]
    %v3935 = vld [vmem:[#allocation2 + $0x30] sm:$0xff]
    %v3936 = vld [vmem:[#allocation2 + $0x38] sm:$0xff]
    %v3937 = vmax.f32 %v3929, 0.0
    %v3938 = vmax.f32 %v3930, 0.0
    %v3939 = vmax.f32 %v3931, 0.0
    %v3940 = vmax.f32 %v3932, 0.0
    %v3941 = vmax.f32 %v3933, 0.0
    %v3942 = vmax.f32 %v3934, 0.0
    %v3943 = vmax.f32 %v3935, 0.0
    %v3944 = vmax.f32 %v3936, 0.0
    %s3945 = scalar_lea.vmem %s7, 64
    %v3946 = vld [vmem:[%s3945] sm:$0xff]
    %v3947 = vld [vmem:[%s3945 + $0x8] sm:$0xff]
    %v3948 = vld [vmem:[%s3945 + $0x10] sm:$0xff]
    %v3949 = vld [vmem:[%s3945 + $0x18] sm:$0xff]
    %v3950 = vld [vmem:[%s3945 + $0x20] sm:$0xff]
    %v3951 = vld [vmem:[%s3945 + $0x28] sm:$0xff]
    %v3952 = vld [vmem:[%s3945 + $0x30] sm:$0xff]
    %v3953 = vld [vmem:[%s3945 + $0x38] sm:$0xff]
    %s3954 = scalar_lea.vmem %s8, 1
    %v3955 = vld [vmem:[%s3954] sm:$0x1]
    %v3957 = vlaneseq
    %v3958 = vshrl.u32 %v3957, 7
    %v3959 = vsub.s32 0, %v3958
    %v3960 = vrot.slane %v3955, %v3959
    %v3963 = vsel %vm198, %v3937, 0
    %v3966 = vsel %vm198, %v3938, 0
    %v3969 = vsel %vm198, %v3939, 0
    %v3972 = vsel %vm198, %v3940, 0
    %v3975 = vsel %vm198, %v3941, 0
    %v3978 = vsel %vm198, %v3942, 0
    %v3981 = vsel %vm198, %v3943, 0
    %v3984 = vsel %vm198, %v3944, 0
    %v3987 = vsel %vm198, %v3946, 0
    %v3990 = vsel %vm198, %v3947, 0
    %v3993 = vsel %vm198, %v3948, 0
    %v3996 = vsel %vm198, %v3949, 0
    %v3999 = vsel %vm198, %v3950, 0
    %v4002 = vsel %vm198, %v3951, 0
    %v4005 = vsel %vm198, %v3952, 0
    %v4008 = vsel %vm198, %v3953, 0
    %4010 = vmatprep.subr.mxu0 0.0
    %4011 = vmatpush1.xpose.msra.mxu0 %v3987
    %4012 = vmatprep.subr.mxu0 0.0
    %4013 = vmatpush1.xpose.msra.mxu0 %v3990
    %4014 = vmatprep.subr.mxu0 0.0
    %4015 = vmatpush1.xpose.msra.mxu0 %v3993
    %4016 = vmatprep.subr.mxu0 0.0
    %4017 = vmatpush1.xpose.msra.mxu0 %v3996
    %4018 = vmatprep.subr.mxu0 0.0
    %4019 = vmatpush1.xpose.msra.mxu0 %v3999
    %4020 = vmatprep.subr.mxu0 0.0
    %4021 = vmatpush1.xpose.msra.mxu0 %v4002
    %4022 = vmatprep.subr.mxu0 0.0
    %4023 = vmatpush1.xpose.msra.mxu0 %v4005
    %4024 = vmatprep.subr.mxu0 0.0
    %4025 = vmatpush1.xpose.msra.mxu0 %v4008
    %4026 = vmatprep.subr.mxu0 0.0
    %4027 = vmatpush1.xpose.msra.mxu0 0.0
    %4028 = vmatprep.subr.mxu0 0.0
    %4029 = vmatpush1.xpose.msra.mxu0 0.0
    %4030 = vmatprep.subr.mxu0 0.0
    %4031 = vmatpush1.xpose.msra.mxu0 0.0
    %4032 = vmatprep.subr.mxu0 0.0
    %4033 = vmatpush1.xpose.msra.mxu0 0.0
    %4034 = vmatprep.subr.mxu0 0.0
    %4035 = vmatpush1.xpose.msra.mxu0 0.0
    %4036 = vmatprep.subr.mxu0 0.0
    %4037 = vmatpush1.xpose.msra.mxu0 0.0
    %4038 = vmatprep.subr.mxu0 0.0
    %4039 = vmatpush1.xpose.msra.mxu0 0.0
    %4040 = vmatprep.subr.mxu0 0.0
    %4041 = vmatpush1.xpose.msra.mxu0 0.0
    %4042 = vmatprep.subr.mxu0 0.0
    %4043 = vmatpush1.xpose.msra.mxu0 0.0
    %4044 = vmatprep.subr.mxu0 0.0
    %4045 = vmatpush1.xpose.msra.mxu0 0.0
    %4046 = vmatprep.subr.mxu0 0.0
    %4047 = vmatpush1.xpose.msra.mxu0 0.0
    %4048 = vmatprep.subr.mxu0 0.0
    %4049 = vmatpush1.xpose.msra.mxu0 0.0
    %4050 = vmatprep.subr.mxu0 0.0
    %4051 = vmatpush1.xpose.msra.mxu0 0.0
    %4052 = vmatprep.subr.mxu0 0.0
    %4053 = vmatpush1.xpose.msra.mxu0 0.0
    %4054 = vmatprep.subr.mxu0 0.0
    %4055 = vmatpush1.xpose.msra.mxu0 0.0
    %4056 = vmatprep.subr.mxu0 0.0
    %4057 = vmatpush1.xpose.msra.mxu0 0.0
    %4058 = vmatprep.subr.mxu0 0.0
    %4059 = vmatpush1.xpose.msra.mxu0 0.0
    %4060 = vmatprep.subr.mxu0 0.0
    %4061 = vmatpush1.xpose.msra.mxu0 0.0
    %4062 = vmatprep.subr.mxu0 0.0
    %4063 = vmatpush1.xpose.msra.mxu0 0.0
    %4064 = vmatprep.subr.mxu0 0.0
    %4065 = vmatpush1.xpose.msra.mxu0 0.0
    %4066 = vmatprep.subr.mxu0 0.0
    %4067 = vmatpush1.xpose.msra.mxu0 0.0
    %4068 = vmatprep.subr.mxu0 0.0
    %4069 = vmatpush1.xpose.msra.mxu0 0.0
    %4070 = vmatprep.subr.mxu0 0.0
    %4071 = vmatpush1.xpose.msra.mxu0 0.0
    %4072 = vmatprep.subr.mxu0 0.0
    %4073 = vmatpush1.xpose.msra.mxu0 0.0
    %4074 = vmatprep.mubr.f32.mxu0 0.0
    %4075 = vmatmul.mubr.f32.gmra.mrb[0].mxu0 %v3963
    %v4076 = vpop.f32.mrb[0].mxu0
    %v4077 = vadd.f32 %v3960, %v4076
    %v4078 = vpop.f32.mrb[0].mxu0
    %4079 = vmatprep.mubr.f32.mxu0 0.0
    %4080 = vmatmul.mubr.f32.gmra.mrb[0].mxu0 %v3966
    %v4081 = vpop.f32.mrb[0].mxu0
    %v4082 = vadd.f32 %v3960, %v4081
    %v4083 = vpop.f32.mrb[0].mxu0
    %4084 = vmatprep.mubr.f32.mxu0 0.0
    %4085 = vmatmul.mubr.f32.gmra.mrb[0].mxu0 %v3969
    %v4086 = vpop.f32.mrb[0].mxu0
    %v4087 = vadd.f32 %v3960, %v4086
    %v4088 = vpop.f32.mrb[0].mxu0
    %4089 = vmatprep.mubr.f32.mxu0 0.0
    %4090 = vmatmul.mubr.f32.gmra.mrb[0].mxu0 %v3972
    %v4091 = vpop.f32.mrb[0].mxu0
    %v4092 = vadd.f32 %v3960, %v4091
    %v4093 = vpop.f32.mrb[0].mxu0
    %4094 = vmatprep.mubr.f32.mxu0 0.0
    %4095 = vmatmul.mubr.f32.gmra.mrb[0].mxu0 %v3975
    %v4096 = vpop.f32.mrb[0].mxu0
    %v4097 = vadd.f32 %v3960, %v4096
    %v4098 = vpop.f32.mrb[0].mxu0
    %4099 = vmatprep.mubr.f32.mxu0 0.0
    %4100 = vmatmul.mubr.f32.gmra.mrb[0].mxu0 %v3978
    %v4101 = vpop.f32.mrb[0].mxu0
    %v4102 = vadd.f32 %v3960, %v4101
    %v4103 = vpop.f32.mrb[0].mxu0
    %4104 = vmatprep.mubr.f32.mxu0 0.0
    %4105 = vmatmul.mubr.f32.gmra.mrb[0].mxu0 %v3981
    %v4106 = vpop.f32.mrb[0].mxu0
    %v4107 = vadd.f32 %v3960, %v4106
    %v4108 = vpop.f32.mrb[0].mxu0
    %4109 = vmatprep.mubr.f32.mxu0 0.0
    %4110 = vmatmul.mubr.f32.gmra.mrb[0].mxu0 %v3984
    %v4111 = vpop.f32.mrb[0].mxu0
    %v4112 = vadd.f32 %v3960, %v4111
    %v4113 = vpop.f32.mrb[0].mxu0
    %4114 = vdwg.mxu0
    %s4115 = scalar_lea.vmem %s9, 192
    %v4116 = vld [vmem:[%s4115] sm:$0xff]
    %v4117 = vld [vmem:[%s4115 + $0x8] sm:$0xff]
    %v4118 = vld [vmem:[%s4115 + $0x10] sm:$0xff]
    %v4119 = vld [vmem:[%s4115 + $0x18] sm:$0xff]
    %v4120 = vld [vmem:[%s4115 + $0x20] sm:$0xff]
    %v4121 = vld [vmem:[%s4115 + $0x28] sm:$0xff]
    %v4122 = vld [vmem:[%s4115 + $0x30] sm:$0xff]
    %v4123 = vld [vmem:[%s4115 + $0x38] sm:$0xff]
    %v4124 = vld [vmem:[%s4115 + $0x40] sm:$0xff]
    %v4125 = vld [vmem:[%s4115 + $0x48] sm:$0xff]
    %v4126 = vld [vmem:[%s4115 + $0x50] sm:$0xff]
    %v4127 = vld [vmem:[%s4115 + $0x58] sm:$0xff]
    %v4128 = vld [vmem:[%s4115 + $0x60] sm:$0xff]
    %v4129 = vld [vmem:[%s4115 + $0x68] sm:$0xff]
    %v4130 = vld [vmem:[%s4115 + $0x70] sm:$0xff]
    %v4131 = vld [vmem:[%s4115 + $0x78] sm:$0xff]
    %v4132 = vld [vmem:[%s4115 + $0x80] sm:$0xff]
    %v4133 = vld [vmem:[%s4115 + $0x88] sm:$0xff]
    %v4134 = vld [vmem:[%s4115 + $0x90] sm:$0xff]
    %v4135 = vld [vmem:[%s4115 + $0x98] sm:$0xff]
    %v4136 = vld [vmem:[%s4115 + $0xa0] sm:$0xff]
    %v4137 = vld [vmem:[%s4115 + $0xa8] sm:$0xff]
    %v4138 = vld [vmem:[%s4115 + $0xb0] sm:$0xff]
    %v4139 = vld [vmem:[%s4115 + $0xb8] sm:$0xff]
    %s4140 = scalar_lea.vmem %s10, 2
    %v4141 = vld [vmem:[%s4140] sm:$0x3]
    %v4143 = vlaneseq
    %v4144 = vshrl.u32 %v4143, 7
    %v4145 = vsub.s32 0, %v4144
    %v4146 = vrot.slane %v4141, %v4145
    %v4147 = vlaneseq
    %v4148 = vshrl.u32 %v4147, 7
    %v4149 = vsub.s32 1, %v4148
    %v4150 = vrot.slane %v4141, %v4149
    %v4154 = vsel %vm958, %v4077, 0
    %v4157 = vsel %vm958, %v4082, 0
    %v4160 = vsel %vm958, %v4087, 0
    %v4163 = vsel %vm958, %v4092, 0
    %v4166 = vsel %vm958, %v4097, 0
    %v4169 = vsel %vm958, %v4102, 0
    %v4172 = vsel %vm958, %v4107, 0
    %v4175 = vsel %vm958, %v4112, 0
    %v4178 = vsel %vm958, %v4116, 0
    %v4181 = vsel %vm958, %v4117, 0
    %v4184 = vsel %vm958, %v4118, 0
    %v4187 = vsel %vm958, %v4119, 0
    %v4190 = vsel %vm958, %v4120, 0
    %v4193 = vsel %vm958, %v4121, 0
    %v4196 = vsel %vm958, %v4122, 0
    %v4199 = vsel %vm958, %v4123, 0
    %v4202 = vsel %vm958, %v4124, 0
    %v4205 = vsel %vm958, %v4125, 0
    %v4208 = vsel %vm958, %v4126, 0
    %v4211 = vsel %vm958, %v4127, 0
    %v4214 = vsel %vm958, %v4128, 0
    %v4217 = vsel %vm958, %v4129, 0
    %v4220 = vsel %vm958, %v4130, 0
    %v4223 = vsel %vm958, %v4131, 0
    %v4226 = vsel %vm958, %v4132, 0
    %v4229 = vsel %vm958, %v4133, 0
    %v4232 = vsel %vm958, %v4134, 0
    %v4235 = vsel %vm958, %v4135, 0
    %v4238 = vsel %vm958, %v4136, 0
    %v4241 = vsel %vm958, %v4137, 0
    %v4244 = vsel %vm958, %v4138, 0
    %v4247 = vsel %vm958, %v4139, 0
    %4249 = vmatprep.subr.mxu0 0.0
    %4250 = vmatpush1.xpose.msra.mxu0 %v4178
    %4251 = vmatprep.subr.mxu0 0.0
    %4252 = vmatpush1.xpose.msra.mxu0 %v4181
    %4253 = vmatprep.subr.mxu0 0.0
    %4254 = vmatpush1.xpose.msra.mxu0 %v4184
    %4255 = vmatprep.subr.mxu0 0.0
    %4256 = vmatpush1.xpose.msra.mxu0 %v4187
    %4257 = vmatprep.subr.mxu0 0.0
    %4258 = vmatpush1.xpose.msra.mxu0 %v4190
    %4259 = vmatprep.subr.mxu0 0.0
    %4260 = vmatpush1.xpose.msra.mxu0 %v4193
    %4261 = vmatprep.subr.mxu0 0.0
    %4262 = vmatpush1.xpose.msra.mxu0 %v4196
    %4263 = vmatprep.subr.mxu0 0.0
    %4264 = vmatpush1.xpose.msra.mxu0 %v4199
    %4265 = vmatprep.subr.mxu0 0.0
    %4266 = vmatpush1.xpose.msra.mxu0 %v4202
    %4267 = vmatprep.subr.mxu0 0.0
    %4268 = vmatpush1.xpose.msra.mxu0 %v4205
    %4269 = vmatprep.subr.mxu0 0.0
    %4270 = vmatpush1.xpose.msra.mxu0 %v4208
    %4271 = vmatprep.subr.mxu0 0.0
    %4272 = vmatpush1.xpose.msra.mxu0 %v4211
    %4273 = vmatprep.subr.mxu0 0.0
    %4274 = vmatpush1.xpose.msra.mxu0 %v4214
    %4275 = vmatprep.subr.mxu0 0.0
    %4276 = vmatpush1.xpose.msra.mxu0 %v4217
    %4277 = vmatprep.subr.mxu0 0.0
    %4278 = vmatpush1.xpose.msra.mxu0 %v4220
    %4279 = vmatprep.subr.mxu0 0.0
    %4280 = vmatpush1.xpose.msra.mxu0 %v4223
    %4281 = vmatprep.subr.mxu0 0.0
    %4282 = vmatpush1.xpose.msra.mxu0 %v4226
    %4283 = vmatprep.subr.mxu0 0.0
    %4284 = vmatpush1.xpose.msra.mxu0 %v4229
    %4285 = vmatprep.subr.mxu0 0.0
    %4286 = vmatpush1.xpose.msra.mxu0 %v4232
    %4287 = vmatprep.subr.mxu0 0.0
    %4288 = vmatpush1.xpose.msra.mxu0 %v4235
    %4289 = vmatprep.subr.mxu0 0.0
    %4290 = vmatpush1.xpose.msra.mxu0 %v4238
    %4291 = vmatprep.subr.mxu0 0.0
    %4292 = vmatpush1.xpose.msra.mxu0 %v4241
    %4293 = vmatprep.subr.mxu0 0.0
    %4294 = vmatpush1.xpose.msra.mxu0 %v4244
    %4295 = vmatprep.subr.mxu0 0.0
    %4296 = vmatpush1.xpose.msra.mxu0 %v4247
    %4297 = vmatprep.subr.mxu0 0.0
    %4298 = vmatpush1.xpose.msra.mxu0 0.0
    %4299 = vmatprep.subr.mxu0 0.0
    %4300 = vmatpush1.xpose.msra.mxu0 0.0
    %4301 = vmatprep.subr.mxu0 0.0
    %4302 = vmatpush1.xpose.msra.mxu0 0.0
    %4303 = vmatprep.subr.mxu0 0.0
    %4304 = vmatpush1.xpose.msra.mxu0 0.0
    %4305 = vmatprep.subr.mxu0 0.0
    %4306 = vmatpush1.xpose.msra.mxu0 0.0
    %4307 = vmatprep.subr.mxu0 0.0
    %4308 = vmatpush1.xpose.msra.mxu0 0.0
    %4309 = vmatprep.subr.mxu0 0.0
    %4310 = vmatpush1.xpose.msra.mxu0 0.0
    %4311 = vmatprep.subr.mxu0 0.0
    %4312 = vmatpush1.xpose.msra.mxu0 0.0
    %4313 = vmatprep.mubr.f32.mxu0 0.0
    %4314 = vmatmul.mubr.f32.gmra.mrb[0].mxu0 %v4154
    %v4315 = vpop.f32.mrb[0].mxu0
    %v4316 = vadd.f32 %v4146, %v4315
    %v4317 = vpop.f32.mrb[0].mxu0
    %v4318 = vadd.f32 %v4150, %v4317
    %4319 = vmatprep.mubr.f32.mxu0 0.0
    %4320 = vmatmul.mubr.f32.gmra.mrb[0].mxu0 %v4157
    %v4321 = vpop.f32.mrb[0].mxu0
    %v4322 = vadd.f32 %v4146, %v4321
    %v4323 = vpop.f32.mrb[0].mxu0
    %v4324 = vadd.f32 %v4150, %v4323
    %4325 = vmatprep.mubr.f32.mxu0 0.0
    %4326 = vmatmul.mubr.f32.gmra.mrb[0].mxu0 %v4160
    %v4327 = vpop.f32.mrb[0].mxu0
    %v4328 = vadd.f32 %v4146, %v4327
    %v4329 = vpop.f32.mrb[0].mxu0
    %v4330 = vadd.f32 %v4150, %v4329
    %4331 = vmatprep.mubr.f32.mxu0 0.0
    %4332 = vmatmul.mubr.f32.gmra.mrb[0].mxu0 %v4163
    %v4333 = vpop.f32.mrb[0].mxu0
    %v4334 = vadd.f32 %v4146, %v4333
    %v4335 = vpop.f32.mrb[0].mxu0
    %v4336 = vadd.f32 %v4150, %v4335
    %4337 = vmatprep.mubr.f32.mxu0 0.0
    %4338 = vmatmul.mubr.f32.gmra.mrb[0].mxu0 %v4166
    %v4339 = vpop.f32.mrb[0].mxu0
    %v4340 = vadd.f32 %v4146, %v4339
    %v4341 = vpop.f32.mrb[0].mxu0
    %v4342 = vadd.f32 %v4150, %v4341
    %4343 = vmatprep.mubr.f32.mxu0 0.0
    %4344 = vmatmul.mubr.f32.gmra.mrb[0].mxu0 %v4169
    %v4345 = vpop.f32.mrb[0].mxu0
    %v4346 = vadd.f32 %v4146, %v4345
    %v4347 = vpop.f32.mrb[0].mxu0
    %v4348 = vadd.f32 %v4150, %v4347
    %4349 = vmatprep.mubr.f32.mxu0 0.0
    %4350 = vmatmul.mubr.f32.gmra.mrb[0].mxu0 %v4172
    %v4351 = vpop.f32.mrb[0].mxu0
    %v4352 = vadd.f32 %v4146, %v4351
    %v4353 = vpop.f32.mrb[0].mxu0
    %v4354 = vadd.f32 %v4150, %v4353
    %4355 = vmatprep.mubr.f32.mxu0 0.0
    %4356 = vmatmul.mubr.f32.gmra.mrb[0].mxu0 %v4175
    %v4357 = vpop.f32.mrb[0].mxu0
    %v4358 = vadd.f32 %v4146, %v4357
    %v4359 = vpop.f32.mrb[0].mxu0
    %v4360 = vadd.f32 %v4150, %v4359
    %4361 = vdwg.mxu0
    %v4362 = vmul.f32 %v4316, 0.25
    %v4363 = vmul.f32 %v4322, 0.25
    %v4364 = vmul.f32 %v4328, 0.25
    %v4365 = vmul.f32 %v4334, 0.25
    %v4366 = vmul.f32 %v4340, 0.25
    %v4367 = vmul.f32 %v4346, 0.25
    %v4368 = vmul.f32 %v4352, 0.25
    %v4369 = vmul.f32 %v4358, 0.25
    %4374 = vrot.lane.b32.xlu0 %v4316, 64
    %v4375 = vpop.permute.xlu0 %4374
    %4376 = vrot.lane.b32.xlu0 %v4322, 64
    %v4377 = vpop.permute.xlu0 %4376
    %4378 = vrot.lane.b32.xlu0 %v4328, 64
    %v4379 = vpop.permute.xlu0 %4378
    %4380 = vrot.lane.b32.xlu0 %v4334, 64
    %v4381 = vpop.permute.xlu0 %4380
    %v4383 = vsel %vm285, %v4362, 0
    %v4386 = vsel %vm285, %v4363, 0
    %v4389 = vsel %vm285, %v4364, 0
    %v4392 = vsel %vm285, %v4365, 0
    %v4394 = vsel %vm285, %v4375, 0
    %v4396 = vsel %vm285, %v4377, 0
    %v4398 = vsel %vm285, %v4379, 0
    %v4400 = vsel %vm285, %v4381, 0
    %4402 = vmatprep.subr.mxu0 0.0
    %4403 = vmatpush1.xpose.msra.mxu0 %v4394
    %4404 = vmatprep.subr.mxu0 0.0
    %4405 = vmatpush1.xpose.msra.mxu0 %v4396
    %4406 = vmatprep.subr.mxu0 0.0
    %4407 = vmatpush1.xpose.msra.mxu0 %v4398
    %4408 = vmatprep.subr.mxu0 0.0
    %4409 = vmatpush1.xpose.msra.mxu0 %v4400
    %4410 = vmatprep.subr.mxu0 0.0
    %4411 = vmatpush1.xpose.msra.mxu0 0.0
    %4412 = vmatprep.subr.mxu0 0.0
    %4413 = vmatpush1.xpose.msra.mxu0 0.0
    %4414 = vmatprep.subr.mxu0 0.0
    %4415 = vmatpush1.xpose.msra.mxu0 0.0
    %4416 = vmatprep.subr.mxu0 0.0
    %4417 = vmatpush1.xpose.msra.mxu0 0.0
    %4418 = vmatprep.subr.mxu0 0.0
    %4419 = vmatpush1.xpose.msra.mxu0 0.0
    %4420 = vmatprep.subr.mxu0 0.0
    %4421 = vmatpush1.xpose.msra.mxu0 0.0
    %4422 = vmatprep.subr.mxu0 0.0
    %4423 = vmatpush1.xpose.msra.mxu0 0.0
    %4424 = vmatprep.subr.mxu0 0.0
    %4425 = vmatpush1.xpose.msra.mxu0 0.0
    %4426 = vmatprep.subr.mxu0 0.0
    %4427 = vmatpush1.xpose.msra.mxu0 0.0
    %4428 = vmatprep.subr.mxu0 0.0
    %4429 = vmatpush1.xpose.msra.mxu0 0.0
    %4430 = vmatprep.subr.mxu0 0.0
    %4431 = vmatpush1.xpose.msra.mxu0 0.0
    %4432 = vmatprep.subr.mxu0 0.0
    %4433 = vmatpush1.xpose.msra.mxu0 0.0
    %4434 = vmatprep.subr.mxu0 0.0
    %4435 = vmatpush1.xpose.msra.mxu0 0.0
    %4436 = vmatprep.subr.mxu0 0.0
    %4437 = vmatpush1.xpose.msra.mxu0 0.0
    %4438 = vmatprep.subr.mxu0 0.0
    %4439 = vmatpush1.xpose.msra.mxu0 0.0
    %4440 = vmatprep.subr.mxu0 0.0
    %4441 = vmatpush1.xpose.msra.mxu0 0.0
    %4442 = vmatprep.subr.mxu0 0.0
    %4443 = vmatpush1.xpose.msra.mxu0 0.0
    %4444 = vmatprep.subr.mxu0 0.0
    %4445 = vmatpush1.xpose.msra.mxu0 0.0
    %4446 = vmatprep.subr.mxu0 0.0
    %4447 = vmatpush1.xpose.msra.mxu0 0.0
    %4448 = vmatprep.subr.mxu0 0.0
    %4449 = vmatpush1.xpose.msra.mxu0 0.0
    %4450 = vmatprep.subr.mxu0 0.0
    %4451 = vmatpush1.xpose.msra.mxu0 0.0
    %4452 = vmatprep.subr.mxu0 0.0
    %4453 = vmatpush1.xpose.msra.mxu0 0.0
    %4454 = vmatprep.subr.mxu0 0.0
    %4455 = vmatpush1.xpose.msra.mxu0 0.0
    %4456 = vmatprep.subr.mxu0 0.0
    %4457 = vmatpush1.xpose.msra.mxu0 0.0
    %4458 = vmatprep.subr.mxu0 0.0
    %4459 = vmatpush1.xpose.msra.mxu0 0.0
    %4460 = vmatprep.subr.mxu0 0.0
    %4461 = vmatpush1.xpose.msra.mxu0 0.0
    %4462 = vmatprep.subr.mxu0 0.0
    %4463 = vmatpush1.xpose.msra.mxu0 0.0
    %4464 = vmatprep.subr.mxu0 0.0
    %4465 = vmatpush1.xpose.msra.mxu0 0.0
    %4466 = vmatprep.mubr.f32.mxu0 0.0
    %4467 = vmatmul.mubr.f32.gmra.mrb[0].mxu0 %v4383
    %v4468 = vpop.f32.mrb[0].mxu0
    %v4469 = vadd.f32 0.0, %v4468
    %v4470 = vpop.f32.mrb[0].mxu0
    %4471 = vmatprep.mubr.f32.mxu0 0.0
    %4472 = vmatmul.mubr.f32.gmra.mrb[0].mxu0 %v4386
    %v4473 = vpop.f32.mrb[0].mxu0
    %v4474 = vadd.f32 0.0, %v4473
    %v4475 = vpop.f32.mrb[0].mxu0
    %4476 = vmatprep.mubr.f32.mxu0 0.0
    %4477 = vmatmul.mubr.f32.gmra.mrb[0].mxu0 %v4389
    %v4478 = vpop.f32.mrb[0].mxu0
    %v4479 = vadd.f32 0.0, %v4478
    %v4480 = vpop.f32.mrb[0].mxu0
    %4481 = vmatprep.mubr.f32.mxu0 0.0
    %4482 = vmatmul.mubr.f32.gmra.mrb[0].mxu0 %v4392
    %v4483 = vpop.f32.mrb[0].mxu0
    %v4484 = vadd.f32 0.0, %v4483
    %v4485 = vpop.f32.mrb[0].mxu0
    %4486 = vdwg.mxu0
    %v4487 = vsel %vm198, %v4469, -inf
    %4488 = vmax.xlane.f32.xlu0 %v4487
    %v4489 = vpop.xlane.xlu0 %4488
    %v4490 = vsel %vm198, %v4474, -inf
    %4491 = vmax.xlane.f32.xlu0 %v4490
    %v4492 = vpop.xlane.xlu0 %4491
    %v4493 = vsel %vm198, %v4479, -inf
    %4494 = vmax.xlane.f32.xlu0 %v4493
    %v4495 = vpop.xlane.xlu0 %4494
    %v4496 = vsel %vm198, %v4484, -inf
    %4497 = vmax.xlane.f32.xlu0 %v4496
    %v4498 = vpop.xlane.xlu0 %4497
    %v4499 = vsub.f32 %v4469, %v4489
    %v4500 = vsub.f32 %v4474, %v4492
    %v4501 = vsub.f32 %v4479, %v4495
    %v4502 = vsub.f32 %v4484, %v4498
    %v4503 = vmul.f32 %v4499, 1.442695
    %v4504 = vpow.pop %v4503
    %v4505 = vmul.f32 %v4500, 1.442695
    %v4506 = vpow.pop %v4505
    %v4507 = vmul.f32 %v4501, 1.442695
    %v4508 = vpow.pop %v4507
    %v4509 = vmul.f32 %v4502, 1.442695
    %v4510 = vpow.pop %v4509
    %v4511 = vsel %vm198, %v4504, 0.0
    %4512 = vadd.xlane.f32.xlu0 %v4511
    %v4513 = vpop.xlane.xlu0 %4512
    %v4514 = vsel %vm198, %v4506, 0.0
    %4515 = vadd.xlane.f32.xlu0 %v4514
    %v4516 = vpop.xlane.xlu0 %4515
    %v4517 = vsel %vm198, %v4508, 0.0
    %4518 = vadd.xlane.f32.xlu0 %v4517
    %v4519 = vpop.xlane.xlu0 %4518
    %v4520 = vsel %vm198, %v4510, 0.0
    %4521 = vadd.xlane.f32.xlu0 %v4520
    %v4522 = vpop.xlane.xlu0 %4521
    %v4523 = vrcp.pop %v4513
    %v4524 = vrcp.pop %v4516
    %v4525 = vrcp.pop %v4519
    %v4526 = vrcp.pop %v4522
    %v4527 = vmul.f32 %v4504, %v4523
    %v4528 = vmul.f32 %v4506, %v4524
    %v4529 = vmul.f32 %v4508, %v4525
    %v4530 = vmul.f32 %v4510, %v4526
    %v4532 = vsel %vm198, %v4527, 0
    %v4535 = vsel %vm198, %v4528, 0
    %v4538 = vsel %vm198, %v4529, 0
    %v4541 = vsel %vm198, %v4530, 0
    %4543 = vmatprep.subr.mxu0 0.0
    %4544 = vmatpush1.msra.mxu0 %v4318
    %4545 = vmatprep.subr.mxu0 0.0
    %4546 = vmatpush1.msra.mxu0 %v4324
    %4547 = vmatprep.subr.mxu0 0.0
    %4548 = vmatpush1.msra.mxu0 %v4330
    %4549 = vmatprep.subr.mxu0 0.0
    %4550 = vmatpush1.msra.mxu0 %v4336
    %4551 = vmatprep.subr.mxu0 0.0
    %4552 = vmatpush1.msra.mxu0 0.0
    %4553 = vmatprep.subr.mxu0 0.0
    %4554 = vmatpush1.msra.mxu0 0.0
    %4555 = vmatprep.subr.mxu0 0.0
    %4556 = vmatpush1.msra.mxu0 0.0
    %4557 = vmatprep.subr.mxu0 0.0
    %4558 = vmatpush1.msra.mxu0 0.0
    %4559 = vmatprep.subr.mxu0 0.0
    %4560 = vmatpush1.msra.mxu0 0.0
    %4561 = vmatprep.subr.mxu0 0.0
    %4562 = vmatpush1.msra.mxu0 0.0
    %4563 = vmatprep.subr.mxu0 0.0
    %4564 = vmatpush1.msra.mxu0 0.0
    %4565 = vmatprep.subr.mxu0 0.0
    %4566 = vmatpush1.msra.mxu0 0.0
    %4567 = vmatprep.subr.mxu0 0.0
    %4568 = vmatpush1.msra.mxu0 0.0
    %4569 = vmatprep.subr.mxu0 0.0
    %4570 = vmatpush1.msra.mxu0 0.0
    %4571 = vmatprep.subr.mxu0 0.0
    %4572 = vmatpush1.msra.mxu0 0.0
    %4573 = vmatprep.subr.mxu0 0.0
    %4574 = vmatpush1.msra.mxu0 0.0
    %4575 = vmatprep.subr.mxu0 0.0
    %4576 = vmatpush1.msra.mxu0 0.0
    %4577 = vmatprep.subr.mxu0 0.0
    %4578 = vmatpush1.msra.mxu0 0.0
    %4579 = vmatprep.subr.mxu0 0.0
    %4580 = vmatpush1.msra.mxu0 0.0
    %4581 = vmatprep.subr.mxu0 0.0
    %4582 = vmatpush1.msra.mxu0 0.0
    %4583 = vmatprep.subr.mxu0 0.0
    %4584 = vmatpush1.msra.mxu0 0.0
    %4585 = vmatprep.subr.mxu0 0.0
    %4586 = vmatpush1.msra.mxu0 0.0
    %4587 = vmatprep.subr.mxu0 0.0
    %4588 = vmatpush1.msra.mxu0 0.0
    %4589 = vmatprep.subr.mxu0 0.0
    %4590 = vmatpush1.msra.mxu0 0.0
    %4591 = vmatprep.subr.mxu0 0.0
    %4592 = vmatpush1.msra.mxu0 0.0
    %4593 = vmatprep.subr.mxu0 0.0
    %4594 = vmatpush1.msra.mxu0 0.0
    %4595 = vmatprep.subr.mxu0 0.0
    %4596 = vmatpush1.msra.mxu0 0.0
    %4597 = vmatprep.subr.mxu0 0.0
    %4598 = vmatpush1.msra.mxu0 0.0
    %4599 = vmatprep.subr.mxu0 0.0
    %4600 = vmatpush1.msra.mxu0 0.0
    %4601 = vmatprep.subr.mxu0 0.0
    %4602 = vmatpush1.msra.mxu0 0.0
    %4603 = vmatprep.subr.mxu0 0.0
    %4604 = vmatpush1.msra.mxu0 0.0
    %4605 = vmatprep.subr.mxu0 0.0
    %4606 = vmatpush1.msra.mxu0 0.0
    %4607 = vmatprep.mubr.f32.mxu0 0.0
    %4608 = vmatmul.mubr.f32.gmra.mrb[0].mxu0 %v4532
    %v4609 = vpop.f32.mrb[0].mxu0
    %v4610 = vadd.f32 0.0, %v4609
    %v4611 = vpop.f32.mrb[0].mxu0
    %4612 = vmatprep.mubr.f32.mxu0 0.0
    %4613 = vmatmul.mubr.f32.gmra.mrb[0].mxu0 %v4535
    %v4614 = vpop.f32.mrb[0].mxu0
    %v4615 = vadd.f32 0.0, %v4614
    %v4616 = vpop.f32.mrb[0].mxu0
    %4617 = vmatprep.mubr.f32.mxu0 0.0
    %4618 = vmatmul.mubr.f32.gmra.mrb[0].mxu0 %v4538
    %v4619 = vpop.f32.mrb[0].mxu0
    %v4620 = vadd.f32 0.0, %v4619
    %v4621 = vpop.f32.mrb[0].mxu0
    %4622 = vmatprep.mubr.f32.mxu0 0.0
    %4623 = vmatmul.mubr.f32.gmra.mrb[0].mxu0 %v4541
    %v4624 = vpop.f32.mrb[0].mxu0
    %v4625 = vadd.f32 0.0, %v4624
    %v4626 = vpop.f32.mrb[0].mxu0
    %4627 = vdwg.mxu0
    %4628 = vst.msk [vmem:[#allocation3] sm:$0xff] %vm285, %v4610
    %4629 = vst.msk [vmem:[#allocation3 + $0x8] sm:$0xff] %vm285, %v4615
    %4630 = vst.msk [vmem:[#allocation3 + $0x10] sm:$0xff] %vm285, %v4620
    %4631 = vst.msk [vmem:[#allocation3 + $0x18] sm:$0xff] %vm285, %v4625
    %4632 = vrot.lane.b32.xlu0 %v4362, 112
    %v4633 = vpop.permute.xlu0 %4632
    %4634 = vrot.lane.b32.xlu0 %v4363, 112
    %v4635 = vpop.permute.xlu0 %4634
    %4636 = vrot.lane.b32.xlu0 %v4364, 112
    %v4637 = vpop.permute.xlu0 %4636
    %4638 = vrot.lane.b32.xlu0 %v4365, 112
    %v4639 = vpop.permute.xlu0 %4638
    %4640 = vrot.lane.b32.xlu0 %v4316, 48
    %v4641 = vpop.permute.xlu0 %4640
    %4642 = vrot.lane.b32.xlu0 %v4322, 48
    %v4643 = vpop.permute.xlu0 %4642
    %4644 = vrot.lane.b32.xlu0 %v4328, 48
    %v4645 = vpop.permute.xlu0 %4644
    %4646 = vrot.lane.b32.xlu0 %v4334, 48
    %v4647 = vpop.permute.xlu0 %4646
    %v4648 = vsel %vm285, %v4633, 0
    %v4650 = vsel %vm285, %v4635, 0
    %v4652 = vsel %vm285, %v4637, 0
    %v4654 = vsel %vm285, %v4639, 0
    %v4656 = vsel %vm285, %v4641, 0
    %v4658 = vsel %vm285, %v4643, 0
    %v4660 = vsel %vm285, %v4645, 0
    %v4662 = vsel %vm285, %v4647, 0
    %4664 = vmatprep.subr.mxu0 0.0
    %4665 = vmatpush1.xpose.msra.mxu0 %v4656
    %4666 = vmatprep.subr.mxu0 0.0
    %4667 = vmatpush1.xpose.msra.mxu0 %v4658
    %4668 = vmatprep.subr.mxu0 0.0
    %4669 = vmatpush1.xpose.msra.mxu0 %v4660
    %4670 = vmatprep.subr.mxu0 0.0
    %4671 = vmatpush1.xpose.msra.mxu0 %v4662
    %4672 = vmatprep.subr.mxu0 0.0
    %4673 = vmatpush1.xpose.msra.mxu0 0.0
    %4674 = vmatprep.subr.mxu0 0.0
    %4675 = vmatpush1.xpose.msra.mxu0 0.0
    %4676 = vmatprep.subr.mxu0 0.0
    %4677 = vmatpush1.xpose.msra.mxu0 0.0
    %4678 = vmatprep.subr.mxu0 0.0
    %4679 = vmatpush1.xpose.msra.mxu0 0.0
    %4680 = vmatprep.subr.mxu0 0.0
    %4681 = vmatpush1.xpose.msra.mxu0 0.0
    %4682 = vmatprep.subr.mxu0 0.0
    %4683 = vmatpush1.xpose.msra.mxu0 0.0
    %4684 = vmatprep.subr.mxu0 0.0
    %4685 = vmatpush1.xpose.msra.mxu0 0.0
    %4686 = vmatprep.subr.mxu0 0.0
    %4687 = vmatpush1.xpose.msra.mxu0 0.0
    %4688 = vmatprep.subr.mxu0 0.0
    %4689 = vmatpush1.xpose.msra.mxu0 0.0
    %4690 = vmatprep.subr.mxu0 0.0
    %4691 = vmatpush1.xpose.msra.mxu0 0.0
    %4692 = vmatprep.subr.mxu0 0.0
    %4693 = vmatpush1.xpose.msra.mxu0 0.0
    %4694 = vmatprep.subr.mxu0 0.0
    %4695 = vmatpush1.xpose.msra.mxu0 0.0
    %4696 = vmatprep.subr.mxu0 0.0
    %4697 = vmatpush1.xpose.msra.mxu0 0.0
    %4698 = vmatprep.subr.mxu0 0.0
    %4699 = vmatpush1.xpose.msra.mxu0 0.0
    %4700 = vmatprep.subr.mxu0 0.0
    %4701 = vmatpush1.xpose.msra.mxu0 0.0
    %4702 = vmatprep.subr.mxu0 0.0
    %4703 = vmatpush1.xpose.msra.mxu0 0.0
    %4704 = vmatprep.subr.mxu0 0.0
    %4705 = vmatpush1.xpose.msra.mxu0 0.0
    %4706 = vmatprep.subr.mxu0 0.0
    %4707 = vmatpush1.xpose.msra.mxu0 0.0
    %4708 = vmatprep.subr.mxu0 0.0
    %4709 = vmatpush1.xpose.msra.mxu0 0.0
    %4710 = vmatprep.subr.mxu0 0.0
    %4711 = vmatpush1.xpose.msra.mxu0 0.0
    %4712 = vmatprep.subr.mxu0 0.0
    %4713 = vmatpush1.xpose.msra.mxu0 0.0
    %4714 = vmatprep.subr.mxu0 0.0
    %4715 = vmatpush1.xpose.msra.mxu0 0.0
    %4716 = vmatprep.subr.mxu0 0.0
    %4717 = vmatpush1.xpose.msra.mxu0 0.0
    %4718 = vmatprep.subr.mxu0 0.0
    %4719 = vmatpush1.xpose.msra.mxu0 0.0
    %4720 = vmatprep.subr.mxu0 0.0
    %4721 = vmatpush1.xpose.msra.mxu0 0.0
    %4722 = vmatprep.subr.mxu0 0.0
    %4723 = vmatpush1.xpose.msra.mxu0 0.0
    %4724 = vmatprep.subr.mxu0 0.0
    %4725 = vmatpush1.xpose.msra.mxu0 0.0
    %4726 = vmatprep.subr.mxu0 0.0
    %4727 = vmatpush1.xpose.msra.mxu0 0.0
    %4728 = vmatprep.mubr.f32.mxu0 0.0
    %4729 = vmatmul.mubr.f32.gmra.mrb[0].mxu0 %v4648
    %v4730 = vpop.f32.mrb[0].mxu0
    %v4731 = vadd.f32 0.0, %v4730
    %v4732 = vpop.f32.mrb[0].mxu0
    %4733 = vmatprep.mubr.f32.mxu0 0.0
    %4734 = vmatmul.mubr.f32.gmra.mrb[0].mxu0 %v4650
    %v4735 = vpop.f32.mrb[0].mxu0
    %v4736 = vadd.f32 0.0, %v4735
    %v4737 = vpop.f32.mrb[0].mxu0
    %4738 = vmatprep.mubr.f32.mxu0 0.0
    %4739 = vmatmul.mubr.f32.gmra.mrb[0].mxu0 %v4652
    %v4740 = vpop.f32.mrb[0].mxu0
    %v4741 = vadd.f32 0.0, %v4740
    %v4742 = vpop.f32.mrb[0].mxu0
    %4743 = vmatprep.mubr.f32.mxu0 0.0
    %4744 = vmatmul.mubr.f32.gmra.mrb[0].mxu0 %v4654
    %v4745 = vpop.f32.mrb[0].mxu0
    %v4746 = vadd.f32 0.0, %v4745
    %v4747 = vpop.f32.mrb[0].mxu0
    %4748 = vdwg.mxu0
    %v4749 = vsel %vm198, %v4731, -inf
    %4750 = vmax.xlane.f32.xlu0 %v4749
    %v4751 = vpop.xlane.xlu0 %4750
    %v4752 = vsel %vm198, %v4736, -inf
    %4753 = vmax.xlane.f32.xlu0 %v4752
    %v4754 = vpop.xlane.xlu0 %4753
    %v4755 = vsel %vm198, %v4741, -inf
    %4756 = vmax.xlane.f32.xlu0 %v4755
    %v4757 = vpop.xlane.xlu0 %4756
    %v4758 = vsel %vm198, %v4746, -inf
    %4759 = vmax.xlane.f32.xlu0 %v4758
    %v4760 = vpop.xlane.xlu0 %4759
    %v4761 = vsub.f32 %v4731, %v4751
    %v4762 = vsub.f32 %v4736, %v4754
    %v4763 = vsub.f32 %v4741, %v4757
    %v4764 = vsub.f32 %v4746, %v4760
    %v4765 = vmul.f32 %v4761, 1.442695
    %v4766 = vpow.pop %v4765
    %v4767 = vmul.f32 %v4762, 1.442695
    %v4768 = vpow.pop %v4767
    %v4769 = vmul.f32 %v4763, 1.442695
    %v4770 = vpow.pop %v4769
    %v4771 = vmul.f32 %v4764, 1.442695
    %v4772 = vpow.pop %v4771
    %v4773 = vsel %vm198, %v4766, 0.0
    %4774 = vadd.xlane.f32.xlu0 %v4773
    %v4775 = vpop.xlane.xlu0 %4774
    %v4776 = vsel %vm198, %v4768, 0.0
    %4777 = vadd.xlane.f32.xlu0 %v4776
    %v4778 = vpop.xlane.xlu0 %4777
    %v4779 = vsel %vm198, %v4770, 0.0
    %4780 = vadd.xlane.f32.xlu0 %v4779
    %v4781 = vpop.xlane.xlu0 %4780
    %v4782 = vsel %vm198, %v4772, 0.0
    %4783 = vadd.xlane.f32.xlu0 %v4782
    %v4784 = vpop.xlane.xlu0 %4783
    %v4785 = vrcp.pop %v4775
    %v4786 = vrcp.pop %v4778
    %v4787 = vrcp.pop %v4781
    %v4788 = vrcp.pop %v4784
    %v4789 = vmul.f32 %v4766, %v4785
    %v4790 = vmul.f32 %v4768, %v4786
    %v4791 = vmul.f32 %v4770, %v4787
    %v4792 = vmul.f32 %v4772, %v4788
    %4797 = vrot.lane.b32.xlu0 %v4318, 112
    %v4798 = vpop.permute.xlu0 %4797
    %4799 = vrot.lane.b32.xlu0 %v4324, 112
    %v4800 = vpop.permute.xlu0 %4799
    %4801 = vrot.lane.b32.xlu0 %v4330, 112
    %v4802 = vpop.permute.xlu0 %4801
    %4803 = vrot.lane.b32.xlu0 %v4336, 112
    %v4804 = vpop.permute.xlu0 %4803
    %v4810 = vsel %vm198, %v4789, 0
    %v4813 = vsel %vm198, %v4790, 0
    %v4816 = vsel %vm198, %v4791, 0
    %v4819 = vsel %vm198, %v4792, 0
    %4821 = vmatprep.subr.mxu0 0.0
    %4822 = vmatpush1.msra.mxu0 %v4798
    %4823 = vmatprep.subr.mxu0 0.0
    %4824 = vmatpush1.msra.mxu0 %v4800
    %4825 = vmatprep.subr.mxu0 0.0
    %4826 = vmatpush1.msra.mxu0 %v4802
    %4827 = vmatprep.subr.mxu0 0.0
    %4828 = vmatpush1.msra.mxu0 %v4804
    %4829 = vmatprep.subr.mxu0 0.0
    %4830 = vmatpush1.msra.mxu0 0.0
    %4831 = vmatprep.subr.mxu0 0.0
    %4832 = vmatpush1.msra.mxu0 0.0
    %4833 = vmatprep.subr.mxu0 0.0
    %4834 = vmatpush1.msra.mxu0 0.0
    %4835 = vmatprep.subr.mxu0 0.0
    %4836 = vmatpush1.msra.mxu0 0.0
    %4837 = vmatprep.subr.mxu0 0.0
    %4838 = vmatpush1.msra.mxu0 0.0
    %4839 = vmatprep.subr.mxu0 0.0
    %4840 = vmatpush1.msra.mxu0 0.0
    %4841 = vmatprep.subr.mxu0 0.0
    %4842 = vmatpush1.msra.mxu0 0.0
    %4843 = vmatprep.subr.mxu0 0.0
    %4844 = vmatpush1.msra.mxu0 0.0
    %4845 = vmatprep.subr.mxu0 0.0
    %4846 = vmatpush1.msra.mxu0 0.0
    %4847 = vmatprep.subr.mxu0 0.0
    %4848 = vmatpush1.msra.mxu0 0.0
    %4849 = vmatprep.subr.mxu0 0.0
    %4850 = vmatpush1.msra.mxu0 0.0
    %4851 = vmatprep.subr.mxu0 0.0
    %4852 = vmatpush1.msra.mxu0 0.0
    %4853 = vmatprep.subr.mxu0 0.0
    %4854 = vmatpush1.msra.mxu0 0.0
    %4855 = vmatprep.subr.mxu0 0.0
    %4856 = vmatpush1.msra.mxu0 0.0
    %4857 = vmatprep.subr.mxu0 0.0
    %4858 = vmatpush1.msra.mxu0 0.0
    %4859 = vmatprep.subr.mxu0 0.0
    %4860 = vmatpush1.msra.mxu0 0.0
    %4861 = vmatprep.subr.mxu0 0.0
    %4862 = vmatpush1.msra.mxu0 0.0
    %4863 = vmatprep.subr.mxu0 0.0
    %4864 = vmatpush1.msra.mxu0 0.0
    %4865 = vmatprep.subr.mxu0 0.0
    %4866 = vmatpush1.msra.mxu0 0.0
    %4867 = vmatprep.subr.mxu0 0.0
    %4868 = vmatpush1.msra.mxu0 0.0
    %4869 = vmatprep.subr.mxu0 0.0
    %4870 = vmatpush1.msra.mxu0 0.0
    %4871 = vmatprep.subr.mxu0 0.0
    %4872 = vmatpush1.msra.mxu0 0.0
    %4873 = vmatprep.subr.mxu0 0.0
    %4874 = vmatpush1.msra.mxu0 0.0
    %4875 = vmatprep.subr.mxu0 0.0
    %4876 = vmatpush1.msra.mxu0 0.0
    %4877 = vmatprep.subr.mxu0 0.0
    %4878 = vmatpush1.msra.mxu0 0.0
    %4879 = vmatprep.subr.mxu0 0.0
    %4880 = vmatpush1.msra.mxu0 0.0
    %4881 = vmatprep.subr.mxu0 0.0
    %4882 = vmatpush1.msra.mxu0 0.0
    %4883 = vmatprep.subr.mxu0 0.0
    %4884 = vmatpush1.msra.mxu0 0.0
    %4885 = vmatprep.mubr.f32.mxu0 0.0
    %4886 = vmatmul.mubr.f32.gmra.mrb[0].mxu0 %v4810
    %v4887 = vpop.f32.mrb[0].mxu0
    %v4888 = vadd.f32 0.0, %v4887
    %v4889 = vpop.f32.mrb[0].mxu0
    %4890 = vmatprep.mubr.f32.mxu0 0.0
    %4891 = vmatmul.mubr.f32.gmra.mrb[0].mxu0 %v4813
    %v4892 = vpop.f32.mrb[0].mxu0
    %v4893 = vadd.f32 0.0, %v4892
    %v4894 = vpop.f32.mrb[0].mxu0
    %4895 = vmatprep.mubr.f32.mxu0 0.0
    %4896 = vmatmul.mubr.f32.gmra.mrb[0].mxu0 %v4816
    %v4897 = vpop.f32.mrb[0].mxu0
    %v4898 = vadd.f32 0.0, %v4897
    %v4899 = vpop.f32.mrb[0].mxu0
    %4900 = vmatprep.mubr.f32.mxu0 0.0
    %4901 = vmatmul.mubr.f32.gmra.mrb[0].mxu0 %v4819
    %v4902 = vpop.f32.mrb[0].mxu0
    %v4903 = vadd.f32 0.0, %v4902
    %v4904 = vpop.f32.mrb[0].mxu0
    %4905 = vdwg.mxu0
    %4910 = vrot.lane.b32.xlu0 %v4888, 16
    %v4911 = vpop.permute.xlu0 %4910
    %4912 = vrot.lane.b32.xlu0 %v4893, 16
    %v4913 = vpop.permute.xlu0 %4912
    %4914 = vrot.lane.b32.xlu0 %v4898, 16
    %v4915 = vpop.permute.xlu0 %4914
    %4916 = vrot.lane.b32.xlu0 %v4903, 16
    %v4917 = vpop.permute.xlu0 %4916
    %4922 = vst.msk [vmem:[#allocation3] sm:$0xff] %vm1728, %v4911
    %4923 = vst.msk [vmem:[#allocation3 + $0x8] sm:$0xff] %vm1728, %v4913
    %4924 = vst.msk [vmem:[#allocation3 + $0x10] sm:$0xff] %vm1728, %v4915
    %4925 = vst.msk [vmem:[#allocation3 + $0x18] sm:$0xff] %vm1728, %v4917
    %4926 = vrot.lane.b32.xlu0 %v4362, 96
    %v4927 = vpop.permute.xlu0 %4926
    %4928 = vrot.lane.b32.xlu0 %v4363, 96
    %v4929 = vpop.permute.xlu0 %4928
    %4930 = vrot.lane.b32.xlu0 %v4364, 96
    %v4931 = vpop.permute.xlu0 %4930
    %4932 = vrot.lane.b32.xlu0 %v4365, 96
    %v4933 = vpop.permute.xlu0 %4932
    %4934 = vrot.lane.b32.xlu0 %v4316, 32
    %v4935 = vpop.permute.xlu0 %4934
    %4936 = vrot.lane.b32.xlu0 %v4322, 32
    %v4937 = vpop.permute.xlu0 %4936
    %4938 = vrot.lane.b32.xlu0 %v4328, 32
    %v4939 = vpop.permute.xlu0 %4938
    %4940 = vrot.lane.b32.xlu0 %v4334, 32
    %v4941 = vpop.permute.xlu0 %4940
    %v4942 = vsel %vm285, %v4927, 0
    %v4944 = vsel %vm285, %v4929, 0
    %v4946 = vsel %vm285, %v4931, 0
    %v4948 = vsel %vm285, %v4933, 0
    %v4950 = vsel %vm285, %v4935, 0
    %v4952 = vsel %vm285, %v4937, 0
    %v4954 = vsel %vm285, %v4939, 0
    %v4956 = vsel %vm285, %v4941, 0
    %4958 = vmatprep.subr.mxu0 0.0
    %4959 = vmatpush1.xpose.msra.mxu0 %v4950
    %4960 = vmatprep.subr.mxu0 0.0
    %4961 = vmatpush1.xpose.msra.mxu0 %v4952
    %4962 = vmatprep.subr.mxu0 0.0
    %4963 = vmatpush1.xpose.msra.mxu0 %v4954
    %4964 = vmatprep.subr.mxu0 0.0
    %4965 = vmatpush1.xpose.msra.mxu0 %v4956
    %4966 = vmatprep.subr.mxu0 0.0
    %4967 = vmatpush1.xpose.msra.mxu0 0.0
    %4968 = vmatprep.subr.mxu0 0.0
    %4969 = vmatpush1.xpose.msra.mxu0 0.0
    %4970 = vmatprep.subr.mxu0 0.0
    %4971 = vmatpush1.xpose.msra.mxu0 0.0
    %4972 = vmatprep.subr.mxu0 0.0
    %4973 = vmatpush1.xpose.msra.mxu0 0.0
    %4974 = vmatprep.subr.mxu0 0.0
    %4975 = vmatpush1.xpose.msra.mxu0 0.0
    %4976 = vmatprep.subr.mxu0 0.0
    %4977 = vmatpush1.xpose.msra.mxu0 0.0
    %4978 = vmatprep.subr.mxu0 0.0
    %4979 = vmatpush1.xpose.msra.mxu0 0.0
    %4980 = vmatprep.subr.mxu0 0.0
    %4981 = vmatpush1.xpose.msra.mxu0 0.0
    %4982 = vmatprep.subr.mxu0 0.0
    %4983 = vmatpush1.xpose.msra.mxu0 0.0
    %4984 = vmatprep.subr.mxu0 0.0
    %4985 = vmatpush1.xpose.msra.mxu0 0.0
    %4986 = vmatprep.subr.mxu0 0.0
    %4987 = vmatpush1.xpose.msra.mxu0 0.0
    %4988 = vmatprep.subr.mxu0 0.0
    %4989 = vmatpush1.xpose.msra.mxu0 0.0
    %4990 = vmatprep.subr.mxu0 0.0
    %4991 = vmatpush1.xpose.msra.mxu0 0.0
    %4992 = vmatprep.subr.mxu0 0.0
    %4993 = vmatpush1.xpose.msra.mxu0 0.0
    %4994 = vmatprep.subr.mxu0 0.0
    %4995 = vmatpush1.xpose.msra.mxu0 0.0
    %4996 = vmatprep.subr.mxu0 0.0
    %4997 = vmatpush1.xpose.msra.mxu0 0.0
    %4998 = vmatprep.subr.mxu0 0.0
    %4999 = vmatpush1.xpose.msra.mxu0 0.0
    %5000 = vmatprep.subr.mxu0 0.0
    %5001 = vmatpush1.xpose.msra.mxu0 0.0
    %5002 = vmatprep.subr.mxu0 0.0
    %5003 = vmatpush1.xpose.msra.mxu0 0.0
    %5004 = vmatprep.subr.mxu0 0.0
    %5005 = vmatpush1.xpose.msra.mxu0 0.0
    %5006 = vmatprep.subr.mxu0 0.0
    %5007 = vmatpush1.xpose.msra.mxu0 0.0
    %5008 = vmatprep.subr.mxu0 0.0
    %5009 = vmatpush1.xpose.msra.mxu0 0.0
    %5010 = vmatprep.subr.mxu0 0.0
    %5011 = vmatpush1.xpose.msra.mxu0 0.0
    %5012 = vmatprep.subr.mxu0 0.0
    %5013 = vmatpush1.xpose.msra.mxu0 0.0
    %5014 = vmatprep.subr.mxu0 0.0
    %5015 = vmatpush1.xpose.msra.mxu0 0.0
    %5016 = vmatprep.subr.mxu0 0.0
    %5017 = vmatpush1.xpose.msra.mxu0 0.0
    %5018 = vmatprep.subr.mxu0 0.0
    %5019 = vmatpush1.xpose.msra.mxu0 0.0
    %5020 = vmatprep.subr.mxu0 0.0
    %5021 = vmatpush1.xpose.msra.mxu0 0.0
    %5022 = vmatprep.mubr.f32.mxu0 0.0
    %5023 = vmatmul.mubr.f32.gmra.mrb[0].mxu0 %v4942
    %v5024 = vpop.f32.mrb[0].mxu0
    %v5025 = vadd.f32 0.0, %v5024
    %v5026 = vpop.f32.mrb[0].mxu0
    %5027 = vmatprep.mubr.f32.mxu0 0.0
    %5028 = vmatmul.mubr.f32.gmra.mrb[0].mxu0 %v4944
    %v5029 = vpop.f32.mrb[0].mxu0
    %v5030 = vadd.f32 0.0, %v5029
    %v5031 = vpop.f32.mrb[0].mxu0
    %5032 = vmatprep.mubr.f32.mxu0 0.0
    %5033 = vmatmul.mubr.f32.gmra.mrb[0].mxu0 %v4946
    %v5034 = vpop.f32.mrb[0].mxu0
    %v5035 = vadd.f32 0.0, %v5034
    %v5036 = vpop.f32.mrb[0].mxu0
    %5037 = vmatprep.mubr.f32.mxu0 0.0
    %5038 = vmatmul.mubr.f32.gmra.mrb[0].mxu0 %v4948
    %v5039 = vpop.f32.mrb[0].mxu0
    %v5040 = vadd.f32 0.0, %v5039
    %v5041 = vpop.f32.mrb[0].mxu0
    %5042 = vdwg.mxu0
    %v5043 = vsel %vm198, %v5025, -inf
    %5044 = vmax.xlane.f32.xlu0 %v5043
    %v5045 = vpop.xlane.xlu0 %5044
    %v5046 = vsel %vm198, %v5030, -inf
    %5047 = vmax.xlane.f32.xlu0 %v5046
    %v5048 = vpop.xlane.xlu0 %5047
    %v5049 = vsel %vm198, %v5035, -inf
    %5050 = vmax.xlane.f32.xlu0 %v5049
    %v5051 = vpop.xlane.xlu0 %5050
    %v5052 = vsel %vm198, %v5040, -inf
    %5053 = vmax.xlane.f32.xlu0 %v5052
    %v5054 = vpop.xlane.xlu0 %5053
    %v5055 = vsub.f32 %v5025, %v5045
    %v5056 = vsub.f32 %v5030, %v5048
    %v5057 = vsub.f32 %v5035, %v5051
    %v5058 = vsub.f32 %v5040, %v5054
    %v5059 = vmul.f32 %v5055, 1.442695
    %v5060 = vpow.pop %v5059
    %v5061 = vmul.f32 %v5056, 1.442695
    %v5062 = vpow.pop %v5061
    %v5063 = vmul.f32 %v5057, 1.442695
    %v5064 = vpow.pop %v5063
    %v5065 = vmul.f32 %v5058, 1.442695
    %v5066 = vpow.pop %v5065
    %v5067 = vsel %vm198, %v5060, 0.0
    %5068 = vadd.xlane.f32.xlu0 %v5067
    %v5069 = vpop.xlane.xlu0 %5068
    %v5070 = vsel %vm198, %v5062, 0.0
    %5071 = vadd.xlane.f32.xlu0 %v5070
    %v5072 = vpop.xlane.xlu0 %5071
    %v5073 = vsel %vm198, %v5064, 0.0
    %5074 = vadd.xlane.f32.xlu0 %v5073
    %v5075 = vpop.xlane.xlu0 %5074
    %v5076 = vsel %vm198, %v5066, 0.0
    %5077 = vadd.xlane.f32.xlu0 %v5076
    %v5078 = vpop.xlane.xlu0 %5077
    %v5079 = vrcp.pop %v5069
    %v5080 = vrcp.pop %v5072
    %v5081 = vrcp.pop %v5075
    %v5082 = vrcp.pop %v5078
    %v5083 = vmul.f32 %v5060, %v5079
    %v5084 = vmul.f32 %v5062, %v5080
    %v5085 = vmul.f32 %v5064, %v5081
    %v5086 = vmul.f32 %v5066, %v5082
    %5087 = vrot.lane.b32.xlu0 %v4318, 96
    %v5088 = vpop.permute.xlu0 %5087
    %5089 = vrot.lane.b32.xlu0 %v4324, 96
    %v5090 = vpop.permute.xlu0 %5089
    %5091 = vrot.lane.b32.xlu0 %v4330, 96
    %v5092 = vpop.permute.xlu0 %5091
    %5093 = vrot.lane.b32.xlu0 %v4336, 96
    %v5094 = vpop.permute.xlu0 %5093
    %v5100 = vsel %vm198, %v5083, 0
    %v5103 = vsel %vm198, %v5084, 0
    %v5106 = vsel %vm198, %v5085, 0
    %v5109 = vsel %vm198, %v5086, 0
    %5111 = vmatprep.subr.mxu0 0.0
    %5112 = vmatpush1.msra.mxu0 %v5088
    %5113 = vmatprep.subr.mxu0 0.0
    %5114 = vmatpush1.msra.mxu0 %v5090
    %5115 = vmatprep.subr.mxu0 0.0
    %5116 = vmatpush1.msra.mxu0 %v5092
    %5117 = vmatprep.subr.mxu0 0.0
    %5118 = vmatpush1.msra.mxu0 %v5094
    %5119 = vmatprep.subr.mxu0 0.0
    %5120 = vmatpush1.msra.mxu0 0.0
    %5121 = vmatprep.subr.mxu0 0.0
    %5122 = vmatpush1.msra.mxu0 0.0
    %5123 = vmatprep.subr.mxu0 0.0
    %5124 = vmatpush1.msra.mxu0 0.0
    %5125 = vmatprep.subr.mxu0 0.0
    %5126 = vmatpush1.msra.mxu0 0.0
    %5127 = vmatprep.subr.mxu0 0.0
    %5128 = vmatpush1.msra.mxu0 0.0
    %5129 = vmatprep.subr.mxu0 0.0
    %5130 = vmatpush1.msra.mxu0 0.0
    %5131 = vmatprep.subr.mxu0 0.0
    %5132 = vmatpush1.msra.mxu0 0.0
    %5133 = vmatprep.subr.mxu0 0.0
    %5134 = vmatpush1.msra.mxu0 0.0
    %5135 = vmatprep.subr.mxu0 0.0
    %5136 = vmatpush1.msra.mxu0 0.0
    %5137 = vmatprep.subr.mxu0 0.0
    %5138 = vmatpush1.msra.mxu0 0.0
    %5139 = vmatprep.subr.mxu0 0.0
    %5140 = vmatpush1.msra.mxu0 0.0
    %5141 = vmatprep.subr.mxu0 0.0
    %5142 = vmatpush1.msra.mxu0 0.0
    %5143 = vmatprep.subr.mxu0 0.0
    %5144 = vmatpush1.msra.mxu0 0.0
    %5145 = vmatprep.subr.mxu0 0.0
    %5146 = vmatpush1.msra.mxu0 0.0
    %5147 = vmatprep.subr.mxu0 0.0
    %5148 = vmatpush1.msra.mxu0 0.0
    %5149 = vmatprep.subr.mxu0 0.0
    %5150 = vmatpush1.msra.mxu0 0.0
    %5151 = vmatprep.subr.mxu0 0.0
    %5152 = vmatpush1.msra.mxu0 0.0
    %5153 = vmatprep.subr.mxu0 0.0
    %5154 = vmatpush1.msra.mxu0 0.0
    %5155 = vmatprep.subr.mxu0 0.0
    %5156 = vmatpush1.msra.mxu0 0.0
    %5157 = vmatprep.subr.mxu0 0.0
    %5158 = vmatpush1.msra.mxu0 0.0
    %5159 = vmatprep.subr.mxu0 0.0
    %5160 = vmatpush1.msra.mxu0 0.0
    %5161 = vmatprep.subr.mxu0 0.0
    %5162 = vmatpush1.msra.mxu0 0.0
    %5163 = vmatprep.subr.mxu0 0.0
    %5164 = vmatpush1.msra.mxu0 0.0
    %5165 = vmatprep.subr.mxu0 0.0
    %5166 = vmatpush1.msra.mxu0 0.0
    %5167 = vmatprep.subr.mxu0 0.0
    %5168 = vmatpush1.msra.mxu0 0.0
    %5169 = vmatprep.subr.mxu0 0.0
    %5170 = vmatpush1.msra.mxu0 0.0
    %5171 = vmatprep.subr.mxu0 0.0
    %5172 = vmatpush1.msra.mxu0 0.0
    %5173 = vmatprep.subr.mxu0 0.0
    %5174 = vmatpush1.msra.mxu0 0.0
    %5175 = vmatprep.mubr.f32.mxu0 0.0
    %5176 = vmatmul.mubr.f32.gmra.mrb[0].mxu0 %v5100
    %v5177 = vpop.f32.mrb[0].mxu0
    %v5178 = vadd.f32 0.0, %v5177
    %v5179 = vpop.f32.mrb[0].mxu0
    %5180 = vmatprep.mubr.f32.mxu0 0.0
    %5181 = vmatmul.mubr.f32.gmra.mrb[0].mxu0 %v5103
    %v5182 = vpop.f32.mrb[0].mxu0
    %v5183 = vadd.f32 0.0, %v5182
    %v5184 = vpop.f32.mrb[0].mxu0
    %5185 = vmatprep.mubr.f32.mxu0 0.0
    %5186 = vmatmul.mubr.f32.gmra.mrb[0].mxu0 %v5106
    %v5187 = vpop.f32.mrb[0].mxu0
    %v5188 = vadd.f32 0.0, %v5187
    %v5189 = vpop.f32.mrb[0].mxu0
    %5190 = vmatprep.mubr.f32.mxu0 0.0
    %5191 = vmatmul.mubr.f32.gmra.mrb[0].mxu0 %v5109
    %v5192 = vpop.f32.mrb[0].mxu0
    %v5193 = vadd.f32 0.0, %v5192
    %v5194 = vpop.f32.mrb[0].mxu0
    %5195 = vdwg.mxu0
    %5200 = vrot.lane.b32.xlu0 %v5178, 32
    %v5201 = vpop.permute.xlu0 %5200
    %5202 = vrot.lane.b32.xlu0 %v5183, 32
    %v5203 = vpop.permute.xlu0 %5202
    %5204 = vrot.lane.b32.xlu0 %v5188, 32
    %v5205 = vpop.permute.xlu0 %5204
    %5206 = vrot.lane.b32.xlu0 %v5193, 32
    %v5207 = vpop.permute.xlu0 %5206
    %5212 = vst.msk [vmem:[#allocation3] sm:$0xff] %vm2019, %v5201
    %5213 = vst.msk [vmem:[#allocation3 + $0x8] sm:$0xff] %vm2019, %v5203
    %5214 = vst.msk [vmem:[#allocation3 + $0x10] sm:$0xff] %vm2019, %v5205
    %5215 = vst.msk [vmem:[#allocation3 + $0x18] sm:$0xff] %vm2019, %v5207
    %5216 = vrot.lane.b32.xlu0 %v4362, 80
    %v5217 = vpop.permute.xlu0 %5216
    %5218 = vrot.lane.b32.xlu0 %v4363, 80
    %v5219 = vpop.permute.xlu0 %5218
    %5220 = vrot.lane.b32.xlu0 %v4364, 80
    %v5221 = vpop.permute.xlu0 %5220
    %5222 = vrot.lane.b32.xlu0 %v4365, 80
    %v5223 = vpop.permute.xlu0 %5222
    %5224 = vrot.lane.b32.xlu0 %v4316, 16
    %v5225 = vpop.permute.xlu0 %5224
    %5226 = vrot.lane.b32.xlu0 %v4322, 16
    %v5227 = vpop.permute.xlu0 %5226
    %5228 = vrot.lane.b32.xlu0 %v4328, 16
    %v5229 = vpop.permute.xlu0 %5228
    %5230 = vrot.lane.b32.xlu0 %v4334, 16
    %v5231 = vpop.permute.xlu0 %5230
    %v5232 = vsel %vm285, %v5217, 0
    %v5234 = vsel %vm285, %v5219, 0
    %v5236 = vsel %vm285, %v5221, 0
    %v5238 = vsel %vm285, %v5223, 0
    %v5240 = vsel %vm285, %v5225, 0
    %v5242 = vsel %vm285, %v5227, 0
    %v5244 = vsel %vm285, %v5229, 0
    %v5246 = vsel %vm285, %v5231, 0
    %5248 = vmatprep.subr.mxu0 0.0
    %5249 = vmatpush1.xpose.msra.mxu0 %v5240
    %5250 = vmatprep.subr.mxu0 0.0
    %5251 = vmatpush1.xpose.msra.mxu0 %v5242
    %5252 = vmatprep.subr.mxu0 0.0
    %5253 = vmatpush1.xpose.msra.mxu0 %v5244
    %5254 = vmatprep.subr.mxu0 0.0
    %5255 = vmatpush1.xpose.msra.mxu0 %v5246
    %5256 = vmatprep.subr.mxu0 0.0
    %5257 = vmatpush1.xpose.msra.mxu0 0.0
    %5258 = vmatprep.subr.mxu0 0.0
    %5259 = vmatpush1.xpose.msra.mxu0 0.0
    %5260 = vmatprep.subr.mxu0 0.0
    %5261 = vmatpush1.xpose.msra.mxu0 0.0
    %5262 = vmatprep.subr.mxu0 0.0
    %5263 = vmatpush1.xpose.msra.mxu0 0.0
    %5264 = vmatprep.subr.mxu0 0.0
    %5265 = vmatpush1.xpose.msra.mxu0 0.0
    %5266 = vmatprep.subr.mxu0 0.0
    %5267 = vmatpush1.xpose.msra.mxu0 0.0
    %5268 = vmatprep.subr.mxu0 0.0
    %5269 = vmatpush1.xpose.msra.mxu0 0.0
    %5270 = vmatprep.subr.mxu0 0.0
    %5271 = vmatpush1.xpose.msra.mxu0 0.0
    %5272 = vmatprep.subr.mxu0 0.0
    %5273 = vmatpush1.xpose.msra.mxu0 0.0
    %5274 = vmatprep.subr.mxu0 0.0
    %5275 = vmatpush1.xpose.msra.mxu0 0.0
    %5276 = vmatprep.subr.mxu0 0.0
    %5277 = vmatpush1.xpose.msra.mxu0 0.0
    %5278 = vmatprep.subr.mxu0 0.0
    %5279 = vmatpush1.xpose.msra.mxu0 0.0
    %5280 = vmatprep.subr.mxu0 0.0
    %5281 = vmatpush1.xpose.msra.mxu0 0.0
    %5282 = vmatprep.subr.mxu0 0.0
    %5283 = vmatpush1.xpose.msra.mxu0 0.0
    %5284 = vmatprep.subr.mxu0 0.0
    %5285 = vmatpush1.xpose.msra.mxu0 0.0
    %5286 = vmatprep.subr.mxu0 0.0
    %5287 = vmatpush1.xpose.msra.mxu0 0.0
    %5288 = vmatprep.subr.mxu0 0.0
    %5289 = vmatpush1.xpose.msra.mxu0 0.0
    %5290 = vmatprep.subr.mxu0 0.0
    %5291 = vmatpush1.xpose.msra.mxu0 0.0
    %5292 = vmatprep.subr.mxu0 0.0
    %5293 = vmatpush1.xpose.msra.mxu0 0.0
    %5294 = vmatprep.subr.mxu0 0.0
    %5295 = vmatpush1.xpose.msra.mxu0 0.0
    %5296 = vmatprep.subr.mxu0 0.0
    %5297 = vmatpush1.xpose.msra.mxu0 0.0
    %5298 = vmatprep.subr.mxu0 0.0
    %5299 = vmatpush1.xpose.msra.mxu0 0.0
    %5300 = vmatprep.subr.mxu0 0.0
    %5301 = vmatpush1.xpose.msra.mxu0 0.0
    %5302 = vmatprep.subr.mxu0 0.0
    %5303 = vmatpush1.xpose.msra.mxu0 0.0
    %5304 = vmatprep.subr.mxu0 0.0
    %5305 = vmatpush1.xpose.msra.mxu0 0.0
    %5306 = vmatprep.subr.mxu0 0.0
    %5307 = vmatpush1.xpose.msra.mxu0 0.0
    %5308 = vmatprep.subr.mxu0 0.0
    %5309 = vmatpush1.xpose.msra.mxu0 0.0
    %5310 = vmatprep.subr.mxu0 0.0
    %5311 = vmatpush1.xpose.msra.mxu0 0.0
    %5312 = vmatprep.mubr.f32.mxu0 0.0
    %5313 = vmatmul.mubr.f32.gmra.mrb[0].mxu0 %v5232
    %v5314 = vpop.f32.mrb[0].mxu0
    %v5315 = vadd.f32 0.0, %v5314
    %v5316 = vpop.f32.mrb[0].mxu0
    %5317 = vmatprep.mubr.f32.mxu0 0.0
    %5318 = vmatmul.mubr.f32.gmra.mrb[0].mxu0 %v5234
    %v5319 = vpop.f32.mrb[0].mxu0
    %v5320 = vadd.f32 0.0, %v5319
    %v5321 = vpop.f32.mrb[0].mxu0
    %5322 = vmatprep.mubr.f32.mxu0 0.0
    %5323 = vmatmul.mubr.f32.gmra.mrb[0].mxu0 %v5236
    %v5324 = vpop.f32.mrb[0].mxu0
    %v5325 = vadd.f32 0.0, %v5324
    %v5326 = vpop.f32.mrb[0].mxu0
    %5327 = vmatprep.mubr.f32.mxu0 0.0
    %5328 = vmatmul.mubr.f32.gmra.mrb[0].mxu0 %v5238
    %v5329 = vpop.f32.mrb[0].mxu0
    %v5330 = vadd.f32 0.0, %v5329
    %v5331 = vpop.f32.mrb[0].mxu0
    %5332 = vdwg.mxu0
    %v5333 = vsel %vm198, %v5315, -inf
    %5334 = vmax.xlane.f32.xlu0 %v5333
    %v5335 = vpop.xlane.xlu0 %5334
    %v5336 = vsel %vm198, %v5320, -inf
    %5337 = vmax.xlane.f32.xlu0 %v5336
    %v5338 = vpop.xlane.xlu0 %5337
    %v5339 = vsel %vm198, %v5325, -inf
    %5340 = vmax.xlane.f32.xlu0 %v5339
    %v5341 = vpop.xlane.xlu0 %5340
    %v5342 = vsel %vm198, %v5330, -inf
    %5343 = vmax.xlane.f32.xlu0 %v5342
    %v5344 = vpop.xlane.xlu0 %5343
    %v5345 = vsub.f32 %v5315, %v5335
    %v5346 = vsub.f32 %v5320, %v5338
    %v5347 = vsub.f32 %v5325, %v5341
    %v5348 = vsub.f32 %v5330, %v5344
    %v5349 = vmul.f32 %v5345, 1.442695
    %v5350 = vpow.pop %v5349
    %v5351 = vmul.f32 %v5346, 1.442695
    %v5352 = vpow.pop %v5351
    %v5353 = vmul.f32 %v5347, 1.442695
    %v5354 = vpow.pop %v5353
    %v5355 = vmul.f32 %v5348, 1.442695
    %v5356 = vpow.pop %v5355
    %v5357 = vsel %vm198, %v5350, 0.0
    %5358 = vadd.xlane.f32.xlu0 %v5357
    %v5359 = vpop.xlane.xlu0 %5358
    %v5360 = vsel %vm198, %v5352, 0.0
    %5361 = vadd.xlane.f32.xlu0 %v5360
    %v5362 = vpop.xlane.xlu0 %5361
    %v5363 = vsel %vm198, %v5354, 0.0
    %5364 = vadd.xlane.f32.xlu0 %v5363
    %v5365 = vpop.xlane.xlu0 %5364
    %v5366 = vsel %vm198, %v5356, 0.0
    %5367 = vadd.xlane.f32.xlu0 %v5366
    %v5368 = vpop.xlane.xlu0 %5367
    %v5369 = vrcp.pop %v5359
    %v5370 = vrcp.pop %v5362
    %v5371 = vrcp.pop %v5365
    %v5372 = vrcp.pop %v5368
    %v5373 = vmul.f32 %v5350, %v5369
    %v5374 = vmul.f32 %v5352, %v5370
    %v5375 = vmul.f32 %v5354, %v5371
    %v5376 = vmul.f32 %v5356, %v5372
    %5377 = vrot.lane.b32.xlu0 %v4318, 80
    %v5378 = vpop.permute.xlu0 %5377
    %5379 = vrot.lane.b32.xlu0 %v4324, 80
    %v5380 = vpop.permute.xlu0 %5379
    %5381 = vrot.lane.b32.xlu0 %v4330, 80
    %v5382 = vpop.permute.xlu0 %5381
    %5383 = vrot.lane.b32.xlu0 %v4336, 80
    %v5384 = vpop.permute.xlu0 %5383
    %v5390 = vsel %vm198, %v5373, 0
    %v5393 = vsel %vm198, %v5374, 0
    %v5396 = vsel %vm198, %v5375, 0
    %v5399 = vsel %vm198, %v5376, 0
    %5401 = vmatprep.subr.mxu0 0.0
    %5402 = vmatpush1.msra.mxu0 %v5378
    %5403 = vmatprep.subr.mxu0 0.0
    %5404 = vmatpush1.msra.mxu0 %v5380
    %5405 = vmatprep.subr.mxu0 0.0
    %5406 = vmatpush1.msra.mxu0 %v5382
    %5407 = vmatprep.subr.mxu0 0.0
    %5408 = vmatpush1.msra.mxu0 %v5384
    %5409 = vmatprep.subr.mxu0 0.0
    %5410 = vmatpush1.msra.mxu0 0.0
    %5411 = vmatprep.subr.mxu0 0.0
    %5412 = vmatpush1.msra.mxu0 0.0
    %5413 = vmatprep.subr.mxu0 0.0
    %5414 = vmatpush1.msra.mxu0 0.0
    %5415 = vmatprep.subr.mxu0 0.0
    %5416 = vmatpush1.msra.mxu0 0.0
    %5417 = vmatprep.subr.mxu0 0.0
    %5418 = vmatpush1.msra.mxu0 0.0
    %5419 = vmatprep.subr.mxu0 0.0
    %5420 = vmatpush1.msra.mxu0 0.0
    %5421 = vmatprep.subr.mxu0 0.0
    %5422 = vmatpush1.msra.mxu0 0.0
    %5423 = vmatprep.subr.mxu0 0.0
    %5424 = vmatpush1.msra.mxu0 0.0
    %5425 = vmatprep.subr.mxu0 0.0
    %5426 = vmatpush1.msra.mxu0 0.0
    %5427 = vmatprep.subr.mxu0 0.0
    %5428 = vmatpush1.msra.mxu0 0.0
    %5429 = vmatprep.subr.mxu0 0.0
    %5430 = vmatpush1.msra.mxu0 0.0
    %5431 = vmatprep.subr.mxu0 0.0
    %5432 = vmatpush1.msra.mxu0 0.0
    %5433 = vmatprep.subr.mxu0 0.0
    %5434 = vmatpush1.msra.mxu0 0.0
    %5435 = vmatprep.subr.mxu0 0.0
    %5436 = vmatpush1.msra.mxu0 0.0
    %5437 = vmatprep.subr.mxu0 0.0
    %5438 = vmatpush1.msra.mxu0 0.0
    %5439 = vmatprep.subr.mxu0 0.0
    %5440 = vmatpush1.msra.mxu0 0.0
    %5441 = vmatprep.subr.mxu0 0.0
    %5442 = vmatpush1.msra.mxu0 0.0
    %5443 = vmatprep.subr.mxu0 0.0
    %5444 = vmatpush1.msra.mxu0 0.0
    %5445 = vmatprep.subr.mxu0 0.0
    %5446 = vmatpush1.msra.mxu0 0.0
    %5447 = vmatprep.subr.mxu0 0.0
    %5448 = vmatpush1.msra.mxu0 0.0
    %5449 = vmatprep.subr.mxu0 0.0
    %5450 = vmatpush1.msra.mxu0 0.0
    %5451 = vmatprep.subr.mxu0 0.0
    %5452 = vmatpush1.msra.mxu0 0.0
    %5453 = vmatprep.subr.mxu0 0.0
    %5454 = vmatpush1.msra.mxu0 0.0
    %5455 = vmatprep.subr.mxu0 0.0
    %5456 = vmatpush1.msra.mxu0 0.0
    %5457 = vmatprep.subr.mxu0 0.0
    %5458 = vmatpush1.msra.mxu0 0.0
    %5459 = vmatprep.subr.mxu0 0.0
    %5460 = vmatpush1.msra.mxu0 0.0
    %5461 = vmatprep.subr.mxu0 0.0
    %5462 = vmatpush1.msra.mxu0 0.0
    %5463 = vmatprep.subr.mxu0 0.0
    %5464 = vmatpush1.msra.mxu0 0.0
    %5465 = vmatprep.mubr.f32.mxu0 0.0
    %5466 = vmatmul.mubr.f32.gmra.mrb[0].mxu0 %v5390
    %v5467 = vpop.f32.mrb[0].mxu0
    %v5468 = vadd.f32 0.0, %v5467
    %v5469 = vpop.f32.mrb[0].mxu0
    %5470 = vmatprep.mubr.f32.mxu0 0.0
    %5471 = vmatmul.mubr.f32.gmra.mrb[0].mxu0 %v5393
    %v5472 = vpop.f32.mrb[0].mxu0
    %v5473 = vadd.f32 0.0, %v5472
    %v5474 = vpop.f32.mrb[0].mxu0
    %5475 = vmatprep.mubr.f32.mxu0 0.0
    %5476 = vmatmul.mubr.f32.gmra.mrb[0].mxu0 %v5396
    %v5477 = vpop.f32.mrb[0].mxu0
    %v5478 = vadd.f32 0.0, %v5477
    %v5479 = vpop.f32.mrb[0].mxu0
    %5480 = vmatprep.mubr.f32.mxu0 0.0
    %5481 = vmatmul.mubr.f32.gmra.mrb[0].mxu0 %v5399
    %v5482 = vpop.f32.mrb[0].mxu0
    %v5483 = vadd.f32 0.0, %v5482
    %v5484 = vpop.f32.mrb[0].mxu0
    %5485 = vdwg.mxu0
    %5490 = vrot.lane.b32.xlu0 %v5468, 48
    %v5491 = vpop.permute.xlu0 %5490
    %5492 = vrot.lane.b32.xlu0 %v5473, 48
    %v5493 = vpop.permute.xlu0 %5492
    %5494 = vrot.lane.b32.xlu0 %v5478, 48
    %v5495 = vpop.permute.xlu0 %5494
    %5496 = vrot.lane.b32.xlu0 %v5483, 48
    %v5497 = vpop.permute.xlu0 %5496
    %5502 = vst.msk [vmem:[#allocation3] sm:$0xff] %vm2310, %v5491
    %5503 = vst.msk [vmem:[#allocation3 + $0x8] sm:$0xff] %vm2310, %v5493
    %5504 = vst.msk [vmem:[#allocation3 + $0x10] sm:$0xff] %vm2310, %v5495
    %5505 = vst.msk [vmem:[#allocation3 + $0x18] sm:$0xff] %vm2310, %v5497
    %5510 = vrot.lane.b32.xlu0 %v4340, 64
    %v5511 = vpop.permute.xlu0 %5510
    %5512 = vrot.lane.b32.xlu0 %v4346, 64
    %v5513 = vpop.permute.xlu0 %5512
    %5514 = vrot.lane.b32.xlu0 %v4352, 64
    %v5515 = vpop.permute.xlu0 %5514
    %5516 = vrot.lane.b32.xlu0 %v4358, 64
    %v5517 = vpop.permute.xlu0 %5516
    %v5519 = vsel %vm285, %v4366, 0
    %v5522 = vsel %vm285, %v4367, 0
    %v5525 = vsel %vm285, %v4368, 0
    %v5528 = vsel %vm285, %v4369, 0
    %v5530 = vsel %vm285, %v5511, 0
    %v5532 = vsel %vm285, %v5513, 0
    %v5534 = vsel %vm285, %v5515, 0
    %v5536 = vsel %vm285, %v5517, 0
    %5538 = vmatprep.subr.mxu0 0.0
    %5539 = vmatpush1.xpose.msra.mxu0 %v5530
    %5540 = vmatprep.subr.mxu0 0.0
    %5541 = vmatpush1.xpose.msra.mxu0 %v5532
    %5542 = vmatprep.subr.mxu0 0.0
    %5543 = vmatpush1.xpose.msra.mxu0 %v5534
    %5544 = vmatprep.subr.mxu0 0.0
    %5545 = vmatpush1.xpose.msra.mxu0 %v5536
    %5546 = vmatprep.subr.mxu0 0.0
    %5547 = vmatpush1.xpose.msra.mxu0 0.0
    %5548 = vmatprep.subr.mxu0 0.0
    %5549 = vmatpush1.xpose.msra.mxu0 0.0
    %5550 = vmatprep.subr.mxu0 0.0
    %5551 = vmatpush1.xpose.msra.mxu0 0.0
    %5552 = vmatprep.subr.mxu0 0.0
    %5553 = vmatpush1.xpose.msra.mxu0 0.0
    %5554 = vmatprep.subr.mxu0 0.0
    %5555 = vmatpush1.xpose.msra.mxu0 0.0
    %5556 = vmatprep.subr.mxu0 0.0
    %5557 = vmatpush1.xpose.msra.mxu0 0.0
    %5558 = vmatprep.subr.mxu0 0.0
    %5559 = vmatpush1.xpose.msra.mxu0 0.0
    %5560 = vmatprep.subr.mxu0 0.0
    %5561 = vmatpush1.xpose.msra.mxu0 0.0
    %5562 = vmatprep.subr.mxu0 0.0
    %5563 = vmatpush1.xpose.msra.mxu0 0.0
    %5564 = vmatprep.subr.mxu0 0.0
    %5565 = vmatpush1.xpose.msra.mxu0 0.0
    %5566 = vmatprep.subr.mxu0 0.0
    %5567 = vmatpush1.xpose.msra.mxu0 0.0
    %5568 = vmatprep.subr.mxu0 0.0
    %5569 = vmatpush1.xpose.msra.mxu0 0.0
    %5570 = vmatprep.subr.mxu0 0.0
    %5571 = vmatpush1.xpose.msra.mxu0 0.0
    %5572 = vmatprep.subr.mxu0 0.0
    %5573 = vmatpush1.xpose.msra.mxu0 0.0
    %5574 = vmatprep.subr.mxu0 0.0
    %5575 = vmatpush1.xpose.msra.mxu0 0.0
    %5576 = vmatprep.subr.mxu0 0.0
    %5577 = vmatpush1.xpose.msra.mxu0 0.0
    %5578 = vmatprep.subr.mxu0 0.0
    %5579 = vmatpush1.xpose.msra.mxu0 0.0
    %5580 = vmatprep.subr.mxu0 0.0
    %5581 = vmatpush1.xpose.msra.mxu0 0.0
    %5582 = vmatprep.subr.mxu0 0.0
    %5583 = vmatpush1.xpose.msra.mxu0 0.0
    %5584 = vmatprep.subr.mxu0 0.0
    %5585 = vmatpush1.xpose.msra.mxu0 0.0
    %5586 = vmatprep.subr.mxu0 0.0
    %5587 = vmatpush1.xpose.msra.mxu0 0.0
    %5588 = vmatprep.subr.mxu0 0.0
    %5589 = vmatpush1.xpose.msra.mxu0 0.0
    %5590 = vmatprep.subr.mxu0 0.0
    %5591 = vmatpush1.xpose.msra.mxu0 0.0
    %5592 = vmatprep.subr.mxu0 0.0
    %5593 = vmatpush1.xpose.msra.mxu0 0.0
    %5594 = vmatprep.subr.mxu0 0.0
    %5595 = vmatpush1.xpose.msra.mxu0 0.0
    %5596 = vmatprep.subr.mxu0 0.0
    %5597 = vmatpush1.xpose.msra.mxu0 0.0
    %5598 = vmatprep.subr.mxu0 0.0
    %5599 = vmatpush1.xpose.msra.mxu0 0.0
    %5600 = vmatprep.subr.mxu0 0.0
    %5601 = vmatpush1.xpose.msra.mxu0 0.0
    %5602 = vmatprep.mubr.f32.mxu0 0.0
    %5603 = vmatmul.mubr.f32.gmra.mrb[0].mxu0 %v5519
    %v5604 = vpop.f32.mrb[0].mxu0
    %v5605 = vadd.f32 0.0, %v5604
    %v5606 = vpop.f32.mrb[0].mxu0
    %5607 = vmatprep.mubr.f32.mxu0 0.0
    %5608 = vmatmul.mubr.f32.gmra.mrb[0].mxu0 %v5522
    %v5609 = vpop.f32.mrb[0].mxu0
    %v5610 = vadd.f32 0.0, %v5609
    %v5611 = vpop.f32.mrb[0].mxu0
    %5612 = vmatprep.mubr.f32.mxu0 0.0
    %5613 = vmatmul.mubr.f32.gmra.mrb[0].mxu0 %v5525
    %v5614 = vpop.f32.mrb[0].mxu0
    %v5615 = vadd.f32 0.0, %v5614
    %v5616 = vpop.f32.mrb[0].mxu0
    %5617 = vmatprep.mubr.f32.mxu0 0.0
    %5618 = vmatmul.mubr.f32.gmra.mrb[0].mxu0 %v5528
    %v5619 = vpop.f32.mrb[0].mxu0
    %v5620 = vadd.f32 0.0, %v5619
    %v5621 = vpop.f32.mrb[0].mxu0
    %5622 = vdwg.mxu0
    %v5623 = vsel %vm198, %v5605, -inf
    %5624 = vmax.xlane.f32.xlu0 %v5623
    %v5625 = vpop.xlane.xlu0 %5624
    %v5626 = vsel %vm198, %v5610, -inf
    %5627 = vmax.xlane.f32.xlu0 %v5626
    %v5628 = vpop.xlane.xlu0 %5627
    %v5629 = vsel %vm198, %v5615, -inf
    %5630 = vmax.xlane.f32.xlu0 %v5629
    %v5631 = vpop.xlane.xlu0 %5630
    %v5632 = vsel %vm198, %v5620, -inf
    %5633 = vmax.xlane.f32.xlu0 %v5632
    %v5634 = vpop.xlane.xlu0 %5633
    %v5635 = vsub.f32 %v5605, %v5625
    %v5636 = vsub.f32 %v5610, %v5628
    %v5637 = vsub.f32 %v5615, %v5631
    %v5638 = vsub.f32 %v5620, %v5634
    %v5639 = vmul.f32 %v5635, 1.442695
    %v5640 = vpow.pop %v5639
    %v5641 = vmul.f32 %v5636, 1.442695
    %v5642 = vpow.pop %v5641
    %v5643 = vmul.f32 %v5637, 1.442695
    %v5644 = vpow.pop %v5643
    %v5645 = vmul.f32 %v5638, 1.442695
    %v5646 = vpow.pop %v5645
    %v5647 = vsel %vm198, %v5640, 0.0
    %5648 = vadd.xlane.f32.xlu0 %v5647
    %v5649 = vpop.xlane.xlu0 %5648
    %v5650 = vsel %vm198, %v5642, 0.0
    %5651 = vadd.xlane.f32.xlu0 %v5650
    %v5652 = vpop.xlane.xlu0 %5651
    %v5653 = vsel %vm198, %v5644, 0.0
    %5654 = vadd.xlane.f32.xlu0 %v5653
    %v5655 = vpop.xlane.xlu0 %5654
    %v5656 = vsel %vm198, %v5646, 0.0
    %5657 = vadd.xlane.f32.xlu0 %v5656
    %v5658 = vpop.xlane.xlu0 %5657
    %v5659 = vrcp.pop %v5649
    %v5660 = vrcp.pop %v5652
    %v5661 = vrcp.pop %v5655
    %v5662 = vrcp.pop %v5658
    %v5663 = vmul.f32 %v5640, %v5659
    %v5664 = vmul.f32 %v5642, %v5660
    %v5665 = vmul.f32 %v5644, %v5661
    %v5666 = vmul.f32 %v5646, %v5662
    %v5668 = vsel %vm198, %v5663, 0
    %v5671 = vsel %vm198, %v5664, 0
    %v5674 = vsel %vm198, %v5665, 0
    %v5677 = vsel %vm198, %v5666, 0
    %5679 = vmatprep.subr.mxu0 0.0
    %5680 = vmatpush1.msra.mxu0 %v4342
    %5681 = vmatprep.subr.mxu0 0.0
    %5682 = vmatpush1.msra.mxu0 %v4348
    %5683 = vmatprep.subr.mxu0 0.0
    %5684 = vmatpush1.msra.mxu0 %v4354
    %5685 = vmatprep.subr.mxu0 0.0
    %5686 = vmatpush1.msra.mxu0 %v4360
    %5687 = vmatprep.subr.mxu0 0.0
    %5688 = vmatpush1.msra.mxu0 0.0
    %5689 = vmatprep.subr.mxu0 0.0
    %5690 = vmatpush1.msra.mxu0 0.0
    %5691 = vmatprep.subr.mxu0 0.0
    %5692 = vmatpush1.msra.mxu0 0.0
    %5693 = vmatprep.subr.mxu0 0.0
    %5694 = vmatpush1.msra.mxu0 0.0
    %5695 = vmatprep.subr.mxu0 0.0
    %5696 = vmatpush1.msra.mxu0 0.0
    %5697 = vmatprep.subr.mxu0 0.0
    %5698 = vmatpush1.msra.mxu0 0.0
    %5699 = vmatprep.subr.mxu0 0.0
    %5700 = vmatpush1.msra.mxu0 0.0
    %5701 = vmatprep.subr.mxu0 0.0
    %5702 = vmatpush1.msra.mxu0 0.0
    %5703 = vmatprep.subr.mxu0 0.0
    %5704 = vmatpush1.msra.mxu0 0.0
    %5705 = vmatprep.subr.mxu0 0.0
    %5706 = vmatpush1.msra.mxu0 0.0
    %5707 = vmatprep.subr.mxu0 0.0
    %5708 = vmatpush1.msra.mxu0 0.0
    %5709 = vmatprep.subr.mxu0 0.0
    %5710 = vmatpush1.msra.mxu0 0.0
    %5711 = vmatprep.subr.mxu0 0.0
    %5712 = vmatpush1.msra.mxu0 0.0
    %5713 = vmatprep.subr.mxu0 0.0
    %5714 = vmatpush1.msra.mxu0 0.0
    %5715 = vmatprep.subr.mxu0 0.0
    %5716 = vmatpush1.msra.mxu0 0.0
    %5717 = vmatprep.subr.mxu0 0.0
    %5718 = vmatpush1.msra.mxu0 0.0
    %5719 = vmatprep.subr.mxu0 0.0
    %5720 = vmatpush1.msra.mxu0 0.0
    %5721 = vmatprep.subr.mxu0 0.0
    %5722 = vmatpush1.msra.mxu0 0.0
    %5723 = vmatprep.subr.mxu0 0.0
    %5724 = vmatpush1.msra.mxu0 0.0
    %5725 = vmatprep.subr.mxu0 0.0
    %5726 = vmatpush1.msra.mxu0 0.0
    %5727 = vmatprep.subr.mxu0 0.0
    %5728 = vmatpush1.msra.mxu0 0.0
    %5729 = vmatprep.subr.mxu0 0.0
    %5730 = vmatpush1.msra.mxu0 0.0
    %5731 = vmatprep.subr.mxu0 0.0
    %5732 = vmatpush1.msra.mxu0 0.0
    %5733 = vmatprep.subr.mxu0 0.0
    %5734 = vmatpush1.msra.mxu0 0.0
    %5735 = vmatprep.subr.mxu0 0.0
    %5736 = vmatpush1.msra.mxu0 0.0
    %5737 = vmatprep.subr.mxu0 0.0
    %5738 = vmatpush1.msra.mxu0 0.0
    %5739 = vmatprep.subr.mxu0 0.0
    %5740 = vmatpush1.msra.mxu0 0.0
    %5741 = vmatprep.subr.mxu0 0.0
    %5742 = vmatpush1.msra.mxu0 0.0
    %5743 = vmatprep.mubr.f32.mxu0 0.0
    %5744 = vmatmul.mubr.f32.gmra.mrb[0].mxu0 %v5668
    %v5745 = vpop.f32.mrb[0].mxu0
    %v5746 = vadd.f32 0.0, %v5745
    %v5747 = vpop.f32.mrb[0].mxu0
    %5748 = vmatprep.mubr.f32.mxu0 0.0
    %5749 = vmatmul.mubr.f32.gmra.mrb[0].mxu0 %v5671
    %v5750 = vpop.f32.mrb[0].mxu0
    %v5751 = vadd.f32 0.0, %v5750
    %v5752 = vpop.f32.mrb[0].mxu0
    %5753 = vmatprep.mubr.f32.mxu0 0.0
    %5754 = vmatmul.mubr.f32.gmra.mrb[0].mxu0 %v5674
    %v5755 = vpop.f32.mrb[0].mxu0
    %v5756 = vadd.f32 0.0, %v5755
    %v5757 = vpop.f32.mrb[0].mxu0
    %5758 = vmatprep.mubr.f32.mxu0 0.0
    %5759 = vmatmul.mubr.f32.gmra.mrb[0].mxu0 %v5677
    %v5760 = vpop.f32.mrb[0].mxu0
    %v5761 = vadd.f32 0.0, %v5760
    %v5762 = vpop.f32.mrb[0].mxu0
    %5763 = vdwg.mxu0
    %5764 = vst.msk [vmem:[#allocation3 + $0x20] sm:$0xff] %vm285, %v5746
    %5765 = vst.msk [vmem:[#allocation3 + $0x28] sm:$0xff] %vm285, %v5751
    %5766 = vst.msk [vmem:[#allocation3 + $0x30] sm:$0xff] %vm285, %v5756
    %5767 = vst.msk [vmem:[#allocation3 + $0x38] sm:$0xff] %vm285, %v5761
    %5768 = vrot.lane.b32.xlu0 %v4366, 112
    %v5769 = vpop.permute.xlu0 %5768
    %5770 = vrot.lane.b32.xlu0 %v4367, 112
    %v5771 = vpop.permute.xlu0 %5770
    %5772 = vrot.lane.b32.xlu0 %v4368, 112
    %v5773 = vpop.permute.xlu0 %5772
    %5774 = vrot.lane.b32.xlu0 %v4369, 112
    %v5775 = vpop.permute.xlu0 %5774
    %5776 = vrot.lane.b32.xlu0 %v4340, 48
    %v5777 = vpop.permute.xlu0 %5776
    %5778 = vrot.lane.b32.xlu0 %v4346, 48
    %v5779 = vpop.permute.xlu0 %5778
    %5780 = vrot.lane.b32.xlu0 %v4352, 48
    %v5781 = vpop.permute.xlu0 %5780
    %5782 = vrot.lane.b32.xlu0 %v4358, 48
    %v5783 = vpop.permute.xlu0 %5782
    %v5784 = vsel %vm285, %v5769, 0
    %v5786 = vsel %vm285, %v5771, 0
    %v5788 = vsel %vm285, %v5773, 0
    %v5790 = vsel %vm285, %v5775, 0
    %v5792 = vsel %vm285, %v5777, 0
    %v5794 = vsel %vm285, %v5779, 0
    %v5796 = vsel %vm285, %v5781, 0
    %v5798 = vsel %vm285, %v5783, 0
    %5800 = vmatprep.subr.mxu0 0.0
    %5801 = vmatpush1.xpose.msra.mxu0 %v5792
    %5802 = vmatprep.subr.mxu0 0.0
    %5803 = vmatpush1.xpose.msra.mxu0 %v5794
    %5804 = vmatprep.subr.mxu0 0.0
    %5805 = vmatpush1.xpose.msra.mxu0 %v5796
    %5806 = vmatprep.subr.mxu0 0.0
    %5807 = vmatpush1.xpose.msra.mxu0 %v5798
    %5808 = vmatprep.subr.mxu0 0.0
    %5809 = vmatpush1.xpose.msra.mxu0 0.0
    %5810 = vmatprep.subr.mxu0 0.0
    %5811 = vmatpush1.xpose.msra.mxu0 0.0
    %5812 = vmatprep.subr.mxu0 0.0
    %5813 = vmatpush1.xpose.msra.mxu0 0.0
    %5814 = vmatprep.subr.mxu0 0.0
    %5815 = vmatpush1.xpose.msra.mxu0 0.0
    %5816 = vmatprep.subr.mxu0 0.0
    %5817 = vmatpush1.xpose.msra.mxu0 0.0
    %5818 = vmatprep.subr.mxu0 0.0
    %5819 = vmatpush1.xpose.msra.mxu0 0.0
    %5820 = vmatprep.subr.mxu0 0.0
    %5821 = vmatpush1.xpose.msra.mxu0 0.0
    %5822 = vmatprep.subr.mxu0 0.0
    %5823 = vmatpush1.xpose.msra.mxu0 0.0
    %5824 = vmatprep.subr.mxu0 0.0
    %5825 = vmatpush1.xpose.msra.mxu0 0.0
    %5826 = vmatprep.subr.mxu0 0.0
    %5827 = vmatpush1.xpose.msra.mxu0 0.0
    %5828 = vmatprep.subr.mxu0 0.0
    %5829 = vmatpush1.xpose.msra.mxu0 0.0
    %5830 = vmatprep.subr.mxu0 0.0
    %5831 = vmatpush1.xpose.msra.mxu0 0.0
    %5832 = vmatprep.subr.mxu0 0.0
    %5833 = vmatpush1.xpose.msra.mxu0 0.0
    %5834 = vmatprep.subr.mxu0 0.0
    %5835 = vmatpush1.xpose.msra.mxu0 0.0
    %5836 = vmatprep.subr.mxu0 0.0
    %5837 = vmatpush1.xpose.msra.mxu0 0.0
    %5838 = vmatprep.subr.mxu0 0.0
    %5839 = vmatpush1.xpose.msra.mxu0 0.0
    %5840 = vmatprep.subr.mxu0 0.0
    %5841 = vmatpush1.xpose.msra.mxu0 0.0
    %5842 = vmatprep.subr.mxu0 0.0
    %5843 = vmatpush1.xpose.msra.mxu0 0.0
    %5844 = vmatprep.subr.mxu0 0.0
    %5845 = vmatpush1.xpose.msra.mxu0 0.0
    %5846 = vmatprep.subr.mxu0 0.0
    %5847 = vmatpush1.xpose.msra.mxu0 0.0
    %5848 = vmatprep.subr.mxu0 0.0
    %5849 = vmatpush1.xpose.msra.mxu0 0.0
    %5850 = vmatprep.subr.mxu0 0.0
    %5851 = vmatpush1.xpose.msra.mxu0 0.0
    %5852 = vmatprep.subr.mxu0 0.0
    %5853 = vmatpush1.xpose.msra.mxu0 0.0
    %5854 = vmatprep.subr.mxu0 0.0
    %5855 = vmatpush1.xpose.msra.mxu0 0.0
    %5856 = vmatprep.subr.mxu0 0.0
    %5857 = vmatpush1.xpose.msra.mxu0 0.0
    %5858 = vmatprep.subr.mxu0 0.0
    %5859 = vmatpush1.xpose.msra.mxu0 0.0
    %5860 = vmatprep.subr.mxu0 0.0
    %5861 = vmatpush1.xpose.msra.mxu0 0.0
    %5862 = vmatprep.subr.mxu0 0.0
    %5863 = vmatpush1.xpose.msra.mxu0 0.0
    %5864 = vmatprep.mubr.f32.mxu0 0.0
    %5865 = vmatmul.mubr.f32.gmra.mrb[0].mxu0 %v5784
    %v5866 = vpop.f32.mrb[0].mxu0
    %v5867 = vadd.f32 0.0, %v5866
    %v5868 = vpop.f32.mrb[0].mxu0
    %5869 = vmatprep.mubr.f32.mxu0 0.0
    %5870 = vmatmul.mubr.f32.gmra.mrb[0].mxu0 %v5786
    %v5871 = vpop.f32.mrb[0].mxu0
    %v5872 = vadd.f32 0.0, %v5871
    %v5873 = vpop.f32.mrb[0].mxu0
    %5874 = vmatprep.mubr.f32.mxu0 0.0
    %5875 = vmatmul.mubr.f32.gmra.mrb[0].mxu0 %v5788
    %v5876 = vpop.f32.mrb[0].mxu0
    %v5877 = vadd.f32 0.0, %v5876
    %v5878 = vpop.f32.mrb[0].mxu0
    %5879 = vmatprep.mubr.f32.mxu0 0.0
    %5880 = vmatmul.mubr.f32.gmra.mrb[0].mxu0 %v5790
    %v5881 = vpop.f32.mrb[0].mxu0
    %v5882 = vadd.f32 0.0, %v5881
    %v5883 = vpop.f32.mrb[0].mxu0
    %5884 = vdwg.mxu0
    %v5885 = vsel %vm198, %v5867, -inf
    %5886 = vmax.xlane.f32.xlu0 %v5885
    %v5887 = vpop.xlane.xlu0 %5886
    %v5888 = vsel %vm198, %v5872, -inf
    %5889 = vmax.xlane.f32.xlu0 %v5888
    %v5890 = vpop.xlane.xlu0 %5889
    %v5891 = vsel %vm198, %v5877, -inf
    %5892 = vmax.xlane.f32.xlu0 %v5891
    %v5893 = vpop.xlane.xlu0 %5892
    %v5894 = vsel %vm198, %v5882, -inf
    %5895 = vmax.xlane.f32.xlu0 %v5894
    %v5896 = vpop.xlane.xlu0 %5895
    %v5897 = vsub.f32 %v5867, %v5887
    %v5898 = vsub.f32 %v5872, %v5890
    %v5899 = vsub.f32 %v5877, %v5893
    %v5900 = vsub.f32 %v5882, %v5896
    %v5901 = vmul.f32 %v5897, 1.442695
    %v5902 = vpow.pop %v5901
    %v5903 = vmul.f32 %v5898, 1.442695
    %v5904 = vpow.pop %v5903
    %v5905 = vmul.f32 %v5899, 1.442695
    %v5906 = vpow.pop %v5905
    %v5907 = vmul.f32 %v5900, 1.442695
    %v5908 = vpow.pop %v5907
    %v5909 = vsel %vm198, %v5902, 0.0
    %5910 = vadd.xlane.f32.xlu0 %v5909
    %v5911 = vpop.xlane.xlu0 %5910
    %v5912 = vsel %vm198, %v5904, 0.0
    %5913 = vadd.xlane.f32.xlu0 %v5912
    %v5914 = vpop.xlane.xlu0 %5913
    %v5915 = vsel %vm198, %v5906, 0.0
    %5916 = vadd.xlane.f32.xlu0 %v5915
    %v5917 = vpop.xlane.xlu0 %5916
    %v5918 = vsel %vm198, %v5908, 0.0
    %5919 = vadd.xlane.f32.xlu0 %v5918
    %v5920 = vpop.xlane.xlu0 %5919
    %v5921 = vrcp.pop %v5911
    %v5922 = vrcp.pop %v5914
    %v5923 = vrcp.pop %v5917
    %v5924 = vrcp.pop %v5920
    %v5925 = vmul.f32 %v5902, %v5921
    %v5926 = vmul.f32 %v5904, %v5922
    %v5927 = vmul.f32 %v5906, %v5923
    %v5928 = vmul.f32 %v5908, %v5924
    %5933 = vrot.lane.b32.xlu0 %v4342, 112
    %v5934 = vpop.permute.xlu0 %5933
    %5935 = vrot.lane.b32.xlu0 %v4348, 112
    %v5936 = vpop.permute.xlu0 %5935
    %5937 = vrot.lane.b32.xlu0 %v4354, 112
    %v5938 = vpop.permute.xlu0 %5937
    %5939 = vrot.lane.b32.xlu0 %v4360, 112
    %v5940 = vpop.permute.xlu0 %5939
    %v5946 = vsel %vm198, %v5925, 0
    %v5949 = vsel %vm198, %v5926, 0
    %v5952 = vsel %vm198, %v5927, 0
    %v5955 = vsel %vm198, %v5928, 0
    %5957 = vmatprep.subr.mxu0 0.0
    %5958 = vmatpush1.msra.mxu0 %v5934
    %5959 = vmatprep.subr.mxu0 0.0
    %5960 = vmatpush1.msra.mxu0 %v5936
    %5961 = vmatprep.subr.mxu0 0.0
    %5962 = vmatpush1.msra.mxu0 %v5938
    %5963 = vmatprep.subr.mxu0 0.0
    %5964 = vmatpush1.msra.mxu0 %v5940
    %5965 = vmatprep.subr.mxu0 0.0
    %5966 = vmatpush1.msra.mxu0 0.0
    %5967 = vmatprep.subr.mxu0 0.0
    %5968 = vmatpush1.msra.mxu0 0.0
    %5969 = vmatprep.subr.mxu0 0.0
    %5970 = vmatpush1.msra.mxu0 0.0
    %5971 = vmatprep.subr.mxu0 0.0
    %5972 = vmatpush1.msra.mxu0 0.0
    %5973 = vmatprep.subr.mxu0 0.0
    %5974 = vmatpush1.msra.mxu0 0.0
    %5975 = vmatprep.subr.mxu0 0.0
    %5976 = vmatpush1.msra.mxu0 0.0
    %5977 = vmatprep.subr.mxu0 0.0
    %5978 = vmatpush1.msra.mxu0 0.0
    %5979 = vmatprep.subr.mxu0 0.0
    %5980 = vmatpush1.msra.mxu0 0.0
    %5981 = vmatprep.subr.mxu0 0.0
    %5982 = vmatpush1.msra.mxu0 0.0
    %5983 = vmatprep.subr.mxu0 0.0
    %5984 = vmatpush1.msra.mxu0 0.0
    %5985 = vmatprep.subr.mxu0 0.0
    %5986 = vmatpush1.msra.mxu0 0.0
    %5987 = vmatprep.subr.mxu0 0.0
    %5988 = vmatpush1.msra.mxu0 0.0
    %5989 = vmatprep.subr.mxu0 0.0
    %5990 = vmatpush1.msra.mxu0 0.0
    %5991 = vmatprep.subr.mxu0 0.0
    %5992 = vmatpush1.msra.mxu0 0.0
    %5993 = vmatprep.subr.mxu0 0.0
    %5994 = vmatpush1.msra.mxu0 0.0
    %5995 = vmatprep.subr.mxu0 0.0
    %5996 = vmatpush1.msra.mxu0 0.0
    %5997 = vmatprep.subr.mxu0 0.0
    %5998 = vmatpush1.msra.mxu0 0.0
    %5999 = vmatprep.subr.mxu0 0.0
    %6000 = vmatpush1.msra.mxu0 0.0
    %6001 = vmatprep.subr.mxu0 0.0
    %6002 = vmatpush1.msra.mxu0 0.0
    %6003 = vmatprep.subr.mxu0 0.0
    %6004 = vmatpush1.msra.mxu0 0.0
    %6005 = vmatprep.subr.mxu0 0.0
    %6006 = vmatpush1.msra.mxu0 0.0
    %6007 = vmatprep.subr.mxu0 0.0
    %6008 = vmatpush1.msra.mxu0 0.0
    %6009 = vmatprep.subr.mxu0 0.0
    %6010 = vmatpush1.msra.mxu0 0.0
    %6011 = vmatprep.subr.mxu0 0.0
    %6012 = vmatpush1.msra.mxu0 0.0
    %6013 = vmatprep.subr.mxu0 0.0
    %6014 = vmatpush1.msra.mxu0 0.0
    %6015 = vmatprep.subr.mxu0 0.0
    %6016 = vmatpush1.msra.mxu0 0.0
    %6017 = vmatprep.subr.mxu0 0.0
    %6018 = vmatpush1.msra.mxu0 0.0
    %6019 = vmatprep.subr.mxu0 0.0
    %6020 = vmatpush1.msra.mxu0 0.0
    %6021 = vmatprep.mubr.f32.mxu0 0.0
    %6022 = vmatmul.mubr.f32.gmra.mrb[0].mxu0 %v5946
    %v6023 = vpop.f32.mrb[0].mxu0
    %v6024 = vadd.f32 0.0, %v6023
    %v6025 = vpop.f32.mrb[0].mxu0
    %6026 = vmatprep.mubr.f32.mxu0 0.0
    %6027 = vmatmul.mubr.f32.gmra.mrb[0].mxu0 %v5949
    %v6028 = vpop.f32.mrb[0].mxu0
    %v6029 = vadd.f32 0.0, %v6028
    %v6030 = vpop.f32.mrb[0].mxu0
    %6031 = vmatprep.mubr.f32.mxu0 0.0
    %6032 = vmatmul.mubr.f32.gmra.mrb[0].mxu0 %v5952
    %v6033 = vpop.f32.mrb[0].mxu0
    %v6034 = vadd.f32 0.0, %v6033
    %v6035 = vpop.f32.mrb[0].mxu0
    %6036 = vmatprep.mubr.f32.mxu0 0.0
    %6037 = vmatmul.mubr.f32.gmra.mrb[0].mxu0 %v5955
    %v6038 = vpop.f32.mrb[0].mxu0
    %v6039 = vadd.f32 0.0, %v6038
    %v6040 = vpop.f32.mrb[0].mxu0
    %6041 = vdwg.mxu0
    %6046 = vrot.lane.b32.xlu0 %v6024, 16
    %v6047 = vpop.permute.xlu0 %6046
    %6048 = vrot.lane.b32.xlu0 %v6029, 16
    %v6049 = vpop.permute.xlu0 %6048
    %6050 = vrot.lane.b32.xlu0 %v6034, 16
    %v6051 = vpop.permute.xlu0 %6050
    %6052 = vrot.lane.b32.xlu0 %v6039, 16
    %v6053 = vpop.permute.xlu0 %6052
    %6058 = vst.msk [vmem:[#allocation3 + $0x20] sm:$0xff] %vm1728, %v6047
    %6059 = vst.msk [vmem:[#allocation3 + $0x28] sm:$0xff] %vm1728, %v6049
    %6060 = vst.msk [vmem:[#allocation3 + $0x30] sm:$0xff] %vm1728, %v6051
    %6061 = vst.msk [vmem:[#allocation3 + $0x38] sm:$0xff] %vm1728, %v6053
    %6062 = vrot.lane.b32.xlu0 %v4366, 96
    %v6063 = vpop.permute.xlu0 %6062
    %6064 = vrot.lane.b32.xlu0 %v4367, 96
    %v6065 = vpop.permute.xlu0 %6064
    %6066 = vrot.lane.b32.xlu0 %v4368, 96
    %v6067 = vpop.permute.xlu0 %6066
    %6068 = vrot.lane.b32.xlu0 %v4369, 96
    %v6069 = vpop.permute.xlu0 %6068
    %6070 = vrot.lane.b32.xlu0 %v4340, 32
    %v6071 = vpop.permute.xlu0 %6070
    %6072 = vrot.lane.b32.xlu0 %v4346, 32
    %v6073 = vpop.permute.xlu0 %6072
    %6074 = vrot.lane.b32.xlu0 %v4352, 32
    %v6075 = vpop.permute.xlu0 %6074
    %6076 = vrot.lane.b32.xlu0 %v4358, 32
    %v6077 = vpop.permute.xlu0 %6076
    %v6078 = vsel %vm285, %v6063, 0
    %v6080 = vsel %vm285, %v6065, 0
    %v6082 = vsel %vm285, %v6067, 0
    %v6084 = vsel %vm285, %v6069, 0
    %v6086 = vsel %vm285, %v6071, 0
    %v6088 = vsel %vm285, %v6073, 0
    %v6090 = vsel %vm285, %v6075, 0
    %v6092 = vsel %vm285, %v6077, 0
    %6094 = vmatprep.subr.mxu0 0.0
    %6095 = vmatpush1.xpose.msra.mxu0 %v6086
    %6096 = vmatprep.subr.mxu0 0.0
    %6097 = vmatpush1.xpose.msra.mxu0 %v6088
    %6098 = vmatprep.subr.mxu0 0.0
    %6099 = vmatpush1.xpose.msra.mxu0 %v6090
    %6100 = vmatprep.subr.mxu0 0.0
    %6101 = vmatpush1.xpose.msra.mxu0 %v6092
    %6102 = vmatprep.subr.mxu0 0.0
    %6103 = vmatpush1.xpose.msra.mxu0 0.0
    %6104 = vmatprep.subr.mxu0 0.0
    %6105 = vmatpush1.xpose.msra.mxu0 0.0
    %6106 = vmatprep.subr.mxu0 0.0
    %6107 = vmatpush1.xpose.msra.mxu0 0.0
    %6108 = vmatprep.subr.mxu0 0.0
    %6109 = vmatpush1.xpose.msra.mxu0 0.0
    %6110 = vmatprep.subr.mxu0 0.0
    %6111 = vmatpush1.xpose.msra.mxu0 0.0
    %6112 = vmatprep.subr.mxu0 0.0
    %6113 = vmatpush1.xpose.msra.mxu0 0.0
    %6114 = vmatprep.subr.mxu0 0.0
    %6115 = vmatpush1.xpose.msra.mxu0 0.0
    %6116 = vmatprep.subr.mxu0 0.0
    %6117 = vmatpush1.xpose.msra.mxu0 0.0
    %6118 = vmatprep.subr.mxu0 0.0
    %6119 = vmatpush1.xpose.msra.mxu0 0.0
    %6120 = vmatprep.subr.mxu0 0.0
    %6121 = vmatpush1.xpose.msra.mxu0 0.0
    %6122 = vmatprep.subr.mxu0 0.0
    %6123 = vmatpush1.xpose.msra.mxu0 0.0
    %6124 = vmatprep.subr.mxu0 0.0
    %6125 = vmatpush1.xpose.msra.mxu0 0.0
    %6126 = vmatprep.subr.mxu0 0.0
    %6127 = vmatpush1.xpose.msra.mxu0 0.0
    %6128 = vmatprep.subr.mxu0 0.0
    %6129 = vmatpush1.xpose.msra.mxu0 0.0
    %6130 = vmatprep.subr.mxu0 0.0
    %6131 = vmatpush1.xpose.msra.mxu0 0.0
    %6132 = vmatprep.subr.mxu0 0.0
    %6133 = vmatpush1.xpose.msra.mxu0 0.0
    %6134 = vmatprep.subr.mxu0 0.0
    %6135 = vmatpush1.xpose.msra.mxu0 0.0
    %6136 = vmatprep.subr.mxu0 0.0
    %6137 = vmatpush1.xpose.msra.mxu0 0.0
    %6138 = vmatprep.subr.mxu0 0.0
    %6139 = vmatpush1.xpose.msra.mxu0 0.0
    %6140 = vmatprep.subr.mxu0 0.0
    %6141 = vmatpush1.xpose.msra.mxu0 0.0
    %6142 = vmatprep.subr.mxu0 0.0
    %6143 = vmatpush1.xpose.msra.mxu0 0.0
    %6144 = vmatprep.subr.mxu0 0.0
    %6145 = vmatpush1.xpose.msra.mxu0 0.0
    %6146 = vmatprep.subr.mxu0 0.0
    %6147 = vmatpush1.xpose.msra.mxu0 0.0
    %6148 = vmatprep.subr.mxu0 0.0
    %6149 = vmatpush1.xpose.msra.mxu0 0.0
    %6150 = vmatprep.subr.mxu0 0.0
    %6151 = vmatpush1.xpose.msra.mxu0 0.0
    %6152 = vmatprep.subr.mxu0 0.0
    %6153 = vmatpush1.xpose.msra.mxu0 0.0
    %6154 = vmatprep.subr.mxu0 0.0
    %6155 = vmatpush1.xpose.msra.mxu0 0.0
    %6156 = vmatprep.subr.mxu0 0.0
    %6157 = vmatpush1.xpose.msra.mxu0 0.0
    %6158 = vmatprep.mubr.f32.mxu0 0.0
    %6159 = vmatmul.mubr.f32.gmra.mrb[0].mxu0 %v6078
    %v6160 = vpop.f32.mrb[0].mxu0
    %v6161 = vadd.f32 0.0, %v6160
    %v6162 = vpop.f32.mrb[0].mxu0
    %6163 = vmatprep.mubr.f32.mxu0 0.0
    %6164 = vmatmul.mubr.f32.gmra.mrb[0].mxu0 %v6080
    %v6165 = vpop.f32.mrb[0].mxu0
    %v6166 = vadd.f32 0.0, %v6165
    %v6167 = vpop.f32.mrb[0].mxu0
    %6168 = vmatprep.mubr.f32.mxu0 0.0
    %6169 = vmatmul.mubr.f32.gmra.mrb[0].mxu0 %v6082
    %v6170 = vpop.f32.mrb[0].mxu0
    %v6171 = vadd.f32 0.0, %v6170
    %v6172 = vpop.f32.mrb[0].mxu0
    %6173 = vmatprep.mubr.f32.mxu0 0.0
    %6174 = vmatmul.mubr.f32.gmra.mrb[0].mxu0 %v6084
    %v6175 = vpop.f32.mrb[0].mxu0
    %v6176 = vadd.f32 0.0, %v6175
    %v6177 = vpop.f32.mrb[0].mxu0
    %6178 = vdwg.mxu0
    %v6179 = vsel %vm198, %v6161, -inf
    %6180 = vmax.xlane.f32.xlu0 %v6179
    %v6181 = vpop.xlane.xlu0 %6180
    %v6182 = vsel %vm198, %v6166, -inf
    %6183 = vmax.xlane.f32.xlu0 %v6182
    %v6184 = vpop.xlane.xlu0 %6183
    %v6185 = vsel %vm198, %v6171, -inf
    %6186 = vmax.xlane.f32.xlu0 %v6185
    %v6187 = vpop.xlane.xlu0 %6186
    %v6188 = vsel %vm198, %v6176, -inf
    %6189 = vmax.xlane.f32.xlu0 %v6188
    %v6190 = vpop.xlane.xlu0 %6189
    %v6191 = vsub.f32 %v6161, %v6181
    %v6192 = vsub.f32 %v6166, %v6184
    %v6193 = vsub.f32 %v6171, %v6187
    %v6194 = vsub.f32 %v6176, %v6190
    %v6195 = vmul.f32 %v6191, 1.442695
    %v6196 = vpow.pop %v6195
    %v6197 = vmul.f32 %v6192, 1.442695
    %v6198 = vpow.pop %v6197
    %v6199 = vmul.f32 %v6193, 1.442695
    %v6200 = vpow.pop %v6199
    %v6201 = vmul.f32 %v6194, 1.442695
    %v6202 = vpow.pop %v6201
    %v6203 = vsel %vm198, %v6196, 0.0
    %6204 = vadd.xlane.f32.xlu0 %v6203
    %v6205 = vpop.xlane.xlu0 %6204
    %v6206 = vsel %vm198, %v6198, 0.0
    %6207 = vadd.xlane.f32.xlu0 %v6206
    %v6208 = vpop.xlane.xlu0 %6207
    %v6209 = vsel %vm198, %v6200, 0.0
    %6210 = vadd.xlane.f32.xlu0 %v6209
    %v6211 = vpop.xlane.xlu0 %6210
    %v6212 = vsel %vm198, %v6202, 0.0
    %6213 = vadd.xlane.f32.xlu0 %v6212
    %v6214 = vpop.xlane.xlu0 %6213
    %v6215 = vrcp.pop %v6205
    %v6216 = vrcp.pop %v6208
    %v6217 = vrcp.pop %v6211
    %v6218 = vrcp.pop %v6214
    %v6219 = vmul.f32 %v6196, %v6215
    %v6220 = vmul.f32 %v6198, %v6216
    %v6221 = vmul.f32 %v6200, %v6217
    %v6222 = vmul.f32 %v6202, %v6218
    %6223 = vrot.lane.b32.xlu0 %v4342, 96
    %v6224 = vpop.permute.xlu0 %6223
    %6225 = vrot.lane.b32.xlu0 %v4348, 96
    %v6226 = vpop.permute.xlu0 %6225
    %6227 = vrot.lane.b32.xlu0 %v4354, 96
    %v6228 = vpop.permute.xlu0 %6227
    %6229 = vrot.lane.b32.xlu0 %v4360, 96
    %v6230 = vpop.permute.xlu0 %6229
    %v6236 = vsel %vm198, %v6219, 0
    %v6239 = vsel %vm198, %v6220, 0
    %v6242 = vsel %vm198, %v6221, 0
    %v6245 = vsel %vm198, %v6222, 0
    %6247 = vmatprep.subr.mxu0 0.0
    %6248 = vmatpush1.msra.mxu0 %v6224
    %6249 = vmatprep.subr.mxu0 0.0
    %6250 = vmatpush1.msra.mxu0 %v6226
    %6251 = vmatprep.subr.mxu0 0.0
    %6252 = vmatpush1.msra.mxu0 %v6228
    %6253 = vmatprep.subr.mxu0 0.0
    %6254 = vmatpush1.msra.mxu0 %v6230
    %6255 = vmatprep.subr.mxu0 0.0
    %6256 = vmatpush1.msra.mxu0 0.0
    %6257 = vmatprep.subr.mxu0 0.0
    %6258 = vmatpush1.msra.mxu0 0.0
    %6259 = vmatprep.subr.mxu0 0.0
    %6260 = vmatpush1.msra.mxu0 0.0
    %6261 = vmatprep.subr.mxu0 0.0
    %6262 = vmatpush1.msra.mxu0 0.0
    %6263 = vmatprep.subr.mxu0 0.0
    %6264 = vmatpush1.msra.mxu0 0.0
    %6265 = vmatprep.subr.mxu0 0.0
    %6266 = vmatpush1.msra.mxu0 0.0
    %6267 = vmatprep.subr.mxu0 0.0
    %6268 = vmatpush1.msra.mxu0 0.0
    %6269 = vmatprep.subr.mxu0 0.0
    %6270 = vmatpush1.msra.mxu0 0.0
    %6271 = vmatprep.subr.mxu0 0.0
    %6272 = vmatpush1.msra.mxu0 0.0
    %6273 = vmatprep.subr.mxu0 0.0
    %6274 = vmatpush1.msra.mxu0 0.0
    %6275 = vmatprep.subr.mxu0 0.0
    %6276 = vmatpush1.msra.mxu0 0.0
    %6277 = vmatprep.subr.mxu0 0.0
    %6278 = vmatpush1.msra.mxu0 0.0
    %6279 = vmatprep.subr.mxu0 0.0
    %6280 = vmatpush1.msra.mxu0 0.0
    %6281 = vmatprep.subr.mxu0 0.0
    %6282 = vmatpush1.msra.mxu0 0.0
    %6283 = vmatprep.subr.mxu0 0.0
    %6284 = vmatpush1.msra.mxu0 0.0
    %6285 = vmatprep.subr.mxu0 0.0
    %6286 = vmatpush1.msra.mxu0 0.0
    %6287 = vmatprep.subr.mxu0 0.0
    %6288 = vmatpush1.msra.mxu0 0.0
    %6289 = vmatprep.subr.mxu0 0.0
    %6290 = vmatpush1.msra.mxu0 0.0
    %6291 = vmatprep.subr.mxu0 0.0
    %6292 = vmatpush1.msra.mxu0 0.0
    %6293 = vmatprep.subr.mxu0 0.0
    %6294 = vmatpush1.msra.mxu0 0.0
    %6295 = vmatprep.subr.mxu0 0.0
    %6296 = vmatpush1.msra.mxu0 0.0
    %6297 = vmatprep.subr.mxu0 0.0
    %6298 = vmatpush1.msra.mxu0 0.0
    %6299 = vmatprep.subr.mxu0 0.0
    %6300 = vmatpush1.msra.mxu0 0.0
    %6301 = vmatprep.subr.mxu0 0.0
    %6302 = vmatpush1.msra.mxu0 0.0
    %6303 = vmatprep.subr.mxu0 0.0
    %6304 = vmatpush1.msra.mxu0 0.0
    %6305 = vmatprep.subr.mxu0 0.0
    %6306 = vmatpush1.msra.mxu0 0.0
    %6307 = vmatprep.subr.mxu0 0.0
    %6308 = vmatpush1.msra.mxu0 0.0
    %6309 = vmatprep.subr.mxu0 0.0
    %6310 = vmatpush1.msra.mxu0 0.0
    %6311 = vmatprep.mubr.f32.mxu0 0.0
    %6312 = vmatmul.mubr.f32.gmra.mrb[0].mxu0 %v6236
    %v6313 = vpop.f32.mrb[0].mxu0
    %v6314 = vadd.f32 0.0, %v6313
    %v6315 = vpop.f32.mrb[0].mxu0
    %6316 = vmatprep.mubr.f32.mxu0 0.0
    %6317 = vmatmul.mubr.f32.gmra.mrb[0].mxu0 %v6239
    %v6318 = vpop.f32.mrb[0].mxu0
    %v6319 = vadd.f32 0.0, %v6318
    %v6320 = vpop.f32.mrb[0].mxu0
    %6321 = vmatprep.mubr.f32.mxu0 0.0
    %6322 = vmatmul.mubr.f32.gmra.mrb[0].mxu0 %v6242
    %v6323 = vpop.f32.mrb[0].mxu0
    %v6324 = vadd.f32 0.0, %v6323
    %v6325 = vpop.f32.mrb[0].mxu0
    %6326 = vmatprep.mubr.f32.mxu0 0.0
    %6327 = vmatmul.mubr.f32.gmra.mrb[0].mxu0 %v6245
    %v6328 = vpop.f32.mrb[0].mxu0
    %v6329 = vadd.f32 0.0, %v6328
    %v6330 = vpop.f32.mrb[0].mxu0
    %6331 = vdwg.mxu0
    %6336 = vrot.lane.b32.xlu0 %v6314, 32
    %v6337 = vpop.permute.xlu0 %6336
    %6338 = vrot.lane.b32.xlu0 %v6319, 32
    %v6339 = vpop.permute.xlu0 %6338
    %6340 = vrot.lane.b32.xlu0 %v6324, 32
    %v6341 = vpop.permute.xlu0 %6340
    %6342 = vrot.lane.b32.xlu0 %v6329, 32
    %v6343 = vpop.permute.xlu0 %6342
    %6348 = vst.msk [vmem:[#allocation3 + $0x20] sm:$0xff] %vm2019, %v6337
    %6349 = vst.msk [vmem:[#allocation3 + $0x28] sm:$0xff] %vm2019, %v6339
    %6350 = vst.msk [vmem:[#allocation3 + $0x30] sm:$0xff] %vm2019, %v6341
    %6351 = vst.msk [vmem:[#allocation3 + $0x38] sm:$0xff] %vm2019, %v6343
    %6352 = vrot.lane.b32.xlu0 %v4366, 80
    %v6353 = vpop.permute.xlu0 %6352
    %6354 = vrot.lane.b32.xlu0 %v4367, 80
    %v6355 = vpop.permute.xlu0 %6354
    %6356 = vrot.lane.b32.xlu0 %v4368, 80
    %v6357 = vpop.permute.xlu0 %6356
    %6358 = vrot.lane.b32.xlu0 %v4369, 80
    %v6359 = vpop.permute.xlu0 %6358
    %6360 = vrot.lane.b32.xlu0 %v4340, 16
    %v6361 = vpop.permute.xlu0 %6360
    %6362 = vrot.lane.b32.xlu0 %v4346, 16
    %v6363 = vpop.permute.xlu0 %6362
    %6364 = vrot.lane.b32.xlu0 %v4352, 16
    %v6365 = vpop.permute.xlu0 %6364
    %6366 = vrot.lane.b32.xlu0 %v4358, 16
    %v6367 = vpop.permute.xlu0 %6366
    %v6368 = vsel %vm285, %v6353, 0
    %v6370 = vsel %vm285, %v6355, 0
    %v6372 = vsel %vm285, %v6357, 0
    %v6374 = vsel %vm285, %v6359, 0
    %v6376 = vsel %vm285, %v6361, 0
    %v6378 = vsel %vm285, %v6363, 0
    %v6380 = vsel %vm285, %v6365, 0
    %v6382 = vsel %vm285, %v6367, 0
    %6384 = vmatprep.subr.mxu0 0.0
    %6385 = vmatpush1.xpose.msra.mxu0 %v6376
    %6386 = vmatprep.subr.mxu0 0.0
    %6387 = vmatpush1.xpose.msra.mxu0 %v6378
    %6388 = vmatprep.subr.mxu0 0.0
    %6389 = vmatpush1.xpose.msra.mxu0 %v6380
    %6390 = vmatprep.subr.mxu0 0.0
    %6391 = vmatpush1.xpose.msra.mxu0 %v6382
    %6392 = vmatprep.subr.mxu0 0.0
    %6393 = vmatpush1.xpose.msra.mxu0 0.0
    %6394 = vmatprep.subr.mxu0 0.0
    %6395 = vmatpush1.xpose.msra.mxu0 0.0
    %6396 = vmatprep.subr.mxu0 0.0
    %6397 = vmatpush1.xpose.msra.mxu0 0.0
    %6398 = vmatprep.subr.mxu0 0.0
    %6399 = vmatpush1.xpose.msra.mxu0 0.0
    %6400 = vmatprep.subr.mxu0 0.0
    %6401 = vmatpush1.xpose.msra.mxu0 0.0
    %6402 = vmatprep.subr.mxu0 0.0
    %6403 = vmatpush1.xpose.msra.mxu0 0.0
    %6404 = vmatprep.subr.mxu0 0.0
    %6405 = vmatpush1.xpose.msra.mxu0 0.0
    %6406 = vmatprep.subr.mxu0 0.0
    %6407 = vmatpush1.xpose.msra.mxu0 0.0
    %6408 = vmatprep.subr.mxu0 0.0
    %6409 = vmatpush1.xpose.msra.mxu0 0.0
    %6410 = vmatprep.subr.mxu0 0.0
    %6411 = vmatpush1.xpose.msra.mxu0 0.0
    %6412 = vmatprep.subr.mxu0 0.0
    %6413 = vmatpush1.xpose.msra.mxu0 0.0
    %6414 = vmatprep.subr.mxu0 0.0
    %6415 = vmatpush1.xpose.msra.mxu0 0.0
    %6416 = vmatprep.subr.mxu0 0.0
    %6417 = vmatpush1.xpose.msra.mxu0 0.0
    %6418 = vmatprep.subr.mxu0 0.0
    %6419 = vmatpush1.xpose.msra.mxu0 0.0
    %6420 = vmatprep.subr.mxu0 0.0
    %6421 = vmatpush1.xpose.msra.mxu0 0.0
    %6422 = vmatprep.subr.mxu0 0.0
    %6423 = vmatpush1.xpose.msra.mxu0 0.0
    %6424 = vmatprep.subr.mxu0 0.0
    %6425 = vmatpush1.xpose.msra.mxu0 0.0
    %6426 = vmatprep.subr.mxu0 0.0
    %6427 = vmatpush1.xpose.msra.mxu0 0.0
    %6428 = vmatprep.subr.mxu0 0.0
    %6429 = vmatpush1.xpose.msra.mxu0 0.0
    %6430 = vmatprep.subr.mxu0 0.0
    %6431 = vmatpush1.xpose.msra.mxu0 0.0
    %6432 = vmatprep.subr.mxu0 0.0
    %6433 = vmatpush1.xpose.msra.mxu0 0.0
    %6434 = vmatprep.subr.mxu0 0.0
    %6435 = vmatpush1.xpose.msra.mxu0 0.0
    %6436 = vmatprep.subr.mxu0 0.0
    %6437 = vmatpush1.xpose.msra.mxu0 0.0
    %6438 = vmatprep.subr.mxu0 0.0
    %6439 = vmatpush1.xpose.msra.mxu0 0.0
    %6440 = vmatprep.subr.mxu0 0.0
    %6441 = vmatpush1.xpose.msra.mxu0 0.0
    %6442 = vmatprep.subr.mxu0 0.0
    %6443 = vmatpush1.xpose.msra.mxu0 0.0
    %6444 = vmatprep.subr.mxu0 0.0
    %6445 = vmatpush1.xpose.msra.mxu0 0.0
    %6446 = vmatprep.subr.mxu0 0.0
    %6447 = vmatpush1.xpose.msra.mxu0 0.0
    %6448 = vmatprep.mubr.f32.mxu0 0.0
    %6449 = vmatmul.mubr.f32.gmra.mrb[0].mxu0 %v6368
    %v6450 = vpop.f32.mrb[0].mxu0
    %v6451 = vadd.f32 0.0, %v6450
    %v6452 = vpop.f32.mrb[0].mxu0
    %6453 = vmatprep.mubr.f32.mxu0 0.0
    %6454 = vmatmul.mubr.f32.gmra.mrb[0].mxu0 %v6370
    %v6455 = vpop.f32.mrb[0].mxu0
    %v6456 = vadd.f32 0.0, %v6455
    %v6457 = vpop.f32.mrb[0].mxu0
    %6458 = vmatprep.mubr.f32.mxu0 0.0
    %6459 = vmatmul.mubr.f32.gmra.mrb[0].mxu0 %v6372
    %v6460 = vpop.f32.mrb[0].mxu0
    %v6461 = vadd.f32 0.0, %v6460
    %v6462 = vpop.f32.mrb[0].mxu0
    %6463 = vmatprep.mubr.f32.mxu0 0.0
    %6464 = vmatmul.mubr.f32.gmra.mrb[0].mxu0 %v6374
    %v6465 = vpop.f32.mrb[0].mxu0
    %v6466 = vadd.f32 0.0, %v6465
    %v6467 = vpop.f32.mrb[0].mxu0
    %6468 = vdwg.mxu0
    %v6469 = vsel %vm198, %v6451, -inf
    %6470 = vmax.xlane.f32.xlu0 %v6469
    %v6471 = vpop.xlane.xlu0 %6470
    %v6472 = vsel %vm198, %v6456, -inf
    %6473 = vmax.xlane.f32.xlu0 %v6472
    %v6474 = vpop.xlane.xlu0 %6473
    %v6475 = vsel %vm198, %v6461, -inf
    %6476 = vmax.xlane.f32.xlu0 %v6475
    %v6477 = vpop.xlane.xlu0 %6476
    %v6478 = vsel %vm198, %v6466, -inf
    %6479 = vmax.xlane.f32.xlu0 %v6478
    %v6480 = vpop.xlane.xlu0 %6479
    %v6481 = vsub.f32 %v6451, %v6471
    %v6482 = vsub.f32 %v6456, %v6474
    %v6483 = vsub.f32 %v6461, %v6477
    %v6484 = vsub.f32 %v6466, %v6480
    %v6485 = vmul.f32 %v6481, 1.442695
    %v6486 = vpow.pop %v6485
    %v6487 = vmul.f32 %v6482, 1.442695
    %v6488 = vpow.pop %v6487
    %v6489 = vmul.f32 %v6483, 1.442695
    %v6490 = vpow.pop %v6489
    %v6491 = vmul.f32 %v6484, 1.442695
    %v6492 = vpow.pop %v6491
    %v6493 = vsel %vm198, %v6486, 0.0
    %6494 = vadd.xlane.f32.xlu0 %v6493
    %v6495 = vpop.xlane.xlu0 %6494
    %v6496 = vsel %vm198, %v6488, 0.0
    %6497 = vadd.xlane.f32.xlu0 %v6496
    %v6498 = vpop.xlane.xlu0 %6497
    %v6499 = vsel %vm198, %v6490, 0.0
    %6500 = vadd.xlane.f32.xlu0 %v6499
    %v6501 = vpop.xlane.xlu0 %6500
    %v6502 = vsel %vm198, %v6492, 0.0
    %6503 = vadd.xlane.f32.xlu0 %v6502
    %v6504 = vpop.xlane.xlu0 %6503
    %v6505 = vrcp.pop %v6495
    %v6506 = vrcp.pop %v6498
    %v6507 = vrcp.pop %v6501
    %v6508 = vrcp.pop %v6504
    %v6509 = vmul.f32 %v6486, %v6505
    %v6510 = vmul.f32 %v6488, %v6506
    %v6511 = vmul.f32 %v6490, %v6507
    %v6512 = vmul.f32 %v6492, %v6508
    %6513 = vrot.lane.b32.xlu0 %v4342, 80
    %v6514 = vpop.permute.xlu0 %6513
    %6515 = vrot.lane.b32.xlu0 %v4348, 80
    %v6516 = vpop.permute.xlu0 %6515
    %6517 = vrot.lane.b32.xlu0 %v4354, 80
    %v6518 = vpop.permute.xlu0 %6517
    %6519 = vrot.lane.b32.xlu0 %v4360, 80
    %v6520 = vpop.permute.xlu0 %6519
    %v6526 = vsel %vm198, %v6509, 0
    %v6529 = vsel %vm198, %v6510, 0
    %v6532 = vsel %vm198, %v6511, 0
    %v6535 = vsel %vm198, %v6512, 0
    %6537 = vmatprep.subr.mxu0 0.0
    %6538 = vmatpush1.msra.mxu0 %v6514
    %6539 = vmatprep.subr.mxu0 0.0
    %6540 = vmatpush1.msra.mxu0 %v6516
    %6541 = vmatprep.subr.mxu0 0.0
    %6542 = vmatpush1.msra.mxu0 %v6518
    %6543 = vmatprep.subr.mxu0 0.0
    %6544 = vmatpush1.msra.mxu0 %v6520
    %6545 = vmatprep.subr.mxu0 0.0
    %6546 = vmatpush1.msra.mxu0 0.0
    %6547 = vmatprep.subr.mxu0 0.0
    %6548 = vmatpush1.msra.mxu0 0.0
    %6549 = vmatprep.subr.mxu0 0.0
    %6550 = vmatpush1.msra.mxu0 0.0
    %6551 = vmatprep.subr.mxu0 0.0
    %6552 = vmatpush1.msra.mxu0 0.0
    %6553 = vmatprep.subr.mxu0 0.0
    %6554 = vmatpush1.msra.mxu0 0.0
    %6555 = vmatprep.subr.mxu0 0.0
    %6556 = vmatpush1.msra.mxu0 0.0
    %6557 = vmatprep.subr.mxu0 0.0
    %6558 = vmatpush1.msra.mxu0 0.0
    %6559 = vmatprep.subr.mxu0 0.0
    %6560 = vmatpush1.msra.mxu0 0.0
    %6561 = vmatprep.subr.mxu0 0.0
    %6562 = vmatpush1.msra.mxu0 0.0
    %6563 = vmatprep.subr.mxu0 0.0
    %6564 = vmatpush1.msra.mxu0 0.0
    %6565 = vmatprep.subr.mxu0 0.0
    %6566 = vmatpush1.msra.mxu0 0.0
    %6567 = vmatprep.subr.mxu0 0.0
    %6568 = vmatpush1.msra.mxu0 0.0
    %6569 = vmatprep.subr.mxu0 0.0
    %6570 = vmatpush1.msra.mxu0 0.0
    %6571 = vmatprep.subr.mxu0 0.0
    %6572 = vmatpush1.msra.mxu0 0.0
    %6573 = vmatprep.subr.mxu0 0.0
    %6574 = vmatpush1.msra.mxu0 0.0
    %6575 = vmatprep.subr.mxu0 0.0
    %6576 = vmatpush1.msra.mxu0 0.0
    %6577 = vmatprep.subr.mxu0 0.0
    %6578 = vmatpush1.msra.mxu0 0.0
    %6579 = vmatprep.subr.mxu0 0.0
    %6580 = vmatpush1.msra.mxu0 0.0
    %6581 = vmatprep.subr.mxu0 0.0
    %6582 = vmatpush1.msra.mxu0 0.0
    %6583 = vmatprep.subr.mxu0 0.0
    %6584 = vmatpush1.msra.mxu0 0.0
    %6585 = vmatprep.subr.mxu0 0.0
    %6586 = vmatpush1.msra.mxu0 0.0
    %6587 = vmatprep.subr.mxu0 0.0
    %6588 = vmatpush1.msra.mxu0 0.0
    %6589 = vmatprep.subr.mxu0 0.0
    %6590 = vmatpush1.msra.mxu0 0.0
    %6591 = vmatprep.subr.mxu0 0.0
    %6592 = vmatpush1.msra.mxu0 0.0
    %6593 = vmatprep.subr.mxu0 0.0
    %6594 = vmatpush1.msra.mxu0 0.0
    %6595 = vmatprep.subr.mxu0 0.0
    %6596 = vmatpush1.msra.mxu0 0.0
    %6597 = vmatprep.subr.mxu0 0.0
    %6598 = vmatpush1.msra.mxu0 0.0
    %6599 = vmatprep.subr.mxu0 0.0
    %6600 = vmatpush1.msra.mxu0 0.0
    %6601 = vmatprep.mubr.f32.mxu0 0.0
    %6602 = vmatmul.mubr.f32.gmra.mrb[0].mxu0 %v6526
    %v6603 = vpop.f32.mrb[0].mxu0
    %v6604 = vadd.f32 0.0, %v6603
    %v6605 = vpop.f32.mrb[0].mxu0
    %6606 = vmatprep.mubr.f32.mxu0 0.0
    %6607 = vmatmul.mubr.f32.gmra.mrb[0].mxu0 %v6529
    %v6608 = vpop.f32.mrb[0].mxu0
    %v6609 = vadd.f32 0.0, %v6608
    %v6610 = vpop.f32.mrb[0].mxu0
    %6611 = vmatprep.mubr.f32.mxu0 0.0
    %6612 = vmatmul.mubr.f32.gmra.mrb[0].mxu0 %v6532
    %v6613 = vpop.f32.mrb[0].mxu0
    %v6614 = vadd.f32 0.0, %v6613
    %v6615 = vpop.f32.mrb[0].mxu0
    %6616 = vmatprep.mubr.f32.mxu0 0.0
    %6617 = vmatmul.mubr.f32.gmra.mrb[0].mxu0 %v6535
    %v6618 = vpop.f32.mrb[0].mxu0
    %v6619 = vadd.f32 0.0, %v6618
    %v6620 = vpop.f32.mrb[0].mxu0
    %6621 = vdwg.mxu0
    %6626 = vrot.lane.b32.xlu0 %v6604, 48
    %v6627 = vpop.permute.xlu0 %6626
    %6628 = vrot.lane.b32.xlu0 %v6609, 48
    %v6629 = vpop.permute.xlu0 %6628
    %6630 = vrot.lane.b32.xlu0 %v6614, 48
    %v6631 = vpop.permute.xlu0 %6630
    %6632 = vrot.lane.b32.xlu0 %v6619, 48
    %v6633 = vpop.permute.xlu0 %6632
    %6638 = vst.msk [vmem:[#allocation3 + $0x20] sm:$0xff] %vm2310, %v6627
    %6639 = vst.msk [vmem:[#allocation3 + $0x28] sm:$0xff] %vm2310, %v6629
    %6640 = vst.msk [vmem:[#allocation3 + $0x30] sm:$0xff] %vm2310, %v6631
    %6641 = vst.msk [vmem:[#allocation3 + $0x38] sm:$0xff] %vm2310, %v6633
    %v6642 = vld [vmem:[#allocation3] sm:$0xff]
    %v6643 = vld [vmem:[#allocation3 + $0x8] sm:$0xff]
    %v6644 = vld [vmem:[#allocation3 + $0x10] sm:$0xff]
    %v6645 = vld [vmem:[#allocation3 + $0x18] sm:$0xff]
    %v6646 = vld [vmem:[#allocation3 + $0x20] sm:$0xff]
    %v6647 = vld [vmem:[#allocation3 + $0x28] sm:$0xff]
    %v6648 = vld [vmem:[#allocation3 + $0x30] sm:$0xff]
    %v6649 = vld [vmem:[#allocation3 + $0x38] sm:$0xff]
    %s6650 = scalar_lea.vmem %s11, 64
    %v6651 = vld [vmem:[%s6650] sm:$0xff]
    %v6652 = vld [vmem:[%s6650 + $0x8] sm:$0xff]
    %v6653 = vld [vmem:[%s6650 + $0x10] sm:$0xff]
    %v6654 = vld [vmem:[%s6650 + $0x18] sm:$0xff]
    %v6655 = vld [vmem:[%s6650 + $0x20] sm:$0xff]
    %v6656 = vld [vmem:[%s6650 + $0x28] sm:$0xff]
    %v6657 = vld [vmem:[%s6650 + $0x30] sm:$0xff]
    %v6658 = vld [vmem:[%s6650 + $0x38] sm:$0xff]
    %s6659 = scalar_lea.vmem %s12, 1
    %v6660 = vld [vmem:[%s6659] sm:$0x1]
    %v6662 = vlaneseq
    %v6663 = vshrl.u32 %v6662, 7
    %v6664 = vsub.s32 0, %v6663
    %v6665 = vrot.slane %v6660, %v6664
    %v6668 = vsel %vm958, %v6642, 0
    %v6671 = vsel %vm958, %v6643, 0
    %v6674 = vsel %vm958, %v6644, 0
    %v6677 = vsel %vm958, %v6645, 0
    %v6680 = vsel %vm958, %v6646, 0
    %v6683 = vsel %vm958, %v6647, 0
    %v6686 = vsel %vm958, %v6648, 0
    %v6689 = vsel %vm958, %v6649, 0
    %v6692 = vsel %vm958, %v6651, 0
    %v6695 = vsel %vm958, %v6652, 0
    %v6698 = vsel %vm958, %v6653, 0
    %v6701 = vsel %vm958, %v6654, 0
    %v6704 = vsel %vm958, %v6655, 0
    %v6707 = vsel %vm958, %v6656, 0
    %v6710 = vsel %vm958, %v6657, 0
    %v6713 = vsel %vm958, %v6658, 0
    %6715 = vmatprep.subr.mxu0 0.0
    %6716 = vmatpush1.xpose.msra.mxu0 %v6692
    %6717 = vmatprep.subr.mxu0 0.0
    %6718 = vmatpush1.xpose.msra.mxu0 %v6695
    %6719 = vmatprep.subr.mxu0 0.0
    %6720 = vmatpush1.xpose.msra.mxu0 %v6698
    %6721 = vmatprep.subr.mxu0 0.0
    %6722 = vmatpush1.xpose.msra.mxu0 %v6701
    %6723 = vmatprep.subr.mxu0 0.0
    %6724 = vmatpush1.xpose.msra.mxu0 %v6704
    %6725 = vmatprep.subr.mxu0 0.0
    %6726 = vmatpush1.xpose.msra.mxu0 %v6707
    %6727 = vmatprep.subr.mxu0 0.0
    %6728 = vmatpush1.xpose.msra.mxu0 %v6710
    %6729 = vmatprep.subr.mxu0 0.0
    %6730 = vmatpush1.xpose.msra.mxu0 %v6713
    %6731 = vmatprep.subr.mxu0 0.0
    %6732 = vmatpush1.xpose.msra.mxu0 0.0
    %6733 = vmatprep.subr.mxu0 0.0
    %6734 = vmatpush1.xpose.msra.mxu0 0.0
    %6735 = vmatprep.subr.mxu0 0.0
    %6736 = vmatpush1.xpose.msra.mxu0 0.0
    %6737 = vmatprep.subr.mxu0 0.0
    %6738 = vmatpush1.xpose.msra.mxu0 0.0
    %6739 = vmatprep.subr.mxu0 0.0
    %6740 = vmatpush1.xpose.msra.mxu0 0.0
    %6741 = vmatprep.subr.mxu0 0.0
    %6742 = vmatpush1.xpose.msra.mxu0 0.0
    %6743 = vmatprep.subr.mxu0 0.0
    %6744 = vmatpush1.xpose.msra.mxu0 0.0
    %6745 = vmatprep.subr.mxu0 0.0
    %6746 = vmatpush1.xpose.msra.mxu0 0.0
    %6747 = vmatprep.subr.mxu0 0.0
    %6748 = vmatpush1.xpose.msra.mxu0 0.0
    %6749 = vmatprep.subr.mxu0 0.0
    %6750 = vmatpush1.xpose.msra.mxu0 0.0
    %6751 = vmatprep.subr.mxu0 0.0
    %6752 = vmatpush1.xpose.msra.mxu0 0.0
    %6753 = vmatprep.subr.mxu0 0.0
    %6754 = vmatpush1.xpose.msra.mxu0 0.0
    %6755 = vmatprep.subr.mxu0 0.0
    %6756 = vmatpush1.xpose.msra.mxu0 0.0
    %6757 = vmatprep.subr.mxu0 0.0
    %6758 = vmatpush1.xpose.msra.mxu0 0.0
    %6759 = vmatprep.subr.mxu0 0.0
    %6760 = vmatpush1.xpose.msra.mxu0 0.0
    %6761 = vmatprep.subr.mxu0 0.0
    %6762 = vmatpush1.xpose.msra.mxu0 0.0
    %6763 = vmatprep.subr.mxu0 0.0
    %6764 = vmatpush1.xpose.msra.mxu0 0.0
    %6765 = vmatprep.subr.mxu0 0.0
    %6766 = vmatpush1.xpose.msra.mxu0 0.0
    %6767 = vmatprep.subr.mxu0 0.0
    %6768 = vmatpush1.xpose.msra.mxu0 0.0
    %6769 = vmatprep.subr.mxu0 0.0
    %6770 = vmatpush1.xpose.msra.mxu0 0.0
    %6771 = vmatprep.subr.mxu0 0.0
    %6772 = vmatpush1.xpose.msra.mxu0 0.0
    %6773 = vmatprep.subr.mxu0 0.0
    %6774 = vmatpush1.xpose.msra.mxu0 0.0
    %6775 = vmatprep.subr.mxu0 0.0
    %6776 = vmatpush1.xpose.msra.mxu0 0.0
    %6777 = vmatprep.subr.mxu0 0.0
    %6778 = vmatpush1.xpose.msra.mxu0 0.0
    %6779 = vmatprep.mubr.f32.mxu0 0.0
    %6780 = vmatmul.mubr.f32.gmra.mrb[0].mxu0 %v6668
    %v6781 = vpop.f32.mrb[0].mxu0
    %v6782 = vadd.f32 %v6665, %v6781
    %v6783 = vpop.f32.mrb[0].mxu0
    %6784 = vmatprep.mubr.f32.mxu0 0.0
    %6785 = vmatmul.mubr.f32.gmra.mrb[0].mxu0 %v6671
    %v6786 = vpop.f32.mrb[0].mxu0
    %v6787 = vadd.f32 %v6665, %v6786
    %v6788 = vpop.f32.mrb[0].mxu0
    %6789 = vmatprep.mubr.f32.mxu0 0.0
    %6790 = vmatmul.mubr.f32.gmra.mrb[0].mxu0 %v6674
    %v6791 = vpop.f32.mrb[0].mxu0
    %v6792 = vadd.f32 %v6665, %v6791
    %v6793 = vpop.f32.mrb[0].mxu0
    %6794 = vmatprep.mubr.f32.mxu0 0.0
    %6795 = vmatmul.mubr.f32.gmra.mrb[0].mxu0 %v6677
    %v6796 = vpop.f32.mrb[0].mxu0
    %v6797 = vadd.f32 %v6665, %v6796
    %v6798 = vpop.f32.mrb[0].mxu0
    %6799 = vmatprep.mubr.f32.mxu0 0.0
    %6800 = vmatmul.mubr.f32.gmra.mrb[0].mxu0 %v6680
    %v6801 = vpop.f32.mrb[0].mxu0
    %v6802 = vadd.f32 %v6665, %v6801
    %v6803 = vpop.f32.mrb[0].mxu0
    %6804 = vmatprep.mubr.f32.mxu0 0.0
    %6805 = vmatmul.mubr.f32.gmra.mrb[0].mxu0 %v6683
    %v6806 = vpop.f32.mrb[0].mxu0
    %v6807 = vadd.f32 %v6665, %v6806
    %v6808 = vpop.f32.mrb[0].mxu0
    %6809 = vmatprep.mubr.f32.mxu0 0.0
    %6810 = vmatmul.mubr.f32.gmra.mrb[0].mxu0 %v6686
    %v6811 = vpop.f32.mrb[0].mxu0
    %v6812 = vadd.f32 %v6665, %v6811
    %v6813 = vpop.f32.mrb[0].mxu0
    %6814 = vmatprep.mubr.f32.mxu0 0.0
    %6815 = vmatmul.mubr.f32.gmra.mrb[0].mxu0 %v6689
    %v6816 = vpop.f32.mrb[0].mxu0
    %v6817 = vadd.f32 %v6665, %v6816
    %v6818 = vpop.f32.mrb[0].mxu0
    %6819 = vdwg.mxu0
    %s6820 = scalar_lea.vmem %s13, 32
    %v6821 = vld [vmem:[%s6820] sm:$0xff]
    %v6822 = vld [vmem:[%s6820 + $0x8] sm:$0xff]
    %v6823 = vld [vmem:[%s6820 + $0x10] sm:$0xff]
    %v6824 = vld [vmem:[%s6820 + $0x18] sm:$0xff]
    %s6825 = scalar_lea.vmem %s14, 1
    %v6826 = vld [vmem:[%s6825] sm:$0x1]
    %v6828 = vlaneseq
    %v6829 = vshrl.u32 %v6828, 7
    %v6830 = vsub.s32 0, %v6829
    %v6831 = vrot.slane %v6826, %v6830
    %v6834 = vsel %vm958, %v6782, 0
    %v6837 = vsel %vm958, %v6787, 0
    %v6840 = vsel %vm958, %v6792, 0
    %v6843 = vsel %vm958, %v6797, 0
    %v6846 = vsel %vm958, %v6802, 0
    %v6849 = vsel %vm958, %v6807, 0
    %v6852 = vsel %vm958, %v6812, 0
    %v6855 = vsel %vm958, %v6817, 0
    %v6858 = vsel %vm958, %v6821, 0
    %v6861 = vsel %vm958, %v6822, 0
    %v6864 = vsel %vm958, %v6823, 0
    %v6867 = vsel %vm958, %v6824, 0
    %6869 = vmatprep.subr.mxu0 0.0
    %6870 = vmatpush1.xpose.msra.mxu0 %v6858
    %6871 = vmatprep.subr.mxu0 0.0
    %6872 = vmatpush1.xpose.msra.mxu0 %v6861
    %6873 = vmatprep.subr.mxu0 0.0
    %6874 = vmatpush1.xpose.msra.mxu0 %v6864
    %6875 = vmatprep.subr.mxu0 0.0
    %6876 = vmatpush1.xpose.msra.mxu0 %v6867
    %6877 = vmatprep.subr.mxu0 0.0
    %6878 = vmatpush1.xpose.msra.mxu0 0.0
    %6879 = vmatprep.subr.mxu0 0.0
    %6880 = vmatpush1.xpose.msra.mxu0 0.0
    %6881 = vmatprep.subr.mxu0 0.0
    %6882 = vmatpush1.xpose.msra.mxu0 0.0
    %6883 = vmatprep.subr.mxu0 0.0
    %6884 = vmatpush1.xpose.msra.mxu0 0.0
    %6885 = vmatprep.subr.mxu0 0.0
    %6886 = vmatpush1.xpose.msra.mxu0 0.0
    %6887 = vmatprep.subr.mxu0 0.0
    %6888 = vmatpush1.xpose.msra.mxu0 0.0
    %6889 = vmatprep.subr.mxu0 0.0
    %6890 = vmatpush1.xpose.msra.mxu0 0.0
    %6891 = vmatprep.subr.mxu0 0.0
    %6892 = vmatpush1.xpose.msra.mxu0 0.0
    %6893 = vmatprep.subr.mxu0 0.0
    %6894 = vmatpush1.xpose.msra.mxu0 0.0
    %6895 = vmatprep.subr.mxu0 0.0
    %6896 = vmatpush1.xpose.msra.mxu0 0.0
    %6897 = vmatprep.subr.mxu0 0.0
    %6898 = vmatpush1.xpose.msra.mxu0 0.0
    %6899 = vmatprep.subr.mxu0 0.0
    %6900 = vmatpush1.xpose.msra.mxu0 0.0
    %6901 = vmatprep.subr.mxu0 0.0
    %6902 = vmatpush1.xpose.msra.mxu0 0.0
    %6903 = vmatprep.subr.mxu0 0.0
    %6904 = vmatpush1.xpose.msra.mxu0 0.0
    %6905 = vmatprep.subr.mxu0 0.0
    %6906 = vmatpush1.xpose.msra.mxu0 0.0
    %6907 = vmatprep.subr.mxu0 0.0
    %6908 = vmatpush1.xpose.msra.mxu0 0.0
    %6909 = vmatprep.subr.mxu0 0.0
    %6910 = vmatpush1.xpose.msra.mxu0 0.0
    %6911 = vmatprep.subr.mxu0 0.0
    %6912 = vmatpush1.xpose.msra.mxu0 0.0
    %6913 = vmatprep.subr.mxu0 0.0
    %6914 = vmatpush1.xpose.msra.mxu0 0.0
    %6915 = vmatprep.subr.mxu0 0.0
    %6916 = vmatpush1.xpose.msra.mxu0 0.0
    %6917 = vmatprep.subr.mxu0 0.0
    %6918 = vmatpush1.xpose.msra.mxu0 0.0
    %6919 = vmatprep.subr.mxu0 0.0
    %6920 = vmatpush1.xpose.msra.mxu0 0.0
    %6921 = vmatprep.subr.mxu0 0.0
    %6922 = vmatpush1.xpose.msra.mxu0 0.0
    %6923 = vmatprep.subr.mxu0 0.0
    %6924 = vmatpush1.xpose.msra.mxu0 0.0
    %6925 = vmatprep.subr.mxu0 0.0
    %6926 = vmatpush1.xpose.msra.mxu0 0.0
    %6927 = vmatprep.subr.mxu0 0.0
    %6928 = vmatpush1.xpose.msra.mxu0 0.0
    %6929 = vmatprep.subr.mxu0 0.0
    %6930 = vmatpush1.xpose.msra.mxu0 0.0
    %6931 = vmatprep.subr.mxu0 0.0
    %6932 = vmatpush1.xpose.msra.mxu0 0.0
    %6933 = vmatprep.mubr.f32.mxu0 0.0
    %6934 = vmatmul.mubr.f32.gmra.mrb[0].mxu0 %v6834
    %v6935 = vpop.f32.mrb[0].mxu0
    %v6936 = vadd.f32 %v6831, %v6935
    %v6937 = vpop.f32.mrb[0].mxu0
    %6938 = vmatprep.mubr.f32.mxu0 0.0
    %6939 = vmatmul.mubr.f32.gmra.mrb[0].mxu0 %v6837
    %v6940 = vpop.f32.mrb[0].mxu0
    %v6941 = vadd.f32 %v6831, %v6940
    %v6942 = vpop.f32.mrb[0].mxu0
    %6943 = vmatprep.mubr.f32.mxu0 0.0
    %6944 = vmatmul.mubr.f32.gmra.mrb[0].mxu0 %v6840
    %v6945 = vpop.f32.mrb[0].mxu0
    %v6946 = vadd.f32 %v6831, %v6945
    %v6947 = vpop.f32.mrb[0].mxu0
    %6948 = vmatprep.mubr.f32.mxu0 0.0
    %6949 = vmatmul.mubr.f32.gmra.mrb[0].mxu0 %v6843
    %v6950 = vpop.f32.mrb[0].mxu0
    %v6951 = vadd.f32 %v6831, %v6950
    %v6952 = vpop.f32.mrb[0].mxu0
    %6953 = vmatprep.mubr.f32.mxu0 0.0
    %6954 = vmatmul.mubr.f32.gmra.mrb[0].mxu0 %v6846
    %v6955 = vpop.f32.mrb[0].mxu0
    %v6956 = vadd.f32 %v6831, %v6955
    %v6957 = vpop.f32.mrb[0].mxu0
    %6958 = vmatprep.mubr.f32.mxu0 0.0
    %6959 = vmatmul.mubr.f32.gmra.mrb[0].mxu0 %v6849
    %v6960 = vpop.f32.mrb[0].mxu0
    %v6961 = vadd.f32 %v6831, %v6960
    %v6962 = vpop.f32.mrb[0].mxu0
    %6963 = vmatprep.mubr.f32.mxu0 0.0
    %6964 = vmatmul.mubr.f32.gmra.mrb[0].mxu0 %v6852
    %v6965 = vpop.f32.mrb[0].mxu0
    %v6966 = vadd.f32 %v6831, %v6965
    %v6967 = vpop.f32.mrb[0].mxu0
    %6968 = vmatprep.mubr.f32.mxu0 0.0
    %6969 = vmatmul.mubr.f32.gmra.mrb[0].mxu0 %v6855
    %v6970 = vpop.f32.mrb[0].mxu0
    %v6971 = vadd.f32 %v6831, %v6970
    %v6972 = vpop.f32.mrb[0].mxu0
    %6973 = vdwg.mxu0
    %s6974 = scalar_lea.vmem %s15, 1
    %v6975 = vld [vmem:[%s6974] sm:$0x1]
    %s6976 = scalar_lea.vmem %s16, 1
    %v6977 = vld [vmem:[%s6976] sm:$0x1]
    %v6978 = vsel %vm198, %v6936, 0.0
    %6979 = vadd.xlane.f32.xlu0 %v6978
    %v6980 = vpop.xlane.xlu0 %6979
    %v6981 = vsel %vm198, %v6941, 0.0
    %6982 = vadd.xlane.f32.xlu0 %v6981
    %v6983 = vpop.xlane.xlu0 %6982
    %v6984 = vsel %vm198, %v6946, 0.0
    %6985 = vadd.xlane.f32.xlu0 %v6984
    %v6986 = vpop.xlane.xlu0 %6985
    %v6987 = vsel %vm198, %v6951, 0.0
    %6988 = vadd.xlane.f32.xlu0 %v6987
    %v6989 = vpop.xlane.xlu0 %6988
    %v6990 = vsel %vm198, %v6956, 0.0
    %6991 = vadd.xlane.f32.xlu0 %v6990
    %v6992 = vpop.xlane.xlu0 %6991
    %v6993 = vsel %vm198, %v6961, 0.0
    %6994 = vadd.xlane.f32.xlu0 %v6993
    %v6995 = vpop.xlane.xlu0 %6994
    %v6996 = vsel %vm198, %v6966, 0.0
    %6997 = vadd.xlane.f32.xlu0 %v6996
    %v6998 = vpop.xlane.xlu0 %6997
    %v6999 = vsel %vm198, %v6971, 0.0
    %7000 = vadd.xlane.f32.xlu0 %v6999
    %v7001 = vpop.xlane.xlu0 %7000
    %v7002 = vmul.f32 %v6980, %v205
    %v7003 = vmul.f32 %v6983, %v205
    %v7004 = vmul.f32 %v6986, %v205
    %v7005 = vmul.f32 %v6989, %v205
    %v7006 = vmul.f32 %v6992, %v205
    %v7007 = vmul.f32 %v6995, %v205
    %v7008 = vmul.f32 %v6998, %v205
    %v7009 = vmul.f32 %v7001, %v205
    %v7010 = vsub.f32 %v6936, %v7002
    %v7011 = vsub.f32 %v6941, %v7003
    %v7012 = vsub.f32 %v6946, %v7004
    %v7013 = vsub.f32 %v6951, %v7005
    %v7014 = vsub.f32 %v6956, %v7006
    %v7015 = vsub.f32 %v6961, %v7007
    %v7016 = vsub.f32 %v6966, %v7008
    %v7017 = vsub.f32 %v6971, %v7009
    %v7018 = vmul.f32 %v7010, %v7010
    %v7019 = vmul.f32 %v7011, %v7011
    %v7020 = vmul.f32 %v7012, %v7012
    %v7021 = vmul.f32 %v7013, %v7013
    %v7022 = vmul.f32 %v7014, %v7014
    %v7023 = vmul.f32 %v7015, %v7015
    %v7024 = vmul.f32 %v7016, %v7016
    %v7025 = vmul.f32 %v7017, %v7017
    %v7026 = vsel %vm198, %v7018, 0.0
    %7027 = vadd.xlane.f32.xlu0 %v7026
    %v7028 = vpop.xlane.xlu0 %7027
    %v7029 = vsel %vm198, %v7019, 0.0
    %7030 = vadd.xlane.f32.xlu0 %v7029
    %v7031 = vpop.xlane.xlu0 %7030
    %v7032 = vsel %vm198, %v7020, 0.0
    %7033 = vadd.xlane.f32.xlu0 %v7032
    %v7034 = vpop.xlane.xlu0 %7033
    %v7035 = vsel %vm198, %v7021, 0.0
    %7036 = vadd.xlane.f32.xlu0 %v7035
    %v7037 = vpop.xlane.xlu0 %7036
    %v7038 = vsel %vm198, %v7022, 0.0
    %7039 = vadd.xlane.f32.xlu0 %v7038
    %v7040 = vpop.xlane.xlu0 %7039
    %v7041 = vsel %vm198, %v7023, 0.0
    %7042 = vadd.xlane.f32.xlu0 %v7041
    %v7043 = vpop.xlane.xlu0 %7042
    %v7044 = vsel %vm198, %v7024, 0.0
    %7045 = vadd.xlane.f32.xlu0 %v7044
    %v7046 = vpop.xlane.xlu0 %7045
    %v7047 = vsel %vm198, %v7025, 0.0
    %7048 = vadd.xlane.f32.xlu0 %v7047
    %v7049 = vpop.xlane.xlu0 %7048
    %v7050 = vmul.f32 %v7028, %v205
    %v7051 = vmul.f32 %v7031, %v205
    %v7052 = vmul.f32 %v7034, %v205
    %v7053 = vmul.f32 %v7037, %v205
    %v7054 = vmul.f32 %v7040, %v205
    %v7055 = vmul.f32 %v7043, %v205
    %v7056 = vmul.f32 %v7046, %v205
    %v7057 = vmul.f32 %v7049, %v205
    %v7058 = vadd.f32 %v7050, 1e-12
    %v7059 = vadd.f32 %v7051, 1e-12
    %v7060 = vadd.f32 %v7052, 1e-12
    %v7061 = vadd.f32 %v7053, 1e-12
    %v7062 = vadd.f32 %v7054, 1e-12
    %v7063 = vadd.f32 %v7055, 1e-12
    %v7064 = vadd.f32 %v7056, 1e-12
    %v7065 = vadd.f32 %v7057, 1e-12
    %v7066 = vrsqrt.pop %v7058
    %v7067 = vrsqrt.pop %v7059
    %v7068 = vrsqrt.pop %v7060
    %v7069 = vrsqrt.pop %v7061
    %v7070 = vrsqrt.pop %v7062
    %v7071 = vrsqrt.pop %v7063
    %v7072 = vrsqrt.pop %v7064
    %v7073 = vrsqrt.pop %v7065
    %v7074 = vmul.f32 %v7010, %v7066
    %v7075 = vmul.f32 %v7011, %v7067
    %v7076 = vmul.f32 %v7012, %v7068
    %v7077 = vmul.f32 %v7013, %v7069
    %v7078 = vmul.f32 %v7014, %v7070
    %v7079 = vmul.f32 %v7015, %v7071
    %v7080 = vmul.f32 %v7016, %v7072
    %v7081 = vmul.f32 %v7017, %v7073
    %v7083 = vlaneseq
    %v7084 = vshrl.u32 %v7083, 7
    %v7085 = vsub.s32 0, %v7084
    %v7086 = vrot.slane %v6975, %v7085
    %v7088 = vmul.f32 %v7074, %v7086
    %v7089 = vmul.f32 %v7075, %v7086
    %v7090 = vmul.f32 %v7076, %v7086
    %v7091 = vmul.f32 %v7077, %v7086
    %v7092 = vmul.f32 %v7078, %v7086
    %v7093 = vmul.f32 %v7079, %v7086
    %v7094 = vmul.f32 %v7080, %v7086
    %v7095 = vmul.f32 %v7081, %v7086
    %v7097 = vlaneseq
    %v7098 = vshrl.u32 %v7097, 7
    %v7099 = vsub.s32 0, %v7098
    %v7100 = vrot.slane %v6977, %v7099
    %v7102 = vadd.f32 %v7088, %v7100
    %v7103 = vadd.f32 %v7089, %v7100
    %v7104 = vadd.f32 %v7090, %v7100
    %v7105 = vadd.f32 %v7091, %v7100
    %v7106 = vadd.f32 %v7092, %v7100
    %v7107 = vadd.f32 %v7093, %v7100
    %v7108 = vadd.f32 %v7094, %v7100
    %v7109 = vadd.f32 %v7095, %v7100
    %v7110 = vadd.f32 %v3929, %v7102
    %v7111 = vadd.f32 %v3930, %v7103
    %v7112 = vadd.f32 %v3931, %v7104
    %v7113 = vadd.f32 %v3932, %v7105
    %v7114 = vadd.f32 %v3933, %v7106
    %v7115 = vadd.f32 %v3934, %v7107
    %v7116 = vadd.f32 %v3935, %v7108
    %v7117 = vadd.f32 %v3936, %v7109
    %7118 = vst.msk [vmem:[#allocation2] sm:$0xff] %vm198, %v7110
    %7119 = vst.msk [vmem:[#allocation2 + $0x8] sm:$0xff] %vm198, %v7111
    %7120 = vst.msk [vmem:[#allocation2 + $0x10] sm:$0xff] %vm198, %v7112
    %7121 = vst.msk [vmem:[#allocation2 + $0x18] sm:$0xff] %vm198, %v7113
    %7122 = vst.msk [vmem:[#allocation2 + $0x20] sm:$0xff] %vm198, %v7114
    %7123 = vst.msk [vmem:[#allocation2 + $0x28] sm:$0xff] %vm198, %v7115
    %7124 = vst.msk [vmem:[#allocation2 + $0x30] sm:$0xff] %vm198, %v7116
    %7125 = vst.msk [vmem:[#allocation2 + $0x38] sm:$0xff] %vm198, %v7117
    %v7126 = vld [vmem:[#allocation2] sm:$0xff]
    %v7127 = vld [vmem:[#allocation2 + $0x8] sm:$0xff]
    %v7128 = vld [vmem:[#allocation2 + $0x10] sm:$0xff]
    %v7129 = vld [vmem:[#allocation2 + $0x18] sm:$0xff]
    %v7131 = vsel %vm198, 1.0, 0
    %v7134 = vsel %vm198, %v7126, 0
    %v7137 = vsel %vm198, %v7127, 0
    %v7140 = vsel %vm198, %v7128, 0
    %v7143 = vsel %vm198, %v7129, 0
    %7145 = vmatprep.subr.mxu0 0.0
    %7146 = vmatpush1.xpose.msra.mxu0 %v7134
    %7147 = vmatprep.subr.mxu0 0.0
    %7148 = vmatpush1.xpose.msra.mxu0 %v7137
    %7149 = vmatprep.subr.mxu0 0.0
    %7150 = vmatpush1.xpose.msra.mxu0 %v7140
    %7151 = vmatprep.subr.mxu0 0.0
    %7152 = vmatpush1.xpose.msra.mxu0 %v7143
    %7153 = vmatprep.subr.mxu0 0.0
    %7154 = vmatpush1.xpose.msra.mxu0 0.0
    %7155 = vmatprep.subr.mxu0 0.0
    %7156 = vmatpush1.xpose.msra.mxu0 0.0
    %7157 = vmatprep.subr.mxu0 0.0
    %7158 = vmatpush1.xpose.msra.mxu0 0.0
    %7159 = vmatprep.subr.mxu0 0.0
    %7160 = vmatpush1.xpose.msra.mxu0 0.0
    %7161 = vmatprep.subr.mxu0 0.0
    %7162 = vmatpush1.xpose.msra.mxu0 0.0
    %7163 = vmatprep.subr.mxu0 0.0
    %7164 = vmatpush1.xpose.msra.mxu0 0.0
    %7165 = vmatprep.subr.mxu0 0.0
    %7166 = vmatpush1.xpose.msra.mxu0 0.0
    %7167 = vmatprep.subr.mxu0 0.0
    %7168 = vmatpush1.xpose.msra.mxu0 0.0
    %7169 = vmatprep.subr.mxu0 0.0
    %7170 = vmatpush1.xpose.msra.mxu0 0.0
    %7171 = vmatprep.subr.mxu0 0.0
    %7172 = vmatpush1.xpose.msra.mxu0 0.0
    %7173 = vmatprep.subr.mxu0 0.0
    %7174 = vmatpush1.xpose.msra.mxu0 0.0
    %7175 = vmatprep.subr.mxu0 0.0
    %7176 = vmatpush1.xpose.msra.mxu0 0.0
    %7177 = vmatprep.subr.mxu0 0.0
    %7178 = vmatpush1.xpose.msra.mxu0 0.0
    %7179 = vmatprep.subr.mxu0 0.0
    %7180 = vmatpush1.xpose.msra.mxu0 0.0
    %7181 = vmatprep.subr.mxu0 0.0
    %7182 = vmatpush1.xpose.msra.mxu0 0.0
    %7183 = vmatprep.subr.mxu0 0.0
    %7184 = vmatpush1.xpose.msra.mxu0 0.0
    %7185 = vmatprep.subr.mxu0 0.0
    %7186 = vmatpush1.xpose.msra.mxu0 0.0
    %7187 = vmatprep.subr.mxu0 0.0
    %7188 = vmatpush1.xpose.msra.mxu0 0.0
    %7189 = vmatprep.subr.mxu0 0.0
    %7190 = vmatpush1.xpose.msra.mxu0 0.0
    %7191 = vmatprep.subr.mxu0 0.0
    %7192 = vmatpush1.xpose.msra.mxu0 0.0
    %7193 = vmatprep.subr.mxu0 0.0
    %7194 = vmatpush1.xpose.msra.mxu0 0.0
    %7195 = vmatprep.subr.mxu0 0.0
    %7196 = vmatpush1.xpose.msra.mxu0 0.0
    %7197 = vmatprep.subr.mxu0 0.0
    %7198 = vmatpush1.xpose.msra.mxu0 0.0
    %7199 = vmatprep.subr.mxu0 0.0
    %7200 = vmatpush1.xpose.msra.mxu0 0.0
    %7201 = vmatprep.subr.mxu0 0.0
    %7202 = vmatpush1.xpose.msra.mxu0 0.0
    %7203 = vmatprep.subr.mxu0 0.0
    %7204 = vmatpush1.xpose.msra.mxu0 0.0
    %7205 = vmatprep.subr.mxu0 0.0
    %7206 = vmatpush1.xpose.msra.mxu0 0.0
    %7207 = vmatprep.subr.mxu0 0.0
    %7208 = vmatpush1.xpose.msra.mxu0 0.0
    %7209 = vmatprep.mubr.f32.mxu0 0.0
    %7210 = vmatmul.mubr.f32.gmra.mrb[0].mxu0 %v7131
    %v7211 = vpop.f32.mrb[0].mxu0
    %v7212 = vadd.f32 0.0, %v7211
    %v7213 = vpop.f32.mrb[0].mxu0
    %7214 = vdwg.mxu0
    %vm7215 = vcmask 253952
    %7216 = vst.msk [vmem:[#allocation4] sm:$0x1] %vm7215, %v7212
    %v7217 = vld [vmem:[#allocation2 + $0x20] sm:$0xff]
    %v7218 = vld [vmem:[#allocation2 + $0x28] sm:$0xff]
    %v7219 = vld [vmem:[#allocation2 + $0x30] sm:$0xff]
    %v7220 = vld [vmem:[#allocation2 + $0x38] sm:$0xff]
    %v7222 = vsel %vm198, %v7217, 0
    %v7225 = vsel %vm198, %v7218, 0
    %v7228 = vsel %vm198, %v7219, 0
    %v7231 = vsel %vm198, %v7220, 0
    %7233 = vmatprep.subr.mxu0 0.0
    %7234 = vmatpush1.xpose.msra.mxu0 %v7222
    %7235 = vmatprep.subr.mxu0 0.0
    %7236 = vmatpush1.xpose.msra.mxu0 %v7225
    %7237 = vmatprep.subr.mxu0 0.0
    %7238 = vmatpush1.xpose.msra.mxu0 %v7228
    %7239 = vmatprep.subr.mxu0 0.0
    %7240 = vmatpush1.xpose.msra.mxu0 %v7231
    %7241 = vmatprep.subr.mxu0 0.0
    %7242 = vmatpush1.xpose.msra.mxu0 0.0
    %7243 = vmatprep.subr.mxu0 0.0
    %7244 = vmatpush1.xpose.msra.mxu0 0.0
    %7245 = vmatprep.subr.mxu0 0.0
    %7246 = vmatpush1.xpose.msra.mxu0 0.0
    %7247 = vmatprep.subr.mxu0 0.0
    %7248 = vmatpush1.xpose.msra.mxu0 0.0
    %7249 = vmatprep.subr.mxu0 0.0
    %7250 = vmatpush1.xpose.msra.mxu0 0.0
    %7251 = vmatprep.subr.mxu0 0.0
    %7252 = vmatpush1.xpose.msra.mxu0 0.0
    %7253 = vmatprep.subr.mxu0 0.0
    %7254 = vmatpush1.xpose.msra.mxu0 0.0
    %7255 = vmatprep.subr.mxu0 0.0
    %7256 = vmatpush1.xpose.msra.mxu0 0.0
    %7257 = vmatprep.subr.mxu0 0.0
    %7258 = vmatpush1.xpose.msra.mxu0 0.0
    %7259 = vmatprep.subr.mxu0 0.0
    %7260 = vmatpush1.xpose.msra.mxu0 0.0
    %7261 = vmatprep.subr.mxu0 0.0
    %7262 = vmatpush1.xpose.msra.mxu0 0.0
    %7263 = vmatprep.subr.mxu0 0.0
    %7264 = vmatpush1.xpose.msra.mxu0 0.0
    %7265 = vmatprep.subr.mxu0 0.0
    %7266 = vmatpush1.xpose.msra.mxu0 0.0
    %7267 = vmatprep.subr.mxu0 0.0
    %7268 = vmatpush1.xpose.msra.mxu0 0.0
    %7269 = vmatprep.subr.mxu0 0.0
    %7270 = vmatpush1.xpose.msra.mxu0 0.0
    %7271 = vmatprep.subr.mxu0 0.0
    %7272 = vmatpush1.xpose.msra.mxu0 0.0
    %7273 = vmatprep.subr.mxu0 0.0
    %7274 = vmatpush1.xpose.msra.mxu0 0.0
    %7275 = vmatprep.subr.mxu0 0.0
    %7276 = vmatpush1.xpose.msra.mxu0 0.0
    %7277 = vmatprep.subr.mxu0 0.0
    %7278 = vmatpush1.xpose.msra.mxu0 0.0
    %7279 = vmatprep.subr.mxu0 0.0
    %7280 = vmatpush1.xpose.msra.mxu0 0.0
    %7281 = vmatprep.subr.mxu0 0.0
    %7282 = vmatpush1.xpose.msra.mxu0 0.0
    %7283 = vmatprep.subr.mxu0 0.0
    %7284 = vmatpush1.xpose.msra.mxu0 0.0
    %7285 = vmatprep.subr.mxu0 0.0
    %7286 = vmatpush1.xpose.msra.mxu0 0.0
    %7287 = vmatprep.subr.mxu0 0.0
    %7288 = vmatpush1.xpose.msra.mxu0 0.0
    %7289 = vmatprep.subr.mxu0 0.0
    %7290 = vmatpush1.xpose.msra.mxu0 0.0
    %7291 = vmatprep.subr.mxu0 0.0
    %7292 = vmatpush1.xpose.msra.mxu0 0.0
    %7293 = vmatprep.subr.mxu0 0.0
    %7294 = vmatpush1.xpose.msra.mxu0 0.0
    %7295 = vmatprep.subr.mxu0 0.0
    %7296 = vmatpush1.xpose.msra.mxu0 0.0
    %7297 = vmatprep.mubr.f32.mxu0 0.0
    %7298 = vmatmul.mubr.f32.gmra.mrb[0].mxu0 %v7131
    %v7299 = vpop.f32.mrb[0].mxu0
    %v7300 = vadd.f32 0.0, %v7299
    %v7301 = vpop.f32.mrb[0].mxu0
    %7302 = vdwg.mxu0
    %s7303 = scalar_lea.vmem [#allocation4], 1
    %7304 = vst.msk [vmem:[%s7303] sm:$0x1] %vm7215, %v7300
    // Predicated region
    $region70: #{tpu_custom_call.1} parent=1 // pred_check
      _
    $region71: #{tpu_custom_call.1} parent=1 // pred_check_branch
      %7306 = sbr.rel (0) target = $region73
    $region72: #{tpu_custom_call.1} parent=1 // pred_region
      %s7308 = ssub.s32 32, 32
      %7309 = vsyncadd [#allocation5], %s7308
      %s7310 = sshll.u32 [#allocation4], 4
      %s7311 = int_to_ptr.vmem [resolvable:$true] %s7310
      %7316 = dma.vmem_to_hbm [thread:$0]  %s7311, 32, %s17, [#allocation5], 16, 16, 1
    $region73: #{tpu_custom_call.1} parent=1 // pred_fallthru
      _
    // Predicated region
    $region74: #{tpu_custom_call.1} parent=1 // pred_check
      _
    $region75: #{tpu_custom_call.1} parent=1 // pred_check_branch
      %7318 = sbr.rel (0) target = $region77
    $region76: #{tpu_custom_call.1} parent=1 // pred_region
      %7319 = dma.done [#allocation5], 32
    $region77: #{tpu_custom_call.1} parent=1 // pred_fallthru
      _
    %7320 = vsyncpa [#allocation5], 1

</llo_original>
